<compile_context>
chip_gen: v7x
topology: tpu7x:2x2x1
jax: 0.10.0
libtpu: 0.0.40
codegen_flags: <defaults>
</compile_context>

<pallas_src>
import functools

import jax
import jax.numpy as jnp
from jax.experimental import pallas as pl
from jax.experimental.pallas import tpu as pltpu


_TARGET_OUT_BLOCK_BYTES = 4 * 1024 * 1024   # ~85%+ of HBM roofline per tiling data
_VMEM_LIMIT_BYTES = 32 * 1024 * 1024        # safe on v5e/v6e (128 MiB) and v7x (64 MiB)


def _cdiv(a: int, b: int) -> int:
    return -(-a // b)


def _sublane_granule(itemsize: int) -> int:
    # (8,128) tiles for 4-byte, (16,128) for 2-byte, (32,128) for 1-byte dtypes.
    return max(8, 32 // int(itemsize))


def _w_replicate_kernel(x_ref, o_ref, *, scale: int):
    """Fast path body: x_ref (TC, TH, W) -> o_ref (TC, TH, W*scale).

    Lane-axis nearest replication only; H replication is done by the output
    BlockSpec (grid axis r), so stores are exactly one pass over the output.
    """
    x = x_ref[...]                                        # source dtype, no casts
    tc, th, w = x.shape
    o_ref[...] = jnp.broadcast_to(
        x[..., None], (tc, th, w, scale)).reshape(tc, th, w * scale)


def _hw_replicate_kernel(x_ref, o_ref, *, scale: int):
    """Fallback body: x_ref (TC, TH, W) -> o_ref (TC, TH*scale, W*scale)."""
    s = scale
    x = x_ref[...]
    tc, th, w = x.shape
    xw = jnp.broadcast_to(x[..., None], (tc, th, w, s)).reshape(tc, th, w * s)
    xhw = jnp.broadcast_to(xw[:, :, None, :], (tc, th, s, w * s))
    o_ref[...] = xhw.reshape(tc, th * s, w * s)


def _pick_tiling(nc, h, row_out_bytes, granule, target=_TARGET_OUT_BLOCK_BYTES):
    """Choose (channels per block, input-H rows per block).

    `row_out_bytes` = output bytes produced per (channel, input row) per grid
    step.  Blocks need not divide the array dims (cdiv grid, boundary clip).
    """
    per_ch = h * row_out_bytes
    if per_ch <= target:
        tc = max(1, min(nc, target // per_ch))
        # Leave >=2 grid steps along the channel axis so both v7x TCs get work.
        if nc >= 2 and nc // tc < 2:
            tc = _cdiv(nc, 2)
        return tc, h
    rows = max(granule, (target // row_out_bytes) // granule * granule)
    return 1, min(h, rows)


def interpolate_nearest(x, scale_factor):
    """Equivalent of Interpolate(scale_factor)(x) for NCHW input x."""
    s = int(scale_factor)
    assert s >= 1 and float(scale_factor) == float(s), \
        "only integer scale factors (PyTorch default mode='nearest') supported"
    n, c, h, w = x.shape
    ho, wo = h * s, w * s
    nc = n * c
    itemsize = jnp.dtype(x.dtype).itemsize
    granule = _sublane_granule(itemsize)

    x2 = x.reshape(nc, h, w)  # free row-major glue reshape
    cost = pl.CostEstimate(flops=0, transcendentals=0,
                           bytes_accessed=(nc * h * w + nc * ho * wo) * itemsize)

    if s > 1 and wo % 128 == 0:
        # ---- Fast path: H replication via output BlockSpec (grid axis r). ----
        # Output viewed as (nc, h, s*wo); out[:, i, r*wo + j] = in[:, i, j//s],
        # which reshapes for free to the final (n, c, h*s, wo).
        tc, th = _pick_tiling(nc, h, wo * itemsize, granule)
        grid = (_cdiv(nc, tc), _cdiv(h, th), s)
        out3 = pl.pallas_call(
            functools.partial(_w_replicate_kernel, scale=s),
            out_shape=jax.ShapeDtypeStruct((nc, h, s * wo), x.dtype),
            grid_spec=pltpu.PrefetchScalarGridSpec(
                num_scalar_prefetch=0,
                grid=grid,
                # Input block index ignores r -> not re-DMA'd across the
                # (innermost, sequential) replica axis.
                in_specs=[pl.BlockSpec((tc, th, w), lambda i, j, r: (i, j, 0))],
                out_specs=pl.BlockSpec((tc, th, wo), lambda i, j, r: (i, j, r)),
            ),
            compiler_params=pltpu.CompilerParams(
                dimension_semantics=("parallel", "parallel", "arbitrary"),
                vmem_limit_bytes=_VMEM_LIMIT_BYTES),
            cost_estimate=cost,
        )(x2)
        return out3.reshape(n, c, ho, wo)

    # ---- Fallback path (wo not lane-aligned, or s == 1): full-W blocks, ----
    # ---- in-body H+W replication (always satisfies (8,128) constraints). ----
    tc, th = _pick_tiling(nc, h, s * wo * itemsize, granule)
    grid = (_cdiv(nc, tc), _cdiv(h, th))
    out = pl.pallas_call(
        functools.partial(_hw_replicate_kernel, scale=s),
        out_shape=jax.ShapeDtypeStruct((nc, ho, wo), x.dtype),
        grid_spec=pltpu.PrefetchScalarGridSpec(
            num_scalar_prefetch=0,
            grid=grid,
            in_specs=[pl.BlockSpec((tc, th, w), lambda i, j: (i, j, 0))],
            out_specs=pl.BlockSpec((tc, th * s, wo), lambda i, j: (i, j, 0)),
        ),
        compiler_params=pltpu.CompilerParams(
            dimension_semantics=("parallel", "parallel"),
            vmem_limit_bytes=_VMEM_LIMIT_BYTES),
        cost_estimate=cost,
    )(x2)
    return out.reshape(n, c, ho, wo)


if __name__ == "__main__":
    k0, k1, k2 = jax.random.split(jax.random.PRNGKey(0), 3)

    # Module has no learnable parameters; pick scale_factor=2 deterministically.
    scale_factor = 2
    x = jax.random.normal(k0, (2, 4, 16, 16), dtype=jnp.float32)
    y = jax.block_until_ready(interpolate_nearest(x, scale_factor))
    ref = jnp.repeat(jnp.repeat(x, scale_factor, axis=2), scale_factor, axis=3)
    assert y.shape == (2, 4, 32, 32)
    assert y.dtype == x.dtype
    assert jnp.array_equal(y, ref)

    # Scale 3, odd channel count (exercises cdiv boundary-clipped channel blocks).
    x3 = jax.random.normal(k1, (1, 3, 8, 8), dtype=jnp.float32)
    y3 = jax.block_until_ready(interpolate_nearest(x3, 3))
    ref3 = jnp.repeat(jnp.repeat(x3, 3, axis=2), 3, axis=3)
    assert y3.shape == (1, 3, 24, 24)
    assert jnp.array_equal(y3, ref3)

    # Lane-aligned fast path (wo = 128): H replication via the output BlockSpec.
    xw = jax.random.normal(k2, (1, 4, 8, 64), dtype=jnp.float32)
    yw = jax.block_until_ready(interpolate_nearest(xw, 2))
    refw = jnp.repeat(jnp.repeat(xw, 2, axis=2), 2, axis=3)
    assert yw.shape == (1, 4, 16, 128)
    assert jnp.array_equal(yw, refw)

    print("KERNEL_OK")
</pallas_src>

<mosaic_0001>
module attributes {stable_mosaic.version = 11 : i64} {
  func.func @_hw_replicate_kernel(%arg0: i32, %arg1: i32, %arg2: memref<4x16x16xf32, #tpu.memory_space<vmem>>, %arg3: memref<4x32x32xf32, #tpu.memory_space<vmem>>) attributes {dimension_semantics = [#tpu.dimension_semantics<parallel>, #tpu.dimension_semantics<parallel>], iteration_bounds = array<i64: 2, 1>, scalar_prefetch = 0 : i64, scratch_operands = 0 : i64, tpu.core_type = #tpu.core_type<tc>, window_params = [{transform_indices = @transform_0, window_bounds = array<i64: 4, 16, 16>}, {transform_indices = @transform_1, window_bounds = array<i64: 4, 32, 32>}]} {
    %c0 = arith.constant 0 : index
    %c0_0 = arith.constant 0 : index
    %c0_1 = arith.constant 0 : index
    %0 = vector.load %arg2[%c0, %c0_0, %c0_1] : memref<4x16x16xf32, #tpu.memory_space<vmem>>, vector<4x16x16xf32>
    %1 = vector.shape_cast %0 : vector<4x16x16xf32> to vector<4x16x16x1xf32>
    %2 = vector.shape_cast %1 : vector<4x16x16x1xf32> to vector<4x16x16x1xf32>
    %3 = vector.broadcast %2 : vector<4x16x16x1xf32> to vector<4x16x16x2xf32>
    %4 = vector.shape_cast %3 : vector<4x16x16x2xf32> to vector<4x16x32xf32>
    %5 = vector.shape_cast %4 : vector<4x16x32xf32> to vector<4x16x1x32xf32>
    %6 = vector.shape_cast %5 : vector<4x16x1x32xf32> to vector<4x16x1x32xf32>
    %7 = vector.broadcast %6 : vector<4x16x1x32xf32> to vector<4x16x2x32xf32>
    %8 = vector.shape_cast %7 : vector<4x16x2x32xf32> to vector<4x32x32xf32>
    %c0_2 = arith.constant 0 : index
    %c0_3 = arith.constant 0 : index
    %c0_4 = arith.constant 0 : index
    %9 = vector.load %arg3[%c0_2, %c0_3, %c0_4] : memref<4x32x32xf32, #tpu.memory_space<vmem>>, vector<4x32x32xf32>
    tpu.vector_store %arg3[%c0_2, %c0_3, %c0_4], %8 {strides = array<i32>} : memref<4x32x32xf32, #tpu.memory_space<vmem>>, vector<4x32x32xf32>,
    return
  }
  func.func @transform_0(%arg0: i32, %arg1: i32) -> (i32, i32, i32) {
    %c0_i32 = arith.constant 0 : i32
    %c0_i32_0 = arith.constant 0 : i32
    return %arg0, %arg1, %c0_i32 : i32, i32, i32
  }
  func.func @transform_1(%arg0: i32, %arg1: i32) -> (i32, i32, i32) {
    %c0_i32 = arith.constant 0 : i32
    %c0_i32_0 = arith.constant 0 : i32
    return %arg0, %arg1, %c0_i32 : i32, i32, i32
  }
}

</mosaic_0001>

<llo_original>
// kernel: tpu_custom_call.1
$region0: #{tpu_custom_call.1}
  #allocation0 [shape = 'u32[]', space=smem, size = 0x4, offset = 0x4, fixed_abs, tag = 'smem constant byte address 0x4 - core index']
  #allocation1 [shape = 'u32[144,128]{1,0:T(1,128)}', space=vmem, size = 0x12000, scoped, tag = 'internal scratch']
  %s0 = inlined_call_operand.hbm [shape: f32[8,16,16], index: 0, kind: input, shape index: {}]
  %s1 = inlined_call_operand.hbm [shape: f32[8,32,32], index: 1, kind: output, shape index: {}]
  %s2 = sld [smem:[#allocation0]]
  $region41: #{tpu_custom_call.1} parent=0
    _
  %s4 = ssub.s32 1, %s2
  %s5 = scalar_select 0, %s4, %s2
  $region1: #{tpu_custom_call.1} parent=0
    #allocation2 [shape = 'u8[65536]{0}', space=vmem, size = 0x10000, scoped, tag = 'input window, operand 0']
    #allocation3 [shape = 's32[2]{0}', space=sflag, size = 0x8, scoped, tag = 'scoped memory for tpu_custom_call.1']
    #allocation4 [shape = 's32[2]{0}', space=sflag, size = 0x8, scoped, tag = 'scoped memory for tpu_custom_call.1']
    #allocation5 [shape = 'u8[131072]{0}', space=vmem, size = 0x20000, scoped, tag = 'output window, operand 0']
    %6 = vsyncpa [#allocation3], 0
    %s7 = scalar_lea.sflag [#allocation3], 1
    %8 = vsyncpa %s7, 0
    %9 = vsyncpa [#allocation4], 0
    %s10 = scalar_lea.sflag [#allocation4], 1
    %11 = vsyncpa %s10, 0
    loop: start=0, step=1, limit=4
    $region2: #{tpu_custom_call.1} parent=1 // loop_pre_header
      _
    $region3: #{tpu_custom_call.1} parent=1 // loop_header
      %s13 = sphi 0, %s17
      %p14 = scmp.ge.s32.totalorder %s13, 4
      %s20 = sphi 0, %s32
      %s21 = sphi 0, %s28
      %s22 = sphi 0, %s20
      %s23 = sphi 0, %s21
      %s24 = sphi 0, %s22
      %s25 = sphi 0, %s23
      %s37 = sphi 0, %s39
      %s40 = sphi 0, %s37
      %s41 = sphi 0, %s40
      %s57 = sphi 0, %s41
      %s65 = sphi 0, %s67
      %s68 = sphi 0, %s65
      %s69 = sphi 0, %s68
      %s85 = sphi 0, %s69
    $region4: #{tpu_custom_call.1} parent=1 // loop_header_branch
      %16 = sbr.rel (%p14) target = $region8
    $region5: #{tpu_custom_call.1} parent=1 // loop_body
      %s18 = ssub.s32 %s13, 1
      %s19 = ssub.s32 %s13, 2
      %s26 = sadd.s32 1, %s21
      %p27 = scmp.ge.s32.totalorder %s26, 1
      %s28 = scalar_select %p27, 0, %s26
      %s29 = sadd.s32 1, %s20
      %s30 = scalar_select %p27, %s29, %s20
      %p31 = scmp.ge.s32.totalorder %s30, 2
      %s32 = scalar_select %p31, 0, %s30
      %s33 = ssub.s32 %s20, %s32
      %s34 = ssub.s32 %s21, %s28
      %s35 = sor.u32 %s33, %s34
      %p36 = scmp.eq.s32.totalorder %s35, 0
      %s38 = sadd.s32 %s37, 1
      %s39 = scalar_select %p36, %s37, %s38
      %p42 = pneg %p36
      %p43 = scmp.eq.s32.totalorder %s13, 1
      %p44 = por %p42, %p43
      %p45 = scmp.ne.s32.totalorder %s37, %s40
      %p46 = scmp.eq.s32.totalorder %s13, 0
      %p47 = por %p45, %p46
      %p48 = scmp.ne.s32.totalorder %s37, %s40
      %p49 = scmp.eq.s32.totalorder %s18, 1
      %p50 = por %p48, %p49
      %p51 = scmp.ne.s32.totalorder %s40, %s41
      %p52 = scmp.eq.s32.totalorder %s18, 0
      %p53 = por %p51, %p52
      %p54 = scmp.ne.s32.totalorder %s40, %s41
      %p55 = scmp.eq.s32.totalorder %s19, 1
      %p56 = por %p54, %p55
      %p58 = scmp.ne.s32.totalorder %s41, %s57
      %p59 = scmp.eq.s32.totalorder %s19, 0
      %p60 = por %p58, %p59
      %s61 = ssub.s32 %s20, %s32
      %s62 = ssub.s32 %s21, %s28
      %s63 = sor.u32 %s61, %s62
      %p64 = scmp.eq.s32.totalorder %s63, 0
      %s66 = sadd.s32 %s65, 1
      %s67 = scalar_select %p64, %s65, %s66
      %p70 = pneg %p64
      %p71 = scmp.eq.s32.totalorder %s13, 1
      %p72 = por %p70, %p71
      %p73 = scmp.ne.s32.totalorder %s65, %s68
      %p74 = scmp.eq.s32.totalorder %s13, 0
      %p75 = por %p73, %p74
      %p76 = scmp.ne.s32.totalorder %s65, %s68
      %p77 = scmp.eq.s32.totalorder %s18, 1
      %p78 = por %p76, %p77
      %p79 = scmp.ne.s32.totalorder %s68, %s69
      %p80 = scmp.eq.s32.totalorder %s18, 0
      %p81 = por %p79, %p80
      %p82 = scmp.ne.s32.totalorder %s68, %s69
      %p83 = scmp.eq.s32.totalorder %s19, 1
      %p84 = por %p82, %p83
      %p86 = scmp.ne.s32.totalorder %s69, %s85
      %p87 = scmp.eq.s32.totalorder %s19, 0
      %p88 = por %p86, %p87
      %p89 = scmp.le.s32.totalorder 1, %s13
      %p90 = scmp.lt.s32.totalorder %s13, 3
      %p91 = pnand %p89, %p90
      %p92 = pneg %p91
      // Predicated region
      $region9: #{tpu_custom_call.1} parent=5 // pred_check
        _
      $region10: #{tpu_custom_call.1} parent=5 // pred_check_branch
        %94 = sbr.rel (%p91) target = $region12
      $region11: #{tpu_custom_call.1} parent=5 // pred_region
        %s95 = ssub.s32 %s13, 1
      $region12: #{tpu_custom_call.1} parent=5 // pred_fallthru
        _
      %p96 = scmp.lt.s32.totalorder %s13, 2
      // Predicated region
      $region13: #{tpu_custom_call.1} parent=5 // pred_check
        %p97 = pneg %p96
      $region14: #{tpu_custom_call.1} parent=5 // pred_check_branch
        %99 = sbr.rel (%p97) target = $region16
      $region15: #{tpu_custom_call.1} parent=5 // pred_region
        // Predicated region
        $region17: #{tpu_custom_call.1} parent=15 // pred_check
          %p100 = pneg %p47
        $region18: #{tpu_custom_call.1} parent=15 // pred_check_branch
          %102 = sbr.rel (%p100) target = $region20
        $region19: #{tpu_custom_call.1} parent=15 // pred_region
          %s103 = sand.u32 %s37, 1
          %s104 = scalar_lea.sflag [#allocation3], %s103
          %s105 = sand.u32 %s37, 1
          %s106 = smul.addr %s105, 64
          %s107 = scalar_lea.vmem [#allocation2], %s106
          %s108 = smul.u32 4, %s20
          %s109 = smul.u32 2, %s21
          %s111 = ssub.s32 1024, 1024
          %112 = vsyncadd %s104, %s111
          %s113 = smul.addr %s108, 2
          %s114 = sadd.s32 %s109, %s113
          %s115 = smul.addr %s114, 128
          %s116 = scalar_lea.hbm %s0, %s115
          %s117 = sshll.u32 %s107, 4
          %s118 = int_to_ptr.vmem [resolvable:$true] %s117
          %123 = dma.hbm_to_vmem [thread:$0]  %s116, 1024, %s118, %s104, 128, 128, 8
        $region20: #{tpu_custom_call.1} parent=15 // pred_fallthru
          _
      $region16: #{tpu_custom_call.1} parent=5 // pred_fallthru
        _
      %p124 = scmp.le.s32.totalorder 1, %s13
      %p125 = scmp.lt.s32.totalorder %s13, 3
      %p126 = pnand %p124, %p125
      %p127 = pneg %p126
      // Predicated region
      $region21: #{tpu_custom_call.1} parent=5 // pred_check
        _
      $region22: #{tpu_custom_call.1} parent=5 // pred_check_branch
        %129 = sbr.rel (%p126) target = $region24
      $region23: #{tpu_custom_call.1} parent=5 // pred_region
        %s130 = ssub.s32 %s13, 1
        %s131 = sand.u32 %s40, 1
        %s132 = scalar_lea.sflag [#allocation3], %s131
        %s133 = sand.u32 %s40, 1
        %s134 = smul.addr %s133, 64
        %s135 = scalar_lea.vmem [#allocation2], %s134
        // Predicated region
        $region25: #{tpu_custom_call.1} parent=23 // pred_check
          %p136 = pneg %p53
        $region26: #{tpu_custom_call.1} parent=23 // pred_check_branch
          %138 = sbr.rel (%p136) target = $region28
        $region27: #{tpu_custom_call.1} parent=23 // pred_region
          %139 = dma.done %s132, 1024
        $region28: #{tpu_custom_call.1} parent=23 // pred_fallthru
          _
        %s140 = sand.u32 %s40, 1
        %s141 = scalar_lea.sflag [#allocation3], %s140
        %s142 = sand.u32 %s40, 1
        %s143 = smul.addr %s142, 64
        %s144 = scalar_lea.vmem [#allocation2], %s143
        %p145 = pneg %p53
        %p146 = pneg %p50
        %p147 = pneg %p81
        %p148 = pneg %p78
        %s149 = sand.u32 %s68, 1
        %s150 = scalar_lea.sflag [#allocation4], %s149
        %s151 = sand.u32 %s68, 1
        %s152 = smul.addr %s151, 128
        %s153 = scalar_lea.vmem [#allocation5], %s152
        %s154 = smul.u32 4, %s22
        %s155 = smul.u32 2, %s23
        %s156 = smul.u32 4, %s22
        %s157 = smul.u32 4, %s23
        %v158 = vld [vmem:[%s135] sm:$0xff]
        %v159 = vld [vmem:[%s135 + $0x8] sm:$0xff]
        %v160 = vld [vmem:[%s135 + $0x10] sm:$0xff]
        %v161 = vld [vmem:[%s135 + $0x18] sm:$0xff]
        %v162 = vld [vmem:[%s135 + $0x20] sm:$0xff]
        %v163 = vld [vmem:[%s135 + $0x28] sm:$0xff]
        %v164 = vld [vmem:[%s135 + $0x30] sm:$0xff]
        %v165 = vld [vmem:[%s135 + $0x38] sm:$0xff]
        %v166 = vlaneseq
        %v167 = vshrl.u32 %v166, 7
        %v168 = vsub.s32 0, %v167
        %v169 = vrot.slane %v158, %v168
        %171 = vbcast.lane.b32.xlu0 %v169, 256
        %v172 = vpop.permute.xlu0 %171
        %s174 = sor.u32 256, 8
        %175 = vbcast.lane.b32.xlu0 %v169, %s174
        %v176 = vpop.permute.xlu0 %175
        %v177 = vlaneseq
        %v178 = vshrl.u32 %v177, 7
        %v179 = vsub.s32 1, %v178
        %v180 = vrot.slane %v158, %v179
        %182 = vbcast.lane.b32.xlu0 %v180, 256
        %v183 = vpop.permute.xlu0 %182
        %s185 = sor.u32 256, 8
        %186 = vbcast.lane.b32.xlu0 %v180, %s185
        %v187 = vpop.permute.xlu0 %186
        %v188 = vlaneseq
        %v189 = vshrl.u32 %v188, 7
        %v190 = vsub.s32 2, %v189
        %v191 = vrot.slane %v158, %v190
        %193 = vbcast.lane.b32.xlu0 %v191, 256
        %v194 = vpop.permute.xlu0 %193
        %s196 = sor.u32 256, 8
        %197 = vbcast.lane.b32.xlu0 %v191, %s196
        %v198 = vpop.permute.xlu0 %197
        %v199 = vlaneseq
        %v200 = vshrl.u32 %v199, 7
        %v201 = vsub.s32 3, %v200
        %v202 = vrot.slane %v158, %v201
        %204 = vbcast.lane.b32.xlu0 %v202, 256
        %v205 = vpop.permute.xlu0 %204
        %s207 = sor.u32 256, 8
        %208 = vbcast.lane.b32.xlu0 %v202, %s207
        %v209 = vpop.permute.xlu0 %208
        %v210 = vlaneseq
        %v211 = vshrl.u32 %v210, 7
        %v212 = vsub.s32 4, %v211
        %v213 = vrot.slane %v158, %v212
        %215 = vbcast.lane.b32.xlu0 %v213, 256
        %v216 = vpop.permute.xlu0 %215
        %s218 = sor.u32 256, 8
        %219 = vbcast.lane.b32.xlu0 %v213, %s218
        %v220 = vpop.permute.xlu0 %219
        %v221 = vlaneseq
        %v222 = vshrl.u32 %v221, 7
        %v223 = vsub.s32 5, %v222
        %v224 = vrot.slane %v158, %v223
        %226 = vbcast.lane.b32.xlu0 %v224, 256
        %v227 = vpop.permute.xlu0 %226
        %s229 = sor.u32 256, 8
        %230 = vbcast.lane.b32.xlu0 %v224, %s229
        %v231 = vpop.permute.xlu0 %230
        %v232 = vlaneseq
        %v233 = vshrl.u32 %v232, 7
        %v234 = vsub.s32 6, %v233
        %v235 = vrot.slane %v158, %v234
        %237 = vbcast.lane.b32.xlu0 %v235, 256
        %v238 = vpop.permute.xlu0 %237
        %s240 = sor.u32 256, 8
        %241 = vbcast.lane.b32.xlu0 %v235, %s240
        %v242 = vpop.permute.xlu0 %241
        %v243 = vlaneseq
        %v244 = vshrl.u32 %v243, 7
        %v245 = vsub.s32 7, %v244
        %v246 = vrot.slane %v158, %v245
        %248 = vbcast.lane.b32.xlu0 %v246, 256
        %v249 = vpop.permute.xlu0 %248
        %s251 = sor.u32 256, 8
        %252 = vbcast.lane.b32.xlu0 %v246, %s251
        %v253 = vpop.permute.xlu0 %252
        %v254 = vlaneseq
        %v255 = vshrl.u32 %v254, 7
        %v256 = vsub.s32 0, %v255
        %v257 = vrot.slane %v159, %v256
        %259 = vbcast.lane.b32.xlu0 %v257, 256
        %v260 = vpop.permute.xlu0 %259
        %s262 = sor.u32 256, 8
        %263 = vbcast.lane.b32.xlu0 %v257, %s262
        %v264 = vpop.permute.xlu0 %263
        %v265 = vlaneseq
        %v266 = vshrl.u32 %v265, 7
        %v267 = vsub.s32 1, %v266
        %v268 = vrot.slane %v159, %v267
        %270 = vbcast.lane.b32.xlu0 %v268, 256
        %v271 = vpop.permute.xlu0 %270
        %s273 = sor.u32 256, 8
        %274 = vbcast.lane.b32.xlu0 %v268, %s273
        %v275 = vpop.permute.xlu0 %274
        %v276 = vlaneseq
        %v277 = vshrl.u32 %v276, 7
        %v278 = vsub.s32 2, %v277
        %v279 = vrot.slane %v159, %v278
        %281 = vbcast.lane.b32.xlu0 %v279, 256
        %v282 = vpop.permute.xlu0 %281
        %s284 = sor.u32 256, 8
        %285 = vbcast.lane.b32.xlu0 %v279, %s284
        %v286 = vpop.permute.xlu0 %285
        %v287 = vlaneseq
        %v288 = vshrl.u32 %v287, 7
        %v289 = vsub.s32 3, %v288
        %v290 = vrot.slane %v159, %v289
        %292 = vbcast.lane.b32.xlu0 %v290, 256
        %v293 = vpop.permute.xlu0 %292
        %s295 = sor.u32 256, 8
        %296 = vbcast.lane.b32.xlu0 %v290, %s295
        %v297 = vpop.permute.xlu0 %296
        %v298 = vlaneseq
        %v299 = vshrl.u32 %v298, 7
        %v300 = vsub.s32 4, %v299
        %v301 = vrot.slane %v159, %v300
        %303 = vbcast.lane.b32.xlu0 %v301, 256
        %v304 = vpop.permute.xlu0 %303
        %s306 = sor.u32 256, 8
        %307 = vbcast.lane.b32.xlu0 %v301, %s306
        %v308 = vpop.permute.xlu0 %307
        %v309 = vlaneseq
        %v310 = vshrl.u32 %v309, 7
        %v311 = vsub.s32 5, %v310
        %v312 = vrot.slane %v159, %v311
        %314 = vbcast.lane.b32.xlu0 %v312, 256
        %v315 = vpop.permute.xlu0 %314
        %s317 = sor.u32 256, 8
        %318 = vbcast.lane.b32.xlu0 %v312, %s317
        %v319 = vpop.permute.xlu0 %318
        %v320 = vlaneseq
        %v321 = vshrl.u32 %v320, 7
        %v322 = vsub.s32 6, %v321
        %v323 = vrot.slane %v159, %v322
        %325 = vbcast.lane.b32.xlu0 %v323, 256
        %v326 = vpop.permute.xlu0 %325
        %s328 = sor.u32 256, 8
        %329 = vbcast.lane.b32.xlu0 %v323, %s328
        %v330 = vpop.permute.xlu0 %329
        %v331 = vlaneseq
        %v332 = vshrl.u32 %v331, 7
        %v333 = vsub.s32 7, %v332
        %v334 = vrot.slane %v159, %v333
        %336 = vbcast.lane.b32.xlu0 %v334, 256
        %v337 = vpop.permute.xlu0 %336
        %s339 = sor.u32 256, 8
        %340 = vbcast.lane.b32.xlu0 %v334, %s339
        %v341 = vpop.permute.xlu0 %340
        %v342 = vlaneseq
        %v343 = vshrl.u32 %v342, 7
        %v344 = vsub.s32 0, %v343
        %v345 = vrot.slane %v160, %v344
        %347 = vbcast.lane.b32.xlu0 %v345, 256
        %v348 = vpop.permute.xlu0 %347
        %s350 = sor.u32 256, 8
        %351 = vbcast.lane.b32.xlu0 %v345, %s350
        %v352 = vpop.permute.xlu0 %351
        %v353 = vlaneseq
        %v354 = vshrl.u32 %v353, 7
        %v355 = vsub.s32 1, %v354
        %v356 = vrot.slane %v160, %v355
        %358 = vbcast.lane.b32.xlu0 %v356, 256
        %v359 = vpop.permute.xlu0 %358
        %s361 = sor.u32 256, 8
        %362 = vbcast.lane.b32.xlu0 %v356, %s361
        %v363 = vpop.permute.xlu0 %362
        %v364 = vlaneseq
        %v365 = vshrl.u32 %v364, 7
        %v366 = vsub.s32 2, %v365
        %v367 = vrot.slane %v160, %v366
        %369 = vbcast.lane.b32.xlu0 %v367, 256
        %v370 = vpop.permute.xlu0 %369
        %s372 = sor.u32 256, 8
        %373 = vbcast.lane.b32.xlu0 %v367, %s372
        %v374 = vpop.permute.xlu0 %373
        %v375 = vlaneseq
        %v376 = vshrl.u32 %v375, 7
        %v377 = vsub.s32 3, %v376
        %v378 = vrot.slane %v160, %v377
        %380 = vbcast.lane.b32.xlu0 %v378, 256
        %v381 = vpop.permute.xlu0 %380
        %s383 = sor.u32 256, 8
        %384 = vbcast.lane.b32.xlu0 %v378, %s383
        %v385 = vpop.permute.xlu0 %384
        %v386 = vlaneseq
        %v387 = vshrl.u32 %v386, 7
        %v388 = vsub.s32 4, %v387
        %v389 = vrot.slane %v160, %v388
        %391 = vbcast.lane.b32.xlu0 %v389, 256
        %v392 = vpop.permute.xlu0 %391
        %s394 = sor.u32 256, 8
        %395 = vbcast.lane.b32.xlu0 %v389, %s394
        %v396 = vpop.permute.xlu0 %395
        %v397 = vlaneseq
        %v398 = vshrl.u32 %v397, 7
        %v399 = vsub.s32 5, %v398
        %v400 = vrot.slane %v160, %v399
        %402 = vbcast.lane.b32.xlu0 %v400, 256
        %v403 = vpop.permute.xlu0 %402
        %s405 = sor.u32 256, 8
        %406 = vbcast.lane.b32.xlu0 %v400, %s405
        %v407 = vpop.permute.xlu0 %406
        %v408 = vlaneseq
        %v409 = vshrl.u32 %v408, 7
        %v410 = vsub.s32 6, %v409
        %v411 = vrot.slane %v160, %v410
        %413 = vbcast.lane.b32.xlu0 %v411, 256
        %v414 = vpop.permute.xlu0 %413
        %s416 = sor.u32 256, 8
        %417 = vbcast.lane.b32.xlu0 %v411, %s416
        %v418 = vpop.permute.xlu0 %417
        %v419 = vlaneseq
        %v420 = vshrl.u32 %v419, 7
        %v421 = vsub.s32 7, %v420
        %v422 = vrot.slane %v160, %v421
        %424 = vbcast.lane.b32.xlu0 %v422, 256
        %v425 = vpop.permute.xlu0 %424
        %s427 = sor.u32 256, 8
        %428 = vbcast.lane.b32.xlu0 %v422, %s427
        %v429 = vpop.permute.xlu0 %428
        %v430 = vlaneseq
        %v431 = vshrl.u32 %v430, 7
        %v432 = vsub.s32 0, %v431
        %v433 = vrot.slane %v161, %v432
        %435 = vbcast.lane.b32.xlu0 %v433, 256
        %v436 = vpop.permute.xlu0 %435
        %s438 = sor.u32 256, 8
        %439 = vbcast.lane.b32.xlu0 %v433, %s438
        %v440 = vpop.permute.xlu0 %439
        %v441 = vlaneseq
        %v442 = vshrl.u32 %v441, 7
        %v443 = vsub.s32 1, %v442
        %v444 = vrot.slane %v161, %v443
        %446 = vbcast.lane.b32.xlu0 %v444, 256
        %v447 = vpop.permute.xlu0 %446
        %s449 = sor.u32 256, 8
        %450 = vbcast.lane.b32.xlu0 %v444, %s449
        %v451 = vpop.permute.xlu0 %450
        %v452 = vlaneseq
        %v453 = vshrl.u32 %v452, 7
        %v454 = vsub.s32 2, %v453
        %v455 = vrot.slane %v161, %v454
        %457 = vbcast.lane.b32.xlu0 %v455, 256
        %v458 = vpop.permute.xlu0 %457
        %s460 = sor.u32 256, 8
        %461 = vbcast.lane.b32.xlu0 %v455, %s460
        %v462 = vpop.permute.xlu0 %461
        %v463 = vlaneseq
        %v464 = vshrl.u32 %v463, 7
        %v465 = vsub.s32 3, %v464
        %v466 = vrot.slane %v161, %v465
        %468 = vbcast.lane.b32.xlu0 %v466, 256
        %v469 = vpop.permute.xlu0 %468
        %s471 = sor.u32 256, 8
        %472 = vbcast.lane.b32.xlu0 %v466, %s471
        %v473 = vpop.permute.xlu0 %472
        %v474 = vlaneseq
        %v475 = vshrl.u32 %v474, 7
        %v476 = vsub.s32 4, %v475
        %v477 = vrot.slane %v161, %v476
        %479 = vbcast.lane.b32.xlu0 %v477, 256
        %v480 = vpop.permute.xlu0 %479
        %s482 = sor.u32 256, 8
        %483 = vbcast.lane.b32.xlu0 %v477, %s482
        %v484 = vpop.permute.xlu0 %483
        %v485 = vlaneseq
        %v486 = vshrl.u32 %v485, 7
        %v487 = vsub.s32 5, %v486
        %v488 = vrot.slane %v161, %v487
        %490 = vbcast.lane.b32.xlu0 %v488, 256
        %v491 = vpop.permute.xlu0 %490
        %s493 = sor.u32 256, 8
        %494 = vbcast.lane.b32.xlu0 %v488, %s493
        %v495 = vpop.permute.xlu0 %494
        %v496 = vlaneseq
        %v497 = vshrl.u32 %v496, 7
        %v498 = vsub.s32 6, %v497
        %v499 = vrot.slane %v161, %v498
        %501 = vbcast.lane.b32.xlu0 %v499, 256
        %v502 = vpop.permute.xlu0 %501
        %s504 = sor.u32 256, 8
        %505 = vbcast.lane.b32.xlu0 %v499, %s504
        %v506 = vpop.permute.xlu0 %505
        %v507 = vlaneseq
        %v508 = vshrl.u32 %v507, 7
        %v509 = vsub.s32 7, %v508
        %v510 = vrot.slane %v161, %v509
        %512 = vbcast.lane.b32.xlu0 %v510, 256
        %v513 = vpop.permute.xlu0 %512
        %s515 = sor.u32 256, 8
        %516 = vbcast.lane.b32.xlu0 %v510, %s515
        %v517 = vpop.permute.xlu0 %516
        %v518 = vlaneseq
        %v519 = vshrl.u32 %v518, 7
        %v520 = vsub.s32 0, %v519
        %v521 = vrot.slane %v162, %v520
        %523 = vbcast.lane.b32.xlu0 %v521, 256
        %v524 = vpop.permute.xlu0 %523
        %s526 = sor.u32 256, 8
        %527 = vbcast.lane.b32.xlu0 %v521, %s526
        %v528 = vpop.permute.xlu0 %527
        %v529 = vlaneseq
        %v530 = vshrl.u32 %v529, 7
        %v531 = vsub.s32 1, %v530
        %v532 = vrot.slane %v162, %v531
        %534 = vbcast.lane.b32.xlu0 %v532, 256
        %v535 = vpop.permute.xlu0 %534
        %s537 = sor.u32 256, 8
        %538 = vbcast.lane.b32.xlu0 %v532, %s537
        %v539 = vpop.permute.xlu0 %538
        %v540 = vlaneseq
        %v541 = vshrl.u32 %v540, 7
        %v542 = vsub.s32 2, %v541
        %v543 = vrot.slane %v162, %v542
        %545 = vbcast.lane.b32.xlu0 %v543, 256
        %v546 = vpop.permute.xlu0 %545
        %s548 = sor.u32 256, 8
        %549 = vbcast.lane.b32.xlu0 %v543, %s548
        %v550 = vpop.permute.xlu0 %549
        %v551 = vlaneseq
        %v552 = vshrl.u32 %v551, 7
        %v553 = vsub.s32 3, %v552
        %v554 = vrot.slane %v162, %v553
        %556 = vbcast.lane.b32.xlu0 %v554, 256
        %v557 = vpop.permute.xlu0 %556
        %s559 = sor.u32 256, 8
        %560 = vbcast.lane.b32.xlu0 %v554, %s559
        %v561 = vpop.permute.xlu0 %560
        %v562 = vlaneseq
        %v563 = vshrl.u32 %v562, 7
        %v564 = vsub.s32 4, %v563
        %v565 = vrot.slane %v162, %v564
        %567 = vbcast.lane.b32.xlu0 %v565, 256
        %v568 = vpop.permute.xlu0 %567
        %s570 = sor.u32 256, 8
        %571 = vbcast.lane.b32.xlu0 %v565, %s570
        %v572 = vpop.permute.xlu0 %571
        %v573 = vlaneseq
        %v574 = vshrl.u32 %v573, 7
        %v575 = vsub.s32 5, %v574
        %v576 = vrot.slane %v162, %v575
        %578 = vbcast.lane.b32.xlu0 %v576, 256
        %v579 = vpop.permute.xlu0 %578
        %s581 = sor.u32 256, 8
        %582 = vbcast.lane.b32.xlu0 %v576, %s581
        %v583 = vpop.permute.xlu0 %582
        %v584 = vlaneseq
        %v585 = vshrl.u32 %v584, 7
        %v586 = vsub.s32 6, %v585
        %v587 = vrot.slane %v162, %v586
        %589 = vbcast.lane.b32.xlu0 %v587, 256
        %v590 = vpop.permute.xlu0 %589
        %s592 = sor.u32 256, 8
        %593 = vbcast.lane.b32.xlu0 %v587, %s592
        %v594 = vpop.permute.xlu0 %593
        %v595 = vlaneseq
        %v596 = vshrl.u32 %v595, 7
        %v597 = vsub.s32 7, %v596
        %v598 = vrot.slane %v162, %v597
        %600 = vbcast.lane.b32.xlu0 %v598, 256
        %v601 = vpop.permute.xlu0 %600
        %s603 = sor.u32 256, 8
        %604 = vbcast.lane.b32.xlu0 %v598, %s603
        %v605 = vpop.permute.xlu0 %604
        %v606 = vlaneseq
        %v607 = vshrl.u32 %v606, 7
        %v608 = vsub.s32 0, %v607
        %v609 = vrot.slane %v163, %v608
        %611 = vbcast.lane.b32.xlu0 %v609, 256
        %v612 = vpop.permute.xlu0 %611
        %s614 = sor.u32 256, 8
        %615 = vbcast.lane.b32.xlu0 %v609, %s614
        %v616 = vpop.permute.xlu0 %615
        %v617 = vlaneseq
        %v618 = vshrl.u32 %v617, 7
        %v619 = vsub.s32 1, %v618
        %v620 = vrot.slane %v163, %v619
        %622 = vbcast.lane.b32.xlu0 %v620, 256
        %v623 = vpop.permute.xlu0 %622
        %s625 = sor.u32 256, 8
        %626 = vbcast.lane.b32.xlu0 %v620, %s625
        %v627 = vpop.permute.xlu0 %626
        %v628 = vlaneseq
        %v629 = vshrl.u32 %v628, 7
        %v630 = vsub.s32 2, %v629
        %v631 = vrot.slane %v163, %v630
        %633 = vbcast.lane.b32.xlu0 %v631, 256
        %v634 = vpop.permute.xlu0 %633
        %s636 = sor.u32 256, 8
        %637 = vbcast.lane.b32.xlu0 %v631, %s636
        %v638 = vpop.permute.xlu0 %637
        %v639 = vlaneseq
        %v640 = vshrl.u32 %v639, 7
        %v641 = vsub.s32 3, %v640
        %v642 = vrot.slane %v163, %v641
        %644 = vbcast.lane.b32.xlu0 %v642, 256
        %v645 = vpop.permute.xlu0 %644
        %s647 = sor.u32 256, 8
        %648 = vbcast.lane.b32.xlu0 %v642, %s647
        %v649 = vpop.permute.xlu0 %648
        %v650 = vlaneseq
        %v651 = vshrl.u32 %v650, 7
        %v652 = vsub.s32 4, %v651
        %v653 = vrot.slane %v163, %v652
        %655 = vbcast.lane.b32.xlu0 %v653, 256
        %v656 = vpop.permute.xlu0 %655
        %s658 = sor.u32 256, 8
        %659 = vbcast.lane.b32.xlu0 %v653, %s658
        %v660 = vpop.permute.xlu0 %659
        %v661 = vlaneseq
        %v662 = vshrl.u32 %v661, 7
        %v663 = vsub.s32 5, %v662
        %v664 = vrot.slane %v163, %v663
        %666 = vbcast.lane.b32.xlu0 %v664, 256
        %v667 = vpop.permute.xlu0 %666
        %s669 = sor.u32 256, 8
        %670 = vbcast.lane.b32.xlu0 %v664, %s669
        %v671 = vpop.permute.xlu0 %670
        %v672 = vlaneseq
        %v673 = vshrl.u32 %v672, 7
        %v674 = vsub.s32 6, %v673
        %v675 = vrot.slane %v163, %v674
        %677 = vbcast.lane.b32.xlu0 %v675, 256
        %v678 = vpop.permute.xlu0 %677
        %s680 = sor.u32 256, 8
        %681 = vbcast.lane.b32.xlu0 %v675, %s680
        %v682 = vpop.permute.xlu0 %681
        %v683 = vlaneseq
        %v684 = vshrl.u32 %v683, 7
        %v685 = vsub.s32 7, %v684
        %v686 = vrot.slane %v163, %v685
        %688 = vbcast.lane.b32.xlu0 %v686, 256
        %v689 = vpop.permute.xlu0 %688
        %s691 = sor.u32 256, 8
        %692 = vbcast.lane.b32.xlu0 %v686, %s691
        %v693 = vpop.permute.xlu0 %692
        %v694 = vlaneseq
        %v695 = vshrl.u32 %v694, 7
        %v696 = vsub.s32 0, %v695
        %v697 = vrot.slane %v164, %v696
        %699 = vbcast.lane.b32.xlu0 %v697, 256
        %v700 = vpop.permute.xlu0 %699
        %s702 = sor.u32 256, 8
        %703 = vbcast.lane.b32.xlu0 %v697, %s702
        %v704 = vpop.permute.xlu0 %703
        %v705 = vlaneseq
        %v706 = vshrl.u32 %v705, 7
        %v707 = vsub.s32 1, %v706
        %v708 = vrot.slane %v164, %v707
        %710 = vbcast.lane.b32.xlu0 %v708, 256
        %v711 = vpop.permute.xlu0 %710
        %s713 = sor.u32 256, 8
        %714 = vbcast.lane.b32.xlu0 %v708, %s713
        %v715 = vpop.permute.xlu0 %714
        %v716 = vlaneseq
        %v717 = vshrl.u32 %v716, 7
        %v718 = vsub.s32 2, %v717
        %v719 = vrot.slane %v164, %v718
        %721 = vbcast.lane.b32.xlu0 %v719, 256
        %v722 = vpop.permute.xlu0 %721
        %s724 = sor.u32 256, 8
        %725 = vbcast.lane.b32.xlu0 %v719, %s724
        %v726 = vpop.permute.xlu0 %725
        %v727 = vlaneseq
        %v728 = vshrl.u32 %v727, 7
        %v729 = vsub.s32 3, %v728
        %v730 = vrot.slane %v164, %v729
        %732 = vbcast.lane.b32.xlu0 %v730, 256
        %v733 = vpop.permute.xlu0 %732
        %s735 = sor.u32 256, 8
        %736 = vbcast.lane.b32.xlu0 %v730, %s735
        %v737 = vpop.permute.xlu0 %736
        %v738 = vlaneseq
        %v739 = vshrl.u32 %v738, 7
        %v740 = vsub.s32 4, %v739
        %v741 = vrot.slane %v164, %v740
        %743 = vbcast.lane.b32.xlu0 %v741, 256
        %v744 = vpop.permute.xlu0 %743
        %s746 = sor.u32 256, 8
        %747 = vbcast.lane.b32.xlu0 %v741, %s746
        %v748 = vpop.permute.xlu0 %747
        %v749 = vlaneseq
        %v750 = vshrl.u32 %v749, 7
        %v751 = vsub.s32 5, %v750
        %v752 = vrot.slane %v164, %v751
        %754 = vbcast.lane.b32.xlu0 %v752, 256
        %v755 = vpop.permute.xlu0 %754
        %s757 = sor.u32 256, 8
        %758 = vbcast.lane.b32.xlu0 %v752, %s757
        %v759 = vpop.permute.xlu0 %758
        %v760 = vlaneseq
        %v761 = vshrl.u32 %v760, 7
        %v762 = vsub.s32 6, %v761
        %v763 = vrot.slane %v164, %v762
        %765 = vbcast.lane.b32.xlu0 %v763, 256
        %v766 = vpop.permute.xlu0 %765
        %s768 = sor.u32 256, 8
        %769 = vbcast.lane.b32.xlu0 %v763, %s768
        %v770 = vpop.permute.xlu0 %769
        %v771 = vlaneseq
        %v772 = vshrl.u32 %v771, 7
        %v773 = vsub.s32 7, %v772
        %v774 = vrot.slane %v164, %v773
        %776 = vbcast.lane.b32.xlu0 %v774, 256
        %v777 = vpop.permute.xlu0 %776
        %s779 = sor.u32 256, 8
        %780 = vbcast.lane.b32.xlu0 %v774, %s779
        %v781 = vpop.permute.xlu0 %780
        %v782 = vlaneseq
        %v783 = vshrl.u32 %v782, 7
        %v784 = vsub.s32 0, %v783
        %v785 = vrot.slane %v165, %v784
        %787 = vbcast.lane.b32.xlu0 %v785, 256
        %v788 = vpop.permute.xlu0 %787
        %s790 = sor.u32 256, 8
        %791 = vbcast.lane.b32.xlu0 %v785, %s790
        %v792 = vpop.permute.xlu0 %791
        %v793 = vlaneseq
        %v794 = vshrl.u32 %v793, 7
        %v795 = vsub.s32 1, %v794
        %v796 = vrot.slane %v165, %v795
        %798 = vbcast.lane.b32.xlu0 %v796, 256
        %v799 = vpop.permute.xlu0 %798
        %s801 = sor.u32 256, 8
        %802 = vbcast.lane.b32.xlu0 %v796, %s801
        %v803 = vpop.permute.xlu0 %802
        %v804 = vlaneseq
        %v805 = vshrl.u32 %v804, 7
        %v806 = vsub.s32 2, %v805
        %v807 = vrot.slane %v165, %v806
        %809 = vbcast.lane.b32.xlu0 %v807, 256
        %v810 = vpop.permute.xlu0 %809
        %s812 = sor.u32 256, 8
        %813 = vbcast.lane.b32.xlu0 %v807, %s812
        %v814 = vpop.permute.xlu0 %813
        %v815 = vlaneseq
        %v816 = vshrl.u32 %v815, 7
        %v817 = vsub.s32 3, %v816
        %v818 = vrot.slane %v165, %v817
        %820 = vbcast.lane.b32.xlu0 %v818, 256
        %v821 = vpop.permute.xlu0 %820
        %s823 = sor.u32 256, 8
        %824 = vbcast.lane.b32.xlu0 %v818, %s823
        %v825 = vpop.permute.xlu0 %824
        %v826 = vlaneseq
        %v827 = vshrl.u32 %v826, 7
        %v828 = vsub.s32 4, %v827
        %v829 = vrot.slane %v165, %v828
        %831 = vbcast.lane.b32.xlu0 %v829, 256
        %v832 = vpop.permute.xlu0 %831
        %s834 = sor.u32 256, 8
        %835 = vbcast.lane.b32.xlu0 %v829, %s834
        %v836 = vpop.permute.xlu0 %835
        %v837 = vlaneseq
        %v838 = vshrl.u32 %v837, 7
        %v839 = vsub.s32 5, %v838
        %v840 = vrot.slane %v165, %v839
        %842 = vbcast.lane.b32.xlu0 %v840, 256
        %v843 = vpop.permute.xlu0 %842
        %s845 = sor.u32 256, 8
        %846 = vbcast.lane.b32.xlu0 %v840, %s845
        %v847 = vpop.permute.xlu0 %846
        %v848 = vlaneseq
        %v849 = vshrl.u32 %v848, 7
        %v850 = vsub.s32 6, %v849
        %v851 = vrot.slane %v165, %v850
        %853 = vbcast.lane.b32.xlu0 %v851, 256
        %v854 = vpop.permute.xlu0 %853
        %s856 = sor.u32 256, 8
        %857 = vbcast.lane.b32.xlu0 %v851, %s856
        %v858 = vpop.permute.xlu0 %857
        %v859 = vlaneseq
        %v860 = vshrl.u32 %v859, 7
        %v861 = vsub.s32 7, %v860
        %v862 = vrot.slane %v165, %v861
        %864 = vbcast.lane.b32.xlu0 %v862, 256
        %v865 = vpop.permute.xlu0 %864
        %s867 = sor.u32 256, 8
        %868 = vbcast.lane.b32.xlu0 %v862, %s867
        %v869 = vpop.permute.xlu0 %868
        %v870 = vcombine.high %v172, 0.0
        %v872 = vunpack.c.l.s4 1983009808
        %v873 = vunpack.c.0.s8 %v872
        %v874 = vlaneseq
        %v875 = vshrl.u32 %v874, 7
        %v876 = vsub.s32 %v873, %v875
        %v877 = vrot.slane %v172, %v876
        %v879 = vunpack.c.l.s4 1983009808
        %v880 = vunpack.c.0.s8 %v879
        %v881 = vlaneseq
        %v882 = vshrl.u32 %v881, 7
        %v883 = vsub.s32 %v880, %v882
        %v884 = vrot.slane %v870, %v883
        %v885 = vcombine.high %v877, 0.0
        %v887 = vunpack.c.l.s4 1934713408
        %v888 = vunpack.c.0.s8 %v887
        %v889 = vlaneseq
        %v890 = vshrl.u32 %v889, 7
        %v891 = vsub.s32 %v888, %v890
        %v892 = vrot.slane %v877, %v891
        %v894 = vunpack.c.l.s4 1934713408
        %v895 = vunpack.c.0.s8 %v894
        %v896 = vlaneseq
        %v897 = vshrl.u32 %v896, 7
        %v898 = vsub.s32 %v895, %v897
        %v899 = vrot.slane %v885, %v898
        %v900 = vcombine.high %v884, 0.0
        %v902 = vunpack.c.l.s4 1934713408
        %v903 = vunpack.c.0.s8 %v902
        %v904 = vlaneseq
        %v905 = vshrl.u32 %v904, 7
        %v906 = vsub.s32 %v903, %v905
        %v907 = vrot.slane %v884, %v906
        %v909 = vunpack.c.l.s4 1934713408
        %v910 = vunpack.c.0.s8 %v909
        %v911 = vlaneseq
        %v912 = vshrl.u32 %v911, 7
        %v913 = vsub.s32 %v910, %v912
        %v914 = vrot.slane %v900, %v913
        %v915 = vcombine.high %v892, 0.0
        %v916 = vcombine.high %v899, 0.0
        %v917 = vcombine.high %v907, 0.0
        %v918 = vcombine.high %v914, 0.0
        %v919 = vcombine.high %v176, 0.0
        %v921 = vunpack.c.l.s4 1983009808
        %v922 = vunpack.c.0.s8 %v921
        %v923 = vlaneseq
        %v924 = vshrl.u32 %v923, 7
        %v925 = vsub.s32 %v922, %v924
        %v926 = vrot.slane %v176, %v925
        %v928 = vunpack.c.l.s4 1983009808
        %v929 = vunpack.c.0.s8 %v928
        %v930 = vlaneseq
        %v931 = vshrl.u32 %v930, 7
        %v932 = vsub.s32 %v929, %v931
        %v933 = vrot.slane %v919, %v932
        %v934 = vcombine.high %v926, 0.0
        %v936 = vunpack.c.l.s4 1934713408
        %v937 = vunpack.c.0.s8 %v936
        %v938 = vlaneseq
        %v939 = vshrl.u32 %v938, 7
        %v940 = vsub.s32 %v937, %v939
        %v941 = vrot.slane %v926, %v940
        %v943 = vunpack.c.l.s4 1934713408
        %v944 = vunpack.c.0.s8 %v943
        %v945 = vlaneseq
        %v946 = vshrl.u32 %v945, 7
        %v947 = vsub.s32 %v944, %v946
        %v948 = vrot.slane %v934, %v947
        %v949 = vcombine.high %v933, 0.0
        %v951 = vunpack.c.l.s4 1934713408
        %v952 = vunpack.c.0.s8 %v951
        %v953 = vlaneseq
        %v954 = vshrl.u32 %v953, 7
        %v955 = vsub.s32 %v952, %v954
        %v956 = vrot.slane %v933, %v955
        %v958 = vunpack.c.l.s4 1934713408
        %v959 = vunpack.c.0.s8 %v958
        %v960 = vlaneseq
        %v961 = vshrl.u32 %v960, 7
        %v962 = vsub.s32 %v959, %v961
        %v963 = vrot.slane %v949, %v962
        %v964 = vcombine.high %v941, 0.0
        %v965 = vcombine.high %v948, 0.0
        %v966 = vcombine.high %v956, 0.0
        %v967 = vcombine.high %v963, 0.0
        %v968 = vcombine.high %v183, 0.0
        %v970 = vunpack.c.l.s4 1983009808
        %v971 = vunpack.c.0.s8 %v970
        %v972 = vlaneseq
        %v973 = vshrl.u32 %v972, 7
        %v974 = vsub.s32 %v971, %v973
        %v975 = vrot.slane %v183, %v974
        %v977 = vunpack.c.l.s4 1983009808
        %v978 = vunpack.c.0.s8 %v977
        %v979 = vlaneseq
        %v980 = vshrl.u32 %v979, 7
        %v981 = vsub.s32 %v978, %v980
        %v982 = vrot.slane %v968, %v981
        %v983 = vcombine.high %v975, 0.0
        %v985 = vunpack.c.l.s4 1934713408
        %v986 = vunpack.c.0.s8 %v985
        %v987 = vlaneseq
        %v988 = vshrl.u32 %v987, 7
        %v989 = vsub.s32 %v986, %v988
        %v990 = vrot.slane %v975, %v989
        %v992 = vunpack.c.l.s4 1934713408
        %v993 = vunpack.c.0.s8 %v992
        %v994 = vlaneseq
        %v995 = vshrl.u32 %v994, 7
        %v996 = vsub.s32 %v993, %v995
        %v997 = vrot.slane %v983, %v996
        %v998 = vcombine.high %v982, 0.0
        %v1000 = vunpack.c.l.s4 1934713408
        %v1001 = vunpack.c.0.s8 %v1000
        %v1002 = vlaneseq
        %v1003 = vshrl.u32 %v1002, 7
        %v1004 = vsub.s32 %v1001, %v1003
        %v1005 = vrot.slane %v982, %v1004
        %v1007 = vunpack.c.l.s4 1934713408
        %v1008 = vunpack.c.0.s8 %v1007
        %v1009 = vlaneseq
        %v1010 = vshrl.u32 %v1009, 7
        %v1011 = vsub.s32 %v1008, %v1010
        %v1012 = vrot.slane %v998, %v1011
        %v1013 = vcombine.high %v990, 0.0
        %v1014 = vcombine.high %v997, 0.0
        %v1015 = vcombine.high %v1005, 0.0
        %v1016 = vcombine.high %v1012, 0.0
        %v1017 = vcombine.high %v187, 0.0
        %v1019 = vunpack.c.l.s4 1983009808
        %v1020 = vunpack.c.0.s8 %v1019
        %v1021 = vlaneseq
        %v1022 = vshrl.u32 %v1021, 7
        %v1023 = vsub.s32 %v1020, %v1022
        %v1024 = vrot.slane %v187, %v1023
        %v1026 = vunpack.c.l.s4 1983009808
        %v1027 = vunpack.c.0.s8 %v1026
        %v1028 = vlaneseq
        %v1029 = vshrl.u32 %v1028, 7
        %v1030 = vsub.s32 %v1027, %v1029
        %v1031 = vrot.slane %v1017, %v1030
        %v1032 = vcombine.high %v1024, 0.0
        %v1034 = vunpack.c.l.s4 1934713408
        %v1035 = vunpack.c.0.s8 %v1034
        %v1036 = vlaneseq
        %v1037 = vshrl.u32 %v1036, 7
        %v1038 = vsub.s32 %v1035, %v1037
        %v1039 = vrot.slane %v1024, %v1038
        %v1041 = vunpack.c.l.s4 1934713408
        %v1042 = vunpack.c.0.s8 %v1041
        %v1043 = vlaneseq
        %v1044 = vshrl.u32 %v1043, 7
        %v1045 = vsub.s32 %v1042, %v1044
        %v1046 = vrot.slane %v1032, %v1045
        %v1047 = vcombine.high %v1031, 0.0
        %v1049 = vunpack.c.l.s4 1934713408
        %v1050 = vunpack.c.0.s8 %v1049
        %v1051 = vlaneseq
        %v1052 = vshrl.u32 %v1051, 7
        %v1053 = vsub.s32 %v1050, %v1052
        %v1054 = vrot.slane %v1031, %v1053
        %v1056 = vunpack.c.l.s4 1934713408
        %v1057 = vunpack.c.0.s8 %v1056
        %v1058 = vlaneseq
        %v1059 = vshrl.u32 %v1058, 7
        %v1060 = vsub.s32 %v1057, %v1059
        %v1061 = vrot.slane %v1047, %v1060
        %v1062 = vcombine.high %v1039, 0.0
        %v1063 = vcombine.high %v1046, 0.0
        %v1064 = vcombine.high %v1054, 0.0
        %v1065 = vcombine.high %v1061, 0.0
        %v1066 = vcombine.high %v194, 0.0
        %v1068 = vunpack.c.l.s4 1983009808
        %v1069 = vunpack.c.0.s8 %v1068
        %v1070 = vlaneseq
        %v1071 = vshrl.u32 %v1070, 7
        %v1072 = vsub.s32 %v1069, %v1071
        %v1073 = vrot.slane %v194, %v1072
        %v1075 = vunpack.c.l.s4 1983009808
        %v1076 = vunpack.c.0.s8 %v1075
        %v1077 = vlaneseq
        %v1078 = vshrl.u32 %v1077, 7
        %v1079 = vsub.s32 %v1076, %v1078
        %v1080 = vrot.slane %v1066, %v1079
        %v1081 = vcombine.high %v1073, 0.0
        %v1083 = vunpack.c.l.s4 1934713408
        %v1084 = vunpack.c.0.s8 %v1083
        %v1085 = vlaneseq
        %v1086 = vshrl.u32 %v1085, 7
        %v1087 = vsub.s32 %v1084, %v1086
        %v1088 = vrot.slane %v1073, %v1087
        %v1090 = vunpack.c.l.s4 1934713408
        %v1091 = vunpack.c.0.s8 %v1090
        %v1092 = vlaneseq
        %v1093 = vshrl.u32 %v1092, 7
        %v1094 = vsub.s32 %v1091, %v1093
        %v1095 = vrot.slane %v1081, %v1094
        %v1096 = vcombine.high %v1080, 0.0
        %v1098 = vunpack.c.l.s4 1934713408
        %v1099 = vunpack.c.0.s8 %v1098
        %v1100 = vlaneseq
        %v1101 = vshrl.u32 %v1100, 7
        %v1102 = vsub.s32 %v1099, %v1101
        %v1103 = vrot.slane %v1080, %v1102
        %v1105 = vunpack.c.l.s4 1934713408
        %v1106 = vunpack.c.0.s8 %v1105
        %v1107 = vlaneseq
        %v1108 = vshrl.u32 %v1107, 7
        %v1109 = vsub.s32 %v1106, %v1108
        %v1110 = vrot.slane %v1096, %v1109
        %v1111 = vcombine.high %v1088, 0.0
        %v1112 = vcombine.high %v1095, 0.0
        %v1113 = vcombine.high %v1103, 0.0
        %v1114 = vcombine.high %v1110, 0.0
        %v1115 = vcombine.high %v198, 0.0
        %v1117 = vunpack.c.l.s4 1983009808
        %v1118 = vunpack.c.0.s8 %v1117
        %v1119 = vlaneseq
        %v1120 = vshrl.u32 %v1119, 7
        %v1121 = vsub.s32 %v1118, %v1120
        %v1122 = vrot.slane %v198, %v1121
        %v1124 = vunpack.c.l.s4 1983009808
        %v1125 = vunpack.c.0.s8 %v1124
        %v1126 = vlaneseq
        %v1127 = vshrl.u32 %v1126, 7
        %v1128 = vsub.s32 %v1125, %v1127
        %v1129 = vrot.slane %v1115, %v1128
        %v1130 = vcombine.high %v1122, 0.0
        %v1132 = vunpack.c.l.s4 1934713408
        %v1133 = vunpack.c.0.s8 %v1132
        %v1134 = vlaneseq
        %v1135 = vshrl.u32 %v1134, 7
        %v1136 = vsub.s32 %v1133, %v1135
        %v1137 = vrot.slane %v1122, %v1136
        %v1139 = vunpack.c.l.s4 1934713408
        %v1140 = vunpack.c.0.s8 %v1139
        %v1141 = vlaneseq
        %v1142 = vshrl.u32 %v1141, 7
        %v1143 = vsub.s32 %v1140, %v1142
        %v1144 = vrot.slane %v1130, %v1143
        %v1145 = vcombine.high %v1129, 0.0
        %v1147 = vunpack.c.l.s4 1934713408
        %v1148 = vunpack.c.0.s8 %v1147
        %v1149 = vlaneseq
        %v1150 = vshrl.u32 %v1149, 7
        %v1151 = vsub.s32 %v1148, %v1150
        %v1152 = vrot.slane %v1129, %v1151
        %v1154 = vunpack.c.l.s4 1934713408
        %v1155 = vunpack.c.0.s8 %v1154
        %v1156 = vlaneseq
        %v1157 = vshrl.u32 %v1156, 7
        %v1158 = vsub.s32 %v1155, %v1157
        %v1159 = vrot.slane %v1145, %v1158
        %v1160 = vcombine.high %v1137, 0.0
        %v1161 = vcombine.high %v1144, 0.0
        %v1162 = vcombine.high %v1152, 0.0
        %v1163 = vcombine.high %v1159, 0.0
        %v1164 = vcombine.high %v205, 0.0
        %v1166 = vunpack.c.l.s4 1983009808
        %v1167 = vunpack.c.0.s8 %v1166
        %v1168 = vlaneseq
        %v1169 = vshrl.u32 %v1168, 7
        %v1170 = vsub.s32 %v1167, %v1169
        %v1171 = vrot.slane %v205, %v1170
        %v1173 = vunpack.c.l.s4 1983009808
        %v1174 = vunpack.c.0.s8 %v1173
        %v1175 = vlaneseq
        %v1176 = vshrl.u32 %v1175, 7
        %v1177 = vsub.s32 %v1174, %v1176
        %v1178 = vrot.slane %v1164, %v1177
        %v1179 = vcombine.high %v1171, 0.0
        %v1181 = vunpack.c.l.s4 1934713408
        %v1182 = vunpack.c.0.s8 %v1181
        %v1183 = vlaneseq
        %v1184 = vshrl.u32 %v1183, 7
        %v1185 = vsub.s32 %v1182, %v1184
        %v1186 = vrot.slane %v1171, %v1185
        %v1188 = vunpack.c.l.s4 1934713408
        %v1189 = vunpack.c.0.s8 %v1188
        %v1190 = vlaneseq
        %v1191 = vshrl.u32 %v1190, 7
        %v1192 = vsub.s32 %v1189, %v1191
        %v1193 = vrot.slane %v1179, %v1192
        %v1194 = vcombine.high %v1178, 0.0
        %v1196 = vunpack.c.l.s4 1934713408
        %v1197 = vunpack.c.0.s8 %v1196
        %v1198 = vlaneseq
        %v1199 = vshrl.u32 %v1198, 7
        %v1200 = vsub.s32 %v1197, %v1199
        %v1201 = vrot.slane %v1178, %v1200
        %v1203 = vunpack.c.l.s4 1934713408
        %v1204 = vunpack.c.0.s8 %v1203
        %v1205 = vlaneseq
        %v1206 = vshrl.u32 %v1205, 7
        %v1207 = vsub.s32 %v1204, %v1206
        %v1208 = vrot.slane %v1194, %v1207
        %v1209 = vcombine.high %v1186, 0.0
        %v1210 = vcombine.high %v1193, 0.0
        %v1211 = vcombine.high %v1201, 0.0
        %v1212 = vcombine.high %v1208, 0.0
        %v1213 = vcombine.high %v209, 0.0
        %v1215 = vunpack.c.l.s4 1983009808
        %v1216 = vunpack.c.0.s8 %v1215
        %v1217 = vlaneseq
        %v1218 = vshrl.u32 %v1217, 7
        %v1219 = vsub.s32 %v1216, %v1218
        %v1220 = vrot.slane %v209, %v1219
        %v1222 = vunpack.c.l.s4 1983009808
        %v1223 = vunpack.c.0.s8 %v1222
        %v1224 = vlaneseq
        %v1225 = vshrl.u32 %v1224, 7
        %v1226 = vsub.s32 %v1223, %v1225
        %v1227 = vrot.slane %v1213, %v1226
        %v1228 = vcombine.high %v1220, 0.0
        %v1230 = vunpack.c.l.s4 1934713408
        %v1231 = vunpack.c.0.s8 %v1230
        %v1232 = vlaneseq
        %v1233 = vshrl.u32 %v1232, 7
        %v1234 = vsub.s32 %v1231, %v1233
        %v1235 = vrot.slane %v1220, %v1234
        %v1237 = vunpack.c.l.s4 1934713408
        %v1238 = vunpack.c.0.s8 %v1237
        %v1239 = vlaneseq
        %v1240 = vshrl.u32 %v1239, 7
        %v1241 = vsub.s32 %v1238, %v1240
        %v1242 = vrot.slane %v1228, %v1241
        %v1243 = vcombine.high %v1227, 0.0
        %v1245 = vunpack.c.l.s4 1934713408
        %v1246 = vunpack.c.0.s8 %v1245
        %v1247 = vlaneseq
        %v1248 = vshrl.u32 %v1247, 7
        %v1249 = vsub.s32 %v1246, %v1248
        %v1250 = vrot.slane %v1227, %v1249
        %v1252 = vunpack.c.l.s4 1934713408
        %v1253 = vunpack.c.0.s8 %v1252
        %v1254 = vlaneseq
        %v1255 = vshrl.u32 %v1254, 7
        %v1256 = vsub.s32 %v1253, %v1255
        %v1257 = vrot.slane %v1243, %v1256
        %v1258 = vcombine.high %v1235, 0.0
        %v1259 = vcombine.high %v1242, 0.0
        %v1260 = vcombine.high %v1250, 0.0
        %v1261 = vcombine.high %v1257, 0.0
        %v1262 = vcombine.high %v216, 0.0
        %v1264 = vunpack.c.l.s4 1983009808
        %v1265 = vunpack.c.0.s8 %v1264
        %v1266 = vlaneseq
        %v1267 = vshrl.u32 %v1266, 7
        %v1268 = vsub.s32 %v1265, %v1267
        %v1269 = vrot.slane %v216, %v1268
        %v1271 = vunpack.c.l.s4 1983009808
        %v1272 = vunpack.c.0.s8 %v1271
        %v1273 = vlaneseq
        %v1274 = vshrl.u32 %v1273, 7
        %v1275 = vsub.s32 %v1272, %v1274
        %v1276 = vrot.slane %v1262, %v1275
        %v1277 = vcombine.high %v1269, 0.0
        %v1279 = vunpack.c.l.s4 1934713408
        %v1280 = vunpack.c.0.s8 %v1279
        %v1281 = vlaneseq
        %v1282 = vshrl.u32 %v1281, 7
        %v1283 = vsub.s32 %v1280, %v1282
        %v1284 = vrot.slane %v1269, %v1283
        %v1286 = vunpack.c.l.s4 1934713408
        %v1287 = vunpack.c.0.s8 %v1286
        %v1288 = vlaneseq
        %v1289 = vshrl.u32 %v1288, 7
        %v1290 = vsub.s32 %v1287, %v1289
        %v1291 = vrot.slane %v1277, %v1290
        %v1292 = vcombine.high %v1276, 0.0
        %v1294 = vunpack.c.l.s4 1934713408
        %v1295 = vunpack.c.0.s8 %v1294
        %v1296 = vlaneseq
        %v1297 = vshrl.u32 %v1296, 7
        %v1298 = vsub.s32 %v1295, %v1297
        %v1299 = vrot.slane %v1276, %v1298
        %v1301 = vunpack.c.l.s4 1934713408
        %v1302 = vunpack.c.0.s8 %v1301
        %v1303 = vlaneseq
        %v1304 = vshrl.u32 %v1303, 7
        %v1305 = vsub.s32 %v1302, %v1304
        %v1306 = vrot.slane %v1292, %v1305
        %v1307 = vcombine.high %v1284, 0.0
        %v1308 = vcombine.high %v1291, 0.0
        %v1309 = vcombine.high %v1299, 0.0
        %v1310 = vcombine.high %v1306, 0.0
        %v1311 = vcombine.high %v220, 0.0
        %v1313 = vunpack.c.l.s4 1983009808
        %v1314 = vunpack.c.0.s8 %v1313
        %v1315 = vlaneseq
        %v1316 = vshrl.u32 %v1315, 7
        %v1317 = vsub.s32 %v1314, %v1316
        %v1318 = vrot.slane %v220, %v1317
        %v1320 = vunpack.c.l.s4 1983009808
        %v1321 = vunpack.c.0.s8 %v1320
        %v1322 = vlaneseq
        %v1323 = vshrl.u32 %v1322, 7
        %v1324 = vsub.s32 %v1321, %v1323
        %v1325 = vrot.slane %v1311, %v1324
        %v1326 = vcombine.high %v1318, 0.0
        %v1328 = vunpack.c.l.s4 1934713408
        %v1329 = vunpack.c.0.s8 %v1328
        %v1330 = vlaneseq
        %v1331 = vshrl.u32 %v1330, 7
        %v1332 = vsub.s32 %v1329, %v1331
        %v1333 = vrot.slane %v1318, %v1332
        %v1335 = vunpack.c.l.s4 1934713408
        %v1336 = vunpack.c.0.s8 %v1335
        %v1337 = vlaneseq
        %v1338 = vshrl.u32 %v1337, 7
        %v1339 = vsub.s32 %v1336, %v1338
        %v1340 = vrot.slane %v1326, %v1339
        %v1341 = vcombine.high %v1325, 0.0
        %v1343 = vunpack.c.l.s4 1934713408
        %v1344 = vunpack.c.0.s8 %v1343
        %v1345 = vlaneseq
        %v1346 = vshrl.u32 %v1345, 7
        %v1347 = vsub.s32 %v1344, %v1346
        %v1348 = vrot.slane %v1325, %v1347
        %v1350 = vunpack.c.l.s4 1934713408
        %v1351 = vunpack.c.0.s8 %v1350
        %v1352 = vlaneseq
        %v1353 = vshrl.u32 %v1352, 7
        %v1354 = vsub.s32 %v1351, %v1353
        %v1355 = vrot.slane %v1341, %v1354
        %v1356 = vcombine.high %v1333, 0.0
        %v1357 = vcombine.high %v1340, 0.0
        %v1358 = vcombine.high %v1348, 0.0
        %v1359 = vcombine.high %v1355, 0.0
        %v1360 = vcombine.high %v227, 0.0
        %v1362 = vunpack.c.l.s4 1983009808
        %v1363 = vunpack.c.0.s8 %v1362
        %v1364 = vlaneseq
        %v1365 = vshrl.u32 %v1364, 7
        %v1366 = vsub.s32 %v1363, %v1365
        %v1367 = vrot.slane %v227, %v1366
        %v1369 = vunpack.c.l.s4 1983009808
        %v1370 = vunpack.c.0.s8 %v1369
        %v1371 = vlaneseq
        %v1372 = vshrl.u32 %v1371, 7
        %v1373 = vsub.s32 %v1370, %v1372
        %v1374 = vrot.slane %v1360, %v1373
        %v1375 = vcombine.high %v1367, 0.0
        %v1377 = vunpack.c.l.s4 1934713408
        %v1378 = vunpack.c.0.s8 %v1377
        %v1379 = vlaneseq
        %v1380 = vshrl.u32 %v1379, 7
        %v1381 = vsub.s32 %v1378, %v1380
        %v1382 = vrot.slane %v1367, %v1381
        %v1384 = vunpack.c.l.s4 1934713408
        %v1385 = vunpack.c.0.s8 %v1384
        %v1386 = vlaneseq
        %v1387 = vshrl.u32 %v1386, 7
        %v1388 = vsub.s32 %v1385, %v1387
        %v1389 = vrot.slane %v1375, %v1388
        %v1390 = vcombine.high %v1374, 0.0
        %v1392 = vunpack.c.l.s4 1934713408
        %v1393 = vunpack.c.0.s8 %v1392
        %v1394 = vlaneseq
        %v1395 = vshrl.u32 %v1394, 7
        %v1396 = vsub.s32 %v1393, %v1395
        %v1397 = vrot.slane %v1374, %v1396
        %v1399 = vunpack.c.l.s4 1934713408
        %v1400 = vunpack.c.0.s8 %v1399
        %v1401 = vlaneseq
        %v1402 = vshrl.u32 %v1401, 7
        %v1403 = vsub.s32 %v1400, %v1402
        %v1404 = vrot.slane %v1390, %v1403
        %v1405 = vcombine.high %v1382, 0.0
        %v1406 = vcombine.high %v1389, 0.0
        %v1407 = vcombine.high %v1397, 0.0
        %v1408 = vcombine.high %v1404, 0.0
        %v1409 = vcombine.high %v231, 0.0
        %v1411 = vunpack.c.l.s4 1983009808
        %v1412 = vunpack.c.0.s8 %v1411
        %v1413 = vlaneseq
        %v1414 = vshrl.u32 %v1413, 7
        %v1415 = vsub.s32 %v1412, %v1414
        %v1416 = vrot.slane %v231, %v1415
        %v1418 = vunpack.c.l.s4 1983009808
        %v1419 = vunpack.c.0.s8 %v1418
        %v1420 = vlaneseq
        %v1421 = vshrl.u32 %v1420, 7
        %v1422 = vsub.s32 %v1419, %v1421
        %v1423 = vrot.slane %v1409, %v1422
        %v1424 = vcombine.high %v1416, 0.0
        %v1426 = vunpack.c.l.s4 1934713408
        %v1427 = vunpack.c.0.s8 %v1426
        %v1428 = vlaneseq
        %v1429 = vshrl.u32 %v1428, 7
        %v1430 = vsub.s32 %v1427, %v1429
        %v1431 = vrot.slane %v1416, %v1430
        %v1433 = vunpack.c.l.s4 1934713408
        %v1434 = vunpack.c.0.s8 %v1433
        %v1435 = vlaneseq
        %v1436 = vshrl.u32 %v1435, 7
        %v1437 = vsub.s32 %v1434, %v1436
        %v1438 = vrot.slane %v1424, %v1437
        %v1439 = vcombine.high %v1423, 0.0
        %v1441 = vunpack.c.l.s4 1934713408
        %v1442 = vunpack.c.0.s8 %v1441
        %v1443 = vlaneseq
        %v1444 = vshrl.u32 %v1443, 7
        %v1445 = vsub.s32 %v1442, %v1444
        %v1446 = vrot.slane %v1423, %v1445
        %v1448 = vunpack.c.l.s4 1934713408
        %v1449 = vunpack.c.0.s8 %v1448
        %v1450 = vlaneseq
        %v1451 = vshrl.u32 %v1450, 7
        %v1452 = vsub.s32 %v1449, %v1451
        %v1453 = vrot.slane %v1439, %v1452
        %v1454 = vcombine.high %v1431, 0.0
        %v1455 = vcombine.high %v1438, 0.0
        %v1456 = vcombine.high %v1446, 0.0
        %v1457 = vcombine.high %v1453, 0.0
        %v1458 = vcombine.high %v238, 0.0
        %v1460 = vunpack.c.l.s4 1983009808
        %v1461 = vunpack.c.0.s8 %v1460
        %v1462 = vlaneseq
        %v1463 = vshrl.u32 %v1462, 7
        %v1464 = vsub.s32 %v1461, %v1463
        %v1465 = vrot.slane %v238, %v1464
        %v1467 = vunpack.c.l.s4 1983009808
        %v1468 = vunpack.c.0.s8 %v1467
        %v1469 = vlaneseq
        %v1470 = vshrl.u32 %v1469, 7
        %v1471 = vsub.s32 %v1468, %v1470
        %v1472 = vrot.slane %v1458, %v1471
        %v1473 = vcombine.high %v1465, 0.0
        %v1475 = vunpack.c.l.s4 1934713408
        %v1476 = vunpack.c.0.s8 %v1475
        %v1477 = vlaneseq
        %v1478 = vshrl.u32 %v1477, 7
        %v1479 = vsub.s32 %v1476, %v1478
        %v1480 = vrot.slane %v1465, %v1479
        %v1482 = vunpack.c.l.s4 1934713408
        %v1483 = vunpack.c.0.s8 %v1482
        %v1484 = vlaneseq
        %v1485 = vshrl.u32 %v1484, 7
        %v1486 = vsub.s32 %v1483, %v1485
        %v1487 = vrot.slane %v1473, %v1486
        %v1488 = vcombine.high %v1472, 0.0
        %v1490 = vunpack.c.l.s4 1934713408
        %v1491 = vunpack.c.0.s8 %v1490
        %v1492 = vlaneseq
        %v1493 = vshrl.u32 %v1492, 7
        %v1494 = vsub.s32 %v1491, %v1493
        %v1495 = vrot.slane %v1472, %v1494
        %v1497 = vunpack.c.l.s4 1934713408
        %v1498 = vunpack.c.0.s8 %v1497
        %v1499 = vlaneseq
        %v1500 = vshrl.u32 %v1499, 7
        %v1501 = vsub.s32 %v1498, %v1500
        %v1502 = vrot.slane %v1488, %v1501
        %v1503 = vcombine.high %v1480, 0.0
        %v1504 = vcombine.high %v1487, 0.0
        %v1505 = vcombine.high %v1495, 0.0
        %v1506 = vcombine.high %v1502, 0.0
        %v1507 = vcombine.high %v242, 0.0
        %v1509 = vunpack.c.l.s4 1983009808
        %v1510 = vunpack.c.0.s8 %v1509
        %v1511 = vlaneseq
        %v1512 = vshrl.u32 %v1511, 7
        %v1513 = vsub.s32 %v1510, %v1512
        %v1514 = vrot.slane %v242, %v1513
        %v1516 = vunpack.c.l.s4 1983009808
        %v1517 = vunpack.c.0.s8 %v1516
        %v1518 = vlaneseq
        %v1519 = vshrl.u32 %v1518, 7
        %v1520 = vsub.s32 %v1517, %v1519
        %v1521 = vrot.slane %v1507, %v1520
        %v1522 = vcombine.high %v1514, 0.0
        %v1524 = vunpack.c.l.s4 1934713408
        %v1525 = vunpack.c.0.s8 %v1524
        %v1526 = vlaneseq
        %v1527 = vshrl.u32 %v1526, 7
        %v1528 = vsub.s32 %v1525, %v1527
        %v1529 = vrot.slane %v1514, %v1528
        %v1531 = vunpack.c.l.s4 1934713408
        %v1532 = vunpack.c.0.s8 %v1531
        %v1533 = vlaneseq
        %v1534 = vshrl.u32 %v1533, 7
        %v1535 = vsub.s32 %v1532, %v1534
        %v1536 = vrot.slane %v1522, %v1535
        %v1537 = vcombine.high %v1521, 0.0
        %v1539 = vunpack.c.l.s4 1934713408
        %v1540 = vunpack.c.0.s8 %v1539
        %v1541 = vlaneseq
        %v1542 = vshrl.u32 %v1541, 7
        %v1543 = vsub.s32 %v1540, %v1542
        %v1544 = vrot.slane %v1521, %v1543
        %v1546 = vunpack.c.l.s4 1934713408
        %v1547 = vunpack.c.0.s8 %v1546
        %v1548 = vlaneseq
        %v1549 = vshrl.u32 %v1548, 7
        %v1550 = vsub.s32 %v1547, %v1549
        %v1551 = vrot.slane %v1537, %v1550
        %v1552 = vcombine.high %v1529, 0.0
        %v1553 = vcombine.high %v1536, 0.0
        %v1554 = vcombine.high %v1544, 0.0
        %v1555 = vcombine.high %v1551, 0.0
        %v1556 = vcombine.high %v249, 0.0
        %v1558 = vunpack.c.l.s4 1983009808
        %v1559 = vunpack.c.0.s8 %v1558
        %v1560 = vlaneseq
        %v1561 = vshrl.u32 %v1560, 7
        %v1562 = vsub.s32 %v1559, %v1561
        %v1563 = vrot.slane %v249, %v1562
        %v1565 = vunpack.c.l.s4 1983009808
        %v1566 = vunpack.c.0.s8 %v1565
        %v1567 = vlaneseq
        %v1568 = vshrl.u32 %v1567, 7
        %v1569 = vsub.s32 %v1566, %v1568
        %v1570 = vrot.slane %v1556, %v1569
        %v1571 = vcombine.high %v1563, 0.0
        %v1573 = vunpack.c.l.s4 1934713408
        %v1574 = vunpack.c.0.s8 %v1573
        %v1575 = vlaneseq
        %v1576 = vshrl.u32 %v1575, 7
        %v1577 = vsub.s32 %v1574, %v1576
        %v1578 = vrot.slane %v1563, %v1577
        %v1580 = vunpack.c.l.s4 1934713408
        %v1581 = vunpack.c.0.s8 %v1580
        %v1582 = vlaneseq
        %v1583 = vshrl.u32 %v1582, 7
        %v1584 = vsub.s32 %v1581, %v1583
        %v1585 = vrot.slane %v1571, %v1584
        %v1586 = vcombine.high %v1570, 0.0
        %v1588 = vunpack.c.l.s4 1934713408
        %v1589 = vunpack.c.0.s8 %v1588
        %v1590 = vlaneseq
        %v1591 = vshrl.u32 %v1590, 7
        %v1592 = vsub.s32 %v1589, %v1591
        %v1593 = vrot.slane %v1570, %v1592
        %v1595 = vunpack.c.l.s4 1934713408
        %v1596 = vunpack.c.0.s8 %v1595
        %v1597 = vlaneseq
        %v1598 = vshrl.u32 %v1597, 7
        %v1599 = vsub.s32 %v1596, %v1598
        %v1600 = vrot.slane %v1586, %v1599
        %v1601 = vcombine.high %v1578, 0.0
        %v1602 = vcombine.high %v1585, 0.0
        %v1603 = vcombine.high %v1593, 0.0
        %v1604 = vcombine.high %v1600, 0.0
        %v1605 = vcombine.high %v253, 0.0
        %v1607 = vunpack.c.l.s4 1983009808
        %v1608 = vunpack.c.0.s8 %v1607
        %v1609 = vlaneseq
        %v1610 = vshrl.u32 %v1609, 7
        %v1611 = vsub.s32 %v1608, %v1610
        %v1612 = vrot.slane %v253, %v1611
        %v1614 = vunpack.c.l.s4 1983009808
        %v1615 = vunpack.c.0.s8 %v1614
        %v1616 = vlaneseq
        %v1617 = vshrl.u32 %v1616, 7
        %v1618 = vsub.s32 %v1615, %v1617
        %v1619 = vrot.slane %v1605, %v1618
        %v1620 = vcombine.high %v1612, 0.0
        %v1622 = vunpack.c.l.s4 1934713408
        %v1623 = vunpack.c.0.s8 %v1622
        %v1624 = vlaneseq
        %v1625 = vshrl.u32 %v1624, 7
        %v1626 = vsub.s32 %v1623, %v1625
        %v1627 = vrot.slane %v1612, %v1626
        %v1629 = vunpack.c.l.s4 1934713408
        %v1630 = vunpack.c.0.s8 %v1629
        %v1631 = vlaneseq
        %v1632 = vshrl.u32 %v1631, 7
        %v1633 = vsub.s32 %v1630, %v1632
        %v1634 = vrot.slane %v1620, %v1633
        %v1635 = vcombine.high %v1619, 0.0
        %v1637 = vunpack.c.l.s4 1934713408
        %v1638 = vunpack.c.0.s8 %v1637
        %v1639 = vlaneseq
        %v1640 = vshrl.u32 %v1639, 7
        %v1641 = vsub.s32 %v1638, %v1640
        %v1642 = vrot.slane %v1619, %v1641
        %v1644 = vunpack.c.l.s4 1934713408
        %v1645 = vunpack.c.0.s8 %v1644
        %v1646 = vlaneseq
        %v1647 = vshrl.u32 %v1646, 7
        %v1648 = vsub.s32 %v1645, %v1647
        %v1649 = vrot.slane %v1635, %v1648
        %v1650 = vcombine.high %v1627, 0.0
        %v1651 = vcombine.high %v1634, 0.0
        %v1652 = vcombine.high %v1642, 0.0
        %v1653 = vcombine.high %v1649, 0.0
        %v1654 = vcombine.high %v260, 0.0
        %v1656 = vunpack.c.l.s4 1983009808
        %v1657 = vunpack.c.0.s8 %v1656
        %v1658 = vlaneseq
        %v1659 = vshrl.u32 %v1658, 7
        %v1660 = vsub.s32 %v1657, %v1659
        %v1661 = vrot.slane %v260, %v1660
        %v1663 = vunpack.c.l.s4 1983009808
        %v1664 = vunpack.c.0.s8 %v1663
        %v1665 = vlaneseq
        %v1666 = vshrl.u32 %v1665, 7
        %v1667 = vsub.s32 %v1664, %v1666
        %v1668 = vrot.slane %v1654, %v1667
        %v1669 = vcombine.high %v1661, 0.0
        %v1671 = vunpack.c.l.s4 1934713408
        %v1672 = vunpack.c.0.s8 %v1671
        %v1673 = vlaneseq
        %v1674 = vshrl.u32 %v1673, 7
        %v1675 = vsub.s32 %v1672, %v1674
        %v1676 = vrot.slane %v1661, %v1675
        %v1678 = vunpack.c.l.s4 1934713408
        %v1679 = vunpack.c.0.s8 %v1678
        %v1680 = vlaneseq
        %v1681 = vshrl.u32 %v1680, 7
        %v1682 = vsub.s32 %v1679, %v1681
        %v1683 = vrot.slane %v1669, %v1682
        %v1684 = vcombine.high %v1668, 0.0
        %v1686 = vunpack.c.l.s4 1934713408
        %v1687 = vunpack.c.0.s8 %v1686
        %v1688 = vlaneseq
        %v1689 = vshrl.u32 %v1688, 7
        %v1690 = vsub.s32 %v1687, %v1689
        %v1691 = vrot.slane %v1668, %v1690
        %v1693 = vunpack.c.l.s4 1934713408
        %v1694 = vunpack.c.0.s8 %v1693
        %v1695 = vlaneseq
        %v1696 = vshrl.u32 %v1695, 7
        %v1697 = vsub.s32 %v1694, %v1696
        %v1698 = vrot.slane %v1684, %v1697
        %v1699 = vcombine.high %v1676, 0.0
        %v1700 = vcombine.high %v1683, 0.0
        %v1701 = vcombine.high %v1691, 0.0
        %v1702 = vcombine.high %v1698, 0.0
        %v1703 = vcombine.high %v264, 0.0
        %v1705 = vunpack.c.l.s4 1983009808
        %v1706 = vunpack.c.0.s8 %v1705
        %v1707 = vlaneseq
        %v1708 = vshrl.u32 %v1707, 7
        %v1709 = vsub.s32 %v1706, %v1708
        %v1710 = vrot.slane %v264, %v1709
        %v1712 = vunpack.c.l.s4 1983009808
        %v1713 = vunpack.c.0.s8 %v1712
        %v1714 = vlaneseq
        %v1715 = vshrl.u32 %v1714, 7
        %v1716 = vsub.s32 %v1713, %v1715
        %v1717 = vrot.slane %v1703, %v1716
        %v1718 = vcombine.high %v1710, 0.0
        %v1720 = vunpack.c.l.s4 1934713408
        %v1721 = vunpack.c.0.s8 %v1720
        %v1722 = vlaneseq
        %v1723 = vshrl.u32 %v1722, 7
        %v1724 = vsub.s32 %v1721, %v1723
        %v1725 = vrot.slane %v1710, %v1724
        %v1727 = vunpack.c.l.s4 1934713408
        %v1728 = vunpack.c.0.s8 %v1727
        %v1729 = vlaneseq
        %v1730 = vshrl.u32 %v1729, 7
        %v1731 = vsub.s32 %v1728, %v1730
        %v1732 = vrot.slane %v1718, %v1731
        %v1733 = vcombine.high %v1717, 0.0
        %v1735 = vunpack.c.l.s4 1934713408
        %v1736 = vunpack.c.0.s8 %v1735
        %v1737 = vlaneseq
        %v1738 = vshrl.u32 %v1737, 7
        %v1739 = vsub.s32 %v1736, %v1738
        %v1740 = vrot.slane %v1717, %v1739
        %v1742 = vunpack.c.l.s4 1934713408
        %v1743 = vunpack.c.0.s8 %v1742
        %v1744 = vlaneseq
        %v1745 = vshrl.u32 %v1744, 7
        %v1746 = vsub.s32 %v1743, %v1745
        %v1747 = vrot.slane %v1733, %v1746
        %v1748 = vcombine.high %v1725, 0.0
        %v1749 = vcombine.high %v1732, 0.0
        %v1750 = vcombine.high %v1740, 0.0
        %v1751 = vcombine.high %v1747, 0.0
        %v1752 = vcombine.high %v271, 0.0
        %v1754 = vunpack.c.l.s4 1983009808
        %v1755 = vunpack.c.0.s8 %v1754
        %v1756 = vlaneseq
        %v1757 = vshrl.u32 %v1756, 7
        %v1758 = vsub.s32 %v1755, %v1757
        %v1759 = vrot.slane %v271, %v1758
        %v1761 = vunpack.c.l.s4 1983009808
        %v1762 = vunpack.c.0.s8 %v1761
        %v1763 = vlaneseq
        %v1764 = vshrl.u32 %v1763, 7
        %v1765 = vsub.s32 %v1762, %v1764
        %v1766 = vrot.slane %v1752, %v1765
        %v1767 = vcombine.high %v1759, 0.0
        %v1769 = vunpack.c.l.s4 1934713408
        %v1770 = vunpack.c.0.s8 %v1769
        %v1771 = vlaneseq
        %v1772 = vshrl.u32 %v1771, 7
        %v1773 = vsub.s32 %v1770, %v1772
        %v1774 = vrot.slane %v1759, %v1773
        %v1776 = vunpack.c.l.s4 1934713408
        %v1777 = vunpack.c.0.s8 %v1776
        %v1778 = vlaneseq
        %v1779 = vshrl.u32 %v1778, 7
        %v1780 = vsub.s32 %v1777, %v1779
        %v1781 = vrot.slane %v1767, %v1780
        %v1782 = vcombine.high %v1766, 0.0
        %v1784 = vunpack.c.l.s4 1934713408
        %v1785 = vunpack.c.0.s8 %v1784
        %v1786 = vlaneseq
        %v1787 = vshrl.u32 %v1786, 7
        %v1788 = vsub.s32 %v1785, %v1787
        %v1789 = vrot.slane %v1766, %v1788
        %v1791 = vunpack.c.l.s4 1934713408
        %v1792 = vunpack.c.0.s8 %v1791
        %v1793 = vlaneseq
        %v1794 = vshrl.u32 %v1793, 7
        %v1795 = vsub.s32 %v1792, %v1794
        %v1796 = vrot.slane %v1782, %v1795
        %v1797 = vcombine.high %v1774, 0.0
        %v1798 = vcombine.high %v1781, 0.0
        %v1799 = vcombine.high %v1789, 0.0
        %v1800 = vcombine.high %v1796, 0.0
        %v1801 = vcombine.high %v275, 0.0
        %v1803 = vunpack.c.l.s4 1983009808
        %v1804 = vunpack.c.0.s8 %v1803
        %v1805 = vlaneseq
        %v1806 = vshrl.u32 %v1805, 7
        %v1807 = vsub.s32 %v1804, %v1806
        %v1808 = vrot.slane %v275, %v1807
        %v1810 = vunpack.c.l.s4 1983009808
        %v1811 = vunpack.c.0.s8 %v1810
        %v1812 = vlaneseq
        %v1813 = vshrl.u32 %v1812, 7
        %v1814 = vsub.s32 %v1811, %v1813
        %v1815 = vrot.slane %v1801, %v1814
        %v1816 = vcombine.high %v1808, 0.0
        %v1818 = vunpack.c.l.s4 1934713408
        %v1819 = vunpack.c.0.s8 %v1818
        %v1820 = vlaneseq
        %v1821 = vshrl.u32 %v1820, 7
        %v1822 = vsub.s32 %v1819, %v1821
        %v1823 = vrot.slane %v1808, %v1822
        %v1825 = vunpack.c.l.s4 1934713408
        %v1826 = vunpack.c.0.s8 %v1825
        %v1827 = vlaneseq
        %v1828 = vshrl.u32 %v1827, 7
        %v1829 = vsub.s32 %v1826, %v1828
        %v1830 = vrot.slane %v1816, %v1829
        %v1831 = vcombine.high %v1815, 0.0
        %v1833 = vunpack.c.l.s4 1934713408
        %v1834 = vunpack.c.0.s8 %v1833
        %v1835 = vlaneseq
        %v1836 = vshrl.u32 %v1835, 7
        %v1837 = vsub.s32 %v1834, %v1836
        %v1838 = vrot.slane %v1815, %v1837
        %v1840 = vunpack.c.l.s4 1934713408
        %v1841 = vunpack.c.0.s8 %v1840
        %v1842 = vlaneseq
        %v1843 = vshrl.u32 %v1842, 7
        %v1844 = vsub.s32 %v1841, %v1843
        %v1845 = vrot.slane %v1831, %v1844
        %v1846 = vcombine.high %v1823, 0.0
        %v1847 = vcombine.high %v1830, 0.0
        %v1848 = vcombine.high %v1838, 0.0
        %v1849 = vcombine.high %v1845, 0.0
        %v1850 = vcombine.high %v282, 0.0
        %v1852 = vunpack.c.l.s4 1983009808
        %v1853 = vunpack.c.0.s8 %v1852
        %v1854 = vlaneseq
        %v1855 = vshrl.u32 %v1854, 7
        %v1856 = vsub.s32 %v1853, %v1855
        %v1857 = vrot.slane %v282, %v1856
        %v1859 = vunpack.c.l.s4 1983009808
        %v1860 = vunpack.c.0.s8 %v1859
        %v1861 = vlaneseq
        %v1862 = vshrl.u32 %v1861, 7
        %v1863 = vsub.s32 %v1860, %v1862
        %v1864 = vrot.slane %v1850, %v1863
        %v1865 = vcombine.high %v1857, 0.0
        %v1867 = vunpack.c.l.s4 1934713408
        %v1868 = vunpack.c.0.s8 %v1867
        %v1869 = vlaneseq
        %v1870 = vshrl.u32 %v1869, 7
        %v1871 = vsub.s32 %v1868, %v1870
        %v1872 = vrot.slane %v1857, %v1871
        %v1874 = vunpack.c.l.s4 1934713408
        %v1875 = vunpack.c.0.s8 %v1874
        %v1876 = vlaneseq
        %v1877 = vshrl.u32 %v1876, 7
        %v1878 = vsub.s32 %v1875, %v1877
        %v1879 = vrot.slane %v1865, %v1878
        %v1880 = vcombine.high %v1864, 0.0
        %v1882 = vunpack.c.l.s4 1934713408
        %v1883 = vunpack.c.0.s8 %v1882
        %v1884 = vlaneseq
        %v1885 = vshrl.u32 %v1884, 7
        %v1886 = vsub.s32 %v1883, %v1885
        %v1887 = vrot.slane %v1864, %v1886
        %v1889 = vunpack.c.l.s4 1934713408
        %v1890 = vunpack.c.0.s8 %v1889
        %v1891 = vlaneseq
        %v1892 = vshrl.u32 %v1891, 7
        %v1893 = vsub.s32 %v1890, %v1892
        %v1894 = vrot.slane %v1880, %v1893
        %v1895 = vcombine.high %v1872, 0.0
        %v1896 = vcombine.high %v1879, 0.0
        %v1897 = vcombine.high %v1887, 0.0
        %v1898 = vcombine.high %v1894, 0.0
        %v1899 = vcombine.high %v286, 0.0
        %v1901 = vunpack.c.l.s4 1983009808
        %v1902 = vunpack.c.0.s8 %v1901
        %v1903 = vlaneseq
        %v1904 = vshrl.u32 %v1903, 7
        %v1905 = vsub.s32 %v1902, %v1904
        %v1906 = vrot.slane %v286, %v1905
        %v1908 = vunpack.c.l.s4 1983009808
        %v1909 = vunpack.c.0.s8 %v1908
        %v1910 = vlaneseq
        %v1911 = vshrl.u32 %v1910, 7
        %v1912 = vsub.s32 %v1909, %v1911
        %v1913 = vrot.slane %v1899, %v1912
        %v1914 = vcombine.high %v1906, 0.0
        %v1916 = vunpack.c.l.s4 1934713408
        %v1917 = vunpack.c.0.s8 %v1916
        %v1918 = vlaneseq
        %v1919 = vshrl.u32 %v1918, 7
        %v1920 = vsub.s32 %v1917, %v1919
        %v1921 = vrot.slane %v1906, %v1920
        %v1923 = vunpack.c.l.s4 1934713408
        %v1924 = vunpack.c.0.s8 %v1923
        %v1925 = vlaneseq
        %v1926 = vshrl.u32 %v1925, 7
        %v1927 = vsub.s32 %v1924, %v1926
        %v1928 = vrot.slane %v1914, %v1927
        %v1929 = vcombine.high %v1913, 0.0
        %v1931 = vunpack.c.l.s4 1934713408
        %v1932 = vunpack.c.0.s8 %v1931
        %v1933 = vlaneseq
        %v1934 = vshrl.u32 %v1933, 7
        %v1935 = vsub.s32 %v1932, %v1934
        %v1936 = vrot.slane %v1913, %v1935
        %v1938 = vunpack.c.l.s4 1934713408
        %v1939 = vunpack.c.0.s8 %v1938
        %v1940 = vlaneseq
        %v1941 = vshrl.u32 %v1940, 7
        %v1942 = vsub.s32 %v1939, %v1941
        %v1943 = vrot.slane %v1929, %v1942
        %v1944 = vcombine.high %v1921, 0.0
        %v1945 = vcombine.high %v1928, 0.0
        %v1946 = vcombine.high %v1936, 0.0
        %v1947 = vcombine.high %v1943, 0.0
        %v1948 = vcombine.high %v293, 0.0
        %v1950 = vunpack.c.l.s4 1983009808
        %v1951 = vunpack.c.0.s8 %v1950
        %v1952 = vlaneseq
        %v1953 = vshrl.u32 %v1952, 7
        %v1954 = vsub.s32 %v1951, %v1953
        %v1955 = vrot.slane %v293, %v1954
        %v1957 = vunpack.c.l.s4 1983009808
        %v1958 = vunpack.c.0.s8 %v1957
        %v1959 = vlaneseq
        %v1960 = vshrl.u32 %v1959, 7
        %v1961 = vsub.s32 %v1958, %v1960
        %v1962 = vrot.slane %v1948, %v1961
        %v1963 = vcombine.high %v1955, 0.0
        %v1965 = vunpack.c.l.s4 1934713408
        %v1966 = vunpack.c.0.s8 %v1965
        %v1967 = vlaneseq
        %v1968 = vshrl.u32 %v1967, 7
        %v1969 = vsub.s32 %v1966, %v1968
        %v1970 = vrot.slane %v1955, %v1969
        %v1972 = vunpack.c.l.s4 1934713408
        %v1973 = vunpack.c.0.s8 %v1972
        %v1974 = vlaneseq
        %v1975 = vshrl.u32 %v1974, 7
        %v1976 = vsub.s32 %v1973, %v1975
        %v1977 = vrot.slane %v1963, %v1976
        %v1978 = vcombine.high %v1962, 0.0
        %v1980 = vunpack.c.l.s4 1934713408
        %v1981 = vunpack.c.0.s8 %v1980
        %v1982 = vlaneseq
        %v1983 = vshrl.u32 %v1982, 7
        %v1984 = vsub.s32 %v1981, %v1983
        %v1985 = vrot.slane %v1962, %v1984
        %v1987 = vunpack.c.l.s4 1934713408
        %v1988 = vunpack.c.0.s8 %v1987
        %v1989 = vlaneseq
        %v1990 = vshrl.u32 %v1989, 7
        %v1991 = vsub.s32 %v1988, %v1990
        %v1992 = vrot.slane %v1978, %v1991
        %v1993 = vcombine.high %v1970, 0.0
        %v1994 = vcombine.high %v1977, 0.0
        %v1995 = vcombine.high %v1985, 0.0
        %v1996 = vcombine.high %v1992, 0.0
        %v1997 = vcombine.high %v297, 0.0
        %v1999 = vunpack.c.l.s4 1983009808
        %v2000 = vunpack.c.0.s8 %v1999
        %v2001 = vlaneseq
        %v2002 = vshrl.u32 %v2001, 7
        %v2003 = vsub.s32 %v2000, %v2002
        %v2004 = vrot.slane %v297, %v2003
        %v2006 = vunpack.c.l.s4 1983009808
        %v2007 = vunpack.c.0.s8 %v2006
        %v2008 = vlaneseq
        %v2009 = vshrl.u32 %v2008, 7
        %v2010 = vsub.s32 %v2007, %v2009
        %v2011 = vrot.slane %v1997, %v2010
        %v2012 = vcombine.high %v2004, 0.0
        %v2014 = vunpack.c.l.s4 1934713408
        %v2015 = vunpack.c.0.s8 %v2014
        %v2016 = vlaneseq
        %v2017 = vshrl.u32 %v2016, 7
        %v2018 = vsub.s32 %v2015, %v2017
        %v2019 = vrot.slane %v2004, %v2018
        %v2021 = vunpack.c.l.s4 1934713408
        %v2022 = vunpack.c.0.s8 %v2021
        %v2023 = vlaneseq
        %v2024 = vshrl.u32 %v2023, 7
        %v2025 = vsub.s32 %v2022, %v2024
        %v2026 = vrot.slane %v2012, %v2025
        %v2027 = vcombine.high %v2011, 0.0
        %v2029 = vunpack.c.l.s4 1934713408
        %v2030 = vunpack.c.0.s8 %v2029
        %v2031 = vlaneseq
        %v2032 = vshrl.u32 %v2031, 7
        %v2033 = vsub.s32 %v2030, %v2032
        %v2034 = vrot.slane %v2011, %v2033
        %v2036 = vunpack.c.l.s4 1934713408
        %v2037 = vunpack.c.0.s8 %v2036
        %v2038 = vlaneseq
        %v2039 = vshrl.u32 %v2038, 7
        %v2040 = vsub.s32 %v2037, %v2039
        %v2041 = vrot.slane %v2027, %v2040
        %v2042 = vcombine.high %v2019, 0.0
        %v2043 = vcombine.high %v2026, 0.0
        %v2044 = vcombine.high %v2034, 0.0
        %v2045 = vcombine.high %v2041, 0.0
        %v2046 = vcombine.high %v304, 0.0
        %v2048 = vunpack.c.l.s4 1983009808
        %v2049 = vunpack.c.0.s8 %v2048
        %v2050 = vlaneseq
        %v2051 = vshrl.u32 %v2050, 7
        %v2052 = vsub.s32 %v2049, %v2051
        %v2053 = vrot.slane %v304, %v2052
        %v2055 = vunpack.c.l.s4 1983009808
        %v2056 = vunpack.c.0.s8 %v2055
        %v2057 = vlaneseq
        %v2058 = vshrl.u32 %v2057, 7
        %v2059 = vsub.s32 %v2056, %v2058
        %v2060 = vrot.slane %v2046, %v2059
        %v2061 = vcombine.high %v2053, 0.0
        %v2063 = vunpack.c.l.s4 1934713408
        %v2064 = vunpack.c.0.s8 %v2063
        %v2065 = vlaneseq
        %v2066 = vshrl.u32 %v2065, 7
        %v2067 = vsub.s32 %v2064, %v2066
        %v2068 = vrot.slane %v2053, %v2067
        %v2070 = vunpack.c.l.s4 1934713408
        %v2071 = vunpack.c.0.s8 %v2070
        %v2072 = vlaneseq
        %v2073 = vshrl.u32 %v2072, 7
        %v2074 = vsub.s32 %v2071, %v2073
        %v2075 = vrot.slane %v2061, %v2074
        %v2076 = vcombine.high %v2060, 0.0
        %v2078 = vunpack.c.l.s4 1934713408
        %v2079 = vunpack.c.0.s8 %v2078
        %v2080 = vlaneseq
        %v2081 = vshrl.u32 %v2080, 7
        %v2082 = vsub.s32 %v2079, %v2081
        %v2083 = vrot.slane %v2060, %v2082
        %v2085 = vunpack.c.l.s4 1934713408
        %v2086 = vunpack.c.0.s8 %v2085
        %v2087 = vlaneseq
        %v2088 = vshrl.u32 %v2087, 7
        %v2089 = vsub.s32 %v2086, %v2088
        %v2090 = vrot.slane %v2076, %v2089
        %v2091 = vcombine.high %v2068, 0.0
        %v2092 = vcombine.high %v2075, 0.0
        %v2093 = vcombine.high %v2083, 0.0
        %v2094 = vcombine.high %v2090, 0.0
        %v2095 = vcombine.high %v308, 0.0
        %v2097 = vunpack.c.l.s4 1983009808
        %v2098 = vunpack.c.0.s8 %v2097
        %v2099 = vlaneseq
        %v2100 = vshrl.u32 %v2099, 7
        %v2101 = vsub.s32 %v2098, %v2100
        %v2102 = vrot.slane %v308, %v2101
        %v2104 = vunpack.c.l.s4 1983009808
        %v2105 = vunpack.c.0.s8 %v2104
        %v2106 = vlaneseq
        %v2107 = vshrl.u32 %v2106, 7
        %v2108 = vsub.s32 %v2105, %v2107
        %v2109 = vrot.slane %v2095, %v2108
        %v2110 = vcombine.high %v2102, 0.0
        %v2112 = vunpack.c.l.s4 1934713408
        %v2113 = vunpack.c.0.s8 %v2112
        %v2114 = vlaneseq
        %v2115 = vshrl.u32 %v2114, 7
        %v2116 = vsub.s32 %v2113, %v2115
        %v2117 = vrot.slane %v2102, %v2116
        %v2119 = vunpack.c.l.s4 1934713408
        %v2120 = vunpack.c.0.s8 %v2119
        %v2121 = vlaneseq
        %v2122 = vshrl.u32 %v2121, 7
        %v2123 = vsub.s32 %v2120, %v2122
        %v2124 = vrot.slane %v2110, %v2123
        %v2125 = vcombine.high %v2109, 0.0
        %v2127 = vunpack.c.l.s4 1934713408
        %v2128 = vunpack.c.0.s8 %v2127
        %v2129 = vlaneseq
        %v2130 = vshrl.u32 %v2129, 7
        %v2131 = vsub.s32 %v2128, %v2130
        %v2132 = vrot.slane %v2109, %v2131
        %v2134 = vunpack.c.l.s4 1934713408
        %v2135 = vunpack.c.0.s8 %v2134
        %v2136 = vlaneseq
        %v2137 = vshrl.u32 %v2136, 7
        %v2138 = vsub.s32 %v2135, %v2137
        %v2139 = vrot.slane %v2125, %v2138
        %v2140 = vcombine.high %v2117, 0.0
        %v2141 = vcombine.high %v2124, 0.0
        %v2142 = vcombine.high %v2132, 0.0
        %v2143 = vcombine.high %v2139, 0.0
        %v2144 = vcombine.high %v315, 0.0
        %v2146 = vunpack.c.l.s4 1983009808
        %v2147 = vunpack.c.0.s8 %v2146
        %v2148 = vlaneseq
        %v2149 = vshrl.u32 %v2148, 7
        %v2150 = vsub.s32 %v2147, %v2149
        %v2151 = vrot.slane %v315, %v2150
        %v2153 = vunpack.c.l.s4 1983009808
        %v2154 = vunpack.c.0.s8 %v2153
        %v2155 = vlaneseq
        %v2156 = vshrl.u32 %v2155, 7
        %v2157 = vsub.s32 %v2154, %v2156
        %v2158 = vrot.slane %v2144, %v2157
        %v2159 = vcombine.high %v2151, 0.0
        %v2161 = vunpack.c.l.s4 1934713408
        %v2162 = vunpack.c.0.s8 %v2161
        %v2163 = vlaneseq
        %v2164 = vshrl.u32 %v2163, 7
        %v2165 = vsub.s32 %v2162, %v2164
        %v2166 = vrot.slane %v2151, %v2165
        %v2168 = vunpack.c.l.s4 1934713408
        %v2169 = vunpack.c.0.s8 %v2168
        %v2170 = vlaneseq
        %v2171 = vshrl.u32 %v2170, 7
        %v2172 = vsub.s32 %v2169, %v2171
        %v2173 = vrot.slane %v2159, %v2172
        %v2174 = vcombine.high %v2158, 0.0
        %v2176 = vunpack.c.l.s4 1934713408
        %v2177 = vunpack.c.0.s8 %v2176
        %v2178 = vlaneseq
        %v2179 = vshrl.u32 %v2178, 7
        %v2180 = vsub.s32 %v2177, %v2179
        %v2181 = vrot.slane %v2158, %v2180
        %v2183 = vunpack.c.l.s4 1934713408
        %v2184 = vunpack.c.0.s8 %v2183
        %v2185 = vlaneseq
        %v2186 = vshrl.u32 %v2185, 7
        %v2187 = vsub.s32 %v2184, %v2186
        %v2188 = vrot.slane %v2174, %v2187
        %v2189 = vcombine.high %v2166, 0.0
        %v2190 = vcombine.high %v2173, 0.0
        %v2191 = vcombine.high %v2181, 0.0
        %v2192 = vcombine.high %v2188, 0.0
        %v2193 = vcombine.high %v319, 0.0
        %v2195 = vunpack.c.l.s4 1983009808
        %v2196 = vunpack.c.0.s8 %v2195
        %v2197 = vlaneseq
        %v2198 = vshrl.u32 %v2197, 7
        %v2199 = vsub.s32 %v2196, %v2198
        %v2200 = vrot.slane %v319, %v2199
        %v2202 = vunpack.c.l.s4 1983009808
        %v2203 = vunpack.c.0.s8 %v2202
        %v2204 = vlaneseq
        %v2205 = vshrl.u32 %v2204, 7
        %v2206 = vsub.s32 %v2203, %v2205
        %v2207 = vrot.slane %v2193, %v2206
        %v2208 = vcombine.high %v2200, 0.0
        %v2210 = vunpack.c.l.s4 1934713408
        %v2211 = vunpack.c.0.s8 %v2210
        %v2212 = vlaneseq
        %v2213 = vshrl.u32 %v2212, 7
        %v2214 = vsub.s32 %v2211, %v2213
        %v2215 = vrot.slane %v2200, %v2214
        %v2217 = vunpack.c.l.s4 1934713408
        %v2218 = vunpack.c.0.s8 %v2217
        %v2219 = vlaneseq
        %v2220 = vshrl.u32 %v2219, 7
        %v2221 = vsub.s32 %v2218, %v2220
        %v2222 = vrot.slane %v2208, %v2221
        %v2223 = vcombine.high %v2207, 0.0
        %v2225 = vunpack.c.l.s4 1934713408
        %v2226 = vunpack.c.0.s8 %v2225
        %v2227 = vlaneseq
        %v2228 = vshrl.u32 %v2227, 7
        %v2229 = vsub.s32 %v2226, %v2228
        %v2230 = vrot.slane %v2207, %v2229
        %v2232 = vunpack.c.l.s4 1934713408
        %v2233 = vunpack.c.0.s8 %v2232
        %v2234 = vlaneseq
        %v2235 = vshrl.u32 %v2234, 7
        %v2236 = vsub.s32 %v2233, %v2235
        %v2237 = vrot.slane %v2223, %v2236
        %v2238 = vcombine.high %v2215, 0.0
        %v2239 = vcombine.high %v2222, 0.0
        %v2240 = vcombine.high %v2230, 0.0
        %v2241 = vcombine.high %v2237, 0.0
        %v2242 = vcombine.high %v326, 0.0
        %v2244 = vunpack.c.l.s4 1983009808
        %v2245 = vunpack.c.0.s8 %v2244
        %v2246 = vlaneseq
        %v2247 = vshrl.u32 %v2246, 7
        %v2248 = vsub.s32 %v2245, %v2247
        %v2249 = vrot.slane %v326, %v2248
        %v2251 = vunpack.c.l.s4 1983009808
        %v2252 = vunpack.c.0.s8 %v2251
        %v2253 = vlaneseq
        %v2254 = vshrl.u32 %v2253, 7
        %v2255 = vsub.s32 %v2252, %v2254
        %v2256 = vrot.slane %v2242, %v2255
        %v2257 = vcombine.high %v2249, 0.0
        %v2259 = vunpack.c.l.s4 1934713408
        %v2260 = vunpack.c.0.s8 %v2259
        %v2261 = vlaneseq
        %v2262 = vshrl.u32 %v2261, 7
        %v2263 = vsub.s32 %v2260, %v2262
        %v2264 = vrot.slane %v2249, %v2263
        %v2266 = vunpack.c.l.s4 1934713408
        %v2267 = vunpack.c.0.s8 %v2266
        %v2268 = vlaneseq
        %v2269 = vshrl.u32 %v2268, 7
        %v2270 = vsub.s32 %v2267, %v2269
        %v2271 = vrot.slane %v2257, %v2270
        %v2272 = vcombine.high %v2256, 0.0
        %v2274 = vunpack.c.l.s4 1934713408
        %v2275 = vunpack.c.0.s8 %v2274
        %v2276 = vlaneseq
        %v2277 = vshrl.u32 %v2276, 7
        %v2278 = vsub.s32 %v2275, %v2277
        %v2279 = vrot.slane %v2256, %v2278
        %v2281 = vunpack.c.l.s4 1934713408
        %v2282 = vunpack.c.0.s8 %v2281
        %v2283 = vlaneseq
        %v2284 = vshrl.u32 %v2283, 7
        %v2285 = vsub.s32 %v2282, %v2284
        %v2286 = vrot.slane %v2272, %v2285
        %v2287 = vcombine.high %v2264, 0.0
        %v2288 = vcombine.high %v2271, 0.0
        %v2289 = vcombine.high %v2279, 0.0
        %v2290 = vcombine.high %v2286, 0.0
        %v2291 = vcombine.high %v330, 0.0
        %v2293 = vunpack.c.l.s4 1983009808
        %v2294 = vunpack.c.0.s8 %v2293
        %v2295 = vlaneseq
        %v2296 = vshrl.u32 %v2295, 7
        %v2297 = vsub.s32 %v2294, %v2296
        %v2298 = vrot.slane %v330, %v2297
        %v2300 = vunpack.c.l.s4 1983009808
        %v2301 = vunpack.c.0.s8 %v2300
        %v2302 = vlaneseq
        %v2303 = vshrl.u32 %v2302, 7
        %v2304 = vsub.s32 %v2301, %v2303
        %v2305 = vrot.slane %v2291, %v2304
        %v2306 = vcombine.high %v2298, 0.0
        %v2308 = vunpack.c.l.s4 1934713408
        %v2309 = vunpack.c.0.s8 %v2308
        %v2310 = vlaneseq
        %v2311 = vshrl.u32 %v2310, 7
        %v2312 = vsub.s32 %v2309, %v2311
        %v2313 = vrot.slane %v2298, %v2312
        %v2315 = vunpack.c.l.s4 1934713408
        %v2316 = vunpack.c.0.s8 %v2315
        %v2317 = vlaneseq
        %v2318 = vshrl.u32 %v2317, 7
        %v2319 = vsub.s32 %v2316, %v2318
        %v2320 = vrot.slane %v2306, %v2319
        %v2321 = vcombine.high %v2305, 0.0
        %v2323 = vunpack.c.l.s4 1934713408
        %v2324 = vunpack.c.0.s8 %v2323
        %v2325 = vlaneseq
        %v2326 = vshrl.u32 %v2325, 7
        %v2327 = vsub.s32 %v2324, %v2326
        %v2328 = vrot.slane %v2305, %v2327
        %v2330 = vunpack.c.l.s4 1934713408
        %v2331 = vunpack.c.0.s8 %v2330
        %v2332 = vlaneseq
        %v2333 = vshrl.u32 %v2332, 7
        %v2334 = vsub.s32 %v2331, %v2333
        %v2335 = vrot.slane %v2321, %v2334
        %v2336 = vcombine.high %v2313, 0.0
        %v2337 = vcombine.high %v2320, 0.0
        %v2338 = vcombine.high %v2328, 0.0
        %v2339 = vcombine.high %v2335, 0.0
        %v2340 = vcombine.high %v337, 0.0
        %v2342 = vunpack.c.l.s4 1983009808
        %v2343 = vunpack.c.0.s8 %v2342
        %v2344 = vlaneseq
        %v2345 = vshrl.u32 %v2344, 7
        %v2346 = vsub.s32 %v2343, %v2345
        %v2347 = vrot.slane %v337, %v2346
        %v2349 = vunpack.c.l.s4 1983009808
        %v2350 = vunpack.c.0.s8 %v2349
        %v2351 = vlaneseq
        %v2352 = vshrl.u32 %v2351, 7
        %v2353 = vsub.s32 %v2350, %v2352
        %v2354 = vrot.slane %v2340, %v2353
        %v2355 = vcombine.high %v2347, 0.0
        %v2357 = vunpack.c.l.s4 1934713408
        %v2358 = vunpack.c.0.s8 %v2357
        %v2359 = vlaneseq
        %v2360 = vshrl.u32 %v2359, 7
        %v2361 = vsub.s32 %v2358, %v2360
        %v2362 = vrot.slane %v2347, %v2361
        %v2364 = vunpack.c.l.s4 1934713408
        %v2365 = vunpack.c.0.s8 %v2364
        %v2366 = vlaneseq
        %v2367 = vshrl.u32 %v2366, 7
        %v2368 = vsub.s32 %v2365, %v2367
        %v2369 = vrot.slane %v2355, %v2368
        %v2370 = vcombine.high %v2354, 0.0
        %v2372 = vunpack.c.l.s4 1934713408
        %v2373 = vunpack.c.0.s8 %v2372
        %v2374 = vlaneseq
        %v2375 = vshrl.u32 %v2374, 7
        %v2376 = vsub.s32 %v2373, %v2375
        %v2377 = vrot.slane %v2354, %v2376
        %v2379 = vunpack.c.l.s4 1934713408
        %v2380 = vunpack.c.0.s8 %v2379
        %v2381 = vlaneseq
        %v2382 = vshrl.u32 %v2381, 7
        %v2383 = vsub.s32 %v2380, %v2382
        %v2384 = vrot.slane %v2370, %v2383
        %v2385 = vcombine.high %v2362, 0.0
        %v2386 = vcombine.high %v2369, 0.0
        %v2387 = vcombine.high %v2377, 0.0
        %v2388 = vcombine.high %v2384, 0.0
        %v2389 = vcombine.high %v341, 0.0
        %v2391 = vunpack.c.l.s4 1983009808
        %v2392 = vunpack.c.0.s8 %v2391
        %v2393 = vlaneseq
        %v2394 = vshrl.u32 %v2393, 7
        %v2395 = vsub.s32 %v2392, %v2394
        %v2396 = vrot.slane %v341, %v2395
        %v2398 = vunpack.c.l.s4 1983009808
        %v2399 = vunpack.c.0.s8 %v2398
        %v2400 = vlaneseq
        %v2401 = vshrl.u32 %v2400, 7
        %v2402 = vsub.s32 %v2399, %v2401
        %v2403 = vrot.slane %v2389, %v2402
        %v2404 = vcombine.high %v2396, 0.0
        %v2406 = vunpack.c.l.s4 1934713408
        %v2407 = vunpack.c.0.s8 %v2406
        %v2408 = vlaneseq
        %v2409 = vshrl.u32 %v2408, 7
        %v2410 = vsub.s32 %v2407, %v2409
        %v2411 = vrot.slane %v2396, %v2410
        %v2413 = vunpack.c.l.s4 1934713408
        %v2414 = vunpack.c.0.s8 %v2413
        %v2415 = vlaneseq
        %v2416 = vshrl.u32 %v2415, 7
        %v2417 = vsub.s32 %v2414, %v2416
        %v2418 = vrot.slane %v2404, %v2417
        %v2419 = vcombine.high %v2403, 0.0
        %v2421 = vunpack.c.l.s4 1934713408
        %v2422 = vunpack.c.0.s8 %v2421
        %v2423 = vlaneseq
        %v2424 = vshrl.u32 %v2423, 7
        %v2425 = vsub.s32 %v2422, %v2424
        %v2426 = vrot.slane %v2403, %v2425
        %v2428 = vunpack.c.l.s4 1934713408
        %v2429 = vunpack.c.0.s8 %v2428
        %v2430 = vlaneseq
        %v2431 = vshrl.u32 %v2430, 7
        %v2432 = vsub.s32 %v2429, %v2431
        %v2433 = vrot.slane %v2419, %v2432
        %v2434 = vcombine.high %v2411, 0.0
        %v2435 = vcombine.high %v2418, 0.0
        %v2436 = vcombine.high %v2426, 0.0
        %v2437 = vcombine.high %v2433, 0.0
        %v2438 = vcombine.high %v348, 0.0
        %v2440 = vunpack.c.l.s4 1983009808
        %v2441 = vunpack.c.0.s8 %v2440
        %v2442 = vlaneseq
        %v2443 = vshrl.u32 %v2442, 7
        %v2444 = vsub.s32 %v2441, %v2443
        %v2445 = vrot.slane %v348, %v2444
        %v2447 = vunpack.c.l.s4 1983009808
        %v2448 = vunpack.c.0.s8 %v2447
        %v2449 = vlaneseq
        %v2450 = vshrl.u32 %v2449, 7
        %v2451 = vsub.s32 %v2448, %v2450
        %v2452 = vrot.slane %v2438, %v2451
        %v2453 = vcombine.high %v2445, 0.0
        %v2455 = vunpack.c.l.s4 1934713408
        %v2456 = vunpack.c.0.s8 %v2455
        %v2457 = vlaneseq
        %v2458 = vshrl.u32 %v2457, 7
        %v2459 = vsub.s32 %v2456, %v2458
        %v2460 = vrot.slane %v2445, %v2459
        %v2462 = vunpack.c.l.s4 1934713408
        %v2463 = vunpack.c.0.s8 %v2462
        %v2464 = vlaneseq
        %v2465 = vshrl.u32 %v2464, 7
        %v2466 = vsub.s32 %v2463, %v2465
        %v2467 = vrot.slane %v2453, %v2466
        %v2468 = vcombine.high %v2452, 0.0
        %v2470 = vunpack.c.l.s4 1934713408
        %v2471 = vunpack.c.0.s8 %v2470
        %v2472 = vlaneseq
        %v2473 = vshrl.u32 %v2472, 7
        %v2474 = vsub.s32 %v2471, %v2473
        %v2475 = vrot.slane %v2452, %v2474
        %v2477 = vunpack.c.l.s4 1934713408
        %v2478 = vunpack.c.0.s8 %v2477
        %v2479 = vlaneseq
        %v2480 = vshrl.u32 %v2479, 7
        %v2481 = vsub.s32 %v2478, %v2480
        %v2482 = vrot.slane %v2468, %v2481
        %v2483 = vcombine.high %v2460, 0.0
        %v2484 = vcombine.high %v2467, 0.0
        %v2485 = vcombine.high %v2475, 0.0
        %v2486 = vcombine.high %v2482, 0.0
        %v2487 = vcombine.high %v352, 0.0
        %v2489 = vunpack.c.l.s4 1983009808
        %v2490 = vunpack.c.0.s8 %v2489
        %v2491 = vlaneseq
        %v2492 = vshrl.u32 %v2491, 7
        %v2493 = vsub.s32 %v2490, %v2492
        %v2494 = vrot.slane %v352, %v2493
        %v2496 = vunpack.c.l.s4 1983009808
        %v2497 = vunpack.c.0.s8 %v2496
        %v2498 = vlaneseq
        %v2499 = vshrl.u32 %v2498, 7
        %v2500 = vsub.s32 %v2497, %v2499
        %v2501 = vrot.slane %v2487, %v2500
        %v2502 = vcombine.high %v2494, 0.0
        %v2504 = vunpack.c.l.s4 1934713408
        %v2505 = vunpack.c.0.s8 %v2504
        %v2506 = vlaneseq
        %v2507 = vshrl.u32 %v2506, 7
        %v2508 = vsub.s32 %v2505, %v2507
        %v2509 = vrot.slane %v2494, %v2508
        %v2511 = vunpack.c.l.s4 1934713408
        %v2512 = vunpack.c.0.s8 %v2511
        %v2513 = vlaneseq
        %v2514 = vshrl.u32 %v2513, 7
        %v2515 = vsub.s32 %v2512, %v2514
        %v2516 = vrot.slane %v2502, %v2515
        %v2517 = vcombine.high %v2501, 0.0
        %v2519 = vunpack.c.l.s4 1934713408
        %v2520 = vunpack.c.0.s8 %v2519
        %v2521 = vlaneseq
        %v2522 = vshrl.u32 %v2521, 7
        %v2523 = vsub.s32 %v2520, %v2522
        %v2524 = vrot.slane %v2501, %v2523
        %v2526 = vunpack.c.l.s4 1934713408
        %v2527 = vunpack.c.0.s8 %v2526
        %v2528 = vlaneseq
        %v2529 = vshrl.u32 %v2528, 7
        %v2530 = vsub.s32 %v2527, %v2529
        %v2531 = vrot.slane %v2517, %v2530
        %v2532 = vcombine.high %v2509, 0.0
        %v2533 = vcombine.high %v2516, 0.0
        %v2534 = vcombine.high %v2524, 0.0
        %v2535 = vcombine.high %v2531, 0.0
        %v2536 = vcombine.high %v359, 0.0
        %v2538 = vunpack.c.l.s4 1983009808
        %v2539 = vunpack.c.0.s8 %v2538
        %v2540 = vlaneseq
        %v2541 = vshrl.u32 %v2540, 7
        %v2542 = vsub.s32 %v2539, %v2541
        %v2543 = vrot.slane %v359, %v2542
        %v2545 = vunpack.c.l.s4 1983009808
        %v2546 = vunpack.c.0.s8 %v2545
        %v2547 = vlaneseq
        %v2548 = vshrl.u32 %v2547, 7
        %v2549 = vsub.s32 %v2546, %v2548
        %v2550 = vrot.slane %v2536, %v2549
        %v2551 = vcombine.high %v2543, 0.0
        %v2553 = vunpack.c.l.s4 1934713408
        %v2554 = vunpack.c.0.s8 %v2553
        %v2555 = vlaneseq
        %v2556 = vshrl.u32 %v2555, 7
        %v2557 = vsub.s32 %v2554, %v2556
        %v2558 = vrot.slane %v2543, %v2557
        %v2560 = vunpack.c.l.s4 1934713408
        %v2561 = vunpack.c.0.s8 %v2560
        %v2562 = vlaneseq
        %v2563 = vshrl.u32 %v2562, 7
        %v2564 = vsub.s32 %v2561, %v2563
        %v2565 = vrot.slane %v2551, %v2564
        %v2566 = vcombine.high %v2550, 0.0
        %v2568 = vunpack.c.l.s4 1934713408
        %v2569 = vunpack.c.0.s8 %v2568
        %v2570 = vlaneseq
        %v2571 = vshrl.u32 %v2570, 7
        %v2572 = vsub.s32 %v2569, %v2571
        %v2573 = vrot.slane %v2550, %v2572
        %v2575 = vunpack.c.l.s4 1934713408
        %v2576 = vunpack.c.0.s8 %v2575
        %v2577 = vlaneseq
        %v2578 = vshrl.u32 %v2577, 7
        %v2579 = vsub.s32 %v2576, %v2578
        %v2580 = vrot.slane %v2566, %v2579
        %v2581 = vcombine.high %v2558, 0.0
        %v2582 = vcombine.high %v2565, 0.0
        %v2583 = vcombine.high %v2573, 0.0
        %v2584 = vcombine.high %v2580, 0.0
        %v2585 = vcombine.high %v363, 0.0
        %v2587 = vunpack.c.l.s4 1983009808
        %v2588 = vunpack.c.0.s8 %v2587
        %v2589 = vlaneseq
        %v2590 = vshrl.u32 %v2589, 7
        %v2591 = vsub.s32 %v2588, %v2590
        %v2592 = vrot.slane %v363, %v2591
        %v2594 = vunpack.c.l.s4 1983009808
        %v2595 = vunpack.c.0.s8 %v2594
        %v2596 = vlaneseq
        %v2597 = vshrl.u32 %v2596, 7
        %v2598 = vsub.s32 %v2595, %v2597
        %v2599 = vrot.slane %v2585, %v2598
        %v2600 = vcombine.high %v2592, 0.0
        %v2602 = vunpack.c.l.s4 1934713408
        %v2603 = vunpack.c.0.s8 %v2602
        %v2604 = vlaneseq
        %v2605 = vshrl.u32 %v2604, 7
        %v2606 = vsub.s32 %v2603, %v2605
        %v2607 = vrot.slane %v2592, %v2606
        %v2609 = vunpack.c.l.s4 1934713408
        %v2610 = vunpack.c.0.s8 %v2609
        %v2611 = vlaneseq
        %v2612 = vshrl.u32 %v2611, 7
        %v2613 = vsub.s32 %v2610, %v2612
        %v2614 = vrot.slane %v2600, %v2613
        %v2615 = vcombine.high %v2599, 0.0
        %v2617 = vunpack.c.l.s4 1934713408
        %v2618 = vunpack.c.0.s8 %v2617
        %v2619 = vlaneseq
        %v2620 = vshrl.u32 %v2619, 7
        %v2621 = vsub.s32 %v2618, %v2620
        %v2622 = vrot.slane %v2599, %v2621
        %v2624 = vunpack.c.l.s4 1934713408
        %v2625 = vunpack.c.0.s8 %v2624
        %v2626 = vlaneseq
        %v2627 = vshrl.u32 %v2626, 7
        %v2628 = vsub.s32 %v2625, %v2627
        %v2629 = vrot.slane %v2615, %v2628
        %v2630 = vcombine.high %v2607, 0.0
        %v2631 = vcombine.high %v2614, 0.0
        %v2632 = vcombine.high %v2622, 0.0
        %v2633 = vcombine.high %v2629, 0.0
        %v2634 = vcombine.high %v370, 0.0
        %v2636 = vunpack.c.l.s4 1983009808
        %v2637 = vunpack.c.0.s8 %v2636
        %v2638 = vlaneseq
        %v2639 = vshrl.u32 %v2638, 7
        %v2640 = vsub.s32 %v2637, %v2639
        %v2641 = vrot.slane %v370, %v2640
        %v2643 = vunpack.c.l.s4 1983009808
        %v2644 = vunpack.c.0.s8 %v2643
        %v2645 = vlaneseq
        %v2646 = vshrl.u32 %v2645, 7
        %v2647 = vsub.s32 %v2644, %v2646
        %v2648 = vrot.slane %v2634, %v2647
        %v2649 = vcombine.high %v2641, 0.0
        %v2651 = vunpack.c.l.s4 1934713408
        %v2652 = vunpack.c.0.s8 %v2651
        %v2653 = vlaneseq
        %v2654 = vshrl.u32 %v2653, 7
        %v2655 = vsub.s32 %v2652, %v2654
        %v2656 = vrot.slane %v2641, %v2655
        %v2658 = vunpack.c.l.s4 1934713408
        %v2659 = vunpack.c.0.s8 %v2658
        %v2660 = vlaneseq
        %v2661 = vshrl.u32 %v2660, 7
        %v2662 = vsub.s32 %v2659, %v2661
        %v2663 = vrot.slane %v2649, %v2662
        %v2664 = vcombine.high %v2648, 0.0
        %v2666 = vunpack.c.l.s4 1934713408
        %v2667 = vunpack.c.0.s8 %v2666
        %v2668 = vlaneseq
        %v2669 = vshrl.u32 %v2668, 7
        %v2670 = vsub.s32 %v2667, %v2669
        %v2671 = vrot.slane %v2648, %v2670
        %v2673 = vunpack.c.l.s4 1934713408
        %v2674 = vunpack.c.0.s8 %v2673
        %v2675 = vlaneseq
        %v2676 = vshrl.u32 %v2675, 7
        %v2677 = vsub.s32 %v2674, %v2676
        %v2678 = vrot.slane %v2664, %v2677
        %v2679 = vcombine.high %v2656, 0.0
        %v2680 = vcombine.high %v2663, 0.0
        %v2681 = vcombine.high %v2671, 0.0
        %v2682 = vcombine.high %v2678, 0.0
        %v2683 = vcombine.high %v374, 0.0
        %v2685 = vunpack.c.l.s4 1983009808
        %v2686 = vunpack.c.0.s8 %v2685
        %v2687 = vlaneseq
        %v2688 = vshrl.u32 %v2687, 7
        %v2689 = vsub.s32 %v2686, %v2688
        %v2690 = vrot.slane %v374, %v2689
        %v2692 = vunpack.c.l.s4 1983009808
        %v2693 = vunpack.c.0.s8 %v2692
        %v2694 = vlaneseq
        %v2695 = vshrl.u32 %v2694, 7
        %v2696 = vsub.s32 %v2693, %v2695
        %v2697 = vrot.slane %v2683, %v2696
        %v2698 = vcombine.high %v2690, 0.0
        %v2700 = vunpack.c.l.s4 1934713408
        %v2701 = vunpack.c.0.s8 %v2700
        %v2702 = vlaneseq
        %v2703 = vshrl.u32 %v2702, 7
        %v2704 = vsub.s32 %v2701, %v2703
        %v2705 = vrot.slane %v2690, %v2704
        %v2707 = vunpack.c.l.s4 1934713408
        %v2708 = vunpack.c.0.s8 %v2707
        %v2709 = vlaneseq
        %v2710 = vshrl.u32 %v2709, 7
        %v2711 = vsub.s32 %v2708, %v2710
        %v2712 = vrot.slane %v2698, %v2711
        %v2713 = vcombine.high %v2697, 0.0
        %v2715 = vunpack.c.l.s4 1934713408
        %v2716 = vunpack.c.0.s8 %v2715
        %v2717 = vlaneseq
        %v2718 = vshrl.u32 %v2717, 7
        %v2719 = vsub.s32 %v2716, %v2718
        %v2720 = vrot.slane %v2697, %v2719
        %v2722 = vunpack.c.l.s4 1934713408
        %v2723 = vunpack.c.0.s8 %v2722
        %v2724 = vlaneseq
        %v2725 = vshrl.u32 %v2724, 7
        %v2726 = vsub.s32 %v2723, %v2725
        %v2727 = vrot.slane %v2713, %v2726
        %v2728 = vcombine.high %v2705, 0.0
        %v2729 = vcombine.high %v2712, 0.0
        %v2730 = vcombine.high %v2720, 0.0
        %v2731 = vcombine.high %v2727, 0.0
        %v2732 = vcombine.high %v381, 0.0
        %v2734 = vunpack.c.l.s4 1983009808
        %v2735 = vunpack.c.0.s8 %v2734
        %v2736 = vlaneseq
        %v2737 = vshrl.u32 %v2736, 7
        %v2738 = vsub.s32 %v2735, %v2737
        %v2739 = vrot.slane %v381, %v2738
        %v2741 = vunpack.c.l.s4 1983009808
        %v2742 = vunpack.c.0.s8 %v2741
        %v2743 = vlaneseq
        %v2744 = vshrl.u32 %v2743, 7
        %v2745 = vsub.s32 %v2742, %v2744
        %v2746 = vrot.slane %v2732, %v2745
        %v2747 = vcombine.high %v2739, 0.0
        %v2749 = vunpack.c.l.s4 1934713408
        %v2750 = vunpack.c.0.s8 %v2749
        %v2751 = vlaneseq
        %v2752 = vshrl.u32 %v2751, 7
        %v2753 = vsub.s32 %v2750, %v2752
        %v2754 = vrot.slane %v2739, %v2753
        %v2756 = vunpack.c.l.s4 1934713408
        %v2757 = vunpack.c.0.s8 %v2756
        %v2758 = vlaneseq
        %v2759 = vshrl.u32 %v2758, 7
        %v2760 = vsub.s32 %v2757, %v2759
        %v2761 = vrot.slane %v2747, %v2760
        %v2762 = vcombine.high %v2746, 0.0
        %v2764 = vunpack.c.l.s4 1934713408
        %v2765 = vunpack.c.0.s8 %v2764
        %v2766 = vlaneseq
        %v2767 = vshrl.u32 %v2766, 7
        %v2768 = vsub.s32 %v2765, %v2767
        %v2769 = vrot.slane %v2746, %v2768
        %v2771 = vunpack.c.l.s4 1934713408
        %v2772 = vunpack.c.0.s8 %v2771
        %v2773 = vlaneseq
        %v2774 = vshrl.u32 %v2773, 7
        %v2775 = vsub.s32 %v2772, %v2774
        %v2776 = vrot.slane %v2762, %v2775
        %v2777 = vcombine.high %v2754, 0.0
        %v2778 = vcombine.high %v2761, 0.0
        %v2779 = vcombine.high %v2769, 0.0
        %v2780 = vcombine.high %v2776, 0.0
        %v2781 = vcombine.high %v385, 0.0
        %v2783 = vunpack.c.l.s4 1983009808
        %v2784 = vunpack.c.0.s8 %v2783
        %v2785 = vlaneseq
        %v2786 = vshrl.u32 %v2785, 7
        %v2787 = vsub.s32 %v2784, %v2786
        %v2788 = vrot.slane %v385, %v2787
        %v2790 = vunpack.c.l.s4 1983009808
        %v2791 = vunpack.c.0.s8 %v2790
        %v2792 = vlaneseq
        %v2793 = vshrl.u32 %v2792, 7
        %v2794 = vsub.s32 %v2791, %v2793
        %v2795 = vrot.slane %v2781, %v2794
        %v2796 = vcombine.high %v2788, 0.0
        %v2798 = vunpack.c.l.s4 1934713408
        %v2799 = vunpack.c.0.s8 %v2798
        %v2800 = vlaneseq
        %v2801 = vshrl.u32 %v2800, 7
        %v2802 = vsub.s32 %v2799, %v2801
        %v2803 = vrot.slane %v2788, %v2802
        %v2805 = vunpack.c.l.s4 1934713408
        %v2806 = vunpack.c.0.s8 %v2805
        %v2807 = vlaneseq
        %v2808 = vshrl.u32 %v2807, 7
        %v2809 = vsub.s32 %v2806, %v2808
        %v2810 = vrot.slane %v2796, %v2809
        %v2811 = vcombine.high %v2795, 0.0
        %v2813 = vunpack.c.l.s4 1934713408
        %v2814 = vunpack.c.0.s8 %v2813
        %v2815 = vlaneseq
        %v2816 = vshrl.u32 %v2815, 7
        %v2817 = vsub.s32 %v2814, %v2816
        %v2818 = vrot.slane %v2795, %v2817
        %v2820 = vunpack.c.l.s4 1934713408
        %v2821 = vunpack.c.0.s8 %v2820
        %v2822 = vlaneseq
        %v2823 = vshrl.u32 %v2822, 7
        %v2824 = vsub.s32 %v2821, %v2823
        %v2825 = vrot.slane %v2811, %v2824
        %v2826 = vcombine.high %v2803, 0.0
        %v2827 = vcombine.high %v2810, 0.0
        %v2828 = vcombine.high %v2818, 0.0
        %v2829 = vcombine.high %v2825, 0.0
        %v2830 = vcombine.high %v392, 0.0
        %v2832 = vunpack.c.l.s4 1983009808
        %v2833 = vunpack.c.0.s8 %v2832
        %v2834 = vlaneseq
        %v2835 = vshrl.u32 %v2834, 7
        %v2836 = vsub.s32 %v2833, %v2835
        %v2837 = vrot.slane %v392, %v2836
        %v2839 = vunpack.c.l.s4 1983009808
        %v2840 = vunpack.c.0.s8 %v2839
        %v2841 = vlaneseq
        %v2842 = vshrl.u32 %v2841, 7
        %v2843 = vsub.s32 %v2840, %v2842
        %v2844 = vrot.slane %v2830, %v2843
        %v2845 = vcombine.high %v2837, 0.0
        %v2847 = vunpack.c.l.s4 1934713408
        %v2848 = vunpack.c.0.s8 %v2847
        %v2849 = vlaneseq
        %v2850 = vshrl.u32 %v2849, 7
        %v2851 = vsub.s32 %v2848, %v2850
        %v2852 = vrot.slane %v2837, %v2851
        %v2854 = vunpack.c.l.s4 1934713408
        %v2855 = vunpack.c.0.s8 %v2854
        %v2856 = vlaneseq
        %v2857 = vshrl.u32 %v2856, 7
        %v2858 = vsub.s32 %v2855, %v2857
        %v2859 = vrot.slane %v2845, %v2858
        %v2860 = vcombine.high %v2844, 0.0
        %v2862 = vunpack.c.l.s4 1934713408
        %v2863 = vunpack.c.0.s8 %v2862
        %v2864 = vlaneseq
        %v2865 = vshrl.u32 %v2864, 7
        %v2866 = vsub.s32 %v2863, %v2865
        %v2867 = vrot.slane %v2844, %v2866
        %v2869 = vunpack.c.l.s4 1934713408
        %v2870 = vunpack.c.0.s8 %v2869
        %v2871 = vlaneseq
        %v2872 = vshrl.u32 %v2871, 7
        %v2873 = vsub.s32 %v2870, %v2872
        %v2874 = vrot.slane %v2860, %v2873
        %v2875 = vcombine.high %v2852, 0.0
        %v2876 = vcombine.high %v2859, 0.0
        %v2877 = vcombine.high %v2867, 0.0
        %v2878 = vcombine.high %v2874, 0.0
        %v2879 = vcombine.high %v396, 0.0
        %v2881 = vunpack.c.l.s4 1983009808
        %v2882 = vunpack.c.0.s8 %v2881
        %v2883 = vlaneseq
        %v2884 = vshrl.u32 %v2883, 7
        %v2885 = vsub.s32 %v2882, %v2884
        %v2886 = vrot.slane %v396, %v2885
        %v2888 = vunpack.c.l.s4 1983009808
        %v2889 = vunpack.c.0.s8 %v2888
        %v2890 = vlaneseq
        %v2891 = vshrl.u32 %v2890, 7
        %v2892 = vsub.s32 %v2889, %v2891
        %v2893 = vrot.slane %v2879, %v2892
        %v2894 = vcombine.high %v2886, 0.0
        %v2896 = vunpack.c.l.s4 1934713408
        %v2897 = vunpack.c.0.s8 %v2896
        %v2898 = vlaneseq
        %v2899 = vshrl.u32 %v2898, 7
        %v2900 = vsub.s32 %v2897, %v2899
        %v2901 = vrot.slane %v2886, %v2900
        %v2903 = vunpack.c.l.s4 1934713408
        %v2904 = vunpack.c.0.s8 %v2903
        %v2905 = vlaneseq
        %v2906 = vshrl.u32 %v2905, 7
        %v2907 = vsub.s32 %v2904, %v2906
        %v2908 = vrot.slane %v2894, %v2907
        %v2909 = vcombine.high %v2893, 0.0
        %v2911 = vunpack.c.l.s4 1934713408
        %v2912 = vunpack.c.0.s8 %v2911
        %v2913 = vlaneseq
        %v2914 = vshrl.u32 %v2913, 7
        %v2915 = vsub.s32 %v2912, %v2914
        %v2916 = vrot.slane %v2893, %v2915
        %v2918 = vunpack.c.l.s4 1934713408
        %v2919 = vunpack.c.0.s8 %v2918
        %v2920 = vlaneseq
        %v2921 = vshrl.u32 %v2920, 7
        %v2922 = vsub.s32 %v2919, %v2921
        %v2923 = vrot.slane %v2909, %v2922
        %v2924 = vcombine.high %v2901, 0.0
        %v2925 = vcombine.high %v2908, 0.0
        %v2926 = vcombine.high %v2916, 0.0
        %v2927 = vcombine.high %v2923, 0.0
        %v2928 = vcombine.high %v403, 0.0
        %v2930 = vunpack.c.l.s4 1983009808
        %v2931 = vunpack.c.0.s8 %v2930
        %v2932 = vlaneseq
        %v2933 = vshrl.u32 %v2932, 7
        %v2934 = vsub.s32 %v2931, %v2933
        %v2935 = vrot.slane %v403, %v2934
        %v2937 = vunpack.c.l.s4 1983009808
        %v2938 = vunpack.c.0.s8 %v2937
        %v2939 = vlaneseq
        %v2940 = vshrl.u32 %v2939, 7
        %v2941 = vsub.s32 %v2938, %v2940
        %v2942 = vrot.slane %v2928, %v2941
        %v2943 = vcombine.high %v2935, 0.0
        %v2945 = vunpack.c.l.s4 1934713408
        %v2946 = vunpack.c.0.s8 %v2945
        %v2947 = vlaneseq
        %v2948 = vshrl.u32 %v2947, 7
        %v2949 = vsub.s32 %v2946, %v2948
        %v2950 = vrot.slane %v2935, %v2949
        %v2952 = vunpack.c.l.s4 1934713408
        %v2953 = vunpack.c.0.s8 %v2952
        %v2954 = vlaneseq
        %v2955 = vshrl.u32 %v2954, 7
        %v2956 = vsub.s32 %v2953, %v2955
        %v2957 = vrot.slane %v2943, %v2956
        %v2958 = vcombine.high %v2942, 0.0
        %v2960 = vunpack.c.l.s4 1934713408
        %v2961 = vunpack.c.0.s8 %v2960
        %v2962 = vlaneseq
        %v2963 = vshrl.u32 %v2962, 7
        %v2964 = vsub.s32 %v2961, %v2963
        %v2965 = vrot.slane %v2942, %v2964
        %v2967 = vunpack.c.l.s4 1934713408
        %v2968 = vunpack.c.0.s8 %v2967
        %v2969 = vlaneseq
        %v2970 = vshrl.u32 %v2969, 7
        %v2971 = vsub.s32 %v2968, %v2970
        %v2972 = vrot.slane %v2958, %v2971
        %v2973 = vcombine.high %v2950, 0.0
        %v2974 = vcombine.high %v2957, 0.0
        %v2975 = vcombine.high %v2965, 0.0
        %v2976 = vcombine.high %v2972, 0.0
        %v2977 = vcombine.high %v407, 0.0
        %v2979 = vunpack.c.l.s4 1983009808
        %v2980 = vunpack.c.0.s8 %v2979
        %v2981 = vlaneseq
        %v2982 = vshrl.u32 %v2981, 7
        %v2983 = vsub.s32 %v2980, %v2982
        %v2984 = vrot.slane %v407, %v2983
        %v2986 = vunpack.c.l.s4 1983009808
        %v2987 = vunpack.c.0.s8 %v2986
        %v2988 = vlaneseq
        %v2989 = vshrl.u32 %v2988, 7
        %v2990 = vsub.s32 %v2987, %v2989
        %v2991 = vrot.slane %v2977, %v2990
        %v2992 = vcombine.high %v2984, 0.0
        %v2994 = vunpack.c.l.s4 1934713408
        %v2995 = vunpack.c.0.s8 %v2994
        %v2996 = vlaneseq
        %v2997 = vshrl.u32 %v2996, 7
        %v2998 = vsub.s32 %v2995, %v2997
        %v2999 = vrot.slane %v2984, %v2998
        %v3001 = vunpack.c.l.s4 1934713408
        %v3002 = vunpack.c.0.s8 %v3001
        %v3003 = vlaneseq
        %v3004 = vshrl.u32 %v3003, 7
        %v3005 = vsub.s32 %v3002, %v3004
        %v3006 = vrot.slane %v2992, %v3005
        %v3007 = vcombine.high %v2991, 0.0
        %v3009 = vunpack.c.l.s4 1934713408
        %v3010 = vunpack.c.0.s8 %v3009
        %v3011 = vlaneseq
        %v3012 = vshrl.u32 %v3011, 7
        %v3013 = vsub.s32 %v3010, %v3012
        %v3014 = vrot.slane %v2991, %v3013
        %v3016 = vunpack.c.l.s4 1934713408
        %v3017 = vunpack.c.0.s8 %v3016
        %v3018 = vlaneseq
        %v3019 = vshrl.u32 %v3018, 7
        %v3020 = vsub.s32 %v3017, %v3019
        %v3021 = vrot.slane %v3007, %v3020
        %v3022 = vcombine.high %v2999, 0.0
        %v3023 = vcombine.high %v3006, 0.0
        %v3024 = vcombine.high %v3014, 0.0
        %v3025 = vcombine.high %v3021, 0.0
        %v3026 = vcombine.high %v414, 0.0
        %v3028 = vunpack.c.l.s4 1983009808
        %v3029 = vunpack.c.0.s8 %v3028
        %v3030 = vlaneseq
        %v3031 = vshrl.u32 %v3030, 7
        %v3032 = vsub.s32 %v3029, %v3031
        %v3033 = vrot.slane %v414, %v3032
        %v3035 = vunpack.c.l.s4 1983009808
        %v3036 = vunpack.c.0.s8 %v3035
        %v3037 = vlaneseq
        %v3038 = vshrl.u32 %v3037, 7
        %v3039 = vsub.s32 %v3036, %v3038
        %v3040 = vrot.slane %v3026, %v3039
        %v3041 = vcombine.high %v3033, 0.0
        %v3043 = vunpack.c.l.s4 1934713408
        %v3044 = vunpack.c.0.s8 %v3043
        %v3045 = vlaneseq
        %v3046 = vshrl.u32 %v3045, 7
        %v3047 = vsub.s32 %v3044, %v3046
        %v3048 = vrot.slane %v3033, %v3047
        %v3050 = vunpack.c.l.s4 1934713408
        %v3051 = vunpack.c.0.s8 %v3050
        %v3052 = vlaneseq
        %v3053 = vshrl.u32 %v3052, 7
        %v3054 = vsub.s32 %v3051, %v3053
        %v3055 = vrot.slane %v3041, %v3054
        %v3056 = vcombine.high %v3040, 0.0
        %v3058 = vunpack.c.l.s4 1934713408
        %v3059 = vunpack.c.0.s8 %v3058
        %v3060 = vlaneseq
        %v3061 = vshrl.u32 %v3060, 7
        %v3062 = vsub.s32 %v3059, %v3061
        %v3063 = vrot.slane %v3040, %v3062
        %v3065 = vunpack.c.l.s4 1934713408
        %v3066 = vunpack.c.0.s8 %v3065
        %v3067 = vlaneseq
        %v3068 = vshrl.u32 %v3067, 7
        %v3069 = vsub.s32 %v3066, %v3068
        %v3070 = vrot.slane %v3056, %v3069
        %v3071 = vcombine.high %v3048, 0.0
        %v3072 = vcombine.high %v3055, 0.0
        %v3073 = vcombine.high %v3063, 0.0
        %v3074 = vcombine.high %v3070, 0.0
        %v3075 = vcombine.high %v418, 0.0
        %v3077 = vunpack.c.l.s4 1983009808
        %v3078 = vunpack.c.0.s8 %v3077
        %v3079 = vlaneseq
        %v3080 = vshrl.u32 %v3079, 7
        %v3081 = vsub.s32 %v3078, %v3080
        %v3082 = vrot.slane %v418, %v3081
        %v3084 = vunpack.c.l.s4 1983009808
        %v3085 = vunpack.c.0.s8 %v3084
        %v3086 = vlaneseq
        %v3087 = vshrl.u32 %v3086, 7
        %v3088 = vsub.s32 %v3085, %v3087
        %v3089 = vrot.slane %v3075, %v3088
        %v3090 = vcombine.high %v3082, 0.0
        %v3092 = vunpack.c.l.s4 1934713408
        %v3093 = vunpack.c.0.s8 %v3092
        %v3094 = vlaneseq
        %v3095 = vshrl.u32 %v3094, 7
        %v3096 = vsub.s32 %v3093, %v3095
        %v3097 = vrot.slane %v3082, %v3096
        %v3099 = vunpack.c.l.s4 1934713408
        %v3100 = vunpack.c.0.s8 %v3099
        %v3101 = vlaneseq
        %v3102 = vshrl.u32 %v3101, 7
        %v3103 = vsub.s32 %v3100, %v3102
        %v3104 = vrot.slane %v3090, %v3103
        %v3105 = vcombine.high %v3089, 0.0
        %v3107 = vunpack.c.l.s4 1934713408
        %v3108 = vunpack.c.0.s8 %v3107
        %v3109 = vlaneseq
        %v3110 = vshrl.u32 %v3109, 7
        %v3111 = vsub.s32 %v3108, %v3110
        %v3112 = vrot.slane %v3089, %v3111
        %v3114 = vunpack.c.l.s4 1934713408
        %v3115 = vunpack.c.0.s8 %v3114
        %v3116 = vlaneseq
        %v3117 = vshrl.u32 %v3116, 7
        %v3118 = vsub.s32 %v3115, %v3117
        %v3119 = vrot.slane %v3105, %v3118
        %v3120 = vcombine.high %v3097, 0.0
        %v3121 = vcombine.high %v3104, 0.0
        %v3122 = vcombine.high %v3112, 0.0
        %v3123 = vcombine.high %v3119, 0.0
        %v3124 = vcombine.high %v425, 0.0
        %v3126 = vunpack.c.l.s4 1983009808
        %v3127 = vunpack.c.0.s8 %v3126
        %v3128 = vlaneseq
        %v3129 = vshrl.u32 %v3128, 7
        %v3130 = vsub.s32 %v3127, %v3129
        %v3131 = vrot.slane %v425, %v3130
        %v3133 = vunpack.c.l.s4 1983009808
        %v3134 = vunpack.c.0.s8 %v3133
        %v3135 = vlaneseq
        %v3136 = vshrl.u32 %v3135, 7
        %v3137 = vsub.s32 %v3134, %v3136
        %v3138 = vrot.slane %v3124, %v3137
        %v3139 = vcombine.high %v3131, 0.0
        %v3141 = vunpack.c.l.s4 1934713408
        %v3142 = vunpack.c.0.s8 %v3141
        %v3143 = vlaneseq
        %v3144 = vshrl.u32 %v3143, 7
        %v3145 = vsub.s32 %v3142, %v3144
        %v3146 = vrot.slane %v3131, %v3145
        %v3148 = vunpack.c.l.s4 1934713408
        %v3149 = vunpack.c.0.s8 %v3148
        %v3150 = vlaneseq
        %v3151 = vshrl.u32 %v3150, 7
        %v3152 = vsub.s32 %v3149, %v3151
        %v3153 = vrot.slane %v3139, %v3152
        %v3154 = vcombine.high %v3138, 0.0
        %v3156 = vunpack.c.l.s4 1934713408
        %v3157 = vunpack.c.0.s8 %v3156
        %v3158 = vlaneseq
        %v3159 = vshrl.u32 %v3158, 7
        %v3160 = vsub.s32 %v3157, %v3159
        %v3161 = vrot.slane %v3138, %v3160
        %v3163 = vunpack.c.l.s4 1934713408
        %v3164 = vunpack.c.0.s8 %v3163
        %v3165 = vlaneseq
        %v3166 = vshrl.u32 %v3165, 7
        %v3167 = vsub.s32 %v3164, %v3166
        %v3168 = vrot.slane %v3154, %v3167
        %v3169 = vcombine.high %v3146, 0.0
        %v3170 = vcombine.high %v3153, 0.0
        %v3171 = vcombine.high %v3161, 0.0
        %v3172 = vcombine.high %v3168, 0.0
        %v3173 = vcombine.high %v429, 0.0
        %v3175 = vunpack.c.l.s4 1983009808
        %v3176 = vunpack.c.0.s8 %v3175
        %v3177 = vlaneseq
        %v3178 = vshrl.u32 %v3177, 7
        %v3179 = vsub.s32 %v3176, %v3178
        %v3180 = vrot.slane %v429, %v3179
        %v3182 = vunpack.c.l.s4 1983009808
        %v3183 = vunpack.c.0.s8 %v3182
        %v3184 = vlaneseq
        %v3185 = vshrl.u32 %v3184, 7
        %v3186 = vsub.s32 %v3183, %v3185
        %v3187 = vrot.slane %v3173, %v3186
        %v3188 = vcombine.high %v3180, 0.0
        %v3190 = vunpack.c.l.s4 1934713408
        %v3191 = vunpack.c.0.s8 %v3190
        %v3192 = vlaneseq
        %v3193 = vshrl.u32 %v3192, 7
        %v3194 = vsub.s32 %v3191, %v3193
        %v3195 = vrot.slane %v3180, %v3194
        %v3197 = vunpack.c.l.s4 1934713408
        %v3198 = vunpack.c.0.s8 %v3197
        %v3199 = vlaneseq
        %v3200 = vshrl.u32 %v3199, 7
        %v3201 = vsub.s32 %v3198, %v3200
        %v3202 = vrot.slane %v3188, %v3201
        %v3203 = vcombine.high %v3187, 0.0
        %v3205 = vunpack.c.l.s4 1934713408
        %v3206 = vunpack.c.0.s8 %v3205
        %v3207 = vlaneseq
        %v3208 = vshrl.u32 %v3207, 7
        %v3209 = vsub.s32 %v3206, %v3208
        %v3210 = vrot.slane %v3187, %v3209
        %v3212 = vunpack.c.l.s4 1934713408
        %v3213 = vunpack.c.0.s8 %v3212
        %v3214 = vlaneseq
        %v3215 = vshrl.u32 %v3214, 7
        %v3216 = vsub.s32 %v3213, %v3215
        %v3217 = vrot.slane %v3203, %v3216
        %v3218 = vcombine.high %v3195, 0.0
        %v3219 = vcombine.high %v3202, 0.0
        %v3220 = vcombine.high %v3210, 0.0
        %v3221 = vcombine.high %v3217, 0.0
        %v3222 = vcombine.high %v436, 0.0
        %v3224 = vunpack.c.l.s4 1983009808
        %v3225 = vunpack.c.0.s8 %v3224
        %v3226 = vlaneseq
        %v3227 = vshrl.u32 %v3226, 7
        %v3228 = vsub.s32 %v3225, %v3227
        %v3229 = vrot.slane %v436, %v3228
        %v3231 = vunpack.c.l.s4 1983009808
        %v3232 = vunpack.c.0.s8 %v3231
        %v3233 = vlaneseq
        %v3234 = vshrl.u32 %v3233, 7
        %v3235 = vsub.s32 %v3232, %v3234
        %v3236 = vrot.slane %v3222, %v3235
        %v3237 = vcombine.high %v3229, 0.0
        %v3239 = vunpack.c.l.s4 1934713408
        %v3240 = vunpack.c.0.s8 %v3239
        %v3241 = vlaneseq
        %v3242 = vshrl.u32 %v3241, 7
        %v3243 = vsub.s32 %v3240, %v3242
        %v3244 = vrot.slane %v3229, %v3243
        %v3246 = vunpack.c.l.s4 1934713408
        %v3247 = vunpack.c.0.s8 %v3246
        %v3248 = vlaneseq
        %v3249 = vshrl.u32 %v3248, 7
        %v3250 = vsub.s32 %v3247, %v3249
        %v3251 = vrot.slane %v3237, %v3250
        %v3252 = vcombine.high %v3236, 0.0
        %v3254 = vunpack.c.l.s4 1934713408
        %v3255 = vunpack.c.0.s8 %v3254
        %v3256 = vlaneseq
        %v3257 = vshrl.u32 %v3256, 7
        %v3258 = vsub.s32 %v3255, %v3257
        %v3259 = vrot.slane %v3236, %v3258
        %v3261 = vunpack.c.l.s4 1934713408
        %v3262 = vunpack.c.0.s8 %v3261
        %v3263 = vlaneseq
        %v3264 = vshrl.u32 %v3263, 7
        %v3265 = vsub.s32 %v3262, %v3264
        %v3266 = vrot.slane %v3252, %v3265
        %v3267 = vcombine.high %v3244, 0.0
        %v3268 = vcombine.high %v3251, 0.0
        %v3269 = vcombine.high %v3259, 0.0
        %v3270 = vcombine.high %v3266, 0.0
        %v3271 = vcombine.high %v440, 0.0
        %v3273 = vunpack.c.l.s4 1983009808
        %v3274 = vunpack.c.0.s8 %v3273
        %v3275 = vlaneseq
        %v3276 = vshrl.u32 %v3275, 7
        %v3277 = vsub.s32 %v3274, %v3276
        %v3278 = vrot.slane %v440, %v3277
        %v3280 = vunpack.c.l.s4 1983009808
        %v3281 = vunpack.c.0.s8 %v3280
        %v3282 = vlaneseq
        %v3283 = vshrl.u32 %v3282, 7
        %v3284 = vsub.s32 %v3281, %v3283
        %v3285 = vrot.slane %v3271, %v3284
        %v3286 = vcombine.high %v3278, 0.0
        %v3288 = vunpack.c.l.s4 1934713408
        %v3289 = vunpack.c.0.s8 %v3288
        %v3290 = vlaneseq
        %v3291 = vshrl.u32 %v3290, 7
        %v3292 = vsub.s32 %v3289, %v3291
        %v3293 = vrot.slane %v3278, %v3292
        %v3295 = vunpack.c.l.s4 1934713408
        %v3296 = vunpack.c.0.s8 %v3295
        %v3297 = vlaneseq
        %v3298 = vshrl.u32 %v3297, 7
        %v3299 = vsub.s32 %v3296, %v3298
        %v3300 = vrot.slane %v3286, %v3299
        %v3301 = vcombine.high %v3285, 0.0
        %v3303 = vunpack.c.l.s4 1934713408
        %v3304 = vunpack.c.0.s8 %v3303
        %v3305 = vlaneseq
        %v3306 = vshrl.u32 %v3305, 7
        %v3307 = vsub.s32 %v3304, %v3306
        %v3308 = vrot.slane %v3285, %v3307
        %v3310 = vunpack.c.l.s4 1934713408
        %v3311 = vunpack.c.0.s8 %v3310
        %v3312 = vlaneseq
        %v3313 = vshrl.u32 %v3312, 7
        %v3314 = vsub.s32 %v3311, %v3313
        %v3315 = vrot.slane %v3301, %v3314
        %v3316 = vcombine.high %v3293, 0.0
        %v3317 = vcombine.high %v3300, 0.0
        %v3318 = vcombine.high %v3308, 0.0
        %v3319 = vcombine.high %v3315, 0.0
        %v3320 = vcombine.high %v447, 0.0
        %v3322 = vunpack.c.l.s4 1983009808
        %v3323 = vunpack.c.0.s8 %v3322
        %v3324 = vlaneseq
        %v3325 = vshrl.u32 %v3324, 7
        %v3326 = vsub.s32 %v3323, %v3325
        %v3327 = vrot.slane %v447, %v3326
        %v3329 = vunpack.c.l.s4 1983009808
        %v3330 = vunpack.c.0.s8 %v3329
        %v3331 = vlaneseq
        %v3332 = vshrl.u32 %v3331, 7
        %v3333 = vsub.s32 %v3330, %v3332
        %v3334 = vrot.slane %v3320, %v3333
        %v3335 = vcombine.high %v3327, 0.0
        %v3337 = vunpack.c.l.s4 1934713408
        %v3338 = vunpack.c.0.s8 %v3337
        %v3339 = vlaneseq
        %v3340 = vshrl.u32 %v3339, 7
        %v3341 = vsub.s32 %v3338, %v3340
        %v3342 = vrot.slane %v3327, %v3341
        %v3344 = vunpack.c.l.s4 1934713408
        %v3345 = vunpack.c.0.s8 %v3344
        %v3346 = vlaneseq
        %v3347 = vshrl.u32 %v3346, 7
        %v3348 = vsub.s32 %v3345, %v3347
        %v3349 = vrot.slane %v3335, %v3348
        %v3350 = vcombine.high %v3334, 0.0
        %v3352 = vunpack.c.l.s4 1934713408
        %v3353 = vunpack.c.0.s8 %v3352
        %v3354 = vlaneseq
        %v3355 = vshrl.u32 %v3354, 7
        %v3356 = vsub.s32 %v3353, %v3355
        %v3357 = vrot.slane %v3334, %v3356
        %v3359 = vunpack.c.l.s4 1934713408
        %v3360 = vunpack.c.0.s8 %v3359
        %v3361 = vlaneseq
        %v3362 = vshrl.u32 %v3361, 7
        %v3363 = vsub.s32 %v3360, %v3362
        %v3364 = vrot.slane %v3350, %v3363
        %v3365 = vcombine.high %v3342, 0.0
        %v3366 = vcombine.high %v3349, 0.0
        %v3367 = vcombine.high %v3357, 0.0
        %v3368 = vcombine.high %v3364, 0.0
        %v3369 = vcombine.high %v451, 0.0
        %v3371 = vunpack.c.l.s4 1983009808
        %v3372 = vunpack.c.0.s8 %v3371
        %v3373 = vlaneseq
        %v3374 = vshrl.u32 %v3373, 7
        %v3375 = vsub.s32 %v3372, %v3374
        %v3376 = vrot.slane %v451, %v3375
        %v3378 = vunpack.c.l.s4 1983009808
        %v3379 = vunpack.c.0.s8 %v3378
        %v3380 = vlaneseq
        %v3381 = vshrl.u32 %v3380, 7
        %v3382 = vsub.s32 %v3379, %v3381
        %v3383 = vrot.slane %v3369, %v3382
        %v3384 = vcombine.high %v3376, 0.0
        %v3386 = vunpack.c.l.s4 1934713408
        %v3387 = vunpack.c.0.s8 %v3386
        %v3388 = vlaneseq
        %v3389 = vshrl.u32 %v3388, 7
        %v3390 = vsub.s32 %v3387, %v3389
        %v3391 = vrot.slane %v3376, %v3390
        %v3393 = vunpack.c.l.s4 1934713408
        %v3394 = vunpack.c.0.s8 %v3393
        %v3395 = vlaneseq
        %v3396 = vshrl.u32 %v3395, 7
        %v3397 = vsub.s32 %v3394, %v3396
        %v3398 = vrot.slane %v3384, %v3397
        %v3399 = vcombine.high %v3383, 0.0
        %v3401 = vunpack.c.l.s4 1934713408
        %v3402 = vunpack.c.0.s8 %v3401
        %v3403 = vlaneseq
        %v3404 = vshrl.u32 %v3403, 7
        %v3405 = vsub.s32 %v3402, %v3404
        %v3406 = vrot.slane %v3383, %v3405
        %v3408 = vunpack.c.l.s4 1934713408
        %v3409 = vunpack.c.0.s8 %v3408
        %v3410 = vlaneseq
        %v3411 = vshrl.u32 %v3410, 7
        %v3412 = vsub.s32 %v3409, %v3411
        %v3413 = vrot.slane %v3399, %v3412
        %v3414 = vcombine.high %v3391, 0.0
        %v3415 = vcombine.high %v3398, 0.0
        %v3416 = vcombine.high %v3406, 0.0
        %v3417 = vcombine.high %v3413, 0.0
        %v3418 = vcombine.high %v458, 0.0
        %v3420 = vunpack.c.l.s4 1983009808
        %v3421 = vunpack.c.0.s8 %v3420
        %v3422 = vlaneseq
        %v3423 = vshrl.u32 %v3422, 7
        %v3424 = vsub.s32 %v3421, %v3423
        %v3425 = vrot.slane %v458, %v3424
        %v3427 = vunpack.c.l.s4 1983009808
        %v3428 = vunpack.c.0.s8 %v3427
        %v3429 = vlaneseq
        %v3430 = vshrl.u32 %v3429, 7
        %v3431 = vsub.s32 %v3428, %v3430
        %v3432 = vrot.slane %v3418, %v3431
        %v3433 = vcombine.high %v3425, 0.0
        %v3435 = vunpack.c.l.s4 1934713408
        %v3436 = vunpack.c.0.s8 %v3435
        %v3437 = vlaneseq
        %v3438 = vshrl.u32 %v3437, 7
        %v3439 = vsub.s32 %v3436, %v3438
        %v3440 = vrot.slane %v3425, %v3439
        %v3442 = vunpack.c.l.s4 1934713408
        %v3443 = vunpack.c.0.s8 %v3442
        %v3444 = vlaneseq
        %v3445 = vshrl.u32 %v3444, 7
        %v3446 = vsub.s32 %v3443, %v3445
        %v3447 = vrot.slane %v3433, %v3446
        %v3448 = vcombine.high %v3432, 0.0
        %v3450 = vunpack.c.l.s4 1934713408
        %v3451 = vunpack.c.0.s8 %v3450
        %v3452 = vlaneseq
        %v3453 = vshrl.u32 %v3452, 7
        %v3454 = vsub.s32 %v3451, %v3453
        %v3455 = vrot.slane %v3432, %v3454
        %v3457 = vunpack.c.l.s4 1934713408
        %v3458 = vunpack.c.0.s8 %v3457
        %v3459 = vlaneseq
        %v3460 = vshrl.u32 %v3459, 7
        %v3461 = vsub.s32 %v3458, %v3460
        %v3462 = vrot.slane %v3448, %v3461
        %v3463 = vcombine.high %v3440, 0.0
        %v3464 = vcombine.high %v3447, 0.0
        %v3465 = vcombine.high %v3455, 0.0
        %v3466 = vcombine.high %v3462, 0.0
        %v3467 = vcombine.high %v462, 0.0
        %v3469 = vunpack.c.l.s4 1983009808
        %v3470 = vunpack.c.0.s8 %v3469
        %v3471 = vlaneseq
        %v3472 = vshrl.u32 %v3471, 7
        %v3473 = vsub.s32 %v3470, %v3472
        %v3474 = vrot.slane %v462, %v3473
        %v3476 = vunpack.c.l.s4 1983009808
        %v3477 = vunpack.c.0.s8 %v3476
        %v3478 = vlaneseq
        %v3479 = vshrl.u32 %v3478, 7
        %v3480 = vsub.s32 %v3477, %v3479
        %v3481 = vrot.slane %v3467, %v3480
        %v3482 = vcombine.high %v3474, 0.0
        %v3484 = vunpack.c.l.s4 1934713408
        %v3485 = vunpack.c.0.s8 %v3484
        %v3486 = vlaneseq
        %v3487 = vshrl.u32 %v3486, 7
        %v3488 = vsub.s32 %v3485, %v3487
        %v3489 = vrot.slane %v3474, %v3488
        %v3491 = vunpack.c.l.s4 1934713408
        %v3492 = vunpack.c.0.s8 %v3491
        %v3493 = vlaneseq
        %v3494 = vshrl.u32 %v3493, 7
        %v3495 = vsub.s32 %v3492, %v3494
        %v3496 = vrot.slane %v3482, %v3495
        %v3497 = vcombine.high %v3481, 0.0
        %v3499 = vunpack.c.l.s4 1934713408
        %v3500 = vunpack.c.0.s8 %v3499
        %v3501 = vlaneseq
        %v3502 = vshrl.u32 %v3501, 7
        %v3503 = vsub.s32 %v3500, %v3502
        %v3504 = vrot.slane %v3481, %v3503
        %v3506 = vunpack.c.l.s4 1934713408
        %v3507 = vunpack.c.0.s8 %v3506
        %v3508 = vlaneseq
        %v3509 = vshrl.u32 %v3508, 7
        %v3510 = vsub.s32 %v3507, %v3509
        %v3511 = vrot.slane %v3497, %v3510
        %v3512 = vcombine.high %v3489, 0.0
        %v3513 = vcombine.high %v3496, 0.0
        %v3514 = vcombine.high %v3504, 0.0
        %v3515 = vcombine.high %v3511, 0.0
        %v3516 = vcombine.high %v469, 0.0
        %v3518 = vunpack.c.l.s4 1983009808
        %v3519 = vunpack.c.0.s8 %v3518
        %v3520 = vlaneseq
        %v3521 = vshrl.u32 %v3520, 7
        %v3522 = vsub.s32 %v3519, %v3521
        %v3523 = vrot.slane %v469, %v3522
        %v3525 = vunpack.c.l.s4 1983009808
        %v3526 = vunpack.c.0.s8 %v3525
        %v3527 = vlaneseq
        %v3528 = vshrl.u32 %v3527, 7
        %v3529 = vsub.s32 %v3526, %v3528
        %v3530 = vrot.slane %v3516, %v3529
        %v3531 = vcombine.high %v3523, 0.0
        %v3533 = vunpack.c.l.s4 1934713408
        %v3534 = vunpack.c.0.s8 %v3533
        %v3535 = vlaneseq
        %v3536 = vshrl.u32 %v3535, 7
        %v3537 = vsub.s32 %v3534, %v3536
        %v3538 = vrot.slane %v3523, %v3537
        %v3540 = vunpack.c.l.s4 1934713408
        %v3541 = vunpack.c.0.s8 %v3540
        %v3542 = vlaneseq
        %v3543 = vshrl.u32 %v3542, 7
        %v3544 = vsub.s32 %v3541, %v3543
        %v3545 = vrot.slane %v3531, %v3544
        %v3546 = vcombine.high %v3530, 0.0
        %v3548 = vunpack.c.l.s4 1934713408
        %v3549 = vunpack.c.0.s8 %v3548
        %v3550 = vlaneseq
        %v3551 = vshrl.u32 %v3550, 7
        %v3552 = vsub.s32 %v3549, %v3551
        %v3553 = vrot.slane %v3530, %v3552
        %v3555 = vunpack.c.l.s4 1934713408
        %v3556 = vunpack.c.0.s8 %v3555
        %v3557 = vlaneseq
        %v3558 = vshrl.u32 %v3557, 7
        %v3559 = vsub.s32 %v3556, %v3558
        %v3560 = vrot.slane %v3546, %v3559
        %v3561 = vcombine.high %v3538, 0.0
        %v3562 = vcombine.high %v3545, 0.0
        %v3563 = vcombine.high %v3553, 0.0
        %v3564 = vcombine.high %v3560, 0.0
        %v3565 = vcombine.high %v473, 0.0
        %v3567 = vunpack.c.l.s4 1983009808
        %v3568 = vunpack.c.0.s8 %v3567
        %v3569 = vlaneseq
        %v3570 = vshrl.u32 %v3569, 7
        %v3571 = vsub.s32 %v3568, %v3570
        %v3572 = vrot.slane %v473, %v3571
        %v3574 = vunpack.c.l.s4 1983009808
        %v3575 = vunpack.c.0.s8 %v3574
        %v3576 = vlaneseq
        %v3577 = vshrl.u32 %v3576, 7
        %v3578 = vsub.s32 %v3575, %v3577
        %v3579 = vrot.slane %v3565, %v3578
        %v3580 = vcombine.high %v3572, 0.0
        %v3582 = vunpack.c.l.s4 1934713408
        %v3583 = vunpack.c.0.s8 %v3582
        %v3584 = vlaneseq
        %v3585 = vshrl.u32 %v3584, 7
        %v3586 = vsub.s32 %v3583, %v3585
        %v3587 = vrot.slane %v3572, %v3586
        %v3589 = vunpack.c.l.s4 1934713408
        %v3590 = vunpack.c.0.s8 %v3589
        %v3591 = vlaneseq
        %v3592 = vshrl.u32 %v3591, 7
        %v3593 = vsub.s32 %v3590, %v3592
        %v3594 = vrot.slane %v3580, %v3593
        %v3595 = vcombine.high %v3579, 0.0
        %v3597 = vunpack.c.l.s4 1934713408
        %v3598 = vunpack.c.0.s8 %v3597
        %v3599 = vlaneseq
        %v3600 = vshrl.u32 %v3599, 7
        %v3601 = vsub.s32 %v3598, %v3600
        %v3602 = vrot.slane %v3579, %v3601
        %v3604 = vunpack.c.l.s4 1934713408
        %v3605 = vunpack.c.0.s8 %v3604
        %v3606 = vlaneseq
        %v3607 = vshrl.u32 %v3606, 7
        %v3608 = vsub.s32 %v3605, %v3607
        %v3609 = vrot.slane %v3595, %v3608
        %v3610 = vcombine.high %v3587, 0.0
        %v3611 = vcombine.high %v3594, 0.0
        %v3612 = vcombine.high %v3602, 0.0
        %v3613 = vcombine.high %v3609, 0.0
        %v3614 = vcombine.high %v480, 0.0
        %v3616 = vunpack.c.l.s4 1983009808
        %v3617 = vunpack.c.0.s8 %v3616
        %v3618 = vlaneseq
        %v3619 = vshrl.u32 %v3618, 7
        %v3620 = vsub.s32 %v3617, %v3619
        %v3621 = vrot.slane %v480, %v3620
        %v3623 = vunpack.c.l.s4 1983009808
        %v3624 = vunpack.c.0.s8 %v3623
        %v3625 = vlaneseq
        %v3626 = vshrl.u32 %v3625, 7
        %v3627 = vsub.s32 %v3624, %v3626
        %v3628 = vrot.slane %v3614, %v3627
        %v3629 = vcombine.high %v3621, 0.0
        %v3631 = vunpack.c.l.s4 1934713408
        %v3632 = vunpack.c.0.s8 %v3631
        %v3633 = vlaneseq
        %v3634 = vshrl.u32 %v3633, 7
        %v3635 = vsub.s32 %v3632, %v3634
        %v3636 = vrot.slane %v3621, %v3635
        %v3638 = vunpack.c.l.s4 1934713408
        %v3639 = vunpack.c.0.s8 %v3638
        %v3640 = vlaneseq
        %v3641 = vshrl.u32 %v3640, 7
        %v3642 = vsub.s32 %v3639, %v3641
        %v3643 = vrot.slane %v3629, %v3642
        %v3644 = vcombine.high %v3628, 0.0
        %v3646 = vunpack.c.l.s4 1934713408
        %v3647 = vunpack.c.0.s8 %v3646
        %v3648 = vlaneseq
        %v3649 = vshrl.u32 %v3648, 7
        %v3650 = vsub.s32 %v3647, %v3649
        %v3651 = vrot.slane %v3628, %v3650
        %v3653 = vunpack.c.l.s4 1934713408
        %v3654 = vunpack.c.0.s8 %v3653
        %v3655 = vlaneseq
        %v3656 = vshrl.u32 %v3655, 7
        %v3657 = vsub.s32 %v3654, %v3656
        %v3658 = vrot.slane %v3644, %v3657
        %v3659 = vcombine.high %v3636, 0.0
        %v3660 = vcombine.high %v3643, 0.0
        %v3661 = vcombine.high %v3651, 0.0
        %v3662 = vcombine.high %v3658, 0.0
        %v3663 = vcombine.high %v484, 0.0
        %v3665 = vunpack.c.l.s4 1983009808
        %v3666 = vunpack.c.0.s8 %v3665
        %v3667 = vlaneseq
        %v3668 = vshrl.u32 %v3667, 7
        %v3669 = vsub.s32 %v3666, %v3668
        %v3670 = vrot.slane %v484, %v3669
        %v3672 = vunpack.c.l.s4 1983009808
        %v3673 = vunpack.c.0.s8 %v3672
        %v3674 = vlaneseq
        %v3675 = vshrl.u32 %v3674, 7
        %v3676 = vsub.s32 %v3673, %v3675
        %v3677 = vrot.slane %v3663, %v3676
        %v3678 = vcombine.high %v3670, 0.0
        %v3680 = vunpack.c.l.s4 1934713408
        %v3681 = vunpack.c.0.s8 %v3680
        %v3682 = vlaneseq
        %v3683 = vshrl.u32 %v3682, 7
        %v3684 = vsub.s32 %v3681, %v3683
        %v3685 = vrot.slane %v3670, %v3684
        %v3687 = vunpack.c.l.s4 1934713408
        %v3688 = vunpack.c.0.s8 %v3687
        %v3689 = vlaneseq
        %v3690 = vshrl.u32 %v3689, 7
        %v3691 = vsub.s32 %v3688, %v3690
        %v3692 = vrot.slane %v3678, %v3691
        %v3693 = vcombine.high %v3677, 0.0
        %v3695 = vunpack.c.l.s4 1934713408
        %v3696 = vunpack.c.0.s8 %v3695
        %v3697 = vlaneseq
        %v3698 = vshrl.u32 %v3697, 7
        %v3699 = vsub.s32 %v3696, %v3698
        %v3700 = vrot.slane %v3677, %v3699
        %v3702 = vunpack.c.l.s4 1934713408
        %v3703 = vunpack.c.0.s8 %v3702
        %v3704 = vlaneseq
        %v3705 = vshrl.u32 %v3704, 7
        %v3706 = vsub.s32 %v3703, %v3705
        %v3707 = vrot.slane %v3693, %v3706
        %v3708 = vcombine.high %v3685, 0.0
        %v3709 = vcombine.high %v3692, 0.0
        %v3710 = vcombine.high %v3700, 0.0
        %v3711 = vcombine.high %v3707, 0.0
        %v3712 = vcombine.high %v491, 0.0
        %v3714 = vunpack.c.l.s4 1983009808
        %v3715 = vunpack.c.0.s8 %v3714
        %v3716 = vlaneseq
        %v3717 = vshrl.u32 %v3716, 7
        %v3718 = vsub.s32 %v3715, %v3717
        %v3719 = vrot.slane %v491, %v3718
        %v3721 = vunpack.c.l.s4 1983009808
        %v3722 = vunpack.c.0.s8 %v3721
        %v3723 = vlaneseq
        %v3724 = vshrl.u32 %v3723, 7
        %v3725 = vsub.s32 %v3722, %v3724
        %v3726 = vrot.slane %v3712, %v3725
        %v3727 = vcombine.high %v3719, 0.0
        %v3729 = vunpack.c.l.s4 1934713408
        %v3730 = vunpack.c.0.s8 %v3729
        %v3731 = vlaneseq
        %v3732 = vshrl.u32 %v3731, 7
        %v3733 = vsub.s32 %v3730, %v3732
        %v3734 = vrot.slane %v3719, %v3733
        %v3736 = vunpack.c.l.s4 1934713408
        %v3737 = vunpack.c.0.s8 %v3736
        %v3738 = vlaneseq
        %v3739 = vshrl.u32 %v3738, 7
        %v3740 = vsub.s32 %v3737, %v3739
        %v3741 = vrot.slane %v3727, %v3740
        %v3742 = vcombine.high %v3726, 0.0
        %v3744 = vunpack.c.l.s4 1934713408
        %v3745 = vunpack.c.0.s8 %v3744
        %v3746 = vlaneseq
        %v3747 = vshrl.u32 %v3746, 7
        %v3748 = vsub.s32 %v3745, %v3747
        %v3749 = vrot.slane %v3726, %v3748
        %v3751 = vunpack.c.l.s4 1934713408
        %v3752 = vunpack.c.0.s8 %v3751
        %v3753 = vlaneseq
        %v3754 = vshrl.u32 %v3753, 7
        %v3755 = vsub.s32 %v3752, %v3754
        %v3756 = vrot.slane %v3742, %v3755
        %v3757 = vcombine.high %v3734, 0.0
        %v3758 = vcombine.high %v3741, 0.0
        %v3759 = vcombine.high %v3749, 0.0
        %v3760 = vcombine.high %v3756, 0.0
        %v3761 = vcombine.high %v495, 0.0
        %v3763 = vunpack.c.l.s4 1983009808
        %v3764 = vunpack.c.0.s8 %v3763
        %v3765 = vlaneseq
        %v3766 = vshrl.u32 %v3765, 7
        %v3767 = vsub.s32 %v3764, %v3766
        %v3768 = vrot.slane %v495, %v3767
        %v3770 = vunpack.c.l.s4 1983009808
        %v3771 = vunpack.c.0.s8 %v3770
        %v3772 = vlaneseq
        %v3773 = vshrl.u32 %v3772, 7
        %v3774 = vsub.s32 %v3771, %v3773
        %v3775 = vrot.slane %v3761, %v3774
        %v3776 = vcombine.high %v3768, 0.0
        %v3778 = vunpack.c.l.s4 1934713408
        %v3779 = vunpack.c.0.s8 %v3778
        %v3780 = vlaneseq
        %v3781 = vshrl.u32 %v3780, 7
        %v3782 = vsub.s32 %v3779, %v3781
        %v3783 = vrot.slane %v3768, %v3782
        %v3785 = vunpack.c.l.s4 1934713408
        %v3786 = vunpack.c.0.s8 %v3785
        %v3787 = vlaneseq
        %v3788 = vshrl.u32 %v3787, 7
        %v3789 = vsub.s32 %v3786, %v3788
        %v3790 = vrot.slane %v3776, %v3789
        %v3791 = vcombine.high %v3775, 0.0
        %v3793 = vunpack.c.l.s4 1934713408
        %v3794 = vunpack.c.0.s8 %v3793
        %v3795 = vlaneseq
        %v3796 = vshrl.u32 %v3795, 7
        %v3797 = vsub.s32 %v3794, %v3796
        %v3798 = vrot.slane %v3775, %v3797
        %v3800 = vunpack.c.l.s4 1934713408
        %v3801 = vunpack.c.0.s8 %v3800
        %v3802 = vlaneseq
        %v3803 = vshrl.u32 %v3802, 7
        %v3804 = vsub.s32 %v3801, %v3803
        %v3805 = vrot.slane %v3791, %v3804
        %v3806 = vcombine.high %v3783, 0.0
        %v3807 = vcombine.high %v3790, 0.0
        %v3808 = vcombine.high %v3798, 0.0
        %v3809 = vcombine.high %v3805, 0.0
        %v3810 = vcombine.high %v502, 0.0
        %v3812 = vunpack.c.l.s4 1983009808
        %v3813 = vunpack.c.0.s8 %v3812
        %v3814 = vlaneseq
        %v3815 = vshrl.u32 %v3814, 7
        %v3816 = vsub.s32 %v3813, %v3815
        %v3817 = vrot.slane %v502, %v3816
        %v3819 = vunpack.c.l.s4 1983009808
        %v3820 = vunpack.c.0.s8 %v3819
        %v3821 = vlaneseq
        %v3822 = vshrl.u32 %v3821, 7
        %v3823 = vsub.s32 %v3820, %v3822
        %v3824 = vrot.slane %v3810, %v3823
        %v3825 = vcombine.high %v3817, 0.0
        %v3827 = vunpack.c.l.s4 1934713408
        %v3828 = vunpack.c.0.s8 %v3827
        %v3829 = vlaneseq
        %v3830 = vshrl.u32 %v3829, 7
        %v3831 = vsub.s32 %v3828, %v3830
        %v3832 = vrot.slane %v3817, %v3831
        %v3834 = vunpack.c.l.s4 1934713408
        %v3835 = vunpack.c.0.s8 %v3834
        %v3836 = vlaneseq
        %v3837 = vshrl.u32 %v3836, 7
        %v3838 = vsub.s32 %v3835, %v3837
        %v3839 = vrot.slane %v3825, %v3838
        %v3840 = vcombine.high %v3824, 0.0
        %v3842 = vunpack.c.l.s4 1934713408
        %v3843 = vunpack.c.0.s8 %v3842
        %v3844 = vlaneseq
        %v3845 = vshrl.u32 %v3844, 7
        %v3846 = vsub.s32 %v3843, %v3845
        %v3847 = vrot.slane %v3824, %v3846
        %v3849 = vunpack.c.l.s4 1934713408
        %v3850 = vunpack.c.0.s8 %v3849
        %v3851 = vlaneseq
        %v3852 = vshrl.u32 %v3851, 7
        %v3853 = vsub.s32 %v3850, %v3852
        %v3854 = vrot.slane %v3840, %v3853
        %v3855 = vcombine.high %v3832, 0.0
        %v3856 = vcombine.high %v3839, 0.0
        %v3857 = vcombine.high %v3847, 0.0
        %v3858 = vcombine.high %v3854, 0.0
        %v3859 = vcombine.high %v506, 0.0
        %v3861 = vunpack.c.l.s4 1983009808
        %v3862 = vunpack.c.0.s8 %v3861
        %v3863 = vlaneseq
        %v3864 = vshrl.u32 %v3863, 7
        %v3865 = vsub.s32 %v3862, %v3864
        %v3866 = vrot.slane %v506, %v3865
        %v3868 = vunpack.c.l.s4 1983009808
        %v3869 = vunpack.c.0.s8 %v3868
        %v3870 = vlaneseq
        %v3871 = vshrl.u32 %v3870, 7
        %v3872 = vsub.s32 %v3869, %v3871
        %v3873 = vrot.slane %v3859, %v3872
        %v3874 = vcombine.high %v3866, 0.0
        %v3876 = vunpack.c.l.s4 1934713408
        %v3877 = vunpack.c.0.s8 %v3876
        %v3878 = vlaneseq
        %v3879 = vshrl.u32 %v3878, 7
        %v3880 = vsub.s32 %v3877, %v3879
        %v3881 = vrot.slane %v3866, %v3880
        %v3883 = vunpack.c.l.s4 1934713408
        %v3884 = vunpack.c.0.s8 %v3883
        %v3885 = vlaneseq
        %v3886 = vshrl.u32 %v3885, 7
        %v3887 = vsub.s32 %v3884, %v3886
        %v3888 = vrot.slane %v3874, %v3887
        %v3889 = vcombine.high %v3873, 0.0
        %v3891 = vunpack.c.l.s4 1934713408
        %v3892 = vunpack.c.0.s8 %v3891
        %v3893 = vlaneseq
        %v3894 = vshrl.u32 %v3893, 7
        %v3895 = vsub.s32 %v3892, %v3894
        %v3896 = vrot.slane %v3873, %v3895
        %v3898 = vunpack.c.l.s4 1934713408
        %v3899 = vunpack.c.0.s8 %v3898
        %v3900 = vlaneseq
        %v3901 = vshrl.u32 %v3900, 7
        %v3902 = vsub.s32 %v3899, %v3901
        %v3903 = vrot.slane %v3889, %v3902
        %v3904 = vcombine.high %v3881, 0.0
        %v3905 = vcombine.high %v3888, 0.0
        %v3906 = vcombine.high %v3896, 0.0
        %v3907 = vcombine.high %v3903, 0.0
        %v3908 = vcombine.high %v513, 0.0
        %v3910 = vunpack.c.l.s4 1983009808
        %v3911 = vunpack.c.0.s8 %v3910
        %v3912 = vlaneseq
        %v3913 = vshrl.u32 %v3912, 7
        %v3914 = vsub.s32 %v3911, %v3913
        %v3915 = vrot.slane %v513, %v3914
        %v3917 = vunpack.c.l.s4 1983009808
        %v3918 = vunpack.c.0.s8 %v3917
        %v3919 = vlaneseq
        %v3920 = vshrl.u32 %v3919, 7
        %v3921 = vsub.s32 %v3918, %v3920
        %v3922 = vrot.slane %v3908, %v3921
        %v3923 = vcombine.high %v3915, 0.0
        %v3925 = vunpack.c.l.s4 1934713408
        %v3926 = vunpack.c.0.s8 %v3925
        %v3927 = vlaneseq
        %v3928 = vshrl.u32 %v3927, 7
        %v3929 = vsub.s32 %v3926, %v3928
        %v3930 = vrot.slane %v3915, %v3929
        %v3932 = vunpack.c.l.s4 1934713408
        %v3933 = vunpack.c.0.s8 %v3932
        %v3934 = vlaneseq
        %v3935 = vshrl.u32 %v3934, 7
        %v3936 = vsub.s32 %v3933, %v3935
        %v3937 = vrot.slane %v3923, %v3936
        %v3938 = vcombine.high %v3922, 0.0
        %v3940 = vunpack.c.l.s4 1934713408
        %v3941 = vunpack.c.0.s8 %v3940
        %v3942 = vlaneseq
        %v3943 = vshrl.u32 %v3942, 7
        %v3944 = vsub.s32 %v3941, %v3943
        %v3945 = vrot.slane %v3922, %v3944
        %v3947 = vunpack.c.l.s4 1934713408
        %v3948 = vunpack.c.0.s8 %v3947
        %v3949 = vlaneseq
        %v3950 = vshrl.u32 %v3949, 7
        %v3951 = vsub.s32 %v3948, %v3950
        %v3952 = vrot.slane %v3938, %v3951
        %v3953 = vcombine.high %v3930, 0.0
        %v3954 = vcombine.high %v3937, 0.0
        %v3955 = vcombine.high %v3945, 0.0
        %v3956 = vcombine.high %v3952, 0.0
        %v3957 = vcombine.high %v517, 0.0
        %v3959 = vunpack.c.l.s4 1983009808
        %v3960 = vunpack.c.0.s8 %v3959
        %v3961 = vlaneseq
        %v3962 = vshrl.u32 %v3961, 7
        %v3963 = vsub.s32 %v3960, %v3962
        %v3964 = vrot.slane %v517, %v3963
        %v3966 = vunpack.c.l.s4 1983009808
        %v3967 = vunpack.c.0.s8 %v3966
        %v3968 = vlaneseq
        %v3969 = vshrl.u32 %v3968, 7
        %v3970 = vsub.s32 %v3967, %v3969
        %v3971 = vrot.slane %v3957, %v3970
        %v3972 = vcombine.high %v3964, 0.0
        %v3974 = vunpack.c.l.s4 1934713408
        %v3975 = vunpack.c.0.s8 %v3974
        %v3976 = vlaneseq
        %v3977 = vshrl.u32 %v3976, 7
        %v3978 = vsub.s32 %v3975, %v3977
        %v3979 = vrot.slane %v3964, %v3978
        %v3981 = vunpack.c.l.s4 1934713408
        %v3982 = vunpack.c.0.s8 %v3981
        %v3983 = vlaneseq
        %v3984 = vshrl.u32 %v3983, 7
        %v3985 = vsub.s32 %v3982, %v3984
        %v3986 = vrot.slane %v3972, %v3985
        %v3987 = vcombine.high %v3971, 0.0
        %v3989 = vunpack.c.l.s4 1934713408
        %v3990 = vunpack.c.0.s8 %v3989
        %v3991 = vlaneseq
        %v3992 = vshrl.u32 %v3991, 7
        %v3993 = vsub.s32 %v3990, %v3992
        %v3994 = vrot.slane %v3971, %v3993
        %v3996 = vunpack.c.l.s4 1934713408
        %v3997 = vunpack.c.0.s8 %v3996
        %v3998 = vlaneseq
        %v3999 = vshrl.u32 %v3998, 7
        %v4000 = vsub.s32 %v3997, %v3999
        %v4001 = vrot.slane %v3987, %v4000
        %v4002 = vcombine.high %v3979, 0.0
        %v4003 = vcombine.high %v3986, 0.0
        %v4004 = vcombine.high %v3994, 0.0
        %v4005 = vcombine.high %v4001, 0.0
        %v4006 = vcombine.high %v524, 0.0
        %v4008 = vunpack.c.l.s4 1983009808
        %v4009 = vunpack.c.0.s8 %v4008
        %v4010 = vlaneseq
        %v4011 = vshrl.u32 %v4010, 7
        %v4012 = vsub.s32 %v4009, %v4011
        %v4013 = vrot.slane %v524, %v4012
        %v4015 = vunpack.c.l.s4 1983009808
        %v4016 = vunpack.c.0.s8 %v4015
        %v4017 = vlaneseq
        %v4018 = vshrl.u32 %v4017, 7
        %v4019 = vsub.s32 %v4016, %v4018
        %v4020 = vrot.slane %v4006, %v4019
        %v4021 = vcombine.high %v4013, 0.0
        %v4023 = vunpack.c.l.s4 1934713408
        %v4024 = vunpack.c.0.s8 %v4023
        %v4025 = vlaneseq
        %v4026 = vshrl.u32 %v4025, 7
        %v4027 = vsub.s32 %v4024, %v4026
        %v4028 = vrot.slane %v4013, %v4027
        %v4030 = vunpack.c.l.s4 1934713408
        %v4031 = vunpack.c.0.s8 %v4030
        %v4032 = vlaneseq
        %v4033 = vshrl.u32 %v4032, 7
        %v4034 = vsub.s32 %v4031, %v4033
        %v4035 = vrot.slane %v4021, %v4034
        %v4036 = vcombine.high %v4020, 0.0
        %v4038 = vunpack.c.l.s4 1934713408
        %v4039 = vunpack.c.0.s8 %v4038
        %v4040 = vlaneseq
        %v4041 = vshrl.u32 %v4040, 7
        %v4042 = vsub.s32 %v4039, %v4041
        %v4043 = vrot.slane %v4020, %v4042
        %v4045 = vunpack.c.l.s4 1934713408
        %v4046 = vunpack.c.0.s8 %v4045
        %v4047 = vlaneseq
        %v4048 = vshrl.u32 %v4047, 7
        %v4049 = vsub.s32 %v4046, %v4048
        %v4050 = vrot.slane %v4036, %v4049
        %v4051 = vcombine.high %v4028, 0.0
        %v4052 = vcombine.high %v4035, 0.0
        %v4053 = vcombine.high %v4043, 0.0
        %v4054 = vcombine.high %v4050, 0.0
        %v4055 = vcombine.high %v528, 0.0
        %v4057 = vunpack.c.l.s4 1983009808
        %v4058 = vunpack.c.0.s8 %v4057
        %v4059 = vlaneseq
        %v4060 = vshrl.u32 %v4059, 7
        %v4061 = vsub.s32 %v4058, %v4060
        %v4062 = vrot.slane %v528, %v4061
        %v4064 = vunpack.c.l.s4 1983009808
        %v4065 = vunpack.c.0.s8 %v4064
        %v4066 = vlaneseq
        %v4067 = vshrl.u32 %v4066, 7
        %v4068 = vsub.s32 %v4065, %v4067
        %v4069 = vrot.slane %v4055, %v4068
        %v4070 = vcombine.high %v4062, 0.0
        %v4072 = vunpack.c.l.s4 1934713408
        %v4073 = vunpack.c.0.s8 %v4072
        %v4074 = vlaneseq
        %v4075 = vshrl.u32 %v4074, 7
        %v4076 = vsub.s32 %v4073, %v4075
        %v4077 = vrot.slane %v4062, %v4076
        %v4079 = vunpack.c.l.s4 1934713408
        %v4080 = vunpack.c.0.s8 %v4079
        %v4081 = vlaneseq
        %v4082 = vshrl.u32 %v4081, 7
        %v4083 = vsub.s32 %v4080, %v4082
        %v4084 = vrot.slane %v4070, %v4083
        %v4085 = vcombine.high %v4069, 0.0
        %v4087 = vunpack.c.l.s4 1934713408
        %v4088 = vunpack.c.0.s8 %v4087
        %v4089 = vlaneseq
        %v4090 = vshrl.u32 %v4089, 7
        %v4091 = vsub.s32 %v4088, %v4090
        %v4092 = vrot.slane %v4069, %v4091
        %v4094 = vunpack.c.l.s4 1934713408
        %v4095 = vunpack.c.0.s8 %v4094
        %v4096 = vlaneseq
        %v4097 = vshrl.u32 %v4096, 7
        %v4098 = vsub.s32 %v4095, %v4097
        %v4099 = vrot.slane %v4085, %v4098
        %v4100 = vcombine.high %v4077, 0.0
        %v4101 = vcombine.high %v4084, 0.0
        %v4102 = vcombine.high %v4092, 0.0
        %v4103 = vcombine.high %v4099, 0.0
        %v4104 = vcombine.high %v535, 0.0
        %v4106 = vunpack.c.l.s4 1983009808
        %v4107 = vunpack.c.0.s8 %v4106
        %v4108 = vlaneseq
        %v4109 = vshrl.u32 %v4108, 7
        %v4110 = vsub.s32 %v4107, %v4109
        %v4111 = vrot.slane %v535, %v4110
        %v4113 = vunpack.c.l.s4 1983009808
        %v4114 = vunpack.c.0.s8 %v4113
        %v4115 = vlaneseq
        %v4116 = vshrl.u32 %v4115, 7
        %v4117 = vsub.s32 %v4114, %v4116
        %v4118 = vrot.slane %v4104, %v4117
        %v4119 = vcombine.high %v4111, 0.0
        %v4121 = vunpack.c.l.s4 1934713408
        %v4122 = vunpack.c.0.s8 %v4121
        %v4123 = vlaneseq
        %v4124 = vshrl.u32 %v4123, 7
        %v4125 = vsub.s32 %v4122, %v4124
        %v4126 = vrot.slane %v4111, %v4125
        %v4128 = vunpack.c.l.s4 1934713408
        %v4129 = vunpack.c.0.s8 %v4128
        %v4130 = vlaneseq
        %v4131 = vshrl.u32 %v4130, 7
        %v4132 = vsub.s32 %v4129, %v4131
        %v4133 = vrot.slane %v4119, %v4132
        %v4134 = vcombine.high %v4118, 0.0
        %v4136 = vunpack.c.l.s4 1934713408
        %v4137 = vunpack.c.0.s8 %v4136
        %v4138 = vlaneseq
        %v4139 = vshrl.u32 %v4138, 7
        %v4140 = vsub.s32 %v4137, %v4139
        %v4141 = vrot.slane %v4118, %v4140
        %v4143 = vunpack.c.l.s4 1934713408
        %v4144 = vunpack.c.0.s8 %v4143
        %v4145 = vlaneseq
        %v4146 = vshrl.u32 %v4145, 7
        %v4147 = vsub.s32 %v4144, %v4146
        %v4148 = vrot.slane %v4134, %v4147
        %v4149 = vcombine.high %v4126, 0.0
        %v4150 = vcombine.high %v4133, 0.0
        %v4151 = vcombine.high %v4141, 0.0
        %v4152 = vcombine.high %v4148, 0.0
        %v4153 = vcombine.high %v539, 0.0
        %v4155 = vunpack.c.l.s4 1983009808
        %v4156 = vunpack.c.0.s8 %v4155
        %v4157 = vlaneseq
        %v4158 = vshrl.u32 %v4157, 7
        %v4159 = vsub.s32 %v4156, %v4158
        %v4160 = vrot.slane %v539, %v4159
        %v4162 = vunpack.c.l.s4 1983009808
        %v4163 = vunpack.c.0.s8 %v4162
        %v4164 = vlaneseq
        %v4165 = vshrl.u32 %v4164, 7
        %v4166 = vsub.s32 %v4163, %v4165
        %v4167 = vrot.slane %v4153, %v4166
        %v4168 = vcombine.high %v4160, 0.0
        %v4170 = vunpack.c.l.s4 1934713408
        %v4171 = vunpack.c.0.s8 %v4170
        %v4172 = vlaneseq
        %v4173 = vshrl.u32 %v4172, 7
        %v4174 = vsub.s32 %v4171, %v4173
        %v4175 = vrot.slane %v4160, %v4174
        %v4177 = vunpack.c.l.s4 1934713408
        %v4178 = vunpack.c.0.s8 %v4177
        %v4179 = vlaneseq
        %v4180 = vshrl.u32 %v4179, 7
        %v4181 = vsub.s32 %v4178, %v4180
        %v4182 = vrot.slane %v4168, %v4181
        %v4183 = vcombine.high %v4167, 0.0
        %v4185 = vunpack.c.l.s4 1934713408
        %v4186 = vunpack.c.0.s8 %v4185
        %v4187 = vlaneseq
        %v4188 = vshrl.u32 %v4187, 7
        %v4189 = vsub.s32 %v4186, %v4188
        %v4190 = vrot.slane %v4167, %v4189
        %v4192 = vunpack.c.l.s4 1934713408
        %v4193 = vunpack.c.0.s8 %v4192
        %v4194 = vlaneseq
        %v4195 = vshrl.u32 %v4194, 7
        %v4196 = vsub.s32 %v4193, %v4195
        %v4197 = vrot.slane %v4183, %v4196
        %v4198 = vcombine.high %v4175, 0.0
        %v4199 = vcombine.high %v4182, 0.0
        %v4200 = vcombine.high %v4190, 0.0
        %v4201 = vcombine.high %v4197, 0.0
        %v4202 = vcombine.high %v546, 0.0
        %v4204 = vunpack.c.l.s4 1983009808
        %v4205 = vunpack.c.0.s8 %v4204
        %v4206 = vlaneseq
        %v4207 = vshrl.u32 %v4206, 7
        %v4208 = vsub.s32 %v4205, %v4207
        %v4209 = vrot.slane %v546, %v4208
        %v4211 = vunpack.c.l.s4 1983009808
        %v4212 = vunpack.c.0.s8 %v4211
        %v4213 = vlaneseq
        %v4214 = vshrl.u32 %v4213, 7
        %v4215 = vsub.s32 %v4212, %v4214
        %v4216 = vrot.slane %v4202, %v4215
        %v4217 = vcombine.high %v4209, 0.0
        %v4219 = vunpack.c.l.s4 1934713408
        %v4220 = vunpack.c.0.s8 %v4219
        %v4221 = vlaneseq
        %v4222 = vshrl.u32 %v4221, 7
        %v4223 = vsub.s32 %v4220, %v4222
        %v4224 = vrot.slane %v4209, %v4223
        %v4226 = vunpack.c.l.s4 1934713408
        %v4227 = vunpack.c.0.s8 %v4226
        %v4228 = vlaneseq
        %v4229 = vshrl.u32 %v4228, 7
        %v4230 = vsub.s32 %v4227, %v4229
        %v4231 = vrot.slane %v4217, %v4230
        %v4232 = vcombine.high %v4216, 0.0
        %v4234 = vunpack.c.l.s4 1934713408
        %v4235 = vunpack.c.0.s8 %v4234
        %v4236 = vlaneseq
        %v4237 = vshrl.u32 %v4236, 7
        %v4238 = vsub.s32 %v4235, %v4237
        %v4239 = vrot.slane %v4216, %v4238
        %v4241 = vunpack.c.l.s4 1934713408
        %v4242 = vunpack.c.0.s8 %v4241
        %v4243 = vlaneseq
        %v4244 = vshrl.u32 %v4243, 7
        %v4245 = vsub.s32 %v4242, %v4244
        %v4246 = vrot.slane %v4232, %v4245
        %v4247 = vcombine.high %v4224, 0.0
        %v4248 = vcombine.high %v4231, 0.0
        %v4249 = vcombine.high %v4239, 0.0
        %v4250 = vcombine.high %v4246, 0.0
        %v4251 = vcombine.high %v550, 0.0
        %v4253 = vunpack.c.l.s4 1983009808
        %v4254 = vunpack.c.0.s8 %v4253
        %v4255 = vlaneseq
        %v4256 = vshrl.u32 %v4255, 7
        %v4257 = vsub.s32 %v4254, %v4256
        %v4258 = vrot.slane %v550, %v4257
        %v4260 = vunpack.c.l.s4 1983009808
        %v4261 = vunpack.c.0.s8 %v4260
        %v4262 = vlaneseq
        %v4263 = vshrl.u32 %v4262, 7
        %v4264 = vsub.s32 %v4261, %v4263
        %v4265 = vrot.slane %v4251, %v4264
        %v4266 = vcombine.high %v4258, 0.0
        %v4268 = vunpack.c.l.s4 1934713408
        %v4269 = vunpack.c.0.s8 %v4268
        %v4270 = vlaneseq
        %v4271 = vshrl.u32 %v4270, 7
        %v4272 = vsub.s32 %v4269, %v4271
        %v4273 = vrot.slane %v4258, %v4272
        %v4275 = vunpack.c.l.s4 1934713408
        %v4276 = vunpack.c.0.s8 %v4275
        %v4277 = vlaneseq
        %v4278 = vshrl.u32 %v4277, 7
        %v4279 = vsub.s32 %v4276, %v4278
        %v4280 = vrot.slane %v4266, %v4279
        %v4281 = vcombine.high %v4265, 0.0
        %v4283 = vunpack.c.l.s4 1934713408
        %v4284 = vunpack.c.0.s8 %v4283
        %v4285 = vlaneseq
        %v4286 = vshrl.u32 %v4285, 7
        %v4287 = vsub.s32 %v4284, %v4286
        %v4288 = vrot.slane %v4265, %v4287
        %v4290 = vunpack.c.l.s4 1934713408
        %v4291 = vunpack.c.0.s8 %v4290
        %v4292 = vlaneseq
        %v4293 = vshrl.u32 %v4292, 7
        %v4294 = vsub.s32 %v4291, %v4293
        %v4295 = vrot.slane %v4281, %v4294
        %v4296 = vcombine.high %v4273, 0.0
        %v4297 = vcombine.high %v4280, 0.0
        %v4298 = vcombine.high %v4288, 0.0
        %v4299 = vcombine.high %v4295, 0.0
        %v4300 = vcombine.high %v557, 0.0
        %v4302 = vunpack.c.l.s4 1983009808
        %v4303 = vunpack.c.0.s8 %v4302
        %v4304 = vlaneseq
        %v4305 = vshrl.u32 %v4304, 7
        %v4306 = vsub.s32 %v4303, %v4305
        %v4307 = vrot.slane %v557, %v4306
        %v4309 = vunpack.c.l.s4 1983009808
        %v4310 = vunpack.c.0.s8 %v4309
        %v4311 = vlaneseq
        %v4312 = vshrl.u32 %v4311, 7
        %v4313 = vsub.s32 %v4310, %v4312
        %v4314 = vrot.slane %v4300, %v4313
        %v4315 = vcombine.high %v4307, 0.0
        %v4317 = vunpack.c.l.s4 1934713408
        %v4318 = vunpack.c.0.s8 %v4317
        %v4319 = vlaneseq
        %v4320 = vshrl.u32 %v4319, 7
        %v4321 = vsub.s32 %v4318, %v4320
        %v4322 = vrot.slane %v4307, %v4321
        %v4324 = vunpack.c.l.s4 1934713408
        %v4325 = vunpack.c.0.s8 %v4324
        %v4326 = vlaneseq
        %v4327 = vshrl.u32 %v4326, 7
        %v4328 = vsub.s32 %v4325, %v4327
        %v4329 = vrot.slane %v4315, %v4328
        %v4330 = vcombine.high %v4314, 0.0
        %v4332 = vunpack.c.l.s4 1934713408
        %v4333 = vunpack.c.0.s8 %v4332
        %v4334 = vlaneseq
        %v4335 = vshrl.u32 %v4334, 7
        %v4336 = vsub.s32 %v4333, %v4335
        %v4337 = vrot.slane %v4314, %v4336
        %v4339 = vunpack.c.l.s4 1934713408
        %v4340 = vunpack.c.0.s8 %v4339
        %v4341 = vlaneseq
        %v4342 = vshrl.u32 %v4341, 7
        %v4343 = vsub.s32 %v4340, %v4342
        %v4344 = vrot.slane %v4330, %v4343
        %v4345 = vcombine.high %v4322, 0.0
        %v4346 = vcombine.high %v4329, 0.0
        %v4347 = vcombine.high %v4337, 0.0
        %v4348 = vcombine.high %v4344, 0.0
        %v4349 = vcombine.high %v561, 0.0
        %v4351 = vunpack.c.l.s4 1983009808
        %v4352 = vunpack.c.0.s8 %v4351
        %v4353 = vlaneseq
        %v4354 = vshrl.u32 %v4353, 7
        %v4355 = vsub.s32 %v4352, %v4354
        %v4356 = vrot.slane %v561, %v4355
        %v4358 = vunpack.c.l.s4 1983009808
        %v4359 = vunpack.c.0.s8 %v4358
        %v4360 = vlaneseq
        %v4361 = vshrl.u32 %v4360, 7
        %v4362 = vsub.s32 %v4359, %v4361
        %v4363 = vrot.slane %v4349, %v4362
        %v4364 = vcombine.high %v4356, 0.0
        %v4366 = vunpack.c.l.s4 1934713408
        %v4367 = vunpack.c.0.s8 %v4366
        %v4368 = vlaneseq
        %v4369 = vshrl.u32 %v4368, 7
        %v4370 = vsub.s32 %v4367, %v4369
        %v4371 = vrot.slane %v4356, %v4370
        %v4373 = vunpack.c.l.s4 1934713408
        %v4374 = vunpack.c.0.s8 %v4373
        %v4375 = vlaneseq
        %v4376 = vshrl.u32 %v4375, 7
        %v4377 = vsub.s32 %v4374, %v4376
        %v4378 = vrot.slane %v4364, %v4377
        %v4379 = vcombine.high %v4363, 0.0
        %v4381 = vunpack.c.l.s4 1934713408
        %v4382 = vunpack.c.0.s8 %v4381
        %v4383 = vlaneseq
        %v4384 = vshrl.u32 %v4383, 7
        %v4385 = vsub.s32 %v4382, %v4384
        %v4386 = vrot.slane %v4363, %v4385
        %v4388 = vunpack.c.l.s4 1934713408
        %v4389 = vunpack.c.0.s8 %v4388
        %v4390 = vlaneseq
        %v4391 = vshrl.u32 %v4390, 7
        %v4392 = vsub.s32 %v4389, %v4391
        %v4393 = vrot.slane %v4379, %v4392
        %v4394 = vcombine.high %v4371, 0.0
        %v4395 = vcombine.high %v4378, 0.0
        %v4396 = vcombine.high %v4386, 0.0
        %v4397 = vcombine.high %v4393, 0.0
        %v4398 = vcombine.high %v568, 0.0
        %v4400 = vunpack.c.l.s4 1983009808
        %v4401 = vunpack.c.0.s8 %v4400
        %v4402 = vlaneseq
        %v4403 = vshrl.u32 %v4402, 7
        %v4404 = vsub.s32 %v4401, %v4403
        %v4405 = vrot.slane %v568, %v4404
        %v4407 = vunpack.c.l.s4 1983009808
        %v4408 = vunpack.c.0.s8 %v4407
        %v4409 = vlaneseq
        %v4410 = vshrl.u32 %v4409, 7
        %v4411 = vsub.s32 %v4408, %v4410
        %v4412 = vrot.slane %v4398, %v4411
        %v4413 = vcombine.high %v4405, 0.0
        %v4415 = vunpack.c.l.s4 1934713408
        %v4416 = vunpack.c.0.s8 %v4415
        %v4417 = vlaneseq
        %v4418 = vshrl.u32 %v4417, 7
        %v4419 = vsub.s32 %v4416, %v4418
        %v4420 = vrot.slane %v4405, %v4419
        %v4422 = vunpack.c.l.s4 1934713408
        %v4423 = vunpack.c.0.s8 %v4422
        %v4424 = vlaneseq
        %v4425 = vshrl.u32 %v4424, 7
        %v4426 = vsub.s32 %v4423, %v4425
        %v4427 = vrot.slane %v4413, %v4426
        %v4428 = vcombine.high %v4412, 0.0
        %v4430 = vunpack.c.l.s4 1934713408
        %v4431 = vunpack.c.0.s8 %v4430
        %v4432 = vlaneseq
        %v4433 = vshrl.u32 %v4432, 7
        %v4434 = vsub.s32 %v4431, %v4433
        %v4435 = vrot.slane %v4412, %v4434
        %v4437 = vunpack.c.l.s4 1934713408
        %v4438 = vunpack.c.0.s8 %v4437
        %v4439 = vlaneseq
        %v4440 = vshrl.u32 %v4439, 7
        %v4441 = vsub.s32 %v4438, %v4440
        %v4442 = vrot.slane %v4428, %v4441
        %v4443 = vcombine.high %v4420, 0.0
        %v4444 = vcombine.high %v4427, 0.0
        %v4445 = vcombine.high %v4435, 0.0
        %v4446 = vcombine.high %v4442, 0.0
        %v4447 = vcombine.high %v572, 0.0
        %v4449 = vunpack.c.l.s4 1983009808
        %v4450 = vunpack.c.0.s8 %v4449
        %v4451 = vlaneseq
        %v4452 = vshrl.u32 %v4451, 7
        %v4453 = vsub.s32 %v4450, %v4452
        %v4454 = vrot.slane %v572, %v4453
        %v4456 = vunpack.c.l.s4 1983009808
        %v4457 = vunpack.c.0.s8 %v4456
        %v4458 = vlaneseq
        %v4459 = vshrl.u32 %v4458, 7
        %v4460 = vsub.s32 %v4457, %v4459
        %v4461 = vrot.slane %v4447, %v4460
        %v4462 = vcombine.high %v4454, 0.0
        %v4464 = vunpack.c.l.s4 1934713408
        %v4465 = vunpack.c.0.s8 %v4464
        %v4466 = vlaneseq
        %v4467 = vshrl.u32 %v4466, 7
        %v4468 = vsub.s32 %v4465, %v4467
        %v4469 = vrot.slane %v4454, %v4468
        %v4471 = vunpack.c.l.s4 1934713408
        %v4472 = vunpack.c.0.s8 %v4471
        %v4473 = vlaneseq
        %v4474 = vshrl.u32 %v4473, 7
        %v4475 = vsub.s32 %v4472, %v4474
        %v4476 = vrot.slane %v4462, %v4475
        %v4477 = vcombine.high %v4461, 0.0
        %v4479 = vunpack.c.l.s4 1934713408
        %v4480 = vunpack.c.0.s8 %v4479
        %v4481 = vlaneseq
        %v4482 = vshrl.u32 %v4481, 7
        %v4483 = vsub.s32 %v4480, %v4482
        %v4484 = vrot.slane %v4461, %v4483
        %v4486 = vunpack.c.l.s4 1934713408
        %v4487 = vunpack.c.0.s8 %v4486
        %v4488 = vlaneseq
        %v4489 = vshrl.u32 %v4488, 7
        %v4490 = vsub.s32 %v4487, %v4489
        %v4491 = vrot.slane %v4477, %v4490
        %v4492 = vcombine.high %v4469, 0.0
        %v4493 = vcombine.high %v4476, 0.0
        %v4494 = vcombine.high %v4484, 0.0
        %v4495 = vcombine.high %v4491, 0.0
        %v4496 = vcombine.high %v579, 0.0
        %v4498 = vunpack.c.l.s4 1983009808
        %v4499 = vunpack.c.0.s8 %v4498
        %v4500 = vlaneseq
        %v4501 = vshrl.u32 %v4500, 7
        %v4502 = vsub.s32 %v4499, %v4501
        %v4503 = vrot.slane %v579, %v4502
        %v4505 = vunpack.c.l.s4 1983009808
        %v4506 = vunpack.c.0.s8 %v4505
        %v4507 = vlaneseq
        %v4508 = vshrl.u32 %v4507, 7
        %v4509 = vsub.s32 %v4506, %v4508
        %v4510 = vrot.slane %v4496, %v4509
        %v4511 = vcombine.high %v4503, 0.0
        %v4513 = vunpack.c.l.s4 1934713408
        %v4514 = vunpack.c.0.s8 %v4513
        %v4515 = vlaneseq
        %v4516 = vshrl.u32 %v4515, 7
        %v4517 = vsub.s32 %v4514, %v4516
        %v4518 = vrot.slane %v4503, %v4517
        %v4520 = vunpack.c.l.s4 1934713408
        %v4521 = vunpack.c.0.s8 %v4520
        %v4522 = vlaneseq
        %v4523 = vshrl.u32 %v4522, 7
        %v4524 = vsub.s32 %v4521, %v4523
        %v4525 = vrot.slane %v4511, %v4524
        %v4526 = vcombine.high %v4510, 0.0
        %v4528 = vunpack.c.l.s4 1934713408
        %v4529 = vunpack.c.0.s8 %v4528
        %v4530 = vlaneseq
        %v4531 = vshrl.u32 %v4530, 7
        %v4532 = vsub.s32 %v4529, %v4531
        %v4533 = vrot.slane %v4510, %v4532
        %v4535 = vunpack.c.l.s4 1934713408
        %v4536 = vunpack.c.0.s8 %v4535
        %v4537 = vlaneseq
        %v4538 = vshrl.u32 %v4537, 7
        %v4539 = vsub.s32 %v4536, %v4538
        %v4540 = vrot.slane %v4526, %v4539
        %v4541 = vcombine.high %v4518, 0.0
        %v4542 = vcombine.high %v4525, 0.0
        %v4543 = vcombine.high %v4533, 0.0
        %v4544 = vcombine.high %v4540, 0.0
        %v4545 = vcombine.high %v583, 0.0
        %v4547 = vunpack.c.l.s4 1983009808
        %v4548 = vunpack.c.0.s8 %v4547
        %v4549 = vlaneseq
        %v4550 = vshrl.u32 %v4549, 7
        %v4551 = vsub.s32 %v4548, %v4550
        %v4552 = vrot.slane %v583, %v4551
        %v4554 = vunpack.c.l.s4 1983009808
        %v4555 = vunpack.c.0.s8 %v4554
        %v4556 = vlaneseq
        %v4557 = vshrl.u32 %v4556, 7
        %v4558 = vsub.s32 %v4555, %v4557
        %v4559 = vrot.slane %v4545, %v4558
        %v4560 = vcombine.high %v4552, 0.0
        %v4562 = vunpack.c.l.s4 1934713408
        %v4563 = vunpack.c.0.s8 %v4562
        %v4564 = vlaneseq
        %v4565 = vshrl.u32 %v4564, 7
        %v4566 = vsub.s32 %v4563, %v4565
        %v4567 = vrot.slane %v4552, %v4566
        %v4569 = vunpack.c.l.s4 1934713408
        %v4570 = vunpack.c.0.s8 %v4569
        %v4571 = vlaneseq
        %v4572 = vshrl.u32 %v4571, 7
        %v4573 = vsub.s32 %v4570, %v4572
        %v4574 = vrot.slane %v4560, %v4573
        %v4575 = vcombine.high %v4559, 0.0
        %v4577 = vunpack.c.l.s4 1934713408
        %v4578 = vunpack.c.0.s8 %v4577
        %v4579 = vlaneseq
        %v4580 = vshrl.u32 %v4579, 7
        %v4581 = vsub.s32 %v4578, %v4580
        %v4582 = vrot.slane %v4559, %v4581
        %v4584 = vunpack.c.l.s4 1934713408
        %v4585 = vunpack.c.0.s8 %v4584
        %v4586 = vlaneseq
        %v4587 = vshrl.u32 %v4586, 7
        %v4588 = vsub.s32 %v4585, %v4587
        %v4589 = vrot.slane %v4575, %v4588
        %v4590 = vcombine.high %v4567, 0.0
        %v4591 = vcombine.high %v4574, 0.0
        %v4592 = vcombine.high %v4582, 0.0
        %v4593 = vcombine.high %v4589, 0.0
        %v4594 = vcombine.high %v590, 0.0
        %v4596 = vunpack.c.l.s4 1983009808
        %v4597 = vunpack.c.0.s8 %v4596
        %v4598 = vlaneseq
        %v4599 = vshrl.u32 %v4598, 7
        %v4600 = vsub.s32 %v4597, %v4599
        %v4601 = vrot.slane %v590, %v4600
        %v4603 = vunpack.c.l.s4 1983009808
        %v4604 = vunpack.c.0.s8 %v4603
        %v4605 = vlaneseq
        %v4606 = vshrl.u32 %v4605, 7
        %v4607 = vsub.s32 %v4604, %v4606
        %v4608 = vrot.slane %v4594, %v4607
        %v4609 = vcombine.high %v4601, 0.0
        %v4611 = vunpack.c.l.s4 1934713408
        %v4612 = vunpack.c.0.s8 %v4611
        %v4613 = vlaneseq
        %v4614 = vshrl.u32 %v4613, 7
        %v4615 = vsub.s32 %v4612, %v4614
        %v4616 = vrot.slane %v4601, %v4615
        %v4618 = vunpack.c.l.s4 1934713408
        %v4619 = vunpack.c.0.s8 %v4618
        %v4620 = vlaneseq
        %v4621 = vshrl.u32 %v4620, 7
        %v4622 = vsub.s32 %v4619, %v4621
        %v4623 = vrot.slane %v4609, %v4622
        %v4624 = vcombine.high %v4608, 0.0
        %v4626 = vunpack.c.l.s4 1934713408
        %v4627 = vunpack.c.0.s8 %v4626
        %v4628 = vlaneseq
        %v4629 = vshrl.u32 %v4628, 7
        %v4630 = vsub.s32 %v4627, %v4629
        %v4631 = vrot.slane %v4608, %v4630
        %v4633 = vunpack.c.l.s4 1934713408
        %v4634 = vunpack.c.0.s8 %v4633
        %v4635 = vlaneseq
        %v4636 = vshrl.u32 %v4635, 7
        %v4637 = vsub.s32 %v4634, %v4636
        %v4638 = vrot.slane %v4624, %v4637
        %v4639 = vcombine.high %v4616, 0.0
        %v4640 = vcombine.high %v4623, 0.0
        %v4641 = vcombine.high %v4631, 0.0
        %v4642 = vcombine.high %v4638, 0.0
        %v4643 = vcombine.high %v594, 0.0
        %v4645 = vunpack.c.l.s4 1983009808
        %v4646 = vunpack.c.0.s8 %v4645
        %v4647 = vlaneseq
        %v4648 = vshrl.u32 %v4647, 7
        %v4649 = vsub.s32 %v4646, %v4648
        %v4650 = vrot.slane %v594, %v4649
        %v4652 = vunpack.c.l.s4 1983009808
        %v4653 = vunpack.c.0.s8 %v4652
        %v4654 = vlaneseq
        %v4655 = vshrl.u32 %v4654, 7
        %v4656 = vsub.s32 %v4653, %v4655
        %v4657 = vrot.slane %v4643, %v4656
        %v4658 = vcombine.high %v4650, 0.0
        %v4660 = vunpack.c.l.s4 1934713408
        %v4661 = vunpack.c.0.s8 %v4660
        %v4662 = vlaneseq
        %v4663 = vshrl.u32 %v4662, 7
        %v4664 = vsub.s32 %v4661, %v4663
        %v4665 = vrot.slane %v4650, %v4664
        %v4667 = vunpack.c.l.s4 1934713408
        %v4668 = vunpack.c.0.s8 %v4667
        %v4669 = vlaneseq
        %v4670 = vshrl.u32 %v4669, 7
        %v4671 = vsub.s32 %v4668, %v4670
        %v4672 = vrot.slane %v4658, %v4671
        %v4673 = vcombine.high %v4657, 0.0
        %v4675 = vunpack.c.l.s4 1934713408
        %v4676 = vunpack.c.0.s8 %v4675
        %v4677 = vlaneseq
        %v4678 = vshrl.u32 %v4677, 7
        %v4679 = vsub.s32 %v4676, %v4678
        %v4680 = vrot.slane %v4657, %v4679
        %v4682 = vunpack.c.l.s4 1934713408
        %v4683 = vunpack.c.0.s8 %v4682
        %v4684 = vlaneseq
        %v4685 = vshrl.u32 %v4684, 7
        %v4686 = vsub.s32 %v4683, %v4685
        %v4687 = vrot.slane %v4673, %v4686
        %v4688 = vcombine.high %v4665, 0.0
        %v4689 = vcombine.high %v4672, 0.0
        %v4690 = vcombine.high %v4680, 0.0
        %v4691 = vcombine.high %v4687, 0.0
        %v4692 = vcombine.high %v601, 0.0
        %v4694 = vunpack.c.l.s4 1983009808
        %v4695 = vunpack.c.0.s8 %v4694
        %v4696 = vlaneseq
        %v4697 = vshrl.u32 %v4696, 7
        %v4698 = vsub.s32 %v4695, %v4697
        %v4699 = vrot.slane %v601, %v4698
        %v4701 = vunpack.c.l.s4 1983009808
        %v4702 = vunpack.c.0.s8 %v4701
        %v4703 = vlaneseq
        %v4704 = vshrl.u32 %v4703, 7
        %v4705 = vsub.s32 %v4702, %v4704
        %v4706 = vrot.slane %v4692, %v4705
        %v4707 = vcombine.high %v4699, 0.0
        %v4709 = vunpack.c.l.s4 1934713408
        %v4710 = vunpack.c.0.s8 %v4709
        %v4711 = vlaneseq
        %v4712 = vshrl.u32 %v4711, 7
        %v4713 = vsub.s32 %v4710, %v4712
        %v4714 = vrot.slane %v4699, %v4713
        %v4716 = vunpack.c.l.s4 1934713408
        %v4717 = vunpack.c.0.s8 %v4716
        %v4718 = vlaneseq
        %v4719 = vshrl.u32 %v4718, 7
        %v4720 = vsub.s32 %v4717, %v4719
        %v4721 = vrot.slane %v4707, %v4720
        %v4722 = vcombine.high %v4706, 0.0
        %v4724 = vunpack.c.l.s4 1934713408
        %v4725 = vunpack.c.0.s8 %v4724
        %v4726 = vlaneseq
        %v4727 = vshrl.u32 %v4726, 7
        %v4728 = vsub.s32 %v4725, %v4727
        %v4729 = vrot.slane %v4706, %v4728
        %v4731 = vunpack.c.l.s4 1934713408
        %v4732 = vunpack.c.0.s8 %v4731
        %v4733 = vlaneseq
        %v4734 = vshrl.u32 %v4733, 7
        %v4735 = vsub.s32 %v4732, %v4734
        %v4736 = vrot.slane %v4722, %v4735
        %v4737 = vcombine.high %v4714, 0.0
        %v4738 = vcombine.high %v4721, 0.0
        %v4739 = vcombine.high %v4729, 0.0
        %v4740 = vcombine.high %v4736, 0.0
        %v4741 = vcombine.high %v605, 0.0
        %v4743 = vunpack.c.l.s4 1983009808
        %v4744 = vunpack.c.0.s8 %v4743
        %v4745 = vlaneseq
        %v4746 = vshrl.u32 %v4745, 7
        %v4747 = vsub.s32 %v4744, %v4746
        %v4748 = vrot.slane %v605, %v4747
        %v4750 = vunpack.c.l.s4 1983009808
        %v4751 = vunpack.c.0.s8 %v4750
        %v4752 = vlaneseq
        %v4753 = vshrl.u32 %v4752, 7
        %v4754 = vsub.s32 %v4751, %v4753
        %v4755 = vrot.slane %v4741, %v4754
        %v4756 = vcombine.high %v4748, 0.0
        %v4758 = vunpack.c.l.s4 1934713408
        %v4759 = vunpack.c.0.s8 %v4758
        %v4760 = vlaneseq
        %v4761 = vshrl.u32 %v4760, 7
        %v4762 = vsub.s32 %v4759, %v4761
        %v4763 = vrot.slane %v4748, %v4762
        %v4765 = vunpack.c.l.s4 1934713408
        %v4766 = vunpack.c.0.s8 %v4765
        %v4767 = vlaneseq
        %v4768 = vshrl.u32 %v4767, 7
        %v4769 = vsub.s32 %v4766, %v4768
        %v4770 = vrot.slane %v4756, %v4769
        %v4771 = vcombine.high %v4755, 0.0
        %v4773 = vunpack.c.l.s4 1934713408
        %v4774 = vunpack.c.0.s8 %v4773
        %v4775 = vlaneseq
        %v4776 = vshrl.u32 %v4775, 7
        %v4777 = vsub.s32 %v4774, %v4776
        %v4778 = vrot.slane %v4755, %v4777
        %v4780 = vunpack.c.l.s4 1934713408
        %v4781 = vunpack.c.0.s8 %v4780
        %v4782 = vlaneseq
        %v4783 = vshrl.u32 %v4782, 7
        %v4784 = vsub.s32 %v4781, %v4783
        %v4785 = vrot.slane %v4771, %v4784
        %v4786 = vcombine.high %v4763, 0.0
        %v4787 = vcombine.high %v4770, 0.0
        %v4788 = vcombine.high %v4778, 0.0
        %v4789 = vcombine.high %v4785, 0.0
        %v4790 = vcombine.high %v612, 0.0
        %v4792 = vunpack.c.l.s4 1983009808
        %v4793 = vunpack.c.0.s8 %v4792
        %v4794 = vlaneseq
        %v4795 = vshrl.u32 %v4794, 7
        %v4796 = vsub.s32 %v4793, %v4795
        %v4797 = vrot.slane %v612, %v4796
        %v4799 = vunpack.c.l.s4 1983009808
        %v4800 = vunpack.c.0.s8 %v4799
        %v4801 = vlaneseq
        %v4802 = vshrl.u32 %v4801, 7
        %v4803 = vsub.s32 %v4800, %v4802
        %v4804 = vrot.slane %v4790, %v4803
        %v4805 = vcombine.high %v4797, 0.0
        %v4807 = vunpack.c.l.s4 1934713408
        %v4808 = vunpack.c.0.s8 %v4807
        %v4809 = vlaneseq
        %v4810 = vshrl.u32 %v4809, 7
        %v4811 = vsub.s32 %v4808, %v4810
        %v4812 = vrot.slane %v4797, %v4811
        %v4814 = vunpack.c.l.s4 1934713408
        %v4815 = vunpack.c.0.s8 %v4814
        %v4816 = vlaneseq
        %v4817 = vshrl.u32 %v4816, 7
        %v4818 = vsub.s32 %v4815, %v4817
        %v4819 = vrot.slane %v4805, %v4818
        %v4820 = vcombine.high %v4804, 0.0
        %v4822 = vunpack.c.l.s4 1934713408
        %v4823 = vunpack.c.0.s8 %v4822
        %v4824 = vlaneseq
        %v4825 = vshrl.u32 %v4824, 7
        %v4826 = vsub.s32 %v4823, %v4825
        %v4827 = vrot.slane %v4804, %v4826
        %v4829 = vunpack.c.l.s4 1934713408
        %v4830 = vunpack.c.0.s8 %v4829
        %v4831 = vlaneseq
        %v4832 = vshrl.u32 %v4831, 7
        %v4833 = vsub.s32 %v4830, %v4832
        %v4834 = vrot.slane %v4820, %v4833
        %v4835 = vcombine.high %v4812, 0.0
        %v4836 = vcombine.high %v4819, 0.0
        %v4837 = vcombine.high %v4827, 0.0
        %v4838 = vcombine.high %v4834, 0.0
        %v4839 = vcombine.high %v616, 0.0
        %v4841 = vunpack.c.l.s4 1983009808
        %v4842 = vunpack.c.0.s8 %v4841
        %v4843 = vlaneseq
        %v4844 = vshrl.u32 %v4843, 7
        %v4845 = vsub.s32 %v4842, %v4844
        %v4846 = vrot.slane %v616, %v4845
        %v4848 = vunpack.c.l.s4 1983009808
        %v4849 = vunpack.c.0.s8 %v4848
        %v4850 = vlaneseq
        %v4851 = vshrl.u32 %v4850, 7
        %v4852 = vsub.s32 %v4849, %v4851
        %v4853 = vrot.slane %v4839, %v4852
        %v4854 = vcombine.high %v4846, 0.0
        %v4856 = vunpack.c.l.s4 1934713408
        %v4857 = vunpack.c.0.s8 %v4856
        %v4858 = vlaneseq
        %v4859 = vshrl.u32 %v4858, 7
        %v4860 = vsub.s32 %v4857, %v4859
        %v4861 = vrot.slane %v4846, %v4860
        %v4863 = vunpack.c.l.s4 1934713408
        %v4864 = vunpack.c.0.s8 %v4863
        %v4865 = vlaneseq
        %v4866 = vshrl.u32 %v4865, 7
        %v4867 = vsub.s32 %v4864, %v4866
        %v4868 = vrot.slane %v4854, %v4867
        %v4869 = vcombine.high %v4853, 0.0
        %v4871 = vunpack.c.l.s4 1934713408
        %v4872 = vunpack.c.0.s8 %v4871
        %v4873 = vlaneseq
        %v4874 = vshrl.u32 %v4873, 7
        %v4875 = vsub.s32 %v4872, %v4874
        %v4876 = vrot.slane %v4853, %v4875
        %v4878 = vunpack.c.l.s4 1934713408
        %v4879 = vunpack.c.0.s8 %v4878
        %v4880 = vlaneseq
        %v4881 = vshrl.u32 %v4880, 7
        %v4882 = vsub.s32 %v4879, %v4881
        %v4883 = vrot.slane %v4869, %v4882
        %v4884 = vcombine.high %v4861, 0.0
        %v4885 = vcombine.high %v4868, 0.0
        %v4886 = vcombine.high %v4876, 0.0
        %v4887 = vcombine.high %v4883, 0.0
        %v4888 = vcombine.high %v623, 0.0
        %v4890 = vunpack.c.l.s4 1983009808
        %v4891 = vunpack.c.0.s8 %v4890
        %v4892 = vlaneseq
        %v4893 = vshrl.u32 %v4892, 7
        %v4894 = vsub.s32 %v4891, %v4893
        %v4895 = vrot.slane %v623, %v4894
        %v4897 = vunpack.c.l.s4 1983009808
        %v4898 = vunpack.c.0.s8 %v4897
        %v4899 = vlaneseq
        %v4900 = vshrl.u32 %v4899, 7
        %v4901 = vsub.s32 %v4898, %v4900
        %v4902 = vrot.slane %v4888, %v4901
        %v4903 = vcombine.high %v4895, 0.0
        %v4905 = vunpack.c.l.s4 1934713408
        %v4906 = vunpack.c.0.s8 %v4905
        %v4907 = vlaneseq
        %v4908 = vshrl.u32 %v4907, 7
        %v4909 = vsub.s32 %v4906, %v4908
        %v4910 = vrot.slane %v4895, %v4909
        %v4912 = vunpack.c.l.s4 1934713408
        %v4913 = vunpack.c.0.s8 %v4912
        %v4914 = vlaneseq
        %v4915 = vshrl.u32 %v4914, 7
        %v4916 = vsub.s32 %v4913, %v4915
        %v4917 = vrot.slane %v4903, %v4916
        %v4918 = vcombine.high %v4902, 0.0
        %v4920 = vunpack.c.l.s4 1934713408
        %v4921 = vunpack.c.0.s8 %v4920
        %v4922 = vlaneseq
        %v4923 = vshrl.u32 %v4922, 7
        %v4924 = vsub.s32 %v4921, %v4923
        %v4925 = vrot.slane %v4902, %v4924
        %v4927 = vunpack.c.l.s4 1934713408
        %v4928 = vunpack.c.0.s8 %v4927
        %v4929 = vlaneseq
        %v4930 = vshrl.u32 %v4929, 7
        %v4931 = vsub.s32 %v4928, %v4930
        %v4932 = vrot.slane %v4918, %v4931
        %v4933 = vcombine.high %v4910, 0.0
        %v4934 = vcombine.high %v4917, 0.0
        %v4935 = vcombine.high %v4925, 0.0
        %v4936 = vcombine.high %v4932, 0.0
        %v4937 = vcombine.high %v627, 0.0
        %v4939 = vunpack.c.l.s4 1983009808
        %v4940 = vunpack.c.0.s8 %v4939
        %v4941 = vlaneseq
        %v4942 = vshrl.u32 %v4941, 7
        %v4943 = vsub.s32 %v4940, %v4942
        %v4944 = vrot.slane %v627, %v4943
        %v4946 = vunpack.c.l.s4 1983009808
        %v4947 = vunpack.c.0.s8 %v4946
        %v4948 = vlaneseq
        %v4949 = vshrl.u32 %v4948, 7
        %v4950 = vsub.s32 %v4947, %v4949
        %v4951 = vrot.slane %v4937, %v4950
        %v4952 = vcombine.high %v4944, 0.0
        %v4954 = vunpack.c.l.s4 1934713408
        %v4955 = vunpack.c.0.s8 %v4954
        %v4956 = vlaneseq
        %v4957 = vshrl.u32 %v4956, 7
        %v4958 = vsub.s32 %v4955, %v4957
        %v4959 = vrot.slane %v4944, %v4958
        %v4961 = vunpack.c.l.s4 1934713408
        %v4962 = vunpack.c.0.s8 %v4961
        %v4963 = vlaneseq
        %v4964 = vshrl.u32 %v4963, 7
        %v4965 = vsub.s32 %v4962, %v4964
        %v4966 = vrot.slane %v4952, %v4965
        %v4967 = vcombine.high %v4951, 0.0
        %v4969 = vunpack.c.l.s4 1934713408
        %v4970 = vunpack.c.0.s8 %v4969
        %v4971 = vlaneseq
        %v4972 = vshrl.u32 %v4971, 7
        %v4973 = vsub.s32 %v4970, %v4972
        %v4974 = vrot.slane %v4951, %v4973
        %v4976 = vunpack.c.l.s4 1934713408
        %v4977 = vunpack.c.0.s8 %v4976
        %v4978 = vlaneseq
        %v4979 = vshrl.u32 %v4978, 7
        %v4980 = vsub.s32 %v4977, %v4979
        %v4981 = vrot.slane %v4967, %v4980
        %v4982 = vcombine.high %v4959, 0.0
        %v4983 = vcombine.high %v4966, 0.0
        %v4984 = vcombine.high %v4974, 0.0
        %v4985 = vcombine.high %v4981, 0.0
        %v4986 = vcombine.high %v634, 0.0
        %v4988 = vunpack.c.l.s4 1983009808
        %v4989 = vunpack.c.0.s8 %v4988
        %v4990 = vlaneseq
        %v4991 = vshrl.u32 %v4990, 7
        %v4992 = vsub.s32 %v4989, %v4991
        %v4993 = vrot.slane %v634, %v4992
        %v4995 = vunpack.c.l.s4 1983009808
        %v4996 = vunpack.c.0.s8 %v4995
        %v4997 = vlaneseq
        %v4998 = vshrl.u32 %v4997, 7
        %v4999 = vsub.s32 %v4996, %v4998
        %v5000 = vrot.slane %v4986, %v4999
        %v5001 = vcombine.high %v4993, 0.0
        %v5003 = vunpack.c.l.s4 1934713408
        %v5004 = vunpack.c.0.s8 %v5003
        %v5005 = vlaneseq
        %v5006 = vshrl.u32 %v5005, 7
        %v5007 = vsub.s32 %v5004, %v5006
        %v5008 = vrot.slane %v4993, %v5007
        %v5010 = vunpack.c.l.s4 1934713408
        %v5011 = vunpack.c.0.s8 %v5010
        %v5012 = vlaneseq
        %v5013 = vshrl.u32 %v5012, 7
        %v5014 = vsub.s32 %v5011, %v5013
        %v5015 = vrot.slane %v5001, %v5014
        %v5016 = vcombine.high %v5000, 0.0
        %v5018 = vunpack.c.l.s4 1934713408
        %v5019 = vunpack.c.0.s8 %v5018
        %v5020 = vlaneseq
        %v5021 = vshrl.u32 %v5020, 7
        %v5022 = vsub.s32 %v5019, %v5021
        %v5023 = vrot.slane %v5000, %v5022
        %v5025 = vunpack.c.l.s4 1934713408
        %v5026 = vunpack.c.0.s8 %v5025
        %v5027 = vlaneseq
        %v5028 = vshrl.u32 %v5027, 7
        %v5029 = vsub.s32 %v5026, %v5028
        %v5030 = vrot.slane %v5016, %v5029
        %v5031 = vcombine.high %v5008, 0.0
        %v5032 = vcombine.high %v5015, 0.0
        %v5033 = vcombine.high %v5023, 0.0
        %v5034 = vcombine.high %v5030, 0.0
        %v5035 = vcombine.high %v638, 0.0
        %v5037 = vunpack.c.l.s4 1983009808
        %v5038 = vunpack.c.0.s8 %v5037
        %v5039 = vlaneseq
        %v5040 = vshrl.u32 %v5039, 7
        %v5041 = vsub.s32 %v5038, %v5040
        %v5042 = vrot.slane %v638, %v5041
        %v5044 = vunpack.c.l.s4 1983009808
        %v5045 = vunpack.c.0.s8 %v5044
        %v5046 = vlaneseq
        %v5047 = vshrl.u32 %v5046, 7
        %v5048 = vsub.s32 %v5045, %v5047
        %v5049 = vrot.slane %v5035, %v5048
        %v5050 = vcombine.high %v5042, 0.0
        %v5052 = vunpack.c.l.s4 1934713408
        %v5053 = vunpack.c.0.s8 %v5052
        %v5054 = vlaneseq
        %v5055 = vshrl.u32 %v5054, 7
        %v5056 = vsub.s32 %v5053, %v5055
        %v5057 = vrot.slane %v5042, %v5056
        %v5059 = vunpack.c.l.s4 1934713408
        %v5060 = vunpack.c.0.s8 %v5059
        %v5061 = vlaneseq
        %v5062 = vshrl.u32 %v5061, 7
        %v5063 = vsub.s32 %v5060, %v5062
        %v5064 = vrot.slane %v5050, %v5063
        %v5065 = vcombine.high %v5049, 0.0
        %v5067 = vunpack.c.l.s4 1934713408
        %v5068 = vunpack.c.0.s8 %v5067
        %v5069 = vlaneseq
        %v5070 = vshrl.u32 %v5069, 7
        %v5071 = vsub.s32 %v5068, %v5070
        %v5072 = vrot.slane %v5049, %v5071
        %v5074 = vunpack.c.l.s4 1934713408
        %v5075 = vunpack.c.0.s8 %v5074
        %v5076 = vlaneseq
        %v5077 = vshrl.u32 %v5076, 7
        %v5078 = vsub.s32 %v5075, %v5077
        %v5079 = vrot.slane %v5065, %v5078
        %v5080 = vcombine.high %v5057, 0.0
        %v5081 = vcombine.high %v5064, 0.0
        %v5082 = vcombine.high %v5072, 0.0
        %v5083 = vcombine.high %v5079, 0.0
        %v5084 = vcombine.high %v645, 0.0
        %v5086 = vunpack.c.l.s4 1983009808
        %v5087 = vunpack.c.0.s8 %v5086
        %v5088 = vlaneseq
        %v5089 = vshrl.u32 %v5088, 7
        %v5090 = vsub.s32 %v5087, %v5089
        %v5091 = vrot.slane %v645, %v5090
        %v5093 = vunpack.c.l.s4 1983009808
        %v5094 = vunpack.c.0.s8 %v5093
        %v5095 = vlaneseq
        %v5096 = vshrl.u32 %v5095, 7
        %v5097 = vsub.s32 %v5094, %v5096
        %v5098 = vrot.slane %v5084, %v5097
        %v5099 = vcombine.high %v5091, 0.0
        %v5101 = vunpack.c.l.s4 1934713408
        %v5102 = vunpack.c.0.s8 %v5101
        %v5103 = vlaneseq
        %v5104 = vshrl.u32 %v5103, 7
        %v5105 = vsub.s32 %v5102, %v5104
        %v5106 = vrot.slane %v5091, %v5105
        %v5108 = vunpack.c.l.s4 1934713408
        %v5109 = vunpack.c.0.s8 %v5108
        %v5110 = vlaneseq
        %v5111 = vshrl.u32 %v5110, 7
        %v5112 = vsub.s32 %v5109, %v5111
        %v5113 = vrot.slane %v5099, %v5112
        %v5114 = vcombine.high %v5098, 0.0
        %v5116 = vunpack.c.l.s4 1934713408
        %v5117 = vunpack.c.0.s8 %v5116
        %v5118 = vlaneseq
        %v5119 = vshrl.u32 %v5118, 7
        %v5120 = vsub.s32 %v5117, %v5119
        %v5121 = vrot.slane %v5098, %v5120
        %v5123 = vunpack.c.l.s4 1934713408
        %v5124 = vunpack.c.0.s8 %v5123
        %v5125 = vlaneseq
        %v5126 = vshrl.u32 %v5125, 7
        %v5127 = vsub.s32 %v5124, %v5126
        %v5128 = vrot.slane %v5114, %v5127
        %v5129 = vcombine.high %v5106, 0.0
        %v5130 = vcombine.high %v5113, 0.0
        %v5131 = vcombine.high %v5121, 0.0
        %v5132 = vcombine.high %v5128, 0.0
        %v5133 = vcombine.high %v649, 0.0
        %v5135 = vunpack.c.l.s4 1983009808
        %v5136 = vunpack.c.0.s8 %v5135
        %v5137 = vlaneseq
        %v5138 = vshrl.u32 %v5137, 7
        %v5139 = vsub.s32 %v5136, %v5138
        %v5140 = vrot.slane %v649, %v5139
        %v5142 = vunpack.c.l.s4 1983009808
        %v5143 = vunpack.c.0.s8 %v5142
        %v5144 = vlaneseq
        %v5145 = vshrl.u32 %v5144, 7
        %v5146 = vsub.s32 %v5143, %v5145
        %v5147 = vrot.slane %v5133, %v5146
        %v5148 = vcombine.high %v5140, 0.0
        %v5150 = vunpack.c.l.s4 1934713408
        %v5151 = vunpack.c.0.s8 %v5150
        %v5152 = vlaneseq
        %v5153 = vshrl.u32 %v5152, 7
        %v5154 = vsub.s32 %v5151, %v5153
        %v5155 = vrot.slane %v5140, %v5154
        %v5157 = vunpack.c.l.s4 1934713408
        %v5158 = vunpack.c.0.s8 %v5157
        %v5159 = vlaneseq
        %v5160 = vshrl.u32 %v5159, 7
        %v5161 = vsub.s32 %v5158, %v5160
        %v5162 = vrot.slane %v5148, %v5161
        %v5163 = vcombine.high %v5147, 0.0
        %v5165 = vunpack.c.l.s4 1934713408
        %v5166 = vunpack.c.0.s8 %v5165
        %v5167 = vlaneseq
        %v5168 = vshrl.u32 %v5167, 7
        %v5169 = vsub.s32 %v5166, %v5168
        %v5170 = vrot.slane %v5147, %v5169
        %v5172 = vunpack.c.l.s4 1934713408
        %v5173 = vunpack.c.0.s8 %v5172
        %v5174 = vlaneseq
        %v5175 = vshrl.u32 %v5174, 7
        %v5176 = vsub.s32 %v5173, %v5175
        %v5177 = vrot.slane %v5163, %v5176
        %v5178 = vcombine.high %v5155, 0.0
        %v5179 = vcombine.high %v5162, 0.0
        %v5180 = vcombine.high %v5170, 0.0
        %v5181 = vcombine.high %v5177, 0.0
        %v5182 = vcombine.high %v656, 0.0
        %v5184 = vunpack.c.l.s4 1983009808
        %v5185 = vunpack.c.0.s8 %v5184
        %v5186 = vlaneseq
        %v5187 = vshrl.u32 %v5186, 7
        %v5188 = vsub.s32 %v5185, %v5187
        %v5189 = vrot.slane %v656, %v5188
        %v5191 = vunpack.c.l.s4 1983009808
        %v5192 = vunpack.c.0.s8 %v5191
        %v5193 = vlaneseq
        %v5194 = vshrl.u32 %v5193, 7
        %v5195 = vsub.s32 %v5192, %v5194
        %v5196 = vrot.slane %v5182, %v5195
        %v5197 = vcombine.high %v5189, 0.0
        %v5199 = vunpack.c.l.s4 1934713408
        %v5200 = vunpack.c.0.s8 %v5199
        %v5201 = vlaneseq
        %v5202 = vshrl.u32 %v5201, 7
        %v5203 = vsub.s32 %v5200, %v5202
        %v5204 = vrot.slane %v5189, %v5203
        %v5206 = vunpack.c.l.s4 1934713408
        %v5207 = vunpack.c.0.s8 %v5206
        %v5208 = vlaneseq
        %v5209 = vshrl.u32 %v5208, 7
        %v5210 = vsub.s32 %v5207, %v5209
        %v5211 = vrot.slane %v5197, %v5210
        %v5212 = vcombine.high %v5196, 0.0
        %v5214 = vunpack.c.l.s4 1934713408
        %v5215 = vunpack.c.0.s8 %v5214
        %v5216 = vlaneseq
        %v5217 = vshrl.u32 %v5216, 7
        %v5218 = vsub.s32 %v5215, %v5217
        %v5219 = vrot.slane %v5196, %v5218
        %v5221 = vunpack.c.l.s4 1934713408
        %v5222 = vunpack.c.0.s8 %v5221
        %v5223 = vlaneseq
        %v5224 = vshrl.u32 %v5223, 7
        %v5225 = vsub.s32 %v5222, %v5224
        %v5226 = vrot.slane %v5212, %v5225
        %v5227 = vcombine.high %v5204, 0.0
        %v5228 = vcombine.high %v5211, 0.0
        %v5229 = vcombine.high %v5219, 0.0
        %v5230 = vcombine.high %v5226, 0.0
        %v5231 = vcombine.high %v660, 0.0
        %v5233 = vunpack.c.l.s4 1983009808
        %v5234 = vunpack.c.0.s8 %v5233
        %v5235 = vlaneseq
        %v5236 = vshrl.u32 %v5235, 7
        %v5237 = vsub.s32 %v5234, %v5236
        %v5238 = vrot.slane %v660, %v5237
        %v5240 = vunpack.c.l.s4 1983009808
        %v5241 = vunpack.c.0.s8 %v5240
        %v5242 = vlaneseq
        %v5243 = vshrl.u32 %v5242, 7
        %v5244 = vsub.s32 %v5241, %v5243
        %v5245 = vrot.slane %v5231, %v5244
        %v5246 = vcombine.high %v5238, 0.0
        %v5248 = vunpack.c.l.s4 1934713408
        %v5249 = vunpack.c.0.s8 %v5248
        %v5250 = vlaneseq
        %v5251 = vshrl.u32 %v5250, 7
        %v5252 = vsub.s32 %v5249, %v5251
        %v5253 = vrot.slane %v5238, %v5252
        %v5255 = vunpack.c.l.s4 1934713408
        %v5256 = vunpack.c.0.s8 %v5255
        %v5257 = vlaneseq
        %v5258 = vshrl.u32 %v5257, 7
        %v5259 = vsub.s32 %v5256, %v5258
        %v5260 = vrot.slane %v5246, %v5259
        %v5261 = vcombine.high %v5245, 0.0
        %v5263 = vunpack.c.l.s4 1934713408
        %v5264 = vunpack.c.0.s8 %v5263
        %v5265 = vlaneseq
        %v5266 = vshrl.u32 %v5265, 7
        %v5267 = vsub.s32 %v5264, %v5266
        %v5268 = vrot.slane %v5245, %v5267
        %v5270 = vunpack.c.l.s4 1934713408
        %v5271 = vunpack.c.0.s8 %v5270
        %v5272 = vlaneseq
        %v5273 = vshrl.u32 %v5272, 7
        %v5274 = vsub.s32 %v5271, %v5273
        %v5275 = vrot.slane %v5261, %v5274
        %v5276 = vcombine.high %v5253, 0.0
        %v5277 = vcombine.high %v5260, 0.0
        %v5278 = vcombine.high %v5268, 0.0
        %v5279 = vcombine.high %v5275, 0.0
        %v5280 = vcombine.high %v667, 0.0
        %v5282 = vunpack.c.l.s4 1983009808
        %v5283 = vunpack.c.0.s8 %v5282
        %v5284 = vlaneseq
        %v5285 = vshrl.u32 %v5284, 7
        %v5286 = vsub.s32 %v5283, %v5285
        %v5287 = vrot.slane %v667, %v5286
        %v5289 = vunpack.c.l.s4 1983009808
        %v5290 = vunpack.c.0.s8 %v5289
        %v5291 = vlaneseq
        %v5292 = vshrl.u32 %v5291, 7
        %v5293 = vsub.s32 %v5290, %v5292
        %v5294 = vrot.slane %v5280, %v5293
        %v5295 = vcombine.high %v5287, 0.0
        %v5297 = vunpack.c.l.s4 1934713408
        %v5298 = vunpack.c.0.s8 %v5297
        %v5299 = vlaneseq
        %v5300 = vshrl.u32 %v5299, 7
        %v5301 = vsub.s32 %v5298, %v5300
        %v5302 = vrot.slane %v5287, %v5301
        %v5304 = vunpack.c.l.s4 1934713408
        %v5305 = vunpack.c.0.s8 %v5304
        %v5306 = vlaneseq
        %v5307 = vshrl.u32 %v5306, 7
        %v5308 = vsub.s32 %v5305, %v5307
        %v5309 = vrot.slane %v5295, %v5308
        %v5310 = vcombine.high %v5294, 0.0
        %v5312 = vunpack.c.l.s4 1934713408
        %v5313 = vunpack.c.0.s8 %v5312
        %v5314 = vlaneseq
        %v5315 = vshrl.u32 %v5314, 7
        %v5316 = vsub.s32 %v5313, %v5315
        %v5317 = vrot.slane %v5294, %v5316
        %v5319 = vunpack.c.l.s4 1934713408
        %v5320 = vunpack.c.0.s8 %v5319
        %v5321 = vlaneseq
        %v5322 = vshrl.u32 %v5321, 7
        %v5323 = vsub.s32 %v5320, %v5322
        %v5324 = vrot.slane %v5310, %v5323
        %v5325 = vcombine.high %v5302, 0.0
        %v5326 = vcombine.high %v5309, 0.0
        %v5327 = vcombine.high %v5317, 0.0
        %v5328 = vcombine.high %v5324, 0.0
        %v5329 = vcombine.high %v671, 0.0
        %v5331 = vunpack.c.l.s4 1983009808
        %v5332 = vunpack.c.0.s8 %v5331
        %v5333 = vlaneseq
        %v5334 = vshrl.u32 %v5333, 7
        %v5335 = vsub.s32 %v5332, %v5334
        %v5336 = vrot.slane %v671, %v5335
        %v5338 = vunpack.c.l.s4 1983009808
        %v5339 = vunpack.c.0.s8 %v5338
        %v5340 = vlaneseq
        %v5341 = vshrl.u32 %v5340, 7
        %v5342 = vsub.s32 %v5339, %v5341
        %v5343 = vrot.slane %v5329, %v5342
        %v5344 = vcombine.high %v5336, 0.0
        %v5346 = vunpack.c.l.s4 1934713408
        %v5347 = vunpack.c.0.s8 %v5346
        %v5348 = vlaneseq
        %v5349 = vshrl.u32 %v5348, 7
        %v5350 = vsub.s32 %v5347, %v5349
        %v5351 = vrot.slane %v5336, %v5350
        %v5353 = vunpack.c.l.s4 1934713408
        %v5354 = vunpack.c.0.s8 %v5353
        %v5355 = vlaneseq
        %v5356 = vshrl.u32 %v5355, 7
        %v5357 = vsub.s32 %v5354, %v5356
        %v5358 = vrot.slane %v5344, %v5357
        %v5359 = vcombine.high %v5343, 0.0
        %v5361 = vunpack.c.l.s4 1934713408
        %v5362 = vunpack.c.0.s8 %v5361
        %v5363 = vlaneseq
        %v5364 = vshrl.u32 %v5363, 7
        %v5365 = vsub.s32 %v5362, %v5364
        %v5366 = vrot.slane %v5343, %v5365
        %v5368 = vunpack.c.l.s4 1934713408
        %v5369 = vunpack.c.0.s8 %v5368
        %v5370 = vlaneseq
        %v5371 = vshrl.u32 %v5370, 7
        %v5372 = vsub.s32 %v5369, %v5371
        %v5373 = vrot.slane %v5359, %v5372
        %v5374 = vcombine.high %v5351, 0.0
        %v5375 = vcombine.high %v5358, 0.0
        %v5376 = vcombine.high %v5366, 0.0
        %v5377 = vcombine.high %v5373, 0.0
        %v5378 = vcombine.high %v678, 0.0
        %v5380 = vunpack.c.l.s4 1983009808
        %v5381 = vunpack.c.0.s8 %v5380
        %v5382 = vlaneseq
        %v5383 = vshrl.u32 %v5382, 7
        %v5384 = vsub.s32 %v5381, %v5383
        %v5385 = vrot.slane %v678, %v5384
        %v5387 = vunpack.c.l.s4 1983009808
        %v5388 = vunpack.c.0.s8 %v5387
        %v5389 = vlaneseq
        %v5390 = vshrl.u32 %v5389, 7
        %v5391 = vsub.s32 %v5388, %v5390
        %v5392 = vrot.slane %v5378, %v5391
        %v5393 = vcombine.high %v5385, 0.0
        %v5395 = vunpack.c.l.s4 1934713408
        %v5396 = vunpack.c.0.s8 %v5395
        %v5397 = vlaneseq
        %v5398 = vshrl.u32 %v5397, 7
        %v5399 = vsub.s32 %v5396, %v5398
        %v5400 = vrot.slane %v5385, %v5399
        %v5402 = vunpack.c.l.s4 1934713408
        %v5403 = vunpack.c.0.s8 %v5402
        %v5404 = vlaneseq
        %v5405 = vshrl.u32 %v5404, 7
        %v5406 = vsub.s32 %v5403, %v5405
        %v5407 = vrot.slane %v5393, %v5406
        %v5408 = vcombine.high %v5392, 0.0
        %v5410 = vunpack.c.l.s4 1934713408
        %v5411 = vunpack.c.0.s8 %v5410
        %v5412 = vlaneseq
        %v5413 = vshrl.u32 %v5412, 7
        %v5414 = vsub.s32 %v5411, %v5413
        %v5415 = vrot.slane %v5392, %v5414
        %v5417 = vunpack.c.l.s4 1934713408
        %v5418 = vunpack.c.0.s8 %v5417
        %v5419 = vlaneseq
        %v5420 = vshrl.u32 %v5419, 7
        %v5421 = vsub.s32 %v5418, %v5420
        %v5422 = vrot.slane %v5408, %v5421
        %v5423 = vcombine.high %v5400, 0.0
        %v5424 = vcombine.high %v5407, 0.0
        %v5425 = vcombine.high %v5415, 0.0
        %v5426 = vcombine.high %v5422, 0.0
        %v5427 = vcombine.high %v682, 0.0
        %v5429 = vunpack.c.l.s4 1983009808
        %v5430 = vunpack.c.0.s8 %v5429
        %v5431 = vlaneseq
        %v5432 = vshrl.u32 %v5431, 7
        %v5433 = vsub.s32 %v5430, %v5432
        %v5434 = vrot.slane %v682, %v5433
        %v5436 = vunpack.c.l.s4 1983009808
        %v5437 = vunpack.c.0.s8 %v5436
        %v5438 = vlaneseq
        %v5439 = vshrl.u32 %v5438, 7
        %v5440 = vsub.s32 %v5437, %v5439
        %v5441 = vrot.slane %v5427, %v5440
        %v5442 = vcombine.high %v5434, 0.0
        %v5444 = vunpack.c.l.s4 1934713408
        %v5445 = vunpack.c.0.s8 %v5444
        %v5446 = vlaneseq
        %v5447 = vshrl.u32 %v5446, 7
        %v5448 = vsub.s32 %v5445, %v5447
        %v5449 = vrot.slane %v5434, %v5448
        %v5451 = vunpack.c.l.s4 1934713408
        %v5452 = vunpack.c.0.s8 %v5451
        %v5453 = vlaneseq
        %v5454 = vshrl.u32 %v5453, 7
        %v5455 = vsub.s32 %v5452, %v5454
        %v5456 = vrot.slane %v5442, %v5455
        %v5457 = vcombine.high %v5441, 0.0
        %v5459 = vunpack.c.l.s4 1934713408
        %v5460 = vunpack.c.0.s8 %v5459
        %v5461 = vlaneseq
        %v5462 = vshrl.u32 %v5461, 7
        %v5463 = vsub.s32 %v5460, %v5462
        %v5464 = vrot.slane %v5441, %v5463
        %v5466 = vunpack.c.l.s4 1934713408
        %v5467 = vunpack.c.0.s8 %v5466
        %v5468 = vlaneseq
        %v5469 = vshrl.u32 %v5468, 7
        %v5470 = vsub.s32 %v5467, %v5469
        %v5471 = vrot.slane %v5457, %v5470
        %v5472 = vcombine.high %v5449, 0.0
        %v5473 = vcombine.high %v5456, 0.0
        %v5474 = vcombine.high %v5464, 0.0
        %v5475 = vcombine.high %v5471, 0.0
        %v5476 = vcombine.high %v689, 0.0
        %v5478 = vunpack.c.l.s4 1983009808
        %v5479 = vunpack.c.0.s8 %v5478
        %v5480 = vlaneseq
        %v5481 = vshrl.u32 %v5480, 7
        %v5482 = vsub.s32 %v5479, %v5481
        %v5483 = vrot.slane %v689, %v5482
        %v5485 = vunpack.c.l.s4 1983009808
        %v5486 = vunpack.c.0.s8 %v5485
        %v5487 = vlaneseq
        %v5488 = vshrl.u32 %v5487, 7
        %v5489 = vsub.s32 %v5486, %v5488
        %v5490 = vrot.slane %v5476, %v5489
        %v5491 = vcombine.high %v5483, 0.0
        %v5493 = vunpack.c.l.s4 1934713408
        %v5494 = vunpack.c.0.s8 %v5493
        %v5495 = vlaneseq
        %v5496 = vshrl.u32 %v5495, 7
        %v5497 = vsub.s32 %v5494, %v5496
        %v5498 = vrot.slane %v5483, %v5497
        %v5500 = vunpack.c.l.s4 1934713408
        %v5501 = vunpack.c.0.s8 %v5500
        %v5502 = vlaneseq
        %v5503 = vshrl.u32 %v5502, 7
        %v5504 = vsub.s32 %v5501, %v5503
        %v5505 = vrot.slane %v5491, %v5504
        %v5506 = vcombine.high %v5490, 0.0
        %v5508 = vunpack.c.l.s4 1934713408
        %v5509 = vunpack.c.0.s8 %v5508
        %v5510 = vlaneseq
        %v5511 = vshrl.u32 %v5510, 7
        %v5512 = vsub.s32 %v5509, %v5511
        %v5513 = vrot.slane %v5490, %v5512
        %v5515 = vunpack.c.l.s4 1934713408
        %v5516 = vunpack.c.0.s8 %v5515
        %v5517 = vlaneseq
        %v5518 = vshrl.u32 %v5517, 7
        %v5519 = vsub.s32 %v5516, %v5518
        %v5520 = vrot.slane %v5506, %v5519
        %v5521 = vcombine.high %v5498, 0.0
        %v5522 = vcombine.high %v5505, 0.0
        %v5523 = vcombine.high %v5513, 0.0
        %v5524 = vcombine.high %v5520, 0.0
        %v5525 = vcombine.high %v693, 0.0
        %v5527 = vunpack.c.l.s4 1983009808
        %v5528 = vunpack.c.0.s8 %v5527
        %v5529 = vlaneseq
        %v5530 = vshrl.u32 %v5529, 7
        %v5531 = vsub.s32 %v5528, %v5530
        %v5532 = vrot.slane %v693, %v5531
        %v5534 = vunpack.c.l.s4 1983009808
        %v5535 = vunpack.c.0.s8 %v5534
        %v5536 = vlaneseq
        %v5537 = vshrl.u32 %v5536, 7
        %v5538 = vsub.s32 %v5535, %v5537
        %v5539 = vrot.slane %v5525, %v5538
        %v5540 = vcombine.high %v5532, 0.0
        %v5542 = vunpack.c.l.s4 1934713408
        %v5543 = vunpack.c.0.s8 %v5542
        %v5544 = vlaneseq
        %v5545 = vshrl.u32 %v5544, 7
        %v5546 = vsub.s32 %v5543, %v5545
        %v5547 = vrot.slane %v5532, %v5546
        %v5549 = vunpack.c.l.s4 1934713408
        %v5550 = vunpack.c.0.s8 %v5549
        %v5551 = vlaneseq
        %v5552 = vshrl.u32 %v5551, 7
        %v5553 = vsub.s32 %v5550, %v5552
        %v5554 = vrot.slane %v5540, %v5553
        %v5555 = vcombine.high %v5539, 0.0
        %v5557 = vunpack.c.l.s4 1934713408
        %v5558 = vunpack.c.0.s8 %v5557
        %v5559 = vlaneseq
        %v5560 = vshrl.u32 %v5559, 7
        %v5561 = vsub.s32 %v5558, %v5560
        %v5562 = vrot.slane %v5539, %v5561
        %v5564 = vunpack.c.l.s4 1934713408
        %v5565 = vunpack.c.0.s8 %v5564
        %v5566 = vlaneseq
        %v5567 = vshrl.u32 %v5566, 7
        %v5568 = vsub.s32 %v5565, %v5567
        %v5569 = vrot.slane %v5555, %v5568
        %v5570 = vcombine.high %v5547, 0.0
        %v5571 = vcombine.high %v5554, 0.0
        %v5572 = vcombine.high %v5562, 0.0
        %v5573 = vcombine.high %v5569, 0.0
        %v5574 = vcombine.high %v700, 0.0
        %v5576 = vunpack.c.l.s4 1983009808
        %v5577 = vunpack.c.0.s8 %v5576
        %v5578 = vlaneseq
        %v5579 = vshrl.u32 %v5578, 7
        %v5580 = vsub.s32 %v5577, %v5579
        %v5581 = vrot.slane %v700, %v5580
        %v5583 = vunpack.c.l.s4 1983009808
        %v5584 = vunpack.c.0.s8 %v5583
        %v5585 = vlaneseq
        %v5586 = vshrl.u32 %v5585, 7
        %v5587 = vsub.s32 %v5584, %v5586
        %v5588 = vrot.slane %v5574, %v5587
        %v5589 = vcombine.high %v5581, 0.0
        %v5591 = vunpack.c.l.s4 1934713408
        %v5592 = vunpack.c.0.s8 %v5591
        %v5593 = vlaneseq
        %v5594 = vshrl.u32 %v5593, 7
        %v5595 = vsub.s32 %v5592, %v5594
        %v5596 = vrot.slane %v5581, %v5595
        %v5598 = vunpack.c.l.s4 1934713408
        %v5599 = vunpack.c.0.s8 %v5598
        %v5600 = vlaneseq
        %v5601 = vshrl.u32 %v5600, 7
        %v5602 = vsub.s32 %v5599, %v5601
        %v5603 = vrot.slane %v5589, %v5602
        %v5604 = vcombine.high %v5588, 0.0
        %v5606 = vunpack.c.l.s4 1934713408
        %v5607 = vunpack.c.0.s8 %v5606
        %v5608 = vlaneseq
        %v5609 = vshrl.u32 %v5608, 7
        %v5610 = vsub.s32 %v5607, %v5609
        %v5611 = vrot.slane %v5588, %v5610
        %v5613 = vunpack.c.l.s4 1934713408
        %v5614 = vunpack.c.0.s8 %v5613
        %v5615 = vlaneseq
        %v5616 = vshrl.u32 %v5615, 7
        %v5617 = vsub.s32 %v5614, %v5616
        %v5618 = vrot.slane %v5604, %v5617
        %v5619 = vcombine.high %v5596, 0.0
        %v5620 = vcombine.high %v5603, 0.0
        %v5621 = vcombine.high %v5611, 0.0
        %v5622 = vcombine.high %v5618, 0.0
        %v5623 = vcombine.high %v704, 0.0
        %v5625 = vunpack.c.l.s4 1983009808
        %v5626 = vunpack.c.0.s8 %v5625
        %v5627 = vlaneseq
        %v5628 = vshrl.u32 %v5627, 7
        %v5629 = vsub.s32 %v5626, %v5628
        %v5630 = vrot.slane %v704, %v5629
        %v5632 = vunpack.c.l.s4 1983009808
        %v5633 = vunpack.c.0.s8 %v5632
        %v5634 = vlaneseq
        %v5635 = vshrl.u32 %v5634, 7
        %v5636 = vsub.s32 %v5633, %v5635
        %v5637 = vrot.slane %v5623, %v5636
        %v5638 = vcombine.high %v5630, 0.0
        %v5640 = vunpack.c.l.s4 1934713408
        %v5641 = vunpack.c.0.s8 %v5640
        %v5642 = vlaneseq
        %v5643 = vshrl.u32 %v5642, 7
        %v5644 = vsub.s32 %v5641, %v5643
        %v5645 = vrot.slane %v5630, %v5644
        %v5647 = vunpack.c.l.s4 1934713408
        %v5648 = vunpack.c.0.s8 %v5647
        %v5649 = vlaneseq
        %v5650 = vshrl.u32 %v5649, 7
        %v5651 = vsub.s32 %v5648, %v5650
        %v5652 = vrot.slane %v5638, %v5651
        %v5653 = vcombine.high %v5637, 0.0
        %v5655 = vunpack.c.l.s4 1934713408
        %v5656 = vunpack.c.0.s8 %v5655
        %v5657 = vlaneseq
        %v5658 = vshrl.u32 %v5657, 7
        %v5659 = vsub.s32 %v5656, %v5658
        %v5660 = vrot.slane %v5637, %v5659
        %v5662 = vunpack.c.l.s4 1934713408
        %v5663 = vunpack.c.0.s8 %v5662
        %v5664 = vlaneseq
        %v5665 = vshrl.u32 %v5664, 7
        %v5666 = vsub.s32 %v5663, %v5665
        %v5667 = vrot.slane %v5653, %v5666
        %v5668 = vcombine.high %v5645, 0.0
        %v5669 = vcombine.high %v5652, 0.0
        %v5670 = vcombine.high %v5660, 0.0
        %v5671 = vcombine.high %v5667, 0.0
        %v5672 = vcombine.high %v711, 0.0
        %v5674 = vunpack.c.l.s4 1983009808
        %v5675 = vunpack.c.0.s8 %v5674
        %v5676 = vlaneseq
        %v5677 = vshrl.u32 %v5676, 7
        %v5678 = vsub.s32 %v5675, %v5677
        %v5679 = vrot.slane %v711, %v5678
        %v5681 = vunpack.c.l.s4 1983009808
        %v5682 = vunpack.c.0.s8 %v5681
        %v5683 = vlaneseq
        %v5684 = vshrl.u32 %v5683, 7
        %v5685 = vsub.s32 %v5682, %v5684
        %v5686 = vrot.slane %v5672, %v5685
        %v5687 = vcombine.high %v5679, 0.0
        %v5689 = vunpack.c.l.s4 1934713408
        %v5690 = vunpack.c.0.s8 %v5689
        %v5691 = vlaneseq
        %v5692 = vshrl.u32 %v5691, 7
        %v5693 = vsub.s32 %v5690, %v5692
        %v5694 = vrot.slane %v5679, %v5693
        %v5696 = vunpack.c.l.s4 1934713408
        %v5697 = vunpack.c.0.s8 %v5696
        %v5698 = vlaneseq
        %v5699 = vshrl.u32 %v5698, 7
        %v5700 = vsub.s32 %v5697, %v5699
        %v5701 = vrot.slane %v5687, %v5700
        %v5702 = vcombine.high %v5686, 0.0
        %v5704 = vunpack.c.l.s4 1934713408
        %v5705 = vunpack.c.0.s8 %v5704
        %v5706 = vlaneseq
        %v5707 = vshrl.u32 %v5706, 7
        %v5708 = vsub.s32 %v5705, %v5707
        %v5709 = vrot.slane %v5686, %v5708
        %v5711 = vunpack.c.l.s4 1934713408
        %v5712 = vunpack.c.0.s8 %v5711
        %v5713 = vlaneseq
        %v5714 = vshrl.u32 %v5713, 7
        %v5715 = vsub.s32 %v5712, %v5714
        %v5716 = vrot.slane %v5702, %v5715
        %v5717 = vcombine.high %v5694, 0.0
        %v5718 = vcombine.high %v5701, 0.0
        %v5719 = vcombine.high %v5709, 0.0
        %v5720 = vcombine.high %v5716, 0.0
        %v5721 = vcombine.high %v715, 0.0
        %v5723 = vunpack.c.l.s4 1983009808
        %v5724 = vunpack.c.0.s8 %v5723
        %v5725 = vlaneseq
        %v5726 = vshrl.u32 %v5725, 7
        %v5727 = vsub.s32 %v5724, %v5726
        %v5728 = vrot.slane %v715, %v5727
        %v5730 = vunpack.c.l.s4 1983009808
        %v5731 = vunpack.c.0.s8 %v5730
        %v5732 = vlaneseq
        %v5733 = vshrl.u32 %v5732, 7
        %v5734 = vsub.s32 %v5731, %v5733
        %v5735 = vrot.slane %v5721, %v5734
        %v5736 = vcombine.high %v5728, 0.0
        %v5738 = vunpack.c.l.s4 1934713408
        %v5739 = vunpack.c.0.s8 %v5738
        %v5740 = vlaneseq
        %v5741 = vshrl.u32 %v5740, 7
        %v5742 = vsub.s32 %v5739, %v5741
        %v5743 = vrot.slane %v5728, %v5742
        %v5745 = vunpack.c.l.s4 1934713408
        %v5746 = vunpack.c.0.s8 %v5745
        %v5747 = vlaneseq
        %v5748 = vshrl.u32 %v5747, 7
        %v5749 = vsub.s32 %v5746, %v5748
        %v5750 = vrot.slane %v5736, %v5749
        %v5751 = vcombine.high %v5735, 0.0
        %v5753 = vunpack.c.l.s4 1934713408
        %v5754 = vunpack.c.0.s8 %v5753
        %v5755 = vlaneseq
        %v5756 = vshrl.u32 %v5755, 7
        %v5757 = vsub.s32 %v5754, %v5756
        %v5758 = vrot.slane %v5735, %v5757
        %v5760 = vunpack.c.l.s4 1934713408
        %v5761 = vunpack.c.0.s8 %v5760
        %v5762 = vlaneseq
        %v5763 = vshrl.u32 %v5762, 7
        %v5764 = vsub.s32 %v5761, %v5763
        %v5765 = vrot.slane %v5751, %v5764
        %v5766 = vcombine.high %v5743, 0.0
        %v5767 = vcombine.high %v5750, 0.0
        %v5768 = vcombine.high %v5758, 0.0
        %v5769 = vcombine.high %v5765, 0.0
        %v5770 = vcombine.high %v722, 0.0
        %v5772 = vunpack.c.l.s4 1983009808
        %v5773 = vunpack.c.0.s8 %v5772
        %v5774 = vlaneseq
        %v5775 = vshrl.u32 %v5774, 7
        %v5776 = vsub.s32 %v5773, %v5775
        %v5777 = vrot.slane %v722, %v5776
        %v5779 = vunpack.c.l.s4 1983009808
        %v5780 = vunpack.c.0.s8 %v5779
        %v5781 = vlaneseq
        %v5782 = vshrl.u32 %v5781, 7
        %v5783 = vsub.s32 %v5780, %v5782
        %v5784 = vrot.slane %v5770, %v5783
        %v5785 = vcombine.high %v5777, 0.0
        %v5787 = vunpack.c.l.s4 1934713408
        %v5788 = vunpack.c.0.s8 %v5787
        %v5789 = vlaneseq
        %v5790 = vshrl.u32 %v5789, 7
        %v5791 = vsub.s32 %v5788, %v5790
        %v5792 = vrot.slane %v5777, %v5791
        %v5794 = vunpack.c.l.s4 1934713408
        %v5795 = vunpack.c.0.s8 %v5794
        %v5796 = vlaneseq
        %v5797 = vshrl.u32 %v5796, 7
        %v5798 = vsub.s32 %v5795, %v5797
        %v5799 = vrot.slane %v5785, %v5798
        %v5800 = vcombine.high %v5784, 0.0
        %v5802 = vunpack.c.l.s4 1934713408
        %v5803 = vunpack.c.0.s8 %v5802
        %v5804 = vlaneseq
        %v5805 = vshrl.u32 %v5804, 7
        %v5806 = vsub.s32 %v5803, %v5805
        %v5807 = vrot.slane %v5784, %v5806
        %v5809 = vunpack.c.l.s4 1934713408
        %v5810 = vunpack.c.0.s8 %v5809
        %v5811 = vlaneseq
        %v5812 = vshrl.u32 %v5811, 7
        %v5813 = vsub.s32 %v5810, %v5812
        %v5814 = vrot.slane %v5800, %v5813
        %v5815 = vcombine.high %v5792, 0.0
        %v5816 = vcombine.high %v5799, 0.0
        %v5817 = vcombine.high %v5807, 0.0
        %v5818 = vcombine.high %v5814, 0.0
        %v5819 = vcombine.high %v726, 0.0
        %v5821 = vunpack.c.l.s4 1983009808
        %v5822 = vunpack.c.0.s8 %v5821
        %v5823 = vlaneseq
        %v5824 = vshrl.u32 %v5823, 7
        %v5825 = vsub.s32 %v5822, %v5824
        %v5826 = vrot.slane %v726, %v5825
        %v5828 = vunpack.c.l.s4 1983009808
        %v5829 = vunpack.c.0.s8 %v5828
        %v5830 = vlaneseq
        %v5831 = vshrl.u32 %v5830, 7
        %v5832 = vsub.s32 %v5829, %v5831
        %v5833 = vrot.slane %v5819, %v5832
        %v5834 = vcombine.high %v5826, 0.0
        %v5836 = vunpack.c.l.s4 1934713408
        %v5837 = vunpack.c.0.s8 %v5836
        %v5838 = vlaneseq
        %v5839 = vshrl.u32 %v5838, 7
        %v5840 = vsub.s32 %v5837, %v5839
        %v5841 = vrot.slane %v5826, %v5840
        %v5843 = vunpack.c.l.s4 1934713408
        %v5844 = vunpack.c.0.s8 %v5843
        %v5845 = vlaneseq
        %v5846 = vshrl.u32 %v5845, 7
        %v5847 = vsub.s32 %v5844, %v5846
        %v5848 = vrot.slane %v5834, %v5847
        %v5849 = vcombine.high %v5833, 0.0
        %v5851 = vunpack.c.l.s4 1934713408
        %v5852 = vunpack.c.0.s8 %v5851
        %v5853 = vlaneseq
        %v5854 = vshrl.u32 %v5853, 7
        %v5855 = vsub.s32 %v5852, %v5854
        %v5856 = vrot.slane %v5833, %v5855
        %v5858 = vunpack.c.l.s4 1934713408
        %v5859 = vunpack.c.0.s8 %v5858
        %v5860 = vlaneseq
        %v5861 = vshrl.u32 %v5860, 7
        %v5862 = vsub.s32 %v5859, %v5861
        %v5863 = vrot.slane %v5849, %v5862
        %v5864 = vcombine.high %v5841, 0.0
        %v5865 = vcombine.high %v5848, 0.0
        %v5866 = vcombine.high %v5856, 0.0
        %v5867 = vcombine.high %v5863, 0.0
        %v5868 = vcombine.high %v733, 0.0
        %v5870 = vunpack.c.l.s4 1983009808
        %v5871 = vunpack.c.0.s8 %v5870
        %v5872 = vlaneseq
        %v5873 = vshrl.u32 %v5872, 7
        %v5874 = vsub.s32 %v5871, %v5873
        %v5875 = vrot.slane %v733, %v5874
        %v5877 = vunpack.c.l.s4 1983009808
        %v5878 = vunpack.c.0.s8 %v5877
        %v5879 = vlaneseq
        %v5880 = vshrl.u32 %v5879, 7
        %v5881 = vsub.s32 %v5878, %v5880
        %v5882 = vrot.slane %v5868, %v5881
        %v5883 = vcombine.high %v5875, 0.0
        %v5885 = vunpack.c.l.s4 1934713408
        %v5886 = vunpack.c.0.s8 %v5885
        %v5887 = vlaneseq
        %v5888 = vshrl.u32 %v5887, 7
        %v5889 = vsub.s32 %v5886, %v5888
        %v5890 = vrot.slane %v5875, %v5889
        %v5892 = vunpack.c.l.s4 1934713408
        %v5893 = vunpack.c.0.s8 %v5892
        %v5894 = vlaneseq
        %v5895 = vshrl.u32 %v5894, 7
        %v5896 = vsub.s32 %v5893, %v5895
        %v5897 = vrot.slane %v5883, %v5896
        %v5898 = vcombine.high %v5882, 0.0
        %v5900 = vunpack.c.l.s4 1934713408
        %v5901 = vunpack.c.0.s8 %v5900
        %v5902 = vlaneseq
        %v5903 = vshrl.u32 %v5902, 7
        %v5904 = vsub.s32 %v5901, %v5903
        %v5905 = vrot.slane %v5882, %v5904
        %v5907 = vunpack.c.l.s4 1934713408
        %v5908 = vunpack.c.0.s8 %v5907
        %v5909 = vlaneseq
        %v5910 = vshrl.u32 %v5909, 7
        %v5911 = vsub.s32 %v5908, %v5910
        %v5912 = vrot.slane %v5898, %v5911
        %v5913 = vcombine.high %v5890, 0.0
        %v5914 = vcombine.high %v5897, 0.0
        %v5915 = vcombine.high %v5905, 0.0
        %v5916 = vcombine.high %v5912, 0.0
        %v5917 = vcombine.high %v737, 0.0
        %v5919 = vunpack.c.l.s4 1983009808
        %v5920 = vunpack.c.0.s8 %v5919
        %v5921 = vlaneseq
        %v5922 = vshrl.u32 %v5921, 7
        %v5923 = vsub.s32 %v5920, %v5922
        %v5924 = vrot.slane %v737, %v5923
        %v5926 = vunpack.c.l.s4 1983009808
        %v5927 = vunpack.c.0.s8 %v5926
        %v5928 = vlaneseq
        %v5929 = vshrl.u32 %v5928, 7
        %v5930 = vsub.s32 %v5927, %v5929
        %v5931 = vrot.slane %v5917, %v5930
        %v5932 = vcombine.high %v5924, 0.0
        %v5934 = vunpack.c.l.s4 1934713408
        %v5935 = vunpack.c.0.s8 %v5934
        %v5936 = vlaneseq
        %v5937 = vshrl.u32 %v5936, 7
        %v5938 = vsub.s32 %v5935, %v5937
        %v5939 = vrot.slane %v5924, %v5938
        %v5941 = vunpack.c.l.s4 1934713408
        %v5942 = vunpack.c.0.s8 %v5941
        %v5943 = vlaneseq
        %v5944 = vshrl.u32 %v5943, 7
        %v5945 = vsub.s32 %v5942, %v5944
        %v5946 = vrot.slane %v5932, %v5945
        %v5947 = vcombine.high %v5931, 0.0
        %v5949 = vunpack.c.l.s4 1934713408
        %v5950 = vunpack.c.0.s8 %v5949
        %v5951 = vlaneseq
        %v5952 = vshrl.u32 %v5951, 7
        %v5953 = vsub.s32 %v5950, %v5952
        %v5954 = vrot.slane %v5931, %v5953
        %v5956 = vunpack.c.l.s4 1934713408
        %v5957 = vunpack.c.0.s8 %v5956
        %v5958 = vlaneseq
        %v5959 = vshrl.u32 %v5958, 7
        %v5960 = vsub.s32 %v5957, %v5959
        %v5961 = vrot.slane %v5947, %v5960
        %v5962 = vcombine.high %v5939, 0.0
        %v5963 = vcombine.high %v5946, 0.0
        %v5964 = vcombine.high %v5954, 0.0
        %v5965 = vcombine.high %v5961, 0.0
        %v5966 = vcombine.high %v744, 0.0
        %v5968 = vunpack.c.l.s4 1983009808
        %v5969 = vunpack.c.0.s8 %v5968
        %v5970 = vlaneseq
        %v5971 = vshrl.u32 %v5970, 7
        %v5972 = vsub.s32 %v5969, %v5971
        %v5973 = vrot.slane %v744, %v5972
        %v5975 = vunpack.c.l.s4 1983009808
        %v5976 = vunpack.c.0.s8 %v5975
        %v5977 = vlaneseq
        %v5978 = vshrl.u32 %v5977, 7
        %v5979 = vsub.s32 %v5976, %v5978
        %v5980 = vrot.slane %v5966, %v5979
        %v5981 = vcombine.high %v5973, 0.0
        %v5983 = vunpack.c.l.s4 1934713408
        %v5984 = vunpack.c.0.s8 %v5983
        %v5985 = vlaneseq
        %v5986 = vshrl.u32 %v5985, 7
        %v5987 = vsub.s32 %v5984, %v5986
        %v5988 = vrot.slane %v5973, %v5987
        %v5990 = vunpack.c.l.s4 1934713408
        %v5991 = vunpack.c.0.s8 %v5990
        %v5992 = vlaneseq
        %v5993 = vshrl.u32 %v5992, 7
        %v5994 = vsub.s32 %v5991, %v5993
        %v5995 = vrot.slane %v5981, %v5994
        %v5996 = vcombine.high %v5980, 0.0
        %v5998 = vunpack.c.l.s4 1934713408
        %v5999 = vunpack.c.0.s8 %v5998
        %v6000 = vlaneseq
        %v6001 = vshrl.u32 %v6000, 7
        %v6002 = vsub.s32 %v5999, %v6001
        %v6003 = vrot.slane %v5980, %v6002
        %v6005 = vunpack.c.l.s4 1934713408
        %v6006 = vunpack.c.0.s8 %v6005
        %v6007 = vlaneseq
        %v6008 = vshrl.u32 %v6007, 7
        %v6009 = vsub.s32 %v6006, %v6008
        %v6010 = vrot.slane %v5996, %v6009
        %v6011 = vcombine.high %v5988, 0.0
        %v6012 = vcombine.high %v5995, 0.0
        %v6013 = vcombine.high %v6003, 0.0
        %v6014 = vcombine.high %v6010, 0.0
        %v6015 = vcombine.high %v748, 0.0
        %v6017 = vunpack.c.l.s4 1983009808
        %v6018 = vunpack.c.0.s8 %v6017
        %v6019 = vlaneseq
        %v6020 = vshrl.u32 %v6019, 7
        %v6021 = vsub.s32 %v6018, %v6020
        %v6022 = vrot.slane %v748, %v6021
        %v6024 = vunpack.c.l.s4 1983009808
        %v6025 = vunpack.c.0.s8 %v6024
        %v6026 = vlaneseq
        %v6027 = vshrl.u32 %v6026, 7
        %v6028 = vsub.s32 %v6025, %v6027
        %v6029 = vrot.slane %v6015, %v6028
        %v6030 = vcombine.high %v6022, 0.0
        %v6032 = vunpack.c.l.s4 1934713408
        %v6033 = vunpack.c.0.s8 %v6032
        %v6034 = vlaneseq
        %v6035 = vshrl.u32 %v6034, 7
        %v6036 = vsub.s32 %v6033, %v6035
        %v6037 = vrot.slane %v6022, %v6036
        %v6039 = vunpack.c.l.s4 1934713408
        %v6040 = vunpack.c.0.s8 %v6039
        %v6041 = vlaneseq
        %v6042 = vshrl.u32 %v6041, 7
        %v6043 = vsub.s32 %v6040, %v6042
        %v6044 = vrot.slane %v6030, %v6043
        %v6045 = vcombine.high %v6029, 0.0
        %v6047 = vunpack.c.l.s4 1934713408
        %v6048 = vunpack.c.0.s8 %v6047
        %v6049 = vlaneseq
        %v6050 = vshrl.u32 %v6049, 7
        %v6051 = vsub.s32 %v6048, %v6050
        %v6052 = vrot.slane %v6029, %v6051
        %v6054 = vunpack.c.l.s4 1934713408
        %v6055 = vunpack.c.0.s8 %v6054
        %v6056 = vlaneseq
        %v6057 = vshrl.u32 %v6056, 7
        %v6058 = vsub.s32 %v6055, %v6057
        %v6059 = vrot.slane %v6045, %v6058
        %v6060 = vcombine.high %v6037, 0.0
        %v6061 = vcombine.high %v6044, 0.0
        %v6062 = vcombine.high %v6052, 0.0
        %v6063 = vcombine.high %v6059, 0.0
        %v6064 = vcombine.high %v755, 0.0
        %v6066 = vunpack.c.l.s4 1983009808
        %v6067 = vunpack.c.0.s8 %v6066
        %v6068 = vlaneseq
        %v6069 = vshrl.u32 %v6068, 7
        %v6070 = vsub.s32 %v6067, %v6069
        %v6071 = vrot.slane %v755, %v6070
        %v6073 = vunpack.c.l.s4 1983009808
        %v6074 = vunpack.c.0.s8 %v6073
        %v6075 = vlaneseq
        %v6076 = vshrl.u32 %v6075, 7
        %v6077 = vsub.s32 %v6074, %v6076
        %v6078 = vrot.slane %v6064, %v6077
        %v6079 = vcombine.high %v6071, 0.0
        %v6081 = vunpack.c.l.s4 1934713408
        %v6082 = vunpack.c.0.s8 %v6081
        %v6083 = vlaneseq
        %v6084 = vshrl.u32 %v6083, 7
        %v6085 = vsub.s32 %v6082, %v6084
        %v6086 = vrot.slane %v6071, %v6085
        %v6088 = vunpack.c.l.s4 1934713408
        %v6089 = vunpack.c.0.s8 %v6088
        %v6090 = vlaneseq
        %v6091 = vshrl.u32 %v6090, 7
        %v6092 = vsub.s32 %v6089, %v6091
        %v6093 = vrot.slane %v6079, %v6092
        %v6094 = vcombine.high %v6078, 0.0
        %v6096 = vunpack.c.l.s4 1934713408
        %v6097 = vunpack.c.0.s8 %v6096
        %v6098 = vlaneseq
        %v6099 = vshrl.u32 %v6098, 7
        %v6100 = vsub.s32 %v6097, %v6099
        %v6101 = vrot.slane %v6078, %v6100
        %v6103 = vunpack.c.l.s4 1934713408
        %v6104 = vunpack.c.0.s8 %v6103
        %v6105 = vlaneseq
        %v6106 = vshrl.u32 %v6105, 7
        %v6107 = vsub.s32 %v6104, %v6106
        %v6108 = vrot.slane %v6094, %v6107
        %v6109 = vcombine.high %v6086, 0.0
        %v6110 = vcombine.high %v6093, 0.0
        %v6111 = vcombine.high %v6101, 0.0
        %v6112 = vcombine.high %v6108, 0.0
        %v6113 = vcombine.high %v759, 0.0
        %v6115 = vunpack.c.l.s4 1983009808
        %v6116 = vunpack.c.0.s8 %v6115
        %v6117 = vlaneseq
        %v6118 = vshrl.u32 %v6117, 7
        %v6119 = vsub.s32 %v6116, %v6118
        %v6120 = vrot.slane %v759, %v6119
        %v6122 = vunpack.c.l.s4 1983009808
        %v6123 = vunpack.c.0.s8 %v6122
        %v6124 = vlaneseq
        %v6125 = vshrl.u32 %v6124, 7
        %v6126 = vsub.s32 %v6123, %v6125
        %v6127 = vrot.slane %v6113, %v6126
        %v6128 = vcombine.high %v6120, 0.0
        %v6130 = vunpack.c.l.s4 1934713408
        %v6131 = vunpack.c.0.s8 %v6130
        %v6132 = vlaneseq
        %v6133 = vshrl.u32 %v6132, 7
        %v6134 = vsub.s32 %v6131, %v6133
        %v6135 = vrot.slane %v6120, %v6134
        %v6137 = vunpack.c.l.s4 1934713408
        %v6138 = vunpack.c.0.s8 %v6137
        %v6139 = vlaneseq
        %v6140 = vshrl.u32 %v6139, 7
        %v6141 = vsub.s32 %v6138, %v6140
        %v6142 = vrot.slane %v6128, %v6141
        %v6143 = vcombine.high %v6127, 0.0
        %v6145 = vunpack.c.l.s4 1934713408
        %v6146 = vunpack.c.0.s8 %v6145
        %v6147 = vlaneseq
        %v6148 = vshrl.u32 %v6147, 7
        %v6149 = vsub.s32 %v6146, %v6148
        %v6150 = vrot.slane %v6127, %v6149
        %v6152 = vunpack.c.l.s4 1934713408
        %v6153 = vunpack.c.0.s8 %v6152
        %v6154 = vlaneseq
        %v6155 = vshrl.u32 %v6154, 7
        %v6156 = vsub.s32 %v6153, %v6155
        %v6157 = vrot.slane %v6143, %v6156
        %v6158 = vcombine.high %v6135, 0.0
        %v6159 = vcombine.high %v6142, 0.0
        %v6160 = vcombine.high %v6150, 0.0
        %v6161 = vcombine.high %v6157, 0.0
        %v6162 = vcombine.high %v766, 0.0
        %v6164 = vunpack.c.l.s4 1983009808
        %v6165 = vunpack.c.0.s8 %v6164
        %v6166 = vlaneseq
        %v6167 = vshrl.u32 %v6166, 7
        %v6168 = vsub.s32 %v6165, %v6167
        %v6169 = vrot.slane %v766, %v6168
        %v6171 = vunpack.c.l.s4 1983009808
        %v6172 = vunpack.c.0.s8 %v6171
        %v6173 = vlaneseq
        %v6174 = vshrl.u32 %v6173, 7
        %v6175 = vsub.s32 %v6172, %v6174
        %v6176 = vrot.slane %v6162, %v6175
        %v6177 = vcombine.high %v6169, 0.0
        %v6179 = vunpack.c.l.s4 1934713408
        %v6180 = vunpack.c.0.s8 %v6179
        %v6181 = vlaneseq
        %v6182 = vshrl.u32 %v6181, 7
        %v6183 = vsub.s32 %v6180, %v6182
        %v6184 = vrot.slane %v6169, %v6183
        %v6186 = vunpack.c.l.s4 1934713408
        %v6187 = vunpack.c.0.s8 %v6186
        %v6188 = vlaneseq
        %v6189 = vshrl.u32 %v6188, 7
        %v6190 = vsub.s32 %v6187, %v6189
        %v6191 = vrot.slane %v6177, %v6190
        %v6192 = vcombine.high %v6176, 0.0
        %v6194 = vunpack.c.l.s4 1934713408
        %v6195 = vunpack.c.0.s8 %v6194
        %v6196 = vlaneseq
        %v6197 = vshrl.u32 %v6196, 7
        %v6198 = vsub.s32 %v6195, %v6197
        %v6199 = vrot.slane %v6176, %v6198
        %v6201 = vunpack.c.l.s4 1934713408
        %v6202 = vunpack.c.0.s8 %v6201
        %v6203 = vlaneseq
        %v6204 = vshrl.u32 %v6203, 7
        %v6205 = vsub.s32 %v6202, %v6204
        %v6206 = vrot.slane %v6192, %v6205
        %v6207 = vcombine.high %v6184, 0.0
        %v6208 = vcombine.high %v6191, 0.0
        %v6209 = vcombine.high %v6199, 0.0
        %v6210 = vcombine.high %v6206, 0.0
        %v6211 = vcombine.high %v770, 0.0
        %v6213 = vunpack.c.l.s4 1983009808
        %v6214 = vunpack.c.0.s8 %v6213
        %v6215 = vlaneseq
        %v6216 = vshrl.u32 %v6215, 7
        %v6217 = vsub.s32 %v6214, %v6216
        %v6218 = vrot.slane %v770, %v6217
        %v6220 = vunpack.c.l.s4 1983009808
        %v6221 = vunpack.c.0.s8 %v6220
        %v6222 = vlaneseq
        %v6223 = vshrl.u32 %v6222, 7
        %v6224 = vsub.s32 %v6221, %v6223
        %v6225 = vrot.slane %v6211, %v6224
        %v6226 = vcombine.high %v6218, 0.0
        %v6228 = vunpack.c.l.s4 1934713408
        %v6229 = vunpack.c.0.s8 %v6228
        %v6230 = vlaneseq
        %v6231 = vshrl.u32 %v6230, 7
        %v6232 = vsub.s32 %v6229, %v6231
        %v6233 = vrot.slane %v6218, %v6232
        %v6235 = vunpack.c.l.s4 1934713408
        %v6236 = vunpack.c.0.s8 %v6235
        %v6237 = vlaneseq
        %v6238 = vshrl.u32 %v6237, 7
        %v6239 = vsub.s32 %v6236, %v6238
        %v6240 = vrot.slane %v6226, %v6239
        %v6241 = vcombine.high %v6225, 0.0
        %v6243 = vunpack.c.l.s4 1934713408
        %v6244 = vunpack.c.0.s8 %v6243
        %v6245 = vlaneseq
        %v6246 = vshrl.u32 %v6245, 7
        %v6247 = vsub.s32 %v6244, %v6246
        %v6248 = vrot.slane %v6225, %v6247
        %v6250 = vunpack.c.l.s4 1934713408
        %v6251 = vunpack.c.0.s8 %v6250
        %v6252 = vlaneseq
        %v6253 = vshrl.u32 %v6252, 7
        %v6254 = vsub.s32 %v6251, %v6253
        %v6255 = vrot.slane %v6241, %v6254
        %v6256 = vcombine.high %v6233, 0.0
        %v6257 = vcombine.high %v6240, 0.0
        %v6258 = vcombine.high %v6248, 0.0
        %v6259 = vcombine.high %v6255, 0.0
        %v6260 = vcombine.high %v777, 0.0
        %v6262 = vunpack.c.l.s4 1983009808
        %v6263 = vunpack.c.0.s8 %v6262
        %v6264 = vlaneseq
        %v6265 = vshrl.u32 %v6264, 7
        %v6266 = vsub.s32 %v6263, %v6265
        %v6267 = vrot.slane %v777, %v6266
        %v6269 = vunpack.c.l.s4 1983009808
        %v6270 = vunpack.c.0.s8 %v6269
        %v6271 = vlaneseq
        %v6272 = vshrl.u32 %v6271, 7
        %v6273 = vsub.s32 %v6270, %v6272
        %v6274 = vrot.slane %v6260, %v6273
        %v6275 = vcombine.high %v6267, 0.0
        %v6277 = vunpack.c.l.s4 1934713408
        %v6278 = vunpack.c.0.s8 %v6277
        %v6279 = vlaneseq
        %v6280 = vshrl.u32 %v6279, 7
        %v6281 = vsub.s32 %v6278, %v6280
        %v6282 = vrot.slane %v6267, %v6281
        %v6284 = vunpack.c.l.s4 1934713408
        %v6285 = vunpack.c.0.s8 %v6284
        %v6286 = vlaneseq
        %v6287 = vshrl.u32 %v6286, 7
        %v6288 = vsub.s32 %v6285, %v6287
        %v6289 = vrot.slane %v6275, %v6288
        %v6290 = vcombine.high %v6274, 0.0
        %v6292 = vunpack.c.l.s4 1934713408
        %v6293 = vunpack.c.0.s8 %v6292
        %v6294 = vlaneseq
        %v6295 = vshrl.u32 %v6294, 7
        %v6296 = vsub.s32 %v6293, %v6295
        %v6297 = vrot.slane %v6274, %v6296
        %v6299 = vunpack.c.l.s4 1934713408
        %v6300 = vunpack.c.0.s8 %v6299
        %v6301 = vlaneseq
        %v6302 = vshrl.u32 %v6301, 7
        %v6303 = vsub.s32 %v6300, %v6302
        %v6304 = vrot.slane %v6290, %v6303
        %v6305 = vcombine.high %v6282, 0.0
        %v6306 = vcombine.high %v6289, 0.0
        %v6307 = vcombine.high %v6297, 0.0
        %v6308 = vcombine.high %v6304, 0.0
        %v6309 = vcombine.high %v781, 0.0
        %v6311 = vunpack.c.l.s4 1983009808
        %v6312 = vunpack.c.0.s8 %v6311
        %v6313 = vlaneseq
        %v6314 = vshrl.u32 %v6313, 7
        %v6315 = vsub.s32 %v6312, %v6314
        %v6316 = vrot.slane %v781, %v6315
        %v6318 = vunpack.c.l.s4 1983009808
        %v6319 = vunpack.c.0.s8 %v6318
        %v6320 = vlaneseq
        %v6321 = vshrl.u32 %v6320, 7
        %v6322 = vsub.s32 %v6319, %v6321
        %v6323 = vrot.slane %v6309, %v6322
        %v6324 = vcombine.high %v6316, 0.0
        %v6326 = vunpack.c.l.s4 1934713408
        %v6327 = vunpack.c.0.s8 %v6326
        %v6328 = vlaneseq
        %v6329 = vshrl.u32 %v6328, 7
        %v6330 = vsub.s32 %v6327, %v6329
        %v6331 = vrot.slane %v6316, %v6330
        %v6333 = vunpack.c.l.s4 1934713408
        %v6334 = vunpack.c.0.s8 %v6333
        %v6335 = vlaneseq
        %v6336 = vshrl.u32 %v6335, 7
        %v6337 = vsub.s32 %v6334, %v6336
        %v6338 = vrot.slane %v6324, %v6337
        %v6339 = vcombine.high %v6323, 0.0
        %v6341 = vunpack.c.l.s4 1934713408
        %v6342 = vunpack.c.0.s8 %v6341
        %v6343 = vlaneseq
        %v6344 = vshrl.u32 %v6343, 7
        %v6345 = vsub.s32 %v6342, %v6344
        %v6346 = vrot.slane %v6323, %v6345
        %v6348 = vunpack.c.l.s4 1934713408
        %v6349 = vunpack.c.0.s8 %v6348
        %v6350 = vlaneseq
        %v6351 = vshrl.u32 %v6350, 7
        %v6352 = vsub.s32 %v6349, %v6351
        %v6353 = vrot.slane %v6339, %v6352
        %v6354 = vcombine.high %v6331, 0.0
        %v6355 = vcombine.high %v6338, 0.0
        %v6356 = vcombine.high %v6346, 0.0
        %v6357 = vcombine.high %v6353, 0.0
        %v6358 = vcombine.high %v788, 0.0
        %v6360 = vunpack.c.l.s4 1983009808
        %v6361 = vunpack.c.0.s8 %v6360
        %v6362 = vlaneseq
        %v6363 = vshrl.u32 %v6362, 7
        %v6364 = vsub.s32 %v6361, %v6363
        %v6365 = vrot.slane %v788, %v6364
        %v6367 = vunpack.c.l.s4 1983009808
        %v6368 = vunpack.c.0.s8 %v6367
        %v6369 = vlaneseq
        %v6370 = vshrl.u32 %v6369, 7
        %v6371 = vsub.s32 %v6368, %v6370
        %v6372 = vrot.slane %v6358, %v6371
        %v6373 = vcombine.high %v6365, 0.0
        %v6375 = vunpack.c.l.s4 1934713408
        %v6376 = vunpack.c.0.s8 %v6375
        %v6377 = vlaneseq
        %v6378 = vshrl.u32 %v6377, 7
        %v6379 = vsub.s32 %v6376, %v6378
        %v6380 = vrot.slane %v6365, %v6379
        %v6382 = vunpack.c.l.s4 1934713408
        %v6383 = vunpack.c.0.s8 %v6382
        %v6384 = vlaneseq
        %v6385 = vshrl.u32 %v6384, 7
        %v6386 = vsub.s32 %v6383, %v6385
        %v6387 = vrot.slane %v6373, %v6386
        %v6388 = vcombine.high %v6372, 0.0
        %v6390 = vunpack.c.l.s4 1934713408
        %v6391 = vunpack.c.0.s8 %v6390
        %v6392 = vlaneseq
        %v6393 = vshrl.u32 %v6392, 7
        %v6394 = vsub.s32 %v6391, %v6393
        %v6395 = vrot.slane %v6372, %v6394
        %v6397 = vunpack.c.l.s4 1934713408
        %v6398 = vunpack.c.0.s8 %v6397
        %v6399 = vlaneseq
        %v6400 = vshrl.u32 %v6399, 7
        %v6401 = vsub.s32 %v6398, %v6400
        %v6402 = vrot.slane %v6388, %v6401
        %v6403 = vcombine.high %v6380, 0.0
        %v6404 = vcombine.high %v6387, 0.0
        %v6405 = vcombine.high %v6395, 0.0
        %v6406 = vcombine.high %v6402, 0.0
        %v6407 = vcombine.high %v792, 0.0
        %v6409 = vunpack.c.l.s4 1983009808
        %v6410 = vunpack.c.0.s8 %v6409
        %v6411 = vlaneseq
        %v6412 = vshrl.u32 %v6411, 7
        %v6413 = vsub.s32 %v6410, %v6412
        %v6414 = vrot.slane %v792, %v6413
        %v6416 = vunpack.c.l.s4 1983009808
        %v6417 = vunpack.c.0.s8 %v6416
        %v6418 = vlaneseq
        %v6419 = vshrl.u32 %v6418, 7
        %v6420 = vsub.s32 %v6417, %v6419
        %v6421 = vrot.slane %v6407, %v6420
        %v6422 = vcombine.high %v6414, 0.0
        %v6424 = vunpack.c.l.s4 1934713408
        %v6425 = vunpack.c.0.s8 %v6424
        %v6426 = vlaneseq
        %v6427 = vshrl.u32 %v6426, 7
        %v6428 = vsub.s32 %v6425, %v6427
        %v6429 = vrot.slane %v6414, %v6428
        %v6431 = vunpack.c.l.s4 1934713408
        %v6432 = vunpack.c.0.s8 %v6431
        %v6433 = vlaneseq
        %v6434 = vshrl.u32 %v6433, 7
        %v6435 = vsub.s32 %v6432, %v6434
        %v6436 = vrot.slane %v6422, %v6435
        %v6437 = vcombine.high %v6421, 0.0
        %v6439 = vunpack.c.l.s4 1934713408
        %v6440 = vunpack.c.0.s8 %v6439
        %v6441 = vlaneseq
        %v6442 = vshrl.u32 %v6441, 7
        %v6443 = vsub.s32 %v6440, %v6442
        %v6444 = vrot.slane %v6421, %v6443
        %v6446 = vunpack.c.l.s4 1934713408
        %v6447 = vunpack.c.0.s8 %v6446
        %v6448 = vlaneseq
        %v6449 = vshrl.u32 %v6448, 7
        %v6450 = vsub.s32 %v6447, %v6449
        %v6451 = vrot.slane %v6437, %v6450
        %v6452 = vcombine.high %v6429, 0.0
        %v6453 = vcombine.high %v6436, 0.0
        %v6454 = vcombine.high %v6444, 0.0
        %v6455 = vcombine.high %v6451, 0.0
        %v6456 = vcombine.high %v799, 0.0
        %v6458 = vunpack.c.l.s4 1983009808
        %v6459 = vunpack.c.0.s8 %v6458
        %v6460 = vlaneseq
        %v6461 = vshrl.u32 %v6460, 7
        %v6462 = vsub.s32 %v6459, %v6461
        %v6463 = vrot.slane %v799, %v6462
        %v6465 = vunpack.c.l.s4 1983009808
        %v6466 = vunpack.c.0.s8 %v6465
        %v6467 = vlaneseq
        %v6468 = vshrl.u32 %v6467, 7
        %v6469 = vsub.s32 %v6466, %v6468
        %v6470 = vrot.slane %v6456, %v6469
        %v6471 = vcombine.high %v6463, 0.0
        %v6473 = vunpack.c.l.s4 1934713408
        %v6474 = vunpack.c.0.s8 %v6473
        %v6475 = vlaneseq
        %v6476 = vshrl.u32 %v6475, 7
        %v6477 = vsub.s32 %v6474, %v6476
        %v6478 = vrot.slane %v6463, %v6477
        %v6480 = vunpack.c.l.s4 1934713408
        %v6481 = vunpack.c.0.s8 %v6480
        %v6482 = vlaneseq
        %v6483 = vshrl.u32 %v6482, 7
        %v6484 = vsub.s32 %v6481, %v6483
        %v6485 = vrot.slane %v6471, %v6484
        %v6486 = vcombine.high %v6470, 0.0
        %v6488 = vunpack.c.l.s4 1934713408
        %v6489 = vunpack.c.0.s8 %v6488
        %v6490 = vlaneseq
        %v6491 = vshrl.u32 %v6490, 7
        %v6492 = vsub.s32 %v6489, %v6491
        %v6493 = vrot.slane %v6470, %v6492
        %v6495 = vunpack.c.l.s4 1934713408
        %v6496 = vunpack.c.0.s8 %v6495
        %v6497 = vlaneseq
        %v6498 = vshrl.u32 %v6497, 7
        %v6499 = vsub.s32 %v6496, %v6498
        %v6500 = vrot.slane %v6486, %v6499
        %v6501 = vcombine.high %v6478, 0.0
        %v6502 = vcombine.high %v6485, 0.0
        %v6503 = vcombine.high %v6493, 0.0
        %v6504 = vcombine.high %v6500, 0.0
        %v6505 = vcombine.high %v803, 0.0
        %v6507 = vunpack.c.l.s4 1983009808
        %v6508 = vunpack.c.0.s8 %v6507
        %v6509 = vlaneseq
        %v6510 = vshrl.u32 %v6509, 7
        %v6511 = vsub.s32 %v6508, %v6510
        %v6512 = vrot.slane %v803, %v6511
        %v6514 = vunpack.c.l.s4 1983009808
        %v6515 = vunpack.c.0.s8 %v6514
        %v6516 = vlaneseq
        %v6517 = vshrl.u32 %v6516, 7
        %v6518 = vsub.s32 %v6515, %v6517
        %v6519 = vrot.slane %v6505, %v6518
        %v6520 = vcombine.high %v6512, 0.0
        %v6522 = vunpack.c.l.s4 1934713408
        %v6523 = vunpack.c.0.s8 %v6522
        %v6524 = vlaneseq
        %v6525 = vshrl.u32 %v6524, 7
        %v6526 = vsub.s32 %v6523, %v6525
        %v6527 = vrot.slane %v6512, %v6526
        %v6529 = vunpack.c.l.s4 1934713408
        %v6530 = vunpack.c.0.s8 %v6529
        %v6531 = vlaneseq
        %v6532 = vshrl.u32 %v6531, 7
        %v6533 = vsub.s32 %v6530, %v6532
        %v6534 = vrot.slane %v6520, %v6533
        %v6535 = vcombine.high %v6519, 0.0
        %v6537 = vunpack.c.l.s4 1934713408
        %v6538 = vunpack.c.0.s8 %v6537
        %v6539 = vlaneseq
        %v6540 = vshrl.u32 %v6539, 7
        %v6541 = vsub.s32 %v6538, %v6540
        %v6542 = vrot.slane %v6519, %v6541
        %v6544 = vunpack.c.l.s4 1934713408
        %v6545 = vunpack.c.0.s8 %v6544
        %v6546 = vlaneseq
        %v6547 = vshrl.u32 %v6546, 7
        %v6548 = vsub.s32 %v6545, %v6547
        %v6549 = vrot.slane %v6535, %v6548
        %v6550 = vcombine.high %v6527, 0.0
        %v6551 = vcombine.high %v6534, 0.0
        %v6552 = vcombine.high %v6542, 0.0
        %v6553 = vcombine.high %v6549, 0.0
        %v6554 = vcombine.high %v810, 0.0
        %v6556 = vunpack.c.l.s4 1983009808
        %v6557 = vunpack.c.0.s8 %v6556
        %v6558 = vlaneseq
        %v6559 = vshrl.u32 %v6558, 7
        %v6560 = vsub.s32 %v6557, %v6559
        %v6561 = vrot.slane %v810, %v6560
        %v6563 = vunpack.c.l.s4 1983009808
        %v6564 = vunpack.c.0.s8 %v6563
        %v6565 = vlaneseq
        %v6566 = vshrl.u32 %v6565, 7
        %v6567 = vsub.s32 %v6564, %v6566
        %v6568 = vrot.slane %v6554, %v6567
        %v6569 = vcombine.high %v6561, 0.0
        %v6571 = vunpack.c.l.s4 1934713408
        %v6572 = vunpack.c.0.s8 %v6571
        %v6573 = vlaneseq
        %v6574 = vshrl.u32 %v6573, 7
        %v6575 = vsub.s32 %v6572, %v6574
        %v6576 = vrot.slane %v6561, %v6575
        %v6578 = vunpack.c.l.s4 1934713408
        %v6579 = vunpack.c.0.s8 %v6578
        %v6580 = vlaneseq
        %v6581 = vshrl.u32 %v6580, 7
        %v6582 = vsub.s32 %v6579, %v6581
        %v6583 = vrot.slane %v6569, %v6582
        %v6584 = vcombine.high %v6568, 0.0
        %v6586 = vunpack.c.l.s4 1934713408
        %v6587 = vunpack.c.0.s8 %v6586
        %v6588 = vlaneseq
        %v6589 = vshrl.u32 %v6588, 7
        %v6590 = vsub.s32 %v6587, %v6589
        %v6591 = vrot.slane %v6568, %v6590
        %v6593 = vunpack.c.l.s4 1934713408
        %v6594 = vunpack.c.0.s8 %v6593
        %v6595 = vlaneseq
        %v6596 = vshrl.u32 %v6595, 7
        %v6597 = vsub.s32 %v6594, %v6596
        %v6598 = vrot.slane %v6584, %v6597
        %v6599 = vcombine.high %v6576, 0.0
        %v6600 = vcombine.high %v6583, 0.0
        %v6601 = vcombine.high %v6591, 0.0
        %v6602 = vcombine.high %v6598, 0.0
        %v6603 = vcombine.high %v814, 0.0
        %v6605 = vunpack.c.l.s4 1983009808
        %v6606 = vunpack.c.0.s8 %v6605
        %v6607 = vlaneseq
        %v6608 = vshrl.u32 %v6607, 7
        %v6609 = vsub.s32 %v6606, %v6608
        %v6610 = vrot.slane %v814, %v6609
        %v6612 = vunpack.c.l.s4 1983009808
        %v6613 = vunpack.c.0.s8 %v6612
        %v6614 = vlaneseq
        %v6615 = vshrl.u32 %v6614, 7
        %v6616 = vsub.s32 %v6613, %v6615
        %v6617 = vrot.slane %v6603, %v6616
        %v6618 = vcombine.high %v6610, 0.0
        %v6620 = vunpack.c.l.s4 1934713408
        %v6621 = vunpack.c.0.s8 %v6620
        %v6622 = vlaneseq
        %v6623 = vshrl.u32 %v6622, 7
        %v6624 = vsub.s32 %v6621, %v6623
        %v6625 = vrot.slane %v6610, %v6624
        %v6627 = vunpack.c.l.s4 1934713408
        %v6628 = vunpack.c.0.s8 %v6627
        %v6629 = vlaneseq
        %v6630 = vshrl.u32 %v6629, 7
        %v6631 = vsub.s32 %v6628, %v6630
        %v6632 = vrot.slane %v6618, %v6631
        %v6633 = vcombine.high %v6617, 0.0
        %v6635 = vunpack.c.l.s4 1934713408
        %v6636 = vunpack.c.0.s8 %v6635
        %v6637 = vlaneseq
        %v6638 = vshrl.u32 %v6637, 7
        %v6639 = vsub.s32 %v6636, %v6638
        %v6640 = vrot.slane %v6617, %v6639
        %v6642 = vunpack.c.l.s4 1934713408
        %v6643 = vunpack.c.0.s8 %v6642
        %v6644 = vlaneseq
        %v6645 = vshrl.u32 %v6644, 7
        %v6646 = vsub.s32 %v6643, %v6645
        %v6647 = vrot.slane %v6633, %v6646
        %v6648 = vcombine.high %v6625, 0.0
        %v6649 = vcombine.high %v6632, 0.0
        %v6650 = vcombine.high %v6640, 0.0
        %v6651 = vcombine.high %v6647, 0.0
        %v6652 = vcombine.high %v821, 0.0
        %v6654 = vunpack.c.l.s4 1983009808
        %v6655 = vunpack.c.0.s8 %v6654
        %v6656 = vlaneseq
        %v6657 = vshrl.u32 %v6656, 7
        %v6658 = vsub.s32 %v6655, %v6657
        %v6659 = vrot.slane %v821, %v6658
        %v6661 = vunpack.c.l.s4 1983009808
        %v6662 = vunpack.c.0.s8 %v6661
        %v6663 = vlaneseq
        %v6664 = vshrl.u32 %v6663, 7
        %v6665 = vsub.s32 %v6662, %v6664
        %v6666 = vrot.slane %v6652, %v6665
        %v6667 = vcombine.high %v6659, 0.0
        %v6669 = vunpack.c.l.s4 1934713408
        %v6670 = vunpack.c.0.s8 %v6669
        %v6671 = vlaneseq
        %v6672 = vshrl.u32 %v6671, 7
        %v6673 = vsub.s32 %v6670, %v6672
        %v6674 = vrot.slane %v6659, %v6673
        %v6676 = vunpack.c.l.s4 1934713408
        %v6677 = vunpack.c.0.s8 %v6676
        %v6678 = vlaneseq
        %v6679 = vshrl.u32 %v6678, 7
        %v6680 = vsub.s32 %v6677, %v6679
        %v6681 = vrot.slane %v6667, %v6680
        %v6682 = vcombine.high %v6666, 0.0
        %v6684 = vunpack.c.l.s4 1934713408
        %v6685 = vunpack.c.0.s8 %v6684
        %v6686 = vlaneseq
        %v6687 = vshrl.u32 %v6686, 7
        %v6688 = vsub.s32 %v6685, %v6687
        %v6689 = vrot.slane %v6666, %v6688
        %v6691 = vunpack.c.l.s4 1934713408
        %v6692 = vunpack.c.0.s8 %v6691
        %v6693 = vlaneseq
        %v6694 = vshrl.u32 %v6693, 7
        %v6695 = vsub.s32 %v6692, %v6694
        %v6696 = vrot.slane %v6682, %v6695
        %v6697 = vcombine.high %v6674, 0.0
        %v6698 = vcombine.high %v6681, 0.0
        %v6699 = vcombine.high %v6689, 0.0
        %v6700 = vcombine.high %v6696, 0.0
        %v6701 = vcombine.high %v825, 0.0
        %v6703 = vunpack.c.l.s4 1983009808
        %v6704 = vunpack.c.0.s8 %v6703
        %v6705 = vlaneseq
        %v6706 = vshrl.u32 %v6705, 7
        %v6707 = vsub.s32 %v6704, %v6706
        %v6708 = vrot.slane %v825, %v6707
        %v6710 = vunpack.c.l.s4 1983009808
        %v6711 = vunpack.c.0.s8 %v6710
        %v6712 = vlaneseq
        %v6713 = vshrl.u32 %v6712, 7
        %v6714 = vsub.s32 %v6711, %v6713
        %v6715 = vrot.slane %v6701, %v6714
        %v6716 = vcombine.high %v6708, 0.0
        %v6718 = vunpack.c.l.s4 1934713408
        %v6719 = vunpack.c.0.s8 %v6718
        %v6720 = vlaneseq
        %v6721 = vshrl.u32 %v6720, 7
        %v6722 = vsub.s32 %v6719, %v6721
        %v6723 = vrot.slane %v6708, %v6722
        %v6725 = vunpack.c.l.s4 1934713408
        %v6726 = vunpack.c.0.s8 %v6725
        %v6727 = vlaneseq
        %v6728 = vshrl.u32 %v6727, 7
        %v6729 = vsub.s32 %v6726, %v6728
        %v6730 = vrot.slane %v6716, %v6729
        %v6731 = vcombine.high %v6715, 0.0
        %v6733 = vunpack.c.l.s4 1934713408
        %v6734 = vunpack.c.0.s8 %v6733
        %v6735 = vlaneseq
        %v6736 = vshrl.u32 %v6735, 7
        %v6737 = vsub.s32 %v6734, %v6736
        %v6738 = vrot.slane %v6715, %v6737
        %v6740 = vunpack.c.l.s4 1934713408
        %v6741 = vunpack.c.0.s8 %v6740
        %v6742 = vlaneseq
        %v6743 = vshrl.u32 %v6742, 7
        %v6744 = vsub.s32 %v6741, %v6743
        %v6745 = vrot.slane %v6731, %v6744
        %v6746 = vcombine.high %v6723, 0.0
        %v6747 = vcombine.high %v6730, 0.0
        %v6748 = vcombine.high %v6738, 0.0
        %v6749 = vcombine.high %v6745, 0.0
        %v6750 = vcombine.high %v832, 0.0
        %v6752 = vunpack.c.l.s4 1983009808
        %v6753 = vunpack.c.0.s8 %v6752
        %v6754 = vlaneseq
        %v6755 = vshrl.u32 %v6754, 7
        %v6756 = vsub.s32 %v6753, %v6755
        %v6757 = vrot.slane %v832, %v6756
        %v6759 = vunpack.c.l.s4 1983009808
        %v6760 = vunpack.c.0.s8 %v6759
        %v6761 = vlaneseq
        %v6762 = vshrl.u32 %v6761, 7
        %v6763 = vsub.s32 %v6760, %v6762
        %v6764 = vrot.slane %v6750, %v6763
        %v6765 = vcombine.high %v6757, 0.0
        %v6767 = vunpack.c.l.s4 1934713408
        %v6768 = vunpack.c.0.s8 %v6767
        %v6769 = vlaneseq
        %v6770 = vshrl.u32 %v6769, 7
        %v6771 = vsub.s32 %v6768, %v6770
        %v6772 = vrot.slane %v6757, %v6771
        %v6774 = vunpack.c.l.s4 1934713408
        %v6775 = vunpack.c.0.s8 %v6774
        %v6776 = vlaneseq
        %v6777 = vshrl.u32 %v6776, 7
        %v6778 = vsub.s32 %v6775, %v6777
        %v6779 = vrot.slane %v6765, %v6778
        %v6780 = vcombine.high %v6764, 0.0
        %v6782 = vunpack.c.l.s4 1934713408
        %v6783 = vunpack.c.0.s8 %v6782
        %v6784 = vlaneseq
        %v6785 = vshrl.u32 %v6784, 7
        %v6786 = vsub.s32 %v6783, %v6785
        %v6787 = vrot.slane %v6764, %v6786
        %v6789 = vunpack.c.l.s4 1934713408
        %v6790 = vunpack.c.0.s8 %v6789
        %v6791 = vlaneseq
        %v6792 = vshrl.u32 %v6791, 7
        %v6793 = vsub.s32 %v6790, %v6792
        %v6794 = vrot.slane %v6780, %v6793
        %v6795 = vcombine.high %v6772, 0.0
        %v6796 = vcombine.high %v6779, 0.0
        %v6797 = vcombine.high %v6787, 0.0
        %v6798 = vcombine.high %v6794, 0.0
        %v6799 = vcombine.high %v836, 0.0
        %v6801 = vunpack.c.l.s4 1983009808
        %v6802 = vunpack.c.0.s8 %v6801
        %v6803 = vlaneseq
        %v6804 = vshrl.u32 %v6803, 7
        %v6805 = vsub.s32 %v6802, %v6804
        %v6806 = vrot.slane %v836, %v6805
        %v6808 = vunpack.c.l.s4 1983009808
        %v6809 = vunpack.c.0.s8 %v6808
        %v6810 = vlaneseq
        %v6811 = vshrl.u32 %v6810, 7
        %v6812 = vsub.s32 %v6809, %v6811
        %v6813 = vrot.slane %v6799, %v6812
        %v6814 = vcombine.high %v6806, 0.0
        %v6816 = vunpack.c.l.s4 1934713408
        %v6817 = vunpack.c.0.s8 %v6816
        %v6818 = vlaneseq
        %v6819 = vshrl.u32 %v6818, 7
        %v6820 = vsub.s32 %v6817, %v6819
        %v6821 = vrot.slane %v6806, %v6820
        %v6823 = vunpack.c.l.s4 1934713408
        %v6824 = vunpack.c.0.s8 %v6823
        %v6825 = vlaneseq
        %v6826 = vshrl.u32 %v6825, 7
        %v6827 = vsub.s32 %v6824, %v6826
        %v6828 = vrot.slane %v6814, %v6827
        %v6829 = vcombine.high %v6813, 0.0
        %v6831 = vunpack.c.l.s4 1934713408
        %v6832 = vunpack.c.0.s8 %v6831
        %v6833 = vlaneseq
        %v6834 = vshrl.u32 %v6833, 7
        %v6835 = vsub.s32 %v6832, %v6834
        %v6836 = vrot.slane %v6813, %v6835
        %v6838 = vunpack.c.l.s4 1934713408
        %v6839 = vunpack.c.0.s8 %v6838
        %v6840 = vlaneseq
        %v6841 = vshrl.u32 %v6840, 7
        %v6842 = vsub.s32 %v6839, %v6841
        %v6843 = vrot.slane %v6829, %v6842
        %v6844 = vcombine.high %v6821, 0.0
        %v6845 = vcombine.high %v6828, 0.0
        %v6846 = vcombine.high %v6836, 0.0
        %v6847 = vcombine.high %v6843, 0.0
        %v6848 = vcombine.high %v843, 0.0
        %v6850 = vunpack.c.l.s4 1983009808
        %v6851 = vunpack.c.0.s8 %v6850
        %v6852 = vlaneseq
        %v6853 = vshrl.u32 %v6852, 7
        %v6854 = vsub.s32 %v6851, %v6853
        %v6855 = vrot.slane %v843, %v6854
        %v6857 = vunpack.c.l.s4 1983009808
        %v6858 = vunpack.c.0.s8 %v6857
        %v6859 = vlaneseq
        %v6860 = vshrl.u32 %v6859, 7
        %v6861 = vsub.s32 %v6858, %v6860
        %v6862 = vrot.slane %v6848, %v6861
        %v6863 = vcombine.high %v6855, 0.0
        %v6865 = vunpack.c.l.s4 1934713408
        %v6866 = vunpack.c.0.s8 %v6865
        %v6867 = vlaneseq
        %v6868 = vshrl.u32 %v6867, 7
        %v6869 = vsub.s32 %v6866, %v6868
        %v6870 = vrot.slane %v6855, %v6869
        %v6872 = vunpack.c.l.s4 1934713408
        %v6873 = vunpack.c.0.s8 %v6872
        %v6874 = vlaneseq
        %v6875 = vshrl.u32 %v6874, 7
        %v6876 = vsub.s32 %v6873, %v6875
        %v6877 = vrot.slane %v6863, %v6876
        %v6878 = vcombine.high %v6862, 0.0
        %v6880 = vunpack.c.l.s4 1934713408
        %v6881 = vunpack.c.0.s8 %v6880
        %v6882 = vlaneseq
        %v6883 = vshrl.u32 %v6882, 7
        %v6884 = vsub.s32 %v6881, %v6883
        %v6885 = vrot.slane %v6862, %v6884
        %v6887 = vunpack.c.l.s4 1934713408
        %v6888 = vunpack.c.0.s8 %v6887
        %v6889 = vlaneseq
        %v6890 = vshrl.u32 %v6889, 7
        %v6891 = vsub.s32 %v6888, %v6890
        %v6892 = vrot.slane %v6878, %v6891
        %v6893 = vcombine.high %v6870, 0.0
        %v6894 = vcombine.high %v6877, 0.0
        %v6895 = vcombine.high %v6885, 0.0
        %v6896 = vcombine.high %v6892, 0.0
        %v6897 = vcombine.high %v847, 0.0
        %v6899 = vunpack.c.l.s4 1983009808
        %v6900 = vunpack.c.0.s8 %v6899
        %v6901 = vlaneseq
        %v6902 = vshrl.u32 %v6901, 7
        %v6903 = vsub.s32 %v6900, %v6902
        %v6904 = vrot.slane %v847, %v6903
        %v6906 = vunpack.c.l.s4 1983009808
        %v6907 = vunpack.c.0.s8 %v6906
        %v6908 = vlaneseq
        %v6909 = vshrl.u32 %v6908, 7
        %v6910 = vsub.s32 %v6907, %v6909
        %v6911 = vrot.slane %v6897, %v6910
        %v6912 = vcombine.high %v6904, 0.0
        %v6914 = vunpack.c.l.s4 1934713408
        %v6915 = vunpack.c.0.s8 %v6914
        %v6916 = vlaneseq
        %v6917 = vshrl.u32 %v6916, 7
        %v6918 = vsub.s32 %v6915, %v6917
        %v6919 = vrot.slane %v6904, %v6918
        %v6921 = vunpack.c.l.s4 1934713408
        %v6922 = vunpack.c.0.s8 %v6921
        %v6923 = vlaneseq
        %v6924 = vshrl.u32 %v6923, 7
        %v6925 = vsub.s32 %v6922, %v6924
        %v6926 = vrot.slane %v6912, %v6925
        %v6927 = vcombine.high %v6911, 0.0
        %v6929 = vunpack.c.l.s4 1934713408
        %v6930 = vunpack.c.0.s8 %v6929
        %v6931 = vlaneseq
        %v6932 = vshrl.u32 %v6931, 7
        %v6933 = vsub.s32 %v6930, %v6932
        %v6934 = vrot.slane %v6911, %v6933
        %v6936 = vunpack.c.l.s4 1934713408
        %v6937 = vunpack.c.0.s8 %v6936
        %v6938 = vlaneseq
        %v6939 = vshrl.u32 %v6938, 7
        %v6940 = vsub.s32 %v6937, %v6939
        %v6941 = vrot.slane %v6927, %v6940
        %v6942 = vcombine.high %v6919, 0.0
        %v6943 = vcombine.high %v6926, 0.0
        %v6944 = vcombine.high %v6934, 0.0
        %v6945 = vcombine.high %v6941, 0.0
        %v6946 = vcombine.high %v854, 0.0
        %v6948 = vunpack.c.l.s4 1983009808
        %v6949 = vunpack.c.0.s8 %v6948
        %v6950 = vlaneseq
        %v6951 = vshrl.u32 %v6950, 7
        %v6952 = vsub.s32 %v6949, %v6951
        %v6953 = vrot.slane %v854, %v6952
        %v6955 = vunpack.c.l.s4 1983009808
        %v6956 = vunpack.c.0.s8 %v6955
        %v6957 = vlaneseq
        %v6958 = vshrl.u32 %v6957, 7
        %v6959 = vsub.s32 %v6956, %v6958
        %v6960 = vrot.slane %v6946, %v6959
        %v6961 = vcombine.high %v6953, 0.0
        %v6963 = vunpack.c.l.s4 1934713408
        %v6964 = vunpack.c.0.s8 %v6963
        %v6965 = vlaneseq
        %v6966 = vshrl.u32 %v6965, 7
        %v6967 = vsub.s32 %v6964, %v6966
        %v6968 = vrot.slane %v6953, %v6967
        %v6970 = vunpack.c.l.s4 1934713408
        %v6971 = vunpack.c.0.s8 %v6970
        %v6972 = vlaneseq
        %v6973 = vshrl.u32 %v6972, 7
        %v6974 = vsub.s32 %v6971, %v6973
        %v6975 = vrot.slane %v6961, %v6974
        %v6976 = vcombine.high %v6960, 0.0
        %v6978 = vunpack.c.l.s4 1934713408
        %v6979 = vunpack.c.0.s8 %v6978
        %v6980 = vlaneseq
        %v6981 = vshrl.u32 %v6980, 7
        %v6982 = vsub.s32 %v6979, %v6981
        %v6983 = vrot.slane %v6960, %v6982
        %v6985 = vunpack.c.l.s4 1934713408
        %v6986 = vunpack.c.0.s8 %v6985
        %v6987 = vlaneseq
        %v6988 = vshrl.u32 %v6987, 7
        %v6989 = vsub.s32 %v6986, %v6988
        %v6990 = vrot.slane %v6976, %v6989
        %v6991 = vcombine.high %v6968, 0.0
        %v6992 = vcombine.high %v6975, 0.0
        %v6993 = vcombine.high %v6983, 0.0
        %v6994 = vcombine.high %v6990, 0.0
        %v6995 = vcombine.high %v858, 0.0
        %v6997 = vunpack.c.l.s4 1983009808
        %v6998 = vunpack.c.0.s8 %v6997
        %v6999 = vlaneseq
        %v7000 = vshrl.u32 %v6999, 7
        %v7001 = vsub.s32 %v6998, %v7000
        %v7002 = vrot.slane %v858, %v7001
        %v7004 = vunpack.c.l.s4 1983009808
        %v7005 = vunpack.c.0.s8 %v7004
        %v7006 = vlaneseq
        %v7007 = vshrl.u32 %v7006, 7
        %v7008 = vsub.s32 %v7005, %v7007
        %v7009 = vrot.slane %v6995, %v7008
        %v7010 = vcombine.high %v7002, 0.0
        %v7012 = vunpack.c.l.s4 1934713408
        %v7013 = vunpack.c.0.s8 %v7012
        %v7014 = vlaneseq
        %v7015 = vshrl.u32 %v7014, 7
        %v7016 = vsub.s32 %v7013, %v7015
        %v7017 = vrot.slane %v7002, %v7016
        %v7019 = vunpack.c.l.s4 1934713408
        %v7020 = vunpack.c.0.s8 %v7019
        %v7021 = vlaneseq
        %v7022 = vshrl.u32 %v7021, 7
        %v7023 = vsub.s32 %v7020, %v7022
        %v7024 = vrot.slane %v7010, %v7023
        %v7025 = vcombine.high %v7009, 0.0
        %v7027 = vunpack.c.l.s4 1934713408
        %v7028 = vunpack.c.0.s8 %v7027
        %v7029 = vlaneseq
        %v7030 = vshrl.u32 %v7029, 7
        %v7031 = vsub.s32 %v7028, %v7030
        %v7032 = vrot.slane %v7009, %v7031
        %v7034 = vunpack.c.l.s4 1934713408
        %v7035 = vunpack.c.0.s8 %v7034
        %v7036 = vlaneseq
        %v7037 = vshrl.u32 %v7036, 7
        %v7038 = vsub.s32 %v7035, %v7037
        %v7039 = vrot.slane %v7025, %v7038
        %v7040 = vcombine.high %v7017, 0.0
        %v7041 = vcombine.high %v7024, 0.0
        %v7042 = vcombine.high %v7032, 0.0
        %v7043 = vcombine.high %v7039, 0.0
        %v7044 = vcombine.high %v865, 0.0
        %v7046 = vunpack.c.l.s4 1983009808
        %v7047 = vunpack.c.0.s8 %v7046
        %v7048 = vlaneseq
        %v7049 = vshrl.u32 %v7048, 7
        %v7050 = vsub.s32 %v7047, %v7049
        %v7051 = vrot.slane %v865, %v7050
        %v7053 = vunpack.c.l.s4 1983009808
        %v7054 = vunpack.c.0.s8 %v7053
        %v7055 = vlaneseq
        %v7056 = vshrl.u32 %v7055, 7
        %v7057 = vsub.s32 %v7054, %v7056
        %v7058 = vrot.slane %v7044, %v7057
        %v7059 = vcombine.high %v7051, 0.0
        %v7061 = vunpack.c.l.s4 1934713408
        %v7062 = vunpack.c.0.s8 %v7061
        %v7063 = vlaneseq
        %v7064 = vshrl.u32 %v7063, 7
        %v7065 = vsub.s32 %v7062, %v7064
        %v7066 = vrot.slane %v7051, %v7065
        %v7068 = vunpack.c.l.s4 1934713408
        %v7069 = vunpack.c.0.s8 %v7068
        %v7070 = vlaneseq
        %v7071 = vshrl.u32 %v7070, 7
        %v7072 = vsub.s32 %v7069, %v7071
        %v7073 = vrot.slane %v7059, %v7072
        %v7074 = vcombine.high %v7058, 0.0
        %v7076 = vunpack.c.l.s4 1934713408
        %v7077 = vunpack.c.0.s8 %v7076
        %v7078 = vlaneseq
        %v7079 = vshrl.u32 %v7078, 7
        %v7080 = vsub.s32 %v7077, %v7079
        %v7081 = vrot.slane %v7058, %v7080
        %v7083 = vunpack.c.l.s4 1934713408
        %v7084 = vunpack.c.0.s8 %v7083
        %v7085 = vlaneseq
        %v7086 = vshrl.u32 %v7085, 7
        %v7087 = vsub.s32 %v7084, %v7086
        %v7088 = vrot.slane %v7074, %v7087
        %v7089 = vcombine.high %v7066, 0.0
        %v7090 = vcombine.high %v7073, 0.0
        %v7091 = vcombine.high %v7081, 0.0
        %v7092 = vcombine.high %v7088, 0.0
        %v7093 = vcombine.high %v869, 0.0
        %v7095 = vunpack.c.l.s4 1983009808
        %v7096 = vunpack.c.0.s8 %v7095
        %v7097 = vlaneseq
        %v7098 = vshrl.u32 %v7097, 7
        %v7099 = vsub.s32 %v7096, %v7098
        %v7100 = vrot.slane %v869, %v7099
        %v7102 = vunpack.c.l.s4 1983009808
        %v7103 = vunpack.c.0.s8 %v7102
        %v7104 = vlaneseq
        %v7105 = vshrl.u32 %v7104, 7
        %v7106 = vsub.s32 %v7103, %v7105
        %v7107 = vrot.slane %v7093, %v7106
        %v7108 = vcombine.high %v7100, 0.0
        %v7110 = vunpack.c.l.s4 1934713408
        %v7111 = vunpack.c.0.s8 %v7110
        %v7112 = vlaneseq
        %v7113 = vshrl.u32 %v7112, 7
        %v7114 = vsub.s32 %v7111, %v7113
        %v7115 = vrot.slane %v7100, %v7114
        %v7117 = vunpack.c.l.s4 1934713408
        %v7118 = vunpack.c.0.s8 %v7117
        %v7119 = vlaneseq
        %v7120 = vshrl.u32 %v7119, 7
        %v7121 = vsub.s32 %v7118, %v7120
        %v7122 = vrot.slane %v7108, %v7121
        %v7123 = vcombine.high %v7107, 0.0
        %v7125 = vunpack.c.l.s4 1934713408
        %v7126 = vunpack.c.0.s8 %v7125
        %v7127 = vlaneseq
        %v7128 = vshrl.u32 %v7127, 7
        %v7129 = vsub.s32 %v7126, %v7128
        %v7130 = vrot.slane %v7107, %v7129
        %v7132 = vunpack.c.l.s4 1934713408
        %v7133 = vunpack.c.0.s8 %v7132
        %v7134 = vlaneseq
        %v7135 = vshrl.u32 %v7134, 7
        %v7136 = vsub.s32 %v7133, %v7135
        %v7137 = vrot.slane %v7123, %v7136
        %v7138 = vcombine.high %v7115, 0.0
        %v7139 = vcombine.high %v7122, 0.0
        %v7140 = vcombine.high %v7130, 0.0
        %v7141 = vcombine.high %v7137, 0.0
        %7206 = vrot.lane.b32.xlu0 %v915, 2
        %v7207 = vpop.permute.xlu0 %7206
        %7208 = vrot.lane.b32.xlu0 %v1013, 2
        %v7209 = vpop.permute.xlu0 %7208
        %7210 = vrot.lane.b32.xlu0 %v1111, 2
        %v7211 = vpop.permute.xlu0 %7210
        %7212 = vrot.lane.b32.xlu0 %v1209, 2
        %v7213 = vpop.permute.xlu0 %7212
        %7214 = vrot.lane.b32.xlu0 %v1307, 2
        %v7215 = vpop.permute.xlu0 %7214
        %7216 = vrot.lane.b32.xlu0 %v1405, 2
        %v7217 = vpop.permute.xlu0 %7216
        %7218 = vrot.lane.b32.xlu0 %v1503, 2
        %v7219 = vpop.permute.xlu0 %7218
        %7220 = vrot.lane.b32.xlu0 %v1601, 2
        %v7221 = vpop.permute.xlu0 %7220
        %7222 = vrot.lane.b32.xlu0 %v1699, 2
        %v7223 = vpop.permute.xlu0 %7222
        %7224 = vrot.lane.b32.xlu0 %v1797, 2
        %v7225 = vpop.permute.xlu0 %7224
        %7226 = vrot.lane.b32.xlu0 %v1895, 2
        %v7227 = vpop.permute.xlu0 %7226
        %7228 = vrot.lane.b32.xlu0 %v1993, 2
        %v7229 = vpop.permute.xlu0 %7228
        %7230 = vrot.lane.b32.xlu0 %v2091, 2
        %v7231 = vpop.permute.xlu0 %7230
        %7232 = vrot.lane.b32.xlu0 %v2189, 2
        %v7233 = vpop.permute.xlu0 %7232
        %7234 = vrot.lane.b32.xlu0 %v2287, 2
        %v7235 = vpop.permute.xlu0 %7234
        %7236 = vrot.lane.b32.xlu0 %v2385, 2
        %v7237 = vpop.permute.xlu0 %7236
        %7238 = vrot.lane.b32.xlu0 %v2483, 2
        %v7239 = vpop.permute.xlu0 %7238
        %7240 = vrot.lane.b32.xlu0 %v2581, 2
        %v7241 = vpop.permute.xlu0 %7240
        %7242 = vrot.lane.b32.xlu0 %v2679, 2
        %v7243 = vpop.permute.xlu0 %7242
        %7244 = vrot.lane.b32.xlu0 %v2777, 2
        %v7245 = vpop.permute.xlu0 %7244
        %7246 = vrot.lane.b32.xlu0 %v2875, 2
        %v7247 = vpop.permute.xlu0 %7246
        %7248 = vrot.lane.b32.xlu0 %v2973, 2
        %v7249 = vpop.permute.xlu0 %7248
        %7250 = vrot.lane.b32.xlu0 %v3071, 2
        %v7251 = vpop.permute.xlu0 %7250
        %7252 = vrot.lane.b32.xlu0 %v3169, 2
        %v7253 = vpop.permute.xlu0 %7252
        %7254 = vrot.lane.b32.xlu0 %v3267, 2
        %v7255 = vpop.permute.xlu0 %7254
        %7256 = vrot.lane.b32.xlu0 %v3365, 2
        %v7257 = vpop.permute.xlu0 %7256
        %7258 = vrot.lane.b32.xlu0 %v3463, 2
        %v7259 = vpop.permute.xlu0 %7258
        %7260 = vrot.lane.b32.xlu0 %v3561, 2
        %v7261 = vpop.permute.xlu0 %7260
        %7262 = vrot.lane.b32.xlu0 %v3659, 2
        %v7263 = vpop.permute.xlu0 %7262
        %7264 = vrot.lane.b32.xlu0 %v3757, 2
        %v7265 = vpop.permute.xlu0 %7264
        %7266 = vrot.lane.b32.xlu0 %v3855, 2
        %v7267 = vpop.permute.xlu0 %7266
        %7268 = vrot.lane.b32.xlu0 %v3953, 2
        %v7269 = vpop.permute.xlu0 %7268
        %7270 = vrot.lane.b32.xlu0 %v4051, 2
        %v7271 = vpop.permute.xlu0 %7270
        %7272 = vrot.lane.b32.xlu0 %v4149, 2
        %v7273 = vpop.permute.xlu0 %7272
        %7274 = vrot.lane.b32.xlu0 %v4247, 2
        %v7275 = vpop.permute.xlu0 %7274
        %7276 = vrot.lane.b32.xlu0 %v4345, 2
        %v7277 = vpop.permute.xlu0 %7276
        %7278 = vrot.lane.b32.xlu0 %v4443, 2
        %v7279 = vpop.permute.xlu0 %7278
        %7280 = vrot.lane.b32.xlu0 %v4541, 2
        %v7281 = vpop.permute.xlu0 %7280
        %7282 = vrot.lane.b32.xlu0 %v4639, 2
        %v7283 = vpop.permute.xlu0 %7282
        %7284 = vrot.lane.b32.xlu0 %v4737, 2
        %v7285 = vpop.permute.xlu0 %7284
        %7286 = vrot.lane.b32.xlu0 %v4835, 2
        %v7287 = vpop.permute.xlu0 %7286
        %7288 = vrot.lane.b32.xlu0 %v4933, 2
        %v7289 = vpop.permute.xlu0 %7288
        %7290 = vrot.lane.b32.xlu0 %v5031, 2
        %v7291 = vpop.permute.xlu0 %7290
        %7292 = vrot.lane.b32.xlu0 %v5129, 2
        %v7293 = vpop.permute.xlu0 %7292
        %7294 = vrot.lane.b32.xlu0 %v5227, 2
        %v7295 = vpop.permute.xlu0 %7294
        %7296 = vrot.lane.b32.xlu0 %v5325, 2
        %v7297 = vpop.permute.xlu0 %7296
        %7298 = vrot.lane.b32.xlu0 %v5423, 2
        %v7299 = vpop.permute.xlu0 %7298
        %7300 = vrot.lane.b32.xlu0 %v5521, 2
        %v7301 = vpop.permute.xlu0 %7300
        %7302 = vrot.lane.b32.xlu0 %v5619, 2
        %v7303 = vpop.permute.xlu0 %7302
        %7304 = vrot.lane.b32.xlu0 %v5717, 2
        %v7305 = vpop.permute.xlu0 %7304
        %7306 = vrot.lane.b32.xlu0 %v5815, 2
        %v7307 = vpop.permute.xlu0 %7306
        %7308 = vrot.lane.b32.xlu0 %v5913, 2
        %v7309 = vpop.permute.xlu0 %7308
        %7310 = vrot.lane.b32.xlu0 %v6011, 2
        %v7311 = vpop.permute.xlu0 %7310
        %7312 = vrot.lane.b32.xlu0 %v6109, 2
        %v7313 = vpop.permute.xlu0 %7312
        %7314 = vrot.lane.b32.xlu0 %v6207, 2
        %v7315 = vpop.permute.xlu0 %7314
        %7316 = vrot.lane.b32.xlu0 %v6305, 2
        %v7317 = vpop.permute.xlu0 %7316
        %7318 = vrot.lane.b32.xlu0 %v6403, 2
        %v7319 = vpop.permute.xlu0 %7318
        %7320 = vrot.lane.b32.xlu0 %v6501, 2
        %v7321 = vpop.permute.xlu0 %7320
        %7322 = vrot.lane.b32.xlu0 %v6599, 2
        %v7323 = vpop.permute.xlu0 %7322
        %7324 = vrot.lane.b32.xlu0 %v6697, 2
        %v7325 = vpop.permute.xlu0 %7324
        %7326 = vrot.lane.b32.xlu0 %v6795, 2
        %v7327 = vpop.permute.xlu0 %7326
        %7328 = vrot.lane.b32.xlu0 %v6893, 2
        %v7329 = vpop.permute.xlu0 %7328
        %7330 = vrot.lane.b32.xlu0 %v6991, 2
        %v7331 = vpop.permute.xlu0 %7330
        %7332 = vrot.lane.b32.xlu0 %v7089, 2
        %v7333 = vpop.permute.xlu0 %7332
        %7462 = vrot.lane.b32.xlu0 %v899, 4
        %v7463 = vpop.permute.xlu0 %7462
        %7464 = vrot.lane.b32.xlu0 %v997, 4
        %v7465 = vpop.permute.xlu0 %7464
        %7466 = vrot.lane.b32.xlu0 %v1095, 4
        %v7467 = vpop.permute.xlu0 %7466
        %7468 = vrot.lane.b32.xlu0 %v1193, 4
        %v7469 = vpop.permute.xlu0 %7468
        %7470 = vrot.lane.b32.xlu0 %v1291, 4
        %v7471 = vpop.permute.xlu0 %7470
        %7472 = vrot.lane.b32.xlu0 %v1389, 4
        %v7473 = vpop.permute.xlu0 %7472
        %7474 = vrot.lane.b32.xlu0 %v1487, 4
        %v7475 = vpop.permute.xlu0 %7474
        %7476 = vrot.lane.b32.xlu0 %v1585, 4
        %v7477 = vpop.permute.xlu0 %7476
        %7478 = vrot.lane.b32.xlu0 %v1683, 4
        %v7479 = vpop.permute.xlu0 %7478
        %7480 = vrot.lane.b32.xlu0 %v1781, 4
        %v7481 = vpop.permute.xlu0 %7480
        %7482 = vrot.lane.b32.xlu0 %v1879, 4
        %v7483 = vpop.permute.xlu0 %7482
        %7484 = vrot.lane.b32.xlu0 %v1977, 4
        %v7485 = vpop.permute.xlu0 %7484
        %7486 = vrot.lane.b32.xlu0 %v2075, 4
        %v7487 = vpop.permute.xlu0 %7486
        %7488 = vrot.lane.b32.xlu0 %v2173, 4
        %v7489 = vpop.permute.xlu0 %7488
        %7490 = vrot.lane.b32.xlu0 %v2271, 4
        %v7491 = vpop.permute.xlu0 %7490
        %7492 = vrot.lane.b32.xlu0 %v2369, 4
        %v7493 = vpop.permute.xlu0 %7492
        %7494 = vrot.lane.b32.xlu0 %v2467, 4
        %v7495 = vpop.permute.xlu0 %7494
        %7496 = vrot.lane.b32.xlu0 %v2565, 4
        %v7497 = vpop.permute.xlu0 %7496
        %7498 = vrot.lane.b32.xlu0 %v2663, 4
        %v7499 = vpop.permute.xlu0 %7498
        %7500 = vrot.lane.b32.xlu0 %v2761, 4
        %v7501 = vpop.permute.xlu0 %7500
        %7502 = vrot.lane.b32.xlu0 %v2859, 4
        %v7503 = vpop.permute.xlu0 %7502
        %7504 = vrot.lane.b32.xlu0 %v2957, 4
        %v7505 = vpop.permute.xlu0 %7504
        %7506 = vrot.lane.b32.xlu0 %v3055, 4
        %v7507 = vpop.permute.xlu0 %7506
        %7508 = vrot.lane.b32.xlu0 %v3153, 4
        %v7509 = vpop.permute.xlu0 %7508
        %7510 = vrot.lane.b32.xlu0 %v3251, 4
        %v7511 = vpop.permute.xlu0 %7510
        %7512 = vrot.lane.b32.xlu0 %v3349, 4
        %v7513 = vpop.permute.xlu0 %7512
        %7514 = vrot.lane.b32.xlu0 %v3447, 4
        %v7515 = vpop.permute.xlu0 %7514
        %7516 = vrot.lane.b32.xlu0 %v3545, 4
        %v7517 = vpop.permute.xlu0 %7516
        %7518 = vrot.lane.b32.xlu0 %v3643, 4
        %v7519 = vpop.permute.xlu0 %7518
        %7520 = vrot.lane.b32.xlu0 %v3741, 4
        %v7521 = vpop.permute.xlu0 %7520
        %7522 = vrot.lane.b32.xlu0 %v3839, 4
        %v7523 = vpop.permute.xlu0 %7522
        %7524 = vrot.lane.b32.xlu0 %v3937, 4
        %v7525 = vpop.permute.xlu0 %7524
        %7526 = vrot.lane.b32.xlu0 %v4035, 4
        %v7527 = vpop.permute.xlu0 %7526
        %7528 = vrot.lane.b32.xlu0 %v4133, 4
        %v7529 = vpop.permute.xlu0 %7528
        %7530 = vrot.lane.b32.xlu0 %v4231, 4
        %v7531 = vpop.permute.xlu0 %7530
        %7532 = vrot.lane.b32.xlu0 %v4329, 4
        %v7533 = vpop.permute.xlu0 %7532
        %7534 = vrot.lane.b32.xlu0 %v4427, 4
        %v7535 = vpop.permute.xlu0 %7534
        %7536 = vrot.lane.b32.xlu0 %v4525, 4
        %v7537 = vpop.permute.xlu0 %7536
        %7538 = vrot.lane.b32.xlu0 %v4623, 4
        %v7539 = vpop.permute.xlu0 %7538
        %7540 = vrot.lane.b32.xlu0 %v4721, 4
        %v7541 = vpop.permute.xlu0 %7540
        %7542 = vrot.lane.b32.xlu0 %v4819, 4
        %v7543 = vpop.permute.xlu0 %7542
        %7544 = vrot.lane.b32.xlu0 %v4917, 4
        %v7545 = vpop.permute.xlu0 %7544
        %7546 = vrot.lane.b32.xlu0 %v5015, 4
        %v7547 = vpop.permute.xlu0 %7546
        %7548 = vrot.lane.b32.xlu0 %v5113, 4
        %v7549 = vpop.permute.xlu0 %7548
        %7550 = vrot.lane.b32.xlu0 %v5211, 4
        %v7551 = vpop.permute.xlu0 %7550
        %7552 = vrot.lane.b32.xlu0 %v5309, 4
        %v7553 = vpop.permute.xlu0 %7552
        %7554 = vrot.lane.b32.xlu0 %v5407, 4
        %v7555 = vpop.permute.xlu0 %7554
        %7556 = vrot.lane.b32.xlu0 %v5505, 4
        %v7557 = vpop.permute.xlu0 %7556
        %7558 = vrot.lane.b32.xlu0 %v5603, 4
        %v7559 = vpop.permute.xlu0 %7558
        %7560 = vrot.lane.b32.xlu0 %v5701, 4
        %v7561 = vpop.permute.xlu0 %7560
        %7562 = vrot.lane.b32.xlu0 %v5799, 4
        %v7563 = vpop.permute.xlu0 %7562
        %7564 = vrot.lane.b32.xlu0 %v5897, 4
        %v7565 = vpop.permute.xlu0 %7564
        %7566 = vrot.lane.b32.xlu0 %v5995, 4
        %v7567 = vpop.permute.xlu0 %7566
        %7568 = vrot.lane.b32.xlu0 %v6093, 4
        %v7569 = vpop.permute.xlu0 %7568
        %7570 = vrot.lane.b32.xlu0 %v6191, 4
        %v7571 = vpop.permute.xlu0 %7570
        %7572 = vrot.lane.b32.xlu0 %v6289, 4
        %v7573 = vpop.permute.xlu0 %7572
        %7574 = vrot.lane.b32.xlu0 %v6387, 4
        %v7575 = vpop.permute.xlu0 %7574
        %7576 = vrot.lane.b32.xlu0 %v6485, 4
        %v7577 = vpop.permute.xlu0 %7576
        %7578 = vrot.lane.b32.xlu0 %v6583, 4
        %v7579 = vpop.permute.xlu0 %7578
        %7580 = vrot.lane.b32.xlu0 %v6681, 4
        %v7581 = vpop.permute.xlu0 %7580
        %7582 = vrot.lane.b32.xlu0 %v6779, 4
        %v7583 = vpop.permute.xlu0 %7582
        %7584 = vrot.lane.b32.xlu0 %v6877, 4
        %v7585 = vpop.permute.xlu0 %7584
        %7586 = vrot.lane.b32.xlu0 %v6975, 4
        %v7587 = vpop.permute.xlu0 %7586
        %7588 = vrot.lane.b32.xlu0 %v7073, 4
        %v7589 = vpop.permute.xlu0 %7588
        %7718 = vrot.lane.b32.xlu0 %v916, 6
        %v7719 = vpop.permute.xlu0 %7718
        %7720 = vrot.lane.b32.xlu0 %v1014, 6
        %v7721 = vpop.permute.xlu0 %7720
        %7722 = vrot.lane.b32.xlu0 %v1112, 6
        %v7723 = vpop.permute.xlu0 %7722
        %7724 = vrot.lane.b32.xlu0 %v1210, 6
        %v7725 = vpop.permute.xlu0 %7724
        %7726 = vrot.lane.b32.xlu0 %v1308, 6
        %v7727 = vpop.permute.xlu0 %7726
        %7728 = vrot.lane.b32.xlu0 %v1406, 6
        %v7729 = vpop.permute.xlu0 %7728
        %7730 = vrot.lane.b32.xlu0 %v1504, 6
        %v7731 = vpop.permute.xlu0 %7730
        %7732 = vrot.lane.b32.xlu0 %v1602, 6
        %v7733 = vpop.permute.xlu0 %7732
        %7734 = vrot.lane.b32.xlu0 %v1700, 6
        %v7735 = vpop.permute.xlu0 %7734
        %7736 = vrot.lane.b32.xlu0 %v1798, 6
        %v7737 = vpop.permute.xlu0 %7736
        %7738 = vrot.lane.b32.xlu0 %v1896, 6
        %v7739 = vpop.permute.xlu0 %7738
        %7740 = vrot.lane.b32.xlu0 %v1994, 6
        %v7741 = vpop.permute.xlu0 %7740
        %7742 = vrot.lane.b32.xlu0 %v2092, 6
        %v7743 = vpop.permute.xlu0 %7742
        %7744 = vrot.lane.b32.xlu0 %v2190, 6
        %v7745 = vpop.permute.xlu0 %7744
        %7746 = vrot.lane.b32.xlu0 %v2288, 6
        %v7747 = vpop.permute.xlu0 %7746
        %7748 = vrot.lane.b32.xlu0 %v2386, 6
        %v7749 = vpop.permute.xlu0 %7748
        %7750 = vrot.lane.b32.xlu0 %v2484, 6
        %v7751 = vpop.permute.xlu0 %7750
        %7752 = vrot.lane.b32.xlu0 %v2582, 6
        %v7753 = vpop.permute.xlu0 %7752
        %7754 = vrot.lane.b32.xlu0 %v2680, 6
        %v7755 = vpop.permute.xlu0 %7754
        %7756 = vrot.lane.b32.xlu0 %v2778, 6
        %v7757 = vpop.permute.xlu0 %7756
        %7758 = vrot.lane.b32.xlu0 %v2876, 6
        %v7759 = vpop.permute.xlu0 %7758
        %7760 = vrot.lane.b32.xlu0 %v2974, 6
        %v7761 = vpop.permute.xlu0 %7760
        %7762 = vrot.lane.b32.xlu0 %v3072, 6
        %v7763 = vpop.permute.xlu0 %7762
        %7764 = vrot.lane.b32.xlu0 %v3170, 6
        %v7765 = vpop.permute.xlu0 %7764
        %7766 = vrot.lane.b32.xlu0 %v3268, 6
        %v7767 = vpop.permute.xlu0 %7766
        %7768 = vrot.lane.b32.xlu0 %v3366, 6
        %v7769 = vpop.permute.xlu0 %7768
        %7770 = vrot.lane.b32.xlu0 %v3464, 6
        %v7771 = vpop.permute.xlu0 %7770
        %7772 = vrot.lane.b32.xlu0 %v3562, 6
        %v7773 = vpop.permute.xlu0 %7772
        %7774 = vrot.lane.b32.xlu0 %v3660, 6
        %v7775 = vpop.permute.xlu0 %7774
        %7776 = vrot.lane.b32.xlu0 %v3758, 6
        %v7777 = vpop.permute.xlu0 %7776
        %7778 = vrot.lane.b32.xlu0 %v3856, 6
        %v7779 = vpop.permute.xlu0 %7778
        %7780 = vrot.lane.b32.xlu0 %v3954, 6
        %v7781 = vpop.permute.xlu0 %7780
        %7782 = vrot.lane.b32.xlu0 %v4052, 6
        %v7783 = vpop.permute.xlu0 %7782
        %7784 = vrot.lane.b32.xlu0 %v4150, 6
        %v7785 = vpop.permute.xlu0 %7784
        %7786 = vrot.lane.b32.xlu0 %v4248, 6
        %v7787 = vpop.permute.xlu0 %7786
        %7788 = vrot.lane.b32.xlu0 %v4346, 6
        %v7789 = vpop.permute.xlu0 %7788
        %7790 = vrot.lane.b32.xlu0 %v4444, 6
        %v7791 = vpop.permute.xlu0 %7790
        %7792 = vrot.lane.b32.xlu0 %v4542, 6
        %v7793 = vpop.permute.xlu0 %7792
        %7794 = vrot.lane.b32.xlu0 %v4640, 6
        %v7795 = vpop.permute.xlu0 %7794
        %7796 = vrot.lane.b32.xlu0 %v4738, 6
        %v7797 = vpop.permute.xlu0 %7796
        %7798 = vrot.lane.b32.xlu0 %v4836, 6
        %v7799 = vpop.permute.xlu0 %7798
        %7800 = vrot.lane.b32.xlu0 %v4934, 6
        %v7801 = vpop.permute.xlu0 %7800
        %7802 = vrot.lane.b32.xlu0 %v5032, 6
        %v7803 = vpop.permute.xlu0 %7802
        %7804 = vrot.lane.b32.xlu0 %v5130, 6
        %v7805 = vpop.permute.xlu0 %7804
        %7806 = vrot.lane.b32.xlu0 %v5228, 6
        %v7807 = vpop.permute.xlu0 %7806
        %7808 = vrot.lane.b32.xlu0 %v5326, 6
        %v7809 = vpop.permute.xlu0 %7808
        %7810 = vrot.lane.b32.xlu0 %v5424, 6
        %v7811 = vpop.permute.xlu0 %7810
        %7812 = vrot.lane.b32.xlu0 %v5522, 6
        %v7813 = vpop.permute.xlu0 %7812
        %7814 = vrot.lane.b32.xlu0 %v5620, 6
        %v7815 = vpop.permute.xlu0 %7814
        %7816 = vrot.lane.b32.xlu0 %v5718, 6
        %v7817 = vpop.permute.xlu0 %7816
        %7818 = vrot.lane.b32.xlu0 %v5816, 6
        %v7819 = vpop.permute.xlu0 %7818
        %7820 = vrot.lane.b32.xlu0 %v5914, 6
        %v7821 = vpop.permute.xlu0 %7820
        %7822 = vrot.lane.b32.xlu0 %v6012, 6
        %v7823 = vpop.permute.xlu0 %7822
        %7824 = vrot.lane.b32.xlu0 %v6110, 6
        %v7825 = vpop.permute.xlu0 %7824
        %7826 = vrot.lane.b32.xlu0 %v6208, 6
        %v7827 = vpop.permute.xlu0 %7826
        %7828 = vrot.lane.b32.xlu0 %v6306, 6
        %v7829 = vpop.permute.xlu0 %7828
        %7830 = vrot.lane.b32.xlu0 %v6404, 6
        %v7831 = vpop.permute.xlu0 %7830
        %7832 = vrot.lane.b32.xlu0 %v6502, 6
        %v7833 = vpop.permute.xlu0 %7832
        %7834 = vrot.lane.b32.xlu0 %v6600, 6
        %v7835 = vpop.permute.xlu0 %7834
        %7836 = vrot.lane.b32.xlu0 %v6698, 6
        %v7837 = vpop.permute.xlu0 %7836
        %7838 = vrot.lane.b32.xlu0 %v6796, 6
        %v7839 = vpop.permute.xlu0 %7838
        %7840 = vrot.lane.b32.xlu0 %v6894, 6
        %v7841 = vpop.permute.xlu0 %7840
        %7842 = vrot.lane.b32.xlu0 %v6992, 6
        %v7843 = vpop.permute.xlu0 %7842
        %7844 = vrot.lane.b32.xlu0 %v7090, 6
        %v7845 = vpop.permute.xlu0 %7844
        %7974 = vrot.lane.b32.xlu0 %v907, 8
        %v7975 = vpop.permute.xlu0 %7974
        %7976 = vrot.lane.b32.xlu0 %v1005, 8
        %v7977 = vpop.permute.xlu0 %7976
        %7978 = vrot.lane.b32.xlu0 %v1103, 8
        %v7979 = vpop.permute.xlu0 %7978
        %7980 = vrot.lane.b32.xlu0 %v1201, 8
        %v7981 = vpop.permute.xlu0 %7980
        %7982 = vrot.lane.b32.xlu0 %v1299, 8
        %v7983 = vpop.permute.xlu0 %7982
        %7984 = vrot.lane.b32.xlu0 %v1397, 8
        %v7985 = vpop.permute.xlu0 %7984
        %7986 = vrot.lane.b32.xlu0 %v1495, 8
        %v7987 = vpop.permute.xlu0 %7986
        %7988 = vrot.lane.b32.xlu0 %v1593, 8
        %v7989 = vpop.permute.xlu0 %7988
        %7990 = vrot.lane.b32.xlu0 %v1691, 8
        %v7991 = vpop.permute.xlu0 %7990
        %7992 = vrot.lane.b32.xlu0 %v1789, 8
        %v7993 = vpop.permute.xlu0 %7992
        %7994 = vrot.lane.b32.xlu0 %v1887, 8
        %v7995 = vpop.permute.xlu0 %7994
        %7996 = vrot.lane.b32.xlu0 %v1985, 8
        %v7997 = vpop.permute.xlu0 %7996
        %7998 = vrot.lane.b32.xlu0 %v2083, 8
        %v7999 = vpop.permute.xlu0 %7998
        %8000 = vrot.lane.b32.xlu0 %v2181, 8
        %v8001 = vpop.permute.xlu0 %8000
        %8002 = vrot.lane.b32.xlu0 %v2279, 8
        %v8003 = vpop.permute.xlu0 %8002
        %8004 = vrot.lane.b32.xlu0 %v2377, 8
        %v8005 = vpop.permute.xlu0 %8004
        %8006 = vrot.lane.b32.xlu0 %v2475, 8
        %v8007 = vpop.permute.xlu0 %8006
        %8008 = vrot.lane.b32.xlu0 %v2573, 8
        %v8009 = vpop.permute.xlu0 %8008
        %8010 = vrot.lane.b32.xlu0 %v2671, 8
        %v8011 = vpop.permute.xlu0 %8010
        %8012 = vrot.lane.b32.xlu0 %v2769, 8
        %v8013 = vpop.permute.xlu0 %8012
        %8014 = vrot.lane.b32.xlu0 %v2867, 8
        %v8015 = vpop.permute.xlu0 %8014
        %8016 = vrot.lane.b32.xlu0 %v2965, 8
        %v8017 = vpop.permute.xlu0 %8016
        %8018 = vrot.lane.b32.xlu0 %v3063, 8
        %v8019 = vpop.permute.xlu0 %8018
        %8020 = vrot.lane.b32.xlu0 %v3161, 8
        %v8021 = vpop.permute.xlu0 %8020
        %8022 = vrot.lane.b32.xlu0 %v3259, 8
        %v8023 = vpop.permute.xlu0 %8022
        %8024 = vrot.lane.b32.xlu0 %v3357, 8
        %v8025 = vpop.permute.xlu0 %8024
        %8026 = vrot.lane.b32.xlu0 %v3455, 8
        %v8027 = vpop.permute.xlu0 %8026
        %8028 = vrot.lane.b32.xlu0 %v3553, 8
        %v8029 = vpop.permute.xlu0 %8028
        %8030 = vrot.lane.b32.xlu0 %v3651, 8
        %v8031 = vpop.permute.xlu0 %8030
        %8032 = vrot.lane.b32.xlu0 %v3749, 8
        %v8033 = vpop.permute.xlu0 %8032
        %8034 = vrot.lane.b32.xlu0 %v3847, 8
        %v8035 = vpop.permute.xlu0 %8034
        %8036 = vrot.lane.b32.xlu0 %v3945, 8
        %v8037 = vpop.permute.xlu0 %8036
        %8038 = vrot.lane.b32.xlu0 %v4043, 8
        %v8039 = vpop.permute.xlu0 %8038
        %8040 = vrot.lane.b32.xlu0 %v4141, 8
        %v8041 = vpop.permute.xlu0 %8040
        %8042 = vrot.lane.b32.xlu0 %v4239, 8
        %v8043 = vpop.permute.xlu0 %8042
        %8044 = vrot.lane.b32.xlu0 %v4337, 8
        %v8045 = vpop.permute.xlu0 %8044
        %8046 = vrot.lane.b32.xlu0 %v4435, 8
        %v8047 = vpop.permute.xlu0 %8046
        %8048 = vrot.lane.b32.xlu0 %v4533, 8
        %v8049 = vpop.permute.xlu0 %8048
        %8050 = vrot.lane.b32.xlu0 %v4631, 8
        %v8051 = vpop.permute.xlu0 %8050
        %8052 = vrot.lane.b32.xlu0 %v4729, 8
        %v8053 = vpop.permute.xlu0 %8052
        %8054 = vrot.lane.b32.xlu0 %v4827, 8
        %v8055 = vpop.permute.xlu0 %8054
        %8056 = vrot.lane.b32.xlu0 %v4925, 8
        %v8057 = vpop.permute.xlu0 %8056
        %8058 = vrot.lane.b32.xlu0 %v5023, 8
        %v8059 = vpop.permute.xlu0 %8058
        %8060 = vrot.lane.b32.xlu0 %v5121, 8
        %v8061 = vpop.permute.xlu0 %8060
        %8062 = vrot.lane.b32.xlu0 %v5219, 8
        %v8063 = vpop.permute.xlu0 %8062
        %8064 = vrot.lane.b32.xlu0 %v5317, 8
        %v8065 = vpop.permute.xlu0 %8064
        %8066 = vrot.lane.b32.xlu0 %v5415, 8
        %v8067 = vpop.permute.xlu0 %8066
        %8068 = vrot.lane.b32.xlu0 %v5513, 8
        %v8069 = vpop.permute.xlu0 %8068
        %8070 = vrot.lane.b32.xlu0 %v5611, 8
        %v8071 = vpop.permute.xlu0 %8070
        %8072 = vrot.lane.b32.xlu0 %v5709, 8
        %v8073 = vpop.permute.xlu0 %8072
        %8074 = vrot.lane.b32.xlu0 %v5807, 8
        %v8075 = vpop.permute.xlu0 %8074
        %8076 = vrot.lane.b32.xlu0 %v5905, 8
        %v8077 = vpop.permute.xlu0 %8076
        %8078 = vrot.lane.b32.xlu0 %v6003, 8
        %v8079 = vpop.permute.xlu0 %8078
        %8080 = vrot.lane.b32.xlu0 %v6101, 8
        %v8081 = vpop.permute.xlu0 %8080
        %8082 = vrot.lane.b32.xlu0 %v6199, 8
        %v8083 = vpop.permute.xlu0 %8082
        %8084 = vrot.lane.b32.xlu0 %v6297, 8
        %v8085 = vpop.permute.xlu0 %8084
        %8086 = vrot.lane.b32.xlu0 %v6395, 8
        %v8087 = vpop.permute.xlu0 %8086
        %8088 = vrot.lane.b32.xlu0 %v6493, 8
        %v8089 = vpop.permute.xlu0 %8088
        %8090 = vrot.lane.b32.xlu0 %v6591, 8
        %v8091 = vpop.permute.xlu0 %8090
        %8092 = vrot.lane.b32.xlu0 %v6689, 8
        %v8093 = vpop.permute.xlu0 %8092
        %8094 = vrot.lane.b32.xlu0 %v6787, 8
        %v8095 = vpop.permute.xlu0 %8094
        %8096 = vrot.lane.b32.xlu0 %v6885, 8
        %v8097 = vpop.permute.xlu0 %8096
        %8098 = vrot.lane.b32.xlu0 %v6983, 8
        %v8099 = vpop.permute.xlu0 %8098
        %8100 = vrot.lane.b32.xlu0 %v7081, 8
        %v8101 = vpop.permute.xlu0 %8100
        %8230 = vrot.lane.b32.xlu0 %v917, 10
        %v8231 = vpop.permute.xlu0 %8230
        %8232 = vrot.lane.b32.xlu0 %v1015, 10
        %v8233 = vpop.permute.xlu0 %8232
        %8234 = vrot.lane.b32.xlu0 %v1113, 10
        %v8235 = vpop.permute.xlu0 %8234
        %8236 = vrot.lane.b32.xlu0 %v1211, 10
        %v8237 = vpop.permute.xlu0 %8236
        %8238 = vrot.lane.b32.xlu0 %v1309, 10
        %v8239 = vpop.permute.xlu0 %8238
        %8240 = vrot.lane.b32.xlu0 %v1407, 10
        %v8241 = vpop.permute.xlu0 %8240
        %8242 = vrot.lane.b32.xlu0 %v1505, 10
        %v8243 = vpop.permute.xlu0 %8242
        %8244 = vrot.lane.b32.xlu0 %v1603, 10
        %v8245 = vpop.permute.xlu0 %8244
        %8246 = vrot.lane.b32.xlu0 %v1701, 10
        %v8247 = vpop.permute.xlu0 %8246
        %8248 = vrot.lane.b32.xlu0 %v1799, 10
        %v8249 = vpop.permute.xlu0 %8248
        %8250 = vrot.lane.b32.xlu0 %v1897, 10
        %v8251 = vpop.permute.xlu0 %8250
        %8252 = vrot.lane.b32.xlu0 %v1995, 10
        %v8253 = vpop.permute.xlu0 %8252
        %8254 = vrot.lane.b32.xlu0 %v2093, 10
        %v8255 = vpop.permute.xlu0 %8254
        %8256 = vrot.lane.b32.xlu0 %v2191, 10
        %v8257 = vpop.permute.xlu0 %8256
        %8258 = vrot.lane.b32.xlu0 %v2289, 10
        %v8259 = vpop.permute.xlu0 %8258
        %8260 = vrot.lane.b32.xlu0 %v2387, 10
        %v8261 = vpop.permute.xlu0 %8260
        %8262 = vrot.lane.b32.xlu0 %v2485, 10
        %v8263 = vpop.permute.xlu0 %8262
        %8264 = vrot.lane.b32.xlu0 %v2583, 10
        %v8265 = vpop.permute.xlu0 %8264
        %8266 = vrot.lane.b32.xlu0 %v2681, 10
        %v8267 = vpop.permute.xlu0 %8266
        %8268 = vrot.lane.b32.xlu0 %v2779, 10
        %v8269 = vpop.permute.xlu0 %8268
        %8270 = vrot.lane.b32.xlu0 %v2877, 10
        %v8271 = vpop.permute.xlu0 %8270
        %8272 = vrot.lane.b32.xlu0 %v2975, 10
        %v8273 = vpop.permute.xlu0 %8272
        %8274 = vrot.lane.b32.xlu0 %v3073, 10
        %v8275 = vpop.permute.xlu0 %8274
        %8276 = vrot.lane.b32.xlu0 %v3171, 10
        %v8277 = vpop.permute.xlu0 %8276
        %8278 = vrot.lane.b32.xlu0 %v3269, 10
        %v8279 = vpop.permute.xlu0 %8278
        %8280 = vrot.lane.b32.xlu0 %v3367, 10
        %v8281 = vpop.permute.xlu0 %8280
        %8282 = vrot.lane.b32.xlu0 %v3465, 10
        %v8283 = vpop.permute.xlu0 %8282
        %8284 = vrot.lane.b32.xlu0 %v3563, 10
        %v8285 = vpop.permute.xlu0 %8284
        %8286 = vrot.lane.b32.xlu0 %v3661, 10
        %v8287 = vpop.permute.xlu0 %8286
        %8288 = vrot.lane.b32.xlu0 %v3759, 10
        %v8289 = vpop.permute.xlu0 %8288
        %8290 = vrot.lane.b32.xlu0 %v3857, 10
        %v8291 = vpop.permute.xlu0 %8290
        %8292 = vrot.lane.b32.xlu0 %v3955, 10
        %v8293 = vpop.permute.xlu0 %8292
        %8294 = vrot.lane.b32.xlu0 %v4053, 10
        %v8295 = vpop.permute.xlu0 %8294
        %8296 = vrot.lane.b32.xlu0 %v4151, 10
        %v8297 = vpop.permute.xlu0 %8296
        %8298 = vrot.lane.b32.xlu0 %v4249, 10
        %v8299 = vpop.permute.xlu0 %8298
        %8300 = vrot.lane.b32.xlu0 %v4347, 10
        %v8301 = vpop.permute.xlu0 %8300
        %8302 = vrot.lane.b32.xlu0 %v4445, 10
        %v8303 = vpop.permute.xlu0 %8302
        %8304 = vrot.lane.b32.xlu0 %v4543, 10
        %v8305 = vpop.permute.xlu0 %8304
        %8306 = vrot.lane.b32.xlu0 %v4641, 10
        %v8307 = vpop.permute.xlu0 %8306
        %8308 = vrot.lane.b32.xlu0 %v4739, 10
        %v8309 = vpop.permute.xlu0 %8308
        %8310 = vrot.lane.b32.xlu0 %v4837, 10
        %v8311 = vpop.permute.xlu0 %8310
        %8312 = vrot.lane.b32.xlu0 %v4935, 10
        %v8313 = vpop.permute.xlu0 %8312
        %8314 = vrot.lane.b32.xlu0 %v5033, 10
        %v8315 = vpop.permute.xlu0 %8314
        %8316 = vrot.lane.b32.xlu0 %v5131, 10
        %v8317 = vpop.permute.xlu0 %8316
        %8318 = vrot.lane.b32.xlu0 %v5229, 10
        %v8319 = vpop.permute.xlu0 %8318
        %8320 = vrot.lane.b32.xlu0 %v5327, 10
        %v8321 = vpop.permute.xlu0 %8320
        %8322 = vrot.lane.b32.xlu0 %v5425, 10
        %v8323 = vpop.permute.xlu0 %8322
        %8324 = vrot.lane.b32.xlu0 %v5523, 10
        %v8325 = vpop.permute.xlu0 %8324
        %8326 = vrot.lane.b32.xlu0 %v5621, 10
        %v8327 = vpop.permute.xlu0 %8326
        %8328 = vrot.lane.b32.xlu0 %v5719, 10
        %v8329 = vpop.permute.xlu0 %8328
        %8330 = vrot.lane.b32.xlu0 %v5817, 10
        %v8331 = vpop.permute.xlu0 %8330
        %8332 = vrot.lane.b32.xlu0 %v5915, 10
        %v8333 = vpop.permute.xlu0 %8332
        %8334 = vrot.lane.b32.xlu0 %v6013, 10
        %v8335 = vpop.permute.xlu0 %8334
        %8336 = vrot.lane.b32.xlu0 %v6111, 10
        %v8337 = vpop.permute.xlu0 %8336
        %8338 = vrot.lane.b32.xlu0 %v6209, 10
        %v8339 = vpop.permute.xlu0 %8338
        %8340 = vrot.lane.b32.xlu0 %v6307, 10
        %v8341 = vpop.permute.xlu0 %8340
        %8342 = vrot.lane.b32.xlu0 %v6405, 10
        %v8343 = vpop.permute.xlu0 %8342
        %8344 = vrot.lane.b32.xlu0 %v6503, 10
        %v8345 = vpop.permute.xlu0 %8344
        %8346 = vrot.lane.b32.xlu0 %v6601, 10
        %v8347 = vpop.permute.xlu0 %8346
        %8348 = vrot.lane.b32.xlu0 %v6699, 10
        %v8349 = vpop.permute.xlu0 %8348
        %8350 = vrot.lane.b32.xlu0 %v6797, 10
        %v8351 = vpop.permute.xlu0 %8350
        %8352 = vrot.lane.b32.xlu0 %v6895, 10
        %v8353 = vpop.permute.xlu0 %8352
        %8354 = vrot.lane.b32.xlu0 %v6993, 10
        %v8355 = vpop.permute.xlu0 %8354
        %8356 = vrot.lane.b32.xlu0 %v7091, 10
        %v8357 = vpop.permute.xlu0 %8356
        %8486 = vrot.lane.b32.xlu0 %v914, 12
        %v8487 = vpop.permute.xlu0 %8486
        %8488 = vrot.lane.b32.xlu0 %v1012, 12
        %v8489 = vpop.permute.xlu0 %8488
        %8490 = vrot.lane.b32.xlu0 %v1110, 12
        %v8491 = vpop.permute.xlu0 %8490
        %8492 = vrot.lane.b32.xlu0 %v1208, 12
        %v8493 = vpop.permute.xlu0 %8492
        %8494 = vrot.lane.b32.xlu0 %v1306, 12
        %v8495 = vpop.permute.xlu0 %8494
        %8496 = vrot.lane.b32.xlu0 %v1404, 12
        %v8497 = vpop.permute.xlu0 %8496
        %8498 = vrot.lane.b32.xlu0 %v1502, 12
        %v8499 = vpop.permute.xlu0 %8498
        %8500 = vrot.lane.b32.xlu0 %v1600, 12
        %v8501 = vpop.permute.xlu0 %8500
        %8502 = vrot.lane.b32.xlu0 %v1698, 12
        %v8503 = vpop.permute.xlu0 %8502
        %8504 = vrot.lane.b32.xlu0 %v1796, 12
        %v8505 = vpop.permute.xlu0 %8504
        %8506 = vrot.lane.b32.xlu0 %v1894, 12
        %v8507 = vpop.permute.xlu0 %8506
        %8508 = vrot.lane.b32.xlu0 %v1992, 12
        %v8509 = vpop.permute.xlu0 %8508
        %8510 = vrot.lane.b32.xlu0 %v2090, 12
        %v8511 = vpop.permute.xlu0 %8510
        %8512 = vrot.lane.b32.xlu0 %v2188, 12
        %v8513 = vpop.permute.xlu0 %8512
        %8514 = vrot.lane.b32.xlu0 %v2286, 12
        %v8515 = vpop.permute.xlu0 %8514
        %8516 = vrot.lane.b32.xlu0 %v2384, 12
        %v8517 = vpop.permute.xlu0 %8516
        %8518 = vrot.lane.b32.xlu0 %v2482, 12
        %v8519 = vpop.permute.xlu0 %8518
        %8520 = vrot.lane.b32.xlu0 %v2580, 12
        %v8521 = vpop.permute.xlu0 %8520
        %8522 = vrot.lane.b32.xlu0 %v2678, 12
        %v8523 = vpop.permute.xlu0 %8522
        %8524 = vrot.lane.b32.xlu0 %v2776, 12
        %v8525 = vpop.permute.xlu0 %8524
        %8526 = vrot.lane.b32.xlu0 %v2874, 12
        %v8527 = vpop.permute.xlu0 %8526
        %8528 = vrot.lane.b32.xlu0 %v2972, 12
        %v8529 = vpop.permute.xlu0 %8528
        %8530 = vrot.lane.b32.xlu0 %v3070, 12
        %v8531 = vpop.permute.xlu0 %8530
        %8532 = vrot.lane.b32.xlu0 %v3168, 12
        %v8533 = vpop.permute.xlu0 %8532
        %8534 = vrot.lane.b32.xlu0 %v3266, 12
        %v8535 = vpop.permute.xlu0 %8534
        %8536 = vrot.lane.b32.xlu0 %v3364, 12
        %v8537 = vpop.permute.xlu0 %8536
        %8538 = vrot.lane.b32.xlu0 %v3462, 12
        %v8539 = vpop.permute.xlu0 %8538
        %8540 = vrot.lane.b32.xlu0 %v3560, 12
        %v8541 = vpop.permute.xlu0 %8540
        %8542 = vrot.lane.b32.xlu0 %v3658, 12
        %v8543 = vpop.permute.xlu0 %8542
        %8544 = vrot.lane.b32.xlu0 %v3756, 12
        %v8545 = vpop.permute.xlu0 %8544
        %8546 = vrot.lane.b32.xlu0 %v3854, 12
        %v8547 = vpop.permute.xlu0 %8546
        %8548 = vrot.lane.b32.xlu0 %v3952, 12
        %v8549 = vpop.permute.xlu0 %8548
        %8550 = vrot.lane.b32.xlu0 %v4050, 12
        %v8551 = vpop.permute.xlu0 %8550
        %8552 = vrot.lane.b32.xlu0 %v4148, 12
        %v8553 = vpop.permute.xlu0 %8552
        %8554 = vrot.lane.b32.xlu0 %v4246, 12
        %v8555 = vpop.permute.xlu0 %8554
        %8556 = vrot.lane.b32.xlu0 %v4344, 12
        %v8557 = vpop.permute.xlu0 %8556
        %8558 = vrot.lane.b32.xlu0 %v4442, 12
        %v8559 = vpop.permute.xlu0 %8558
        %8560 = vrot.lane.b32.xlu0 %v4540, 12
        %v8561 = vpop.permute.xlu0 %8560
        %8562 = vrot.lane.b32.xlu0 %v4638, 12
        %v8563 = vpop.permute.xlu0 %8562
        %8564 = vrot.lane.b32.xlu0 %v4736, 12
        %v8565 = vpop.permute.xlu0 %8564
        %8566 = vrot.lane.b32.xlu0 %v4834, 12
        %v8567 = vpop.permute.xlu0 %8566
        %8568 = vrot.lane.b32.xlu0 %v4932, 12
        %v8569 = vpop.permute.xlu0 %8568
        %8570 = vrot.lane.b32.xlu0 %v5030, 12
        %v8571 = vpop.permute.xlu0 %8570
        %8572 = vrot.lane.b32.xlu0 %v5128, 12
        %v8573 = vpop.permute.xlu0 %8572
        %8574 = vrot.lane.b32.xlu0 %v5226, 12
        %v8575 = vpop.permute.xlu0 %8574
        %8576 = vrot.lane.b32.xlu0 %v5324, 12
        %v8577 = vpop.permute.xlu0 %8576
        %8578 = vrot.lane.b32.xlu0 %v5422, 12
        %v8579 = vpop.permute.xlu0 %8578
        %8580 = vrot.lane.b32.xlu0 %v5520, 12
        %v8581 = vpop.permute.xlu0 %8580
        %8582 = vrot.lane.b32.xlu0 %v5618, 12
        %v8583 = vpop.permute.xlu0 %8582
        %8584 = vrot.lane.b32.xlu0 %v5716, 12
        %v8585 = vpop.permute.xlu0 %8584
        %8586 = vrot.lane.b32.xlu0 %v5814, 12
        %v8587 = vpop.permute.xlu0 %8586
        %8588 = vrot.lane.b32.xlu0 %v5912, 12
        %v8589 = vpop.permute.xlu0 %8588
        %8590 = vrot.lane.b32.xlu0 %v6010, 12
        %v8591 = vpop.permute.xlu0 %8590
        %8592 = vrot.lane.b32.xlu0 %v6108, 12
        %v8593 = vpop.permute.xlu0 %8592
        %8594 = vrot.lane.b32.xlu0 %v6206, 12
        %v8595 = vpop.permute.xlu0 %8594
        %8596 = vrot.lane.b32.xlu0 %v6304, 12
        %v8597 = vpop.permute.xlu0 %8596
        %8598 = vrot.lane.b32.xlu0 %v6402, 12
        %v8599 = vpop.permute.xlu0 %8598
        %8600 = vrot.lane.b32.xlu0 %v6500, 12
        %v8601 = vpop.permute.xlu0 %8600
        %8602 = vrot.lane.b32.xlu0 %v6598, 12
        %v8603 = vpop.permute.xlu0 %8602
        %8604 = vrot.lane.b32.xlu0 %v6696, 12
        %v8605 = vpop.permute.xlu0 %8604
        %8606 = vrot.lane.b32.xlu0 %v6794, 12
        %v8607 = vpop.permute.xlu0 %8606
        %8608 = vrot.lane.b32.xlu0 %v6892, 12
        %v8609 = vpop.permute.xlu0 %8608
        %8610 = vrot.lane.b32.xlu0 %v6990, 12
        %v8611 = vpop.permute.xlu0 %8610
        %8612 = vrot.lane.b32.xlu0 %v7088, 12
        %v8613 = vpop.permute.xlu0 %8612
        %8742 = vrot.lane.b32.xlu0 %v918, 14
        %v8743 = vpop.permute.xlu0 %8742
        %8744 = vrot.lane.b32.xlu0 %v1016, 14
        %v8745 = vpop.permute.xlu0 %8744
        %8746 = vrot.lane.b32.xlu0 %v1114, 14
        %v8747 = vpop.permute.xlu0 %8746
        %8748 = vrot.lane.b32.xlu0 %v1212, 14
        %v8749 = vpop.permute.xlu0 %8748
        %8750 = vrot.lane.b32.xlu0 %v1310, 14
        %v8751 = vpop.permute.xlu0 %8750
        %8752 = vrot.lane.b32.xlu0 %v1408, 14
        %v8753 = vpop.permute.xlu0 %8752
        %8754 = vrot.lane.b32.xlu0 %v1506, 14
        %v8755 = vpop.permute.xlu0 %8754
        %8756 = vrot.lane.b32.xlu0 %v1604, 14
        %v8757 = vpop.permute.xlu0 %8756
        %8758 = vrot.lane.b32.xlu0 %v1702, 14
        %v8759 = vpop.permute.xlu0 %8758
        %8760 = vrot.lane.b32.xlu0 %v1800, 14
        %v8761 = vpop.permute.xlu0 %8760
        %8762 = vrot.lane.b32.xlu0 %v1898, 14
        %v8763 = vpop.permute.xlu0 %8762
        %8764 = vrot.lane.b32.xlu0 %v1996, 14
        %v8765 = vpop.permute.xlu0 %8764
        %8766 = vrot.lane.b32.xlu0 %v2094, 14
        %v8767 = vpop.permute.xlu0 %8766
        %8768 = vrot.lane.b32.xlu0 %v2192, 14
        %v8769 = vpop.permute.xlu0 %8768
        %8770 = vrot.lane.b32.xlu0 %v2290, 14
        %v8771 = vpop.permute.xlu0 %8770
        %8772 = vrot.lane.b32.xlu0 %v2388, 14
        %v8773 = vpop.permute.xlu0 %8772
        %8774 = vrot.lane.b32.xlu0 %v2486, 14
        %v8775 = vpop.permute.xlu0 %8774
        %8776 = vrot.lane.b32.xlu0 %v2584, 14
        %v8777 = vpop.permute.xlu0 %8776
        %8778 = vrot.lane.b32.xlu0 %v2682, 14
        %v8779 = vpop.permute.xlu0 %8778
        %8780 = vrot.lane.b32.xlu0 %v2780, 14
        %v8781 = vpop.permute.xlu0 %8780
        %8782 = vrot.lane.b32.xlu0 %v2878, 14
        %v8783 = vpop.permute.xlu0 %8782
        %8784 = vrot.lane.b32.xlu0 %v2976, 14
        %v8785 = vpop.permute.xlu0 %8784
        %8786 = vrot.lane.b32.xlu0 %v3074, 14
        %v8787 = vpop.permute.xlu0 %8786
        %8788 = vrot.lane.b32.xlu0 %v3172, 14
        %v8789 = vpop.permute.xlu0 %8788
        %8790 = vrot.lane.b32.xlu0 %v3270, 14
        %v8791 = vpop.permute.xlu0 %8790
        %8792 = vrot.lane.b32.xlu0 %v3368, 14
        %v8793 = vpop.permute.xlu0 %8792
        %8794 = vrot.lane.b32.xlu0 %v3466, 14
        %v8795 = vpop.permute.xlu0 %8794
        %8796 = vrot.lane.b32.xlu0 %v3564, 14
        %v8797 = vpop.permute.xlu0 %8796
        %8798 = vrot.lane.b32.xlu0 %v3662, 14
        %v8799 = vpop.permute.xlu0 %8798
        %8800 = vrot.lane.b32.xlu0 %v3760, 14
        %v8801 = vpop.permute.xlu0 %8800
        %8802 = vrot.lane.b32.xlu0 %v3858, 14
        %v8803 = vpop.permute.xlu0 %8802
        %8804 = vrot.lane.b32.xlu0 %v3956, 14
        %v8805 = vpop.permute.xlu0 %8804
        %8806 = vrot.lane.b32.xlu0 %v4054, 14
        %v8807 = vpop.permute.xlu0 %8806
        %8808 = vrot.lane.b32.xlu0 %v4152, 14
        %v8809 = vpop.permute.xlu0 %8808
        %8810 = vrot.lane.b32.xlu0 %v4250, 14
        %v8811 = vpop.permute.xlu0 %8810
        %8812 = vrot.lane.b32.xlu0 %v4348, 14
        %v8813 = vpop.permute.xlu0 %8812
        %8814 = vrot.lane.b32.xlu0 %v4446, 14
        %v8815 = vpop.permute.xlu0 %8814
        %8816 = vrot.lane.b32.xlu0 %v4544, 14
        %v8817 = vpop.permute.xlu0 %8816
        %8818 = vrot.lane.b32.xlu0 %v4642, 14
        %v8819 = vpop.permute.xlu0 %8818
        %8820 = vrot.lane.b32.xlu0 %v4740, 14
        %v8821 = vpop.permute.xlu0 %8820
        %8822 = vrot.lane.b32.xlu0 %v4838, 14
        %v8823 = vpop.permute.xlu0 %8822
        %8824 = vrot.lane.b32.xlu0 %v4936, 14
        %v8825 = vpop.permute.xlu0 %8824
        %8826 = vrot.lane.b32.xlu0 %v5034, 14
        %v8827 = vpop.permute.xlu0 %8826
        %8828 = vrot.lane.b32.xlu0 %v5132, 14
        %v8829 = vpop.permute.xlu0 %8828
        %8830 = vrot.lane.b32.xlu0 %v5230, 14
        %v8831 = vpop.permute.xlu0 %8830
        %8832 = vrot.lane.b32.xlu0 %v5328, 14
        %v8833 = vpop.permute.xlu0 %8832
        %8834 = vrot.lane.b32.xlu0 %v5426, 14
        %v8835 = vpop.permute.xlu0 %8834
        %8836 = vrot.lane.b32.xlu0 %v5524, 14
        %v8837 = vpop.permute.xlu0 %8836
        %8838 = vrot.lane.b32.xlu0 %v5622, 14
        %v8839 = vpop.permute.xlu0 %8838
        %8840 = vrot.lane.b32.xlu0 %v5720, 14
        %v8841 = vpop.permute.xlu0 %8840
        %8842 = vrot.lane.b32.xlu0 %v5818, 14
        %v8843 = vpop.permute.xlu0 %8842
        %8844 = vrot.lane.b32.xlu0 %v5916, 14
        %v8845 = vpop.permute.xlu0 %8844
        %8846 = vrot.lane.b32.xlu0 %v6014, 14
        %v8847 = vpop.permute.xlu0 %8846
        %8848 = vrot.lane.b32.xlu0 %v6112, 14
        %v8849 = vpop.permute.xlu0 %8848
        %8850 = vrot.lane.b32.xlu0 %v6210, 14
        %v8851 = vpop.permute.xlu0 %8850
        %8852 = vrot.lane.b32.xlu0 %v6308, 14
        %v8853 = vpop.permute.xlu0 %8852
        %8854 = vrot.lane.b32.xlu0 %v6406, 14
        %v8855 = vpop.permute.xlu0 %8854
        %8856 = vrot.lane.b32.xlu0 %v6504, 14
        %v8857 = vpop.permute.xlu0 %8856
        %8858 = vrot.lane.b32.xlu0 %v6602, 14
        %v8859 = vpop.permute.xlu0 %8858
        %8860 = vrot.lane.b32.xlu0 %v6700, 14
        %v8861 = vpop.permute.xlu0 %8860
        %8862 = vrot.lane.b32.xlu0 %v6798, 14
        %v8863 = vpop.permute.xlu0 %8862
        %8864 = vrot.lane.b32.xlu0 %v6896, 14
        %v8865 = vpop.permute.xlu0 %8864
        %8866 = vrot.lane.b32.xlu0 %v6994, 14
        %v8867 = vpop.permute.xlu0 %8866
        %8868 = vrot.lane.b32.xlu0 %v7092, 14
        %v8869 = vpop.permute.xlu0 %8868
        %8998 = vrot.lane.b32.xlu0 %v941, 16
        %v8999 = vpop.permute.xlu0 %8998
        %9000 = vrot.lane.b32.xlu0 %v1039, 16
        %v9001 = vpop.permute.xlu0 %9000
        %9002 = vrot.lane.b32.xlu0 %v1137, 16
        %v9003 = vpop.permute.xlu0 %9002
        %9004 = vrot.lane.b32.xlu0 %v1235, 16
        %v9005 = vpop.permute.xlu0 %9004
        %9006 = vrot.lane.b32.xlu0 %v1333, 16
        %v9007 = vpop.permute.xlu0 %9006
        %9008 = vrot.lane.b32.xlu0 %v1431, 16
        %v9009 = vpop.permute.xlu0 %9008
        %9010 = vrot.lane.b32.xlu0 %v1529, 16
        %v9011 = vpop.permute.xlu0 %9010
        %9012 = vrot.lane.b32.xlu0 %v1627, 16
        %v9013 = vpop.permute.xlu0 %9012
        %9014 = vrot.lane.b32.xlu0 %v1725, 16
        %v9015 = vpop.permute.xlu0 %9014
        %9016 = vrot.lane.b32.xlu0 %v1823, 16
        %v9017 = vpop.permute.xlu0 %9016
        %9018 = vrot.lane.b32.xlu0 %v1921, 16
        %v9019 = vpop.permute.xlu0 %9018
        %9020 = vrot.lane.b32.xlu0 %v2019, 16
        %v9021 = vpop.permute.xlu0 %9020
        %9022 = vrot.lane.b32.xlu0 %v2117, 16
        %v9023 = vpop.permute.xlu0 %9022
        %9024 = vrot.lane.b32.xlu0 %v2215, 16
        %v9025 = vpop.permute.xlu0 %9024
        %9026 = vrot.lane.b32.xlu0 %v2313, 16
        %v9027 = vpop.permute.xlu0 %9026
        %9028 = vrot.lane.b32.xlu0 %v2411, 16
        %v9029 = vpop.permute.xlu0 %9028
        %9030 = vrot.lane.b32.xlu0 %v2509, 16
        %v9031 = vpop.permute.xlu0 %9030
        %9032 = vrot.lane.b32.xlu0 %v2607, 16
        %v9033 = vpop.permute.xlu0 %9032
        %9034 = vrot.lane.b32.xlu0 %v2705, 16
        %v9035 = vpop.permute.xlu0 %9034
        %9036 = vrot.lane.b32.xlu0 %v2803, 16
        %v9037 = vpop.permute.xlu0 %9036
        %9038 = vrot.lane.b32.xlu0 %v2901, 16
        %v9039 = vpop.permute.xlu0 %9038
        %9040 = vrot.lane.b32.xlu0 %v2999, 16
        %v9041 = vpop.permute.xlu0 %9040
        %9042 = vrot.lane.b32.xlu0 %v3097, 16
        %v9043 = vpop.permute.xlu0 %9042
        %9044 = vrot.lane.b32.xlu0 %v3195, 16
        %v9045 = vpop.permute.xlu0 %9044
        %9046 = vrot.lane.b32.xlu0 %v3293, 16
        %v9047 = vpop.permute.xlu0 %9046
        %9048 = vrot.lane.b32.xlu0 %v3391, 16
        %v9049 = vpop.permute.xlu0 %9048
        %9050 = vrot.lane.b32.xlu0 %v3489, 16
        %v9051 = vpop.permute.xlu0 %9050
        %9052 = vrot.lane.b32.xlu0 %v3587, 16
        %v9053 = vpop.permute.xlu0 %9052
        %9054 = vrot.lane.b32.xlu0 %v3685, 16
        %v9055 = vpop.permute.xlu0 %9054
        %9056 = vrot.lane.b32.xlu0 %v3783, 16
        %v9057 = vpop.permute.xlu0 %9056
        %9058 = vrot.lane.b32.xlu0 %v3881, 16
        %v9059 = vpop.permute.xlu0 %9058
        %9060 = vrot.lane.b32.xlu0 %v3979, 16
        %v9061 = vpop.permute.xlu0 %9060
        %9062 = vrot.lane.b32.xlu0 %v4077, 16
        %v9063 = vpop.permute.xlu0 %9062
        %9064 = vrot.lane.b32.xlu0 %v4175, 16
        %v9065 = vpop.permute.xlu0 %9064
        %9066 = vrot.lane.b32.xlu0 %v4273, 16
        %v9067 = vpop.permute.xlu0 %9066
        %9068 = vrot.lane.b32.xlu0 %v4371, 16
        %v9069 = vpop.permute.xlu0 %9068
        %9070 = vrot.lane.b32.xlu0 %v4469, 16
        %v9071 = vpop.permute.xlu0 %9070
        %9072 = vrot.lane.b32.xlu0 %v4567, 16
        %v9073 = vpop.permute.xlu0 %9072
        %9074 = vrot.lane.b32.xlu0 %v4665, 16
        %v9075 = vpop.permute.xlu0 %9074
        %9076 = vrot.lane.b32.xlu0 %v4763, 16
        %v9077 = vpop.permute.xlu0 %9076
        %9078 = vrot.lane.b32.xlu0 %v4861, 16
        %v9079 = vpop.permute.xlu0 %9078
        %9080 = vrot.lane.b32.xlu0 %v4959, 16
        %v9081 = vpop.permute.xlu0 %9080
        %9082 = vrot.lane.b32.xlu0 %v5057, 16
        %v9083 = vpop.permute.xlu0 %9082
        %9084 = vrot.lane.b32.xlu0 %v5155, 16
        %v9085 = vpop.permute.xlu0 %9084
        %9086 = vrot.lane.b32.xlu0 %v5253, 16
        %v9087 = vpop.permute.xlu0 %9086
        %9088 = vrot.lane.b32.xlu0 %v5351, 16
        %v9089 = vpop.permute.xlu0 %9088
        %9090 = vrot.lane.b32.xlu0 %v5449, 16
        %v9091 = vpop.permute.xlu0 %9090
        %9092 = vrot.lane.b32.xlu0 %v5547, 16
        %v9093 = vpop.permute.xlu0 %9092
        %9094 = vrot.lane.b32.xlu0 %v5645, 16
        %v9095 = vpop.permute.xlu0 %9094
        %9096 = vrot.lane.b32.xlu0 %v5743, 16
        %v9097 = vpop.permute.xlu0 %9096
        %9098 = vrot.lane.b32.xlu0 %v5841, 16
        %v9099 = vpop.permute.xlu0 %9098
        %9100 = vrot.lane.b32.xlu0 %v5939, 16
        %v9101 = vpop.permute.xlu0 %9100
        %9102 = vrot.lane.b32.xlu0 %v6037, 16
        %v9103 = vpop.permute.xlu0 %9102
        %9104 = vrot.lane.b32.xlu0 %v6135, 16
        %v9105 = vpop.permute.xlu0 %9104
        %9106 = vrot.lane.b32.xlu0 %v6233, 16
        %v9107 = vpop.permute.xlu0 %9106
        %9108 = vrot.lane.b32.xlu0 %v6331, 16
        %v9109 = vpop.permute.xlu0 %9108
        %9110 = vrot.lane.b32.xlu0 %v6429, 16
        %v9111 = vpop.permute.xlu0 %9110
        %9112 = vrot.lane.b32.xlu0 %v6527, 16
        %v9113 = vpop.permute.xlu0 %9112
        %9114 = vrot.lane.b32.xlu0 %v6625, 16
        %v9115 = vpop.permute.xlu0 %9114
        %9116 = vrot.lane.b32.xlu0 %v6723, 16
        %v9117 = vpop.permute.xlu0 %9116
        %9118 = vrot.lane.b32.xlu0 %v6821, 16
        %v9119 = vpop.permute.xlu0 %9118
        %9120 = vrot.lane.b32.xlu0 %v6919, 16
        %v9121 = vpop.permute.xlu0 %9120
        %9122 = vrot.lane.b32.xlu0 %v7017, 16
        %v9123 = vpop.permute.xlu0 %9122
        %9124 = vrot.lane.b32.xlu0 %v7115, 16
        %v9125 = vpop.permute.xlu0 %9124
        %9254 = vrot.lane.b32.xlu0 %v964, 18
        %v9255 = vpop.permute.xlu0 %9254
        %9256 = vrot.lane.b32.xlu0 %v1062, 18
        %v9257 = vpop.permute.xlu0 %9256
        %9258 = vrot.lane.b32.xlu0 %v1160, 18
        %v9259 = vpop.permute.xlu0 %9258
        %9260 = vrot.lane.b32.xlu0 %v1258, 18
        %v9261 = vpop.permute.xlu0 %9260
        %9262 = vrot.lane.b32.xlu0 %v1356, 18
        %v9263 = vpop.permute.xlu0 %9262
        %9264 = vrot.lane.b32.xlu0 %v1454, 18
        %v9265 = vpop.permute.xlu0 %9264
        %9266 = vrot.lane.b32.xlu0 %v1552, 18
        %v9267 = vpop.permute.xlu0 %9266
        %9268 = vrot.lane.b32.xlu0 %v1650, 18
        %v9269 = vpop.permute.xlu0 %9268
        %9270 = vrot.lane.b32.xlu0 %v1748, 18
        %v9271 = vpop.permute.xlu0 %9270
        %9272 = vrot.lane.b32.xlu0 %v1846, 18
        %v9273 = vpop.permute.xlu0 %9272
        %9274 = vrot.lane.b32.xlu0 %v1944, 18
        %v9275 = vpop.permute.xlu0 %9274
        %9276 = vrot.lane.b32.xlu0 %v2042, 18
        %v9277 = vpop.permute.xlu0 %9276
        %9278 = vrot.lane.b32.xlu0 %v2140, 18
        %v9279 = vpop.permute.xlu0 %9278
        %9280 = vrot.lane.b32.xlu0 %v2238, 18
        %v9281 = vpop.permute.xlu0 %9280
        %9282 = vrot.lane.b32.xlu0 %v2336, 18
        %v9283 = vpop.permute.xlu0 %9282
        %9284 = vrot.lane.b32.xlu0 %v2434, 18
        %v9285 = vpop.permute.xlu0 %9284
        %9286 = vrot.lane.b32.xlu0 %v2532, 18
        %v9287 = vpop.permute.xlu0 %9286
        %9288 = vrot.lane.b32.xlu0 %v2630, 18
        %v9289 = vpop.permute.xlu0 %9288
        %9290 = vrot.lane.b32.xlu0 %v2728, 18
        %v9291 = vpop.permute.xlu0 %9290
        %9292 = vrot.lane.b32.xlu0 %v2826, 18
        %v9293 = vpop.permute.xlu0 %9292
        %9294 = vrot.lane.b32.xlu0 %v2924, 18
        %v9295 = vpop.permute.xlu0 %9294
        %9296 = vrot.lane.b32.xlu0 %v3022, 18
        %v9297 = vpop.permute.xlu0 %9296
        %9298 = vrot.lane.b32.xlu0 %v3120, 18
        %v9299 = vpop.permute.xlu0 %9298
        %9300 = vrot.lane.b32.xlu0 %v3218, 18
        %v9301 = vpop.permute.xlu0 %9300
        %9302 = vrot.lane.b32.xlu0 %v3316, 18
        %v9303 = vpop.permute.xlu0 %9302
        %9304 = vrot.lane.b32.xlu0 %v3414, 18
        %v9305 = vpop.permute.xlu0 %9304
        %9306 = vrot.lane.b32.xlu0 %v3512, 18
        %v9307 = vpop.permute.xlu0 %9306
        %9308 = vrot.lane.b32.xlu0 %v3610, 18
        %v9309 = vpop.permute.xlu0 %9308
        %9310 = vrot.lane.b32.xlu0 %v3708, 18
        %v9311 = vpop.permute.xlu0 %9310
        %9312 = vrot.lane.b32.xlu0 %v3806, 18
        %v9313 = vpop.permute.xlu0 %9312
        %9314 = vrot.lane.b32.xlu0 %v3904, 18
        %v9315 = vpop.permute.xlu0 %9314
        %9316 = vrot.lane.b32.xlu0 %v4002, 18
        %v9317 = vpop.permute.xlu0 %9316
        %9318 = vrot.lane.b32.xlu0 %v4100, 18
        %v9319 = vpop.permute.xlu0 %9318
        %9320 = vrot.lane.b32.xlu0 %v4198, 18
        %v9321 = vpop.permute.xlu0 %9320
        %9322 = vrot.lane.b32.xlu0 %v4296, 18
        %v9323 = vpop.permute.xlu0 %9322
        %9324 = vrot.lane.b32.xlu0 %v4394, 18
        %v9325 = vpop.permute.xlu0 %9324
        %9326 = vrot.lane.b32.xlu0 %v4492, 18
        %v9327 = vpop.permute.xlu0 %9326
        %9328 = vrot.lane.b32.xlu0 %v4590, 18
        %v9329 = vpop.permute.xlu0 %9328
        %9330 = vrot.lane.b32.xlu0 %v4688, 18
        %v9331 = vpop.permute.xlu0 %9330
        %9332 = vrot.lane.b32.xlu0 %v4786, 18
        %v9333 = vpop.permute.xlu0 %9332
        %9334 = vrot.lane.b32.xlu0 %v4884, 18
        %v9335 = vpop.permute.xlu0 %9334
        %9336 = vrot.lane.b32.xlu0 %v4982, 18
        %v9337 = vpop.permute.xlu0 %9336
        %9338 = vrot.lane.b32.xlu0 %v5080, 18
        %v9339 = vpop.permute.xlu0 %9338
        %9340 = vrot.lane.b32.xlu0 %v5178, 18
        %v9341 = vpop.permute.xlu0 %9340
        %9342 = vrot.lane.b32.xlu0 %v5276, 18
        %v9343 = vpop.permute.xlu0 %9342
        %9344 = vrot.lane.b32.xlu0 %v5374, 18
        %v9345 = vpop.permute.xlu0 %9344
        %9346 = vrot.lane.b32.xlu0 %v5472, 18
        %v9347 = vpop.permute.xlu0 %9346
        %9348 = vrot.lane.b32.xlu0 %v5570, 18
        %v9349 = vpop.permute.xlu0 %9348
        %9350 = vrot.lane.b32.xlu0 %v5668, 18
        %v9351 = vpop.permute.xlu0 %9350
        %9352 = vrot.lane.b32.xlu0 %v5766, 18
        %v9353 = vpop.permute.xlu0 %9352
        %9354 = vrot.lane.b32.xlu0 %v5864, 18
        %v9355 = vpop.permute.xlu0 %9354
        %9356 = vrot.lane.b32.xlu0 %v5962, 18
        %v9357 = vpop.permute.xlu0 %9356
        %9358 = vrot.lane.b32.xlu0 %v6060, 18
        %v9359 = vpop.permute.xlu0 %9358
        %9360 = vrot.lane.b32.xlu0 %v6158, 18
        %v9361 = vpop.permute.xlu0 %9360
        %9362 = vrot.lane.b32.xlu0 %v6256, 18
        %v9363 = vpop.permute.xlu0 %9362
        %9364 = vrot.lane.b32.xlu0 %v6354, 18
        %v9365 = vpop.permute.xlu0 %9364
        %9366 = vrot.lane.b32.xlu0 %v6452, 18
        %v9367 = vpop.permute.xlu0 %9366
        %9368 = vrot.lane.b32.xlu0 %v6550, 18
        %v9369 = vpop.permute.xlu0 %9368
        %9370 = vrot.lane.b32.xlu0 %v6648, 18
        %v9371 = vpop.permute.xlu0 %9370
        %9372 = vrot.lane.b32.xlu0 %v6746, 18
        %v9373 = vpop.permute.xlu0 %9372
        %9374 = vrot.lane.b32.xlu0 %v6844, 18
        %v9375 = vpop.permute.xlu0 %9374
        %9376 = vrot.lane.b32.xlu0 %v6942, 18
        %v9377 = vpop.permute.xlu0 %9376
        %9378 = vrot.lane.b32.xlu0 %v7040, 18
        %v9379 = vpop.permute.xlu0 %9378
        %9380 = vrot.lane.b32.xlu0 %v7138, 18
        %v9381 = vpop.permute.xlu0 %9380
        %9510 = vrot.lane.b32.xlu0 %v948, 20
        %v9511 = vpop.permute.xlu0 %9510
        %9512 = vrot.lane.b32.xlu0 %v1046, 20
        %v9513 = vpop.permute.xlu0 %9512
        %9514 = vrot.lane.b32.xlu0 %v1144, 20
        %v9515 = vpop.permute.xlu0 %9514
        %9516 = vrot.lane.b32.xlu0 %v1242, 20
        %v9517 = vpop.permute.xlu0 %9516
        %9518 = vrot.lane.b32.xlu0 %v1340, 20
        %v9519 = vpop.permute.xlu0 %9518
        %9520 = vrot.lane.b32.xlu0 %v1438, 20
        %v9521 = vpop.permute.xlu0 %9520
        %9522 = vrot.lane.b32.xlu0 %v1536, 20
        %v9523 = vpop.permute.xlu0 %9522
        %9524 = vrot.lane.b32.xlu0 %v1634, 20
        %v9525 = vpop.permute.xlu0 %9524
        %9526 = vrot.lane.b32.xlu0 %v1732, 20
        %v9527 = vpop.permute.xlu0 %9526
        %9528 = vrot.lane.b32.xlu0 %v1830, 20
        %v9529 = vpop.permute.xlu0 %9528
        %9530 = vrot.lane.b32.xlu0 %v1928, 20
        %v9531 = vpop.permute.xlu0 %9530
        %9532 = vrot.lane.b32.xlu0 %v2026, 20
        %v9533 = vpop.permute.xlu0 %9532
        %9534 = vrot.lane.b32.xlu0 %v2124, 20
        %v9535 = vpop.permute.xlu0 %9534
        %9536 = vrot.lane.b32.xlu0 %v2222, 20
        %v9537 = vpop.permute.xlu0 %9536
        %9538 = vrot.lane.b32.xlu0 %v2320, 20
        %v9539 = vpop.permute.xlu0 %9538
        %9540 = vrot.lane.b32.xlu0 %v2418, 20
        %v9541 = vpop.permute.xlu0 %9540
        %9542 = vrot.lane.b32.xlu0 %v2516, 20
        %v9543 = vpop.permute.xlu0 %9542
        %9544 = vrot.lane.b32.xlu0 %v2614, 20
        %v9545 = vpop.permute.xlu0 %9544
        %9546 = vrot.lane.b32.xlu0 %v2712, 20
        %v9547 = vpop.permute.xlu0 %9546
        %9548 = vrot.lane.b32.xlu0 %v2810, 20
        %v9549 = vpop.permute.xlu0 %9548
        %9550 = vrot.lane.b32.xlu0 %v2908, 20
        %v9551 = vpop.permute.xlu0 %9550
        %9552 = vrot.lane.b32.xlu0 %v3006, 20
        %v9553 = vpop.permute.xlu0 %9552
        %9554 = vrot.lane.b32.xlu0 %v3104, 20
        %v9555 = vpop.permute.xlu0 %9554
        %9556 = vrot.lane.b32.xlu0 %v3202, 20
        %v9557 = vpop.permute.xlu0 %9556
        %9558 = vrot.lane.b32.xlu0 %v3300, 20
        %v9559 = vpop.permute.xlu0 %9558
        %9560 = vrot.lane.b32.xlu0 %v3398, 20
        %v9561 = vpop.permute.xlu0 %9560
        %9562 = vrot.lane.b32.xlu0 %v3496, 20
        %v9563 = vpop.permute.xlu0 %9562
        %9564 = vrot.lane.b32.xlu0 %v3594, 20
        %v9565 = vpop.permute.xlu0 %9564
        %9566 = vrot.lane.b32.xlu0 %v3692, 20
        %v9567 = vpop.permute.xlu0 %9566
        %9568 = vrot.lane.b32.xlu0 %v3790, 20
        %v9569 = vpop.permute.xlu0 %9568
        %9570 = vrot.lane.b32.xlu0 %v3888, 20
        %v9571 = vpop.permute.xlu0 %9570
        %9572 = vrot.lane.b32.xlu0 %v3986, 20
        %v9573 = vpop.permute.xlu0 %9572
        %9574 = vrot.lane.b32.xlu0 %v4084, 20
        %v9575 = vpop.permute.xlu0 %9574
        %9576 = vrot.lane.b32.xlu0 %v4182, 20
        %v9577 = vpop.permute.xlu0 %9576
        %9578 = vrot.lane.b32.xlu0 %v4280, 20
        %v9579 = vpop.permute.xlu0 %9578
        %9580 = vrot.lane.b32.xlu0 %v4378, 20
        %v9581 = vpop.permute.xlu0 %9580
        %9582 = vrot.lane.b32.xlu0 %v4476, 20
        %v9583 = vpop.permute.xlu0 %9582
        %9584 = vrot.lane.b32.xlu0 %v4574, 20
        %v9585 = vpop.permute.xlu0 %9584
        %9586 = vrot.lane.b32.xlu0 %v4672, 20
        %v9587 = vpop.permute.xlu0 %9586
        %9588 = vrot.lane.b32.xlu0 %v4770, 20
        %v9589 = vpop.permute.xlu0 %9588
        %9590 = vrot.lane.b32.xlu0 %v4868, 20
        %v9591 = vpop.permute.xlu0 %9590
        %9592 = vrot.lane.b32.xlu0 %v4966, 20
        %v9593 = vpop.permute.xlu0 %9592
        %9594 = vrot.lane.b32.xlu0 %v5064, 20
        %v9595 = vpop.permute.xlu0 %9594
        %9596 = vrot.lane.b32.xlu0 %v5162, 20
        %v9597 = vpop.permute.xlu0 %9596
        %9598 = vrot.lane.b32.xlu0 %v5260, 20
        %v9599 = vpop.permute.xlu0 %9598
        %9600 = vrot.lane.b32.xlu0 %v5358, 20
        %v9601 = vpop.permute.xlu0 %9600
        %9602 = vrot.lane.b32.xlu0 %v5456, 20
        %v9603 = vpop.permute.xlu0 %9602
        %9604 = vrot.lane.b32.xlu0 %v5554, 20
        %v9605 = vpop.permute.xlu0 %9604
        %9606 = vrot.lane.b32.xlu0 %v5652, 20
        %v9607 = vpop.permute.xlu0 %9606
        %9608 = vrot.lane.b32.xlu0 %v5750, 20
        %v9609 = vpop.permute.xlu0 %9608
        %9610 = vrot.lane.b32.xlu0 %v5848, 20
        %v9611 = vpop.permute.xlu0 %9610
        %9612 = vrot.lane.b32.xlu0 %v5946, 20
        %v9613 = vpop.permute.xlu0 %9612
        %9614 = vrot.lane.b32.xlu0 %v6044, 20
        %v9615 = vpop.permute.xlu0 %9614
        %9616 = vrot.lane.b32.xlu0 %v6142, 20
        %v9617 = vpop.permute.xlu0 %9616
        %9618 = vrot.lane.b32.xlu0 %v6240, 20
        %v9619 = vpop.permute.xlu0 %9618
        %9620 = vrot.lane.b32.xlu0 %v6338, 20
        %v9621 = vpop.permute.xlu0 %9620
        %9622 = vrot.lane.b32.xlu0 %v6436, 20
        %v9623 = vpop.permute.xlu0 %9622
        %9624 = vrot.lane.b32.xlu0 %v6534, 20
        %v9625 = vpop.permute.xlu0 %9624
        %9626 = vrot.lane.b32.xlu0 %v6632, 20
        %v9627 = vpop.permute.xlu0 %9626
        %9628 = vrot.lane.b32.xlu0 %v6730, 20
        %v9629 = vpop.permute.xlu0 %9628
        %9630 = vrot.lane.b32.xlu0 %v6828, 20
        %v9631 = vpop.permute.xlu0 %9630
        %9632 = vrot.lane.b32.xlu0 %v6926, 20
        %v9633 = vpop.permute.xlu0 %9632
        %9634 = vrot.lane.b32.xlu0 %v7024, 20
        %v9635 = vpop.permute.xlu0 %9634
        %9636 = vrot.lane.b32.xlu0 %v7122, 20
        %v9637 = vpop.permute.xlu0 %9636
        %9766 = vrot.lane.b32.xlu0 %v965, 22
        %v9767 = vpop.permute.xlu0 %9766
        %9768 = vrot.lane.b32.xlu0 %v1063, 22
        %v9769 = vpop.permute.xlu0 %9768
        %9770 = vrot.lane.b32.xlu0 %v1161, 22
        %v9771 = vpop.permute.xlu0 %9770
        %9772 = vrot.lane.b32.xlu0 %v1259, 22
        %v9773 = vpop.permute.xlu0 %9772
        %9774 = vrot.lane.b32.xlu0 %v1357, 22
        %v9775 = vpop.permute.xlu0 %9774
        %9776 = vrot.lane.b32.xlu0 %v1455, 22
        %v9777 = vpop.permute.xlu0 %9776
        %9778 = vrot.lane.b32.xlu0 %v1553, 22
        %v9779 = vpop.permute.xlu0 %9778
        %9780 = vrot.lane.b32.xlu0 %v1651, 22
        %v9781 = vpop.permute.xlu0 %9780
        %9782 = vrot.lane.b32.xlu0 %v1749, 22
        %v9783 = vpop.permute.xlu0 %9782
        %9784 = vrot.lane.b32.xlu0 %v1847, 22
        %v9785 = vpop.permute.xlu0 %9784
        %9786 = vrot.lane.b32.xlu0 %v1945, 22
        %v9787 = vpop.permute.xlu0 %9786
        %9788 = vrot.lane.b32.xlu0 %v2043, 22
        %v9789 = vpop.permute.xlu0 %9788
        %9790 = vrot.lane.b32.xlu0 %v2141, 22
        %v9791 = vpop.permute.xlu0 %9790
        %9792 = vrot.lane.b32.xlu0 %v2239, 22
        %v9793 = vpop.permute.xlu0 %9792
        %9794 = vrot.lane.b32.xlu0 %v2337, 22
        %v9795 = vpop.permute.xlu0 %9794
        %9796 = vrot.lane.b32.xlu0 %v2435, 22
        %v9797 = vpop.permute.xlu0 %9796
        %9798 = vrot.lane.b32.xlu0 %v2533, 22
        %v9799 = vpop.permute.xlu0 %9798
        %9800 = vrot.lane.b32.xlu0 %v2631, 22
        %v9801 = vpop.permute.xlu0 %9800
        %9802 = vrot.lane.b32.xlu0 %v2729, 22
        %v9803 = vpop.permute.xlu0 %9802
        %9804 = vrot.lane.b32.xlu0 %v2827, 22
        %v9805 = vpop.permute.xlu0 %9804
        %9806 = vrot.lane.b32.xlu0 %v2925, 22
        %v9807 = vpop.permute.xlu0 %9806
        %9808 = vrot.lane.b32.xlu0 %v3023, 22
        %v9809 = vpop.permute.xlu0 %9808
        %9810 = vrot.lane.b32.xlu0 %v3121, 22
        %v9811 = vpop.permute.xlu0 %9810
        %9812 = vrot.lane.b32.xlu0 %v3219, 22
        %v9813 = vpop.permute.xlu0 %9812
        %9814 = vrot.lane.b32.xlu0 %v3317, 22
        %v9815 = vpop.permute.xlu0 %9814
        %9816 = vrot.lane.b32.xlu0 %v3415, 22
        %v9817 = vpop.permute.xlu0 %9816
        %9818 = vrot.lane.b32.xlu0 %v3513, 22
        %v9819 = vpop.permute.xlu0 %9818
        %9820 = vrot.lane.b32.xlu0 %v3611, 22
        %v9821 = vpop.permute.xlu0 %9820
        %9822 = vrot.lane.b32.xlu0 %v3709, 22
        %v9823 = vpop.permute.xlu0 %9822
        %9824 = vrot.lane.b32.xlu0 %v3807, 22
        %v9825 = vpop.permute.xlu0 %9824
        %9826 = vrot.lane.b32.xlu0 %v3905, 22
        %v9827 = vpop.permute.xlu0 %9826
        %9828 = vrot.lane.b32.xlu0 %v4003, 22
        %v9829 = vpop.permute.xlu0 %9828
        %9830 = vrot.lane.b32.xlu0 %v4101, 22
        %v9831 = vpop.permute.xlu0 %9830
        %9832 = vrot.lane.b32.xlu0 %v4199, 22
        %v9833 = vpop.permute.xlu0 %9832
        %9834 = vrot.lane.b32.xlu0 %v4297, 22
        %v9835 = vpop.permute.xlu0 %9834
        %9836 = vrot.lane.b32.xlu0 %v4395, 22
        %v9837 = vpop.permute.xlu0 %9836
        %9838 = vrot.lane.b32.xlu0 %v4493, 22
        %v9839 = vpop.permute.xlu0 %9838
        %9840 = vrot.lane.b32.xlu0 %v4591, 22
        %v9841 = vpop.permute.xlu0 %9840
        %9842 = vrot.lane.b32.xlu0 %v4689, 22
        %v9843 = vpop.permute.xlu0 %9842
        %9844 = vrot.lane.b32.xlu0 %v4787, 22
        %v9845 = vpop.permute.xlu0 %9844
        %9846 = vrot.lane.b32.xlu0 %v4885, 22
        %v9847 = vpop.permute.xlu0 %9846
        %9848 = vrot.lane.b32.xlu0 %v4983, 22
        %v9849 = vpop.permute.xlu0 %9848
        %9850 = vrot.lane.b32.xlu0 %v5081, 22
        %v9851 = vpop.permute.xlu0 %9850
        %9852 = vrot.lane.b32.xlu0 %v5179, 22
        %v9853 = vpop.permute.xlu0 %9852
        %9854 = vrot.lane.b32.xlu0 %v5277, 22
        %v9855 = vpop.permute.xlu0 %9854
        %9856 = vrot.lane.b32.xlu0 %v5375, 22
        %v9857 = vpop.permute.xlu0 %9856
        %9858 = vrot.lane.b32.xlu0 %v5473, 22
        %v9859 = vpop.permute.xlu0 %9858
        %9860 = vrot.lane.b32.xlu0 %v5571, 22
        %v9861 = vpop.permute.xlu0 %9860
        %9862 = vrot.lane.b32.xlu0 %v5669, 22
        %v9863 = vpop.permute.xlu0 %9862
        %9864 = vrot.lane.b32.xlu0 %v5767, 22
        %v9865 = vpop.permute.xlu0 %9864
        %9866 = vrot.lane.b32.xlu0 %v5865, 22
        %v9867 = vpop.permute.xlu0 %9866
        %9868 = vrot.lane.b32.xlu0 %v5963, 22
        %v9869 = vpop.permute.xlu0 %9868
        %9870 = vrot.lane.b32.xlu0 %v6061, 22
        %v9871 = vpop.permute.xlu0 %9870
        %9872 = vrot.lane.b32.xlu0 %v6159, 22
        %v9873 = vpop.permute.xlu0 %9872
        %9874 = vrot.lane.b32.xlu0 %v6257, 22
        %v9875 = vpop.permute.xlu0 %9874
        %9876 = vrot.lane.b32.xlu0 %v6355, 22
        %v9877 = vpop.permute.xlu0 %9876
        %9878 = vrot.lane.b32.xlu0 %v6453, 22
        %v9879 = vpop.permute.xlu0 %9878
        %9880 = vrot.lane.b32.xlu0 %v6551, 22
        %v9881 = vpop.permute.xlu0 %9880
        %9882 = vrot.lane.b32.xlu0 %v6649, 22
        %v9883 = vpop.permute.xlu0 %9882
        %9884 = vrot.lane.b32.xlu0 %v6747, 22
        %v9885 = vpop.permute.xlu0 %9884
        %9886 = vrot.lane.b32.xlu0 %v6845, 22
        %v9887 = vpop.permute.xlu0 %9886
        %9888 = vrot.lane.b32.xlu0 %v6943, 22
        %v9889 = vpop.permute.xlu0 %9888
        %9890 = vrot.lane.b32.xlu0 %v7041, 22
        %v9891 = vpop.permute.xlu0 %9890
        %9892 = vrot.lane.b32.xlu0 %v7139, 22
        %v9893 = vpop.permute.xlu0 %9892
        %10022 = vrot.lane.b32.xlu0 %v956, 24
        %v10023 = vpop.permute.xlu0 %10022
        %10024 = vrot.lane.b32.xlu0 %v1054, 24
        %v10025 = vpop.permute.xlu0 %10024
        %10026 = vrot.lane.b32.xlu0 %v1152, 24
        %v10027 = vpop.permute.xlu0 %10026
        %10028 = vrot.lane.b32.xlu0 %v1250, 24
        %v10029 = vpop.permute.xlu0 %10028
        %10030 = vrot.lane.b32.xlu0 %v1348, 24
        %v10031 = vpop.permute.xlu0 %10030
        %10032 = vrot.lane.b32.xlu0 %v1446, 24
        %v10033 = vpop.permute.xlu0 %10032
        %10034 = vrot.lane.b32.xlu0 %v1544, 24
        %v10035 = vpop.permute.xlu0 %10034
        %10036 = vrot.lane.b32.xlu0 %v1642, 24
        %v10037 = vpop.permute.xlu0 %10036
        %10038 = vrot.lane.b32.xlu0 %v1740, 24
        %v10039 = vpop.permute.xlu0 %10038
        %10040 = vrot.lane.b32.xlu0 %v1838, 24
        %v10041 = vpop.permute.xlu0 %10040
        %10042 = vrot.lane.b32.xlu0 %v1936, 24
        %v10043 = vpop.permute.xlu0 %10042
        %10044 = vrot.lane.b32.xlu0 %v2034, 24
        %v10045 = vpop.permute.xlu0 %10044
        %10046 = vrot.lane.b32.xlu0 %v2132, 24
        %v10047 = vpop.permute.xlu0 %10046
        %10048 = vrot.lane.b32.xlu0 %v2230, 24
        %v10049 = vpop.permute.xlu0 %10048
        %10050 = vrot.lane.b32.xlu0 %v2328, 24
        %v10051 = vpop.permute.xlu0 %10050
        %10052 = vrot.lane.b32.xlu0 %v2426, 24
        %v10053 = vpop.permute.xlu0 %10052
        %10054 = vrot.lane.b32.xlu0 %v2524, 24
        %v10055 = vpop.permute.xlu0 %10054
        %10056 = vrot.lane.b32.xlu0 %v2622, 24
        %v10057 = vpop.permute.xlu0 %10056
        %10058 = vrot.lane.b32.xlu0 %v2720, 24
        %v10059 = vpop.permute.xlu0 %10058
        %10060 = vrot.lane.b32.xlu0 %v2818, 24
        %v10061 = vpop.permute.xlu0 %10060
        %10062 = vrot.lane.b32.xlu0 %v2916, 24
        %v10063 = vpop.permute.xlu0 %10062
        %10064 = vrot.lane.b32.xlu0 %v3014, 24
        %v10065 = vpop.permute.xlu0 %10064
        %10066 = vrot.lane.b32.xlu0 %v3112, 24
        %v10067 = vpop.permute.xlu0 %10066
        %10068 = vrot.lane.b32.xlu0 %v3210, 24
        %v10069 = vpop.permute.xlu0 %10068
        %10070 = vrot.lane.b32.xlu0 %v3308, 24
        %v10071 = vpop.permute.xlu0 %10070
        %10072 = vrot.lane.b32.xlu0 %v3406, 24
        %v10073 = vpop.permute.xlu0 %10072
        %10074 = vrot.lane.b32.xlu0 %v3504, 24
        %v10075 = vpop.permute.xlu0 %10074
        %10076 = vrot.lane.b32.xlu0 %v3602, 24
        %v10077 = vpop.permute.xlu0 %10076
        %10078 = vrot.lane.b32.xlu0 %v3700, 24
        %v10079 = vpop.permute.xlu0 %10078
        %10080 = vrot.lane.b32.xlu0 %v3798, 24
        %v10081 = vpop.permute.xlu0 %10080
        %10082 = vrot.lane.b32.xlu0 %v3896, 24
        %v10083 = vpop.permute.xlu0 %10082
        %10084 = vrot.lane.b32.xlu0 %v3994, 24
        %v10085 = vpop.permute.xlu0 %10084
        %10086 = vrot.lane.b32.xlu0 %v4092, 24
        %v10087 = vpop.permute.xlu0 %10086
        %10088 = vrot.lane.b32.xlu0 %v4190, 24
        %v10089 = vpop.permute.xlu0 %10088
        %10090 = vrot.lane.b32.xlu0 %v4288, 24
        %v10091 = vpop.permute.xlu0 %10090
        %10092 = vrot.lane.b32.xlu0 %v4386, 24
        %v10093 = vpop.permute.xlu0 %10092
        %10094 = vrot.lane.b32.xlu0 %v4484, 24
        %v10095 = vpop.permute.xlu0 %10094
        %10096 = vrot.lane.b32.xlu0 %v4582, 24
        %v10097 = vpop.permute.xlu0 %10096
        %10098 = vrot.lane.b32.xlu0 %v4680, 24
        %v10099 = vpop.permute.xlu0 %10098
        %10100 = vrot.lane.b32.xlu0 %v4778, 24
        %v10101 = vpop.permute.xlu0 %10100
        %10102 = vrot.lane.b32.xlu0 %v4876, 24
        %v10103 = vpop.permute.xlu0 %10102
        %10104 = vrot.lane.b32.xlu0 %v4974, 24
        %v10105 = vpop.permute.xlu0 %10104
        %10106 = vrot.lane.b32.xlu0 %v5072, 24
        %v10107 = vpop.permute.xlu0 %10106
        %10108 = vrot.lane.b32.xlu0 %v5170, 24
        %v10109 = vpop.permute.xlu0 %10108
        %10110 = vrot.lane.b32.xlu0 %v5268, 24
        %v10111 = vpop.permute.xlu0 %10110
        %10112 = vrot.lane.b32.xlu0 %v5366, 24
        %v10113 = vpop.permute.xlu0 %10112
        %10114 = vrot.lane.b32.xlu0 %v5464, 24
        %v10115 = vpop.permute.xlu0 %10114
        %10116 = vrot.lane.b32.xlu0 %v5562, 24
        %v10117 = vpop.permute.xlu0 %10116
        %10118 = vrot.lane.b32.xlu0 %v5660, 24
        %v10119 = vpop.permute.xlu0 %10118
        %10120 = vrot.lane.b32.xlu0 %v5758, 24
        %v10121 = vpop.permute.xlu0 %10120
        %10122 = vrot.lane.b32.xlu0 %v5856, 24
        %v10123 = vpop.permute.xlu0 %10122
        %10124 = vrot.lane.b32.xlu0 %v5954, 24
        %v10125 = vpop.permute.xlu0 %10124
        %10126 = vrot.lane.b32.xlu0 %v6052, 24
        %v10127 = vpop.permute.xlu0 %10126
        %10128 = vrot.lane.b32.xlu0 %v6150, 24
        %v10129 = vpop.permute.xlu0 %10128
        %10130 = vrot.lane.b32.xlu0 %v6248, 24
        %v10131 = vpop.permute.xlu0 %10130
        %10132 = vrot.lane.b32.xlu0 %v6346, 24
        %v10133 = vpop.permute.xlu0 %10132
        %10134 = vrot.lane.b32.xlu0 %v6444, 24
        %v10135 = vpop.permute.xlu0 %10134
        %10136 = vrot.lane.b32.xlu0 %v6542, 24
        %v10137 = vpop.permute.xlu0 %10136
        %10138 = vrot.lane.b32.xlu0 %v6640, 24
        %v10139 = vpop.permute.xlu0 %10138
        %10140 = vrot.lane.b32.xlu0 %v6738, 24
        %v10141 = vpop.permute.xlu0 %10140
        %10142 = vrot.lane.b32.xlu0 %v6836, 24
        %v10143 = vpop.permute.xlu0 %10142
        %10144 = vrot.lane.b32.xlu0 %v6934, 24
        %v10145 = vpop.permute.xlu0 %10144
        %10146 = vrot.lane.b32.xlu0 %v7032, 24
        %v10147 = vpop.permute.xlu0 %10146
        %10148 = vrot.lane.b32.xlu0 %v7130, 24
        %v10149 = vpop.permute.xlu0 %10148
        %10278 = vrot.lane.b32.xlu0 %v966, 26
        %v10279 = vpop.permute.xlu0 %10278
        %10280 = vrot.lane.b32.xlu0 %v1064, 26
        %v10281 = vpop.permute.xlu0 %10280
        %10282 = vrot.lane.b32.xlu0 %v1162, 26
        %v10283 = vpop.permute.xlu0 %10282
        %10284 = vrot.lane.b32.xlu0 %v1260, 26
        %v10285 = vpop.permute.xlu0 %10284
        %10286 = vrot.lane.b32.xlu0 %v1358, 26
        %v10287 = vpop.permute.xlu0 %10286
        %10288 = vrot.lane.b32.xlu0 %v1456, 26
        %v10289 = vpop.permute.xlu0 %10288
        %10290 = vrot.lane.b32.xlu0 %v1554, 26
        %v10291 = vpop.permute.xlu0 %10290
        %10292 = vrot.lane.b32.xlu0 %v1652, 26
        %v10293 = vpop.permute.xlu0 %10292
        %10294 = vrot.lane.b32.xlu0 %v1750, 26
        %v10295 = vpop.permute.xlu0 %10294
        %10296 = vrot.lane.b32.xlu0 %v1848, 26
        %v10297 = vpop.permute.xlu0 %10296
        %10298 = vrot.lane.b32.xlu0 %v1946, 26
        %v10299 = vpop.permute.xlu0 %10298
        %10300 = vrot.lane.b32.xlu0 %v2044, 26
        %v10301 = vpop.permute.xlu0 %10300
        %10302 = vrot.lane.b32.xlu0 %v2142, 26
        %v10303 = vpop.permute.xlu0 %10302
        %10304 = vrot.lane.b32.xlu0 %v2240, 26
        %v10305 = vpop.permute.xlu0 %10304
        %10306 = vrot.lane.b32.xlu0 %v2338, 26
        %v10307 = vpop.permute.xlu0 %10306
        %10308 = vrot.lane.b32.xlu0 %v2436, 26
        %v10309 = vpop.permute.xlu0 %10308
        %10310 = vrot.lane.b32.xlu0 %v2534, 26
        %v10311 = vpop.permute.xlu0 %10310
        %10312 = vrot.lane.b32.xlu0 %v2632, 26
        %v10313 = vpop.permute.xlu0 %10312
        %10314 = vrot.lane.b32.xlu0 %v2730, 26
        %v10315 = vpop.permute.xlu0 %10314
        %10316 = vrot.lane.b32.xlu0 %v2828, 26
        %v10317 = vpop.permute.xlu0 %10316
        %10318 = vrot.lane.b32.xlu0 %v2926, 26
        %v10319 = vpop.permute.xlu0 %10318
        %10320 = vrot.lane.b32.xlu0 %v3024, 26
        %v10321 = vpop.permute.xlu0 %10320
        %10322 = vrot.lane.b32.xlu0 %v3122, 26
        %v10323 = vpop.permute.xlu0 %10322
        %10324 = vrot.lane.b32.xlu0 %v3220, 26
        %v10325 = vpop.permute.xlu0 %10324
        %10326 = vrot.lane.b32.xlu0 %v3318, 26
        %v10327 = vpop.permute.xlu0 %10326
        %10328 = vrot.lane.b32.xlu0 %v3416, 26
        %v10329 = vpop.permute.xlu0 %10328
        %10330 = vrot.lane.b32.xlu0 %v3514, 26
        %v10331 = vpop.permute.xlu0 %10330
        %10332 = vrot.lane.b32.xlu0 %v3612, 26
        %v10333 = vpop.permute.xlu0 %10332
        %10334 = vrot.lane.b32.xlu0 %v3710, 26
        %v10335 = vpop.permute.xlu0 %10334
        %10336 = vrot.lane.b32.xlu0 %v3808, 26
        %v10337 = vpop.permute.xlu0 %10336
        %10338 = vrot.lane.b32.xlu0 %v3906, 26
        %v10339 = vpop.permute.xlu0 %10338
        %10340 = vrot.lane.b32.xlu0 %v4004, 26
        %v10341 = vpop.permute.xlu0 %10340
        %10342 = vrot.lane.b32.xlu0 %v4102, 26
        %v10343 = vpop.permute.xlu0 %10342
        %10344 = vrot.lane.b32.xlu0 %v4200, 26
        %v10345 = vpop.permute.xlu0 %10344
        %10346 = vrot.lane.b32.xlu0 %v4298, 26
        %v10347 = vpop.permute.xlu0 %10346
        %10348 = vrot.lane.b32.xlu0 %v4396, 26
        %v10349 = vpop.permute.xlu0 %10348
        %10350 = vrot.lane.b32.xlu0 %v4494, 26
        %v10351 = vpop.permute.xlu0 %10350
        %10352 = vrot.lane.b32.xlu0 %v4592, 26
        %v10353 = vpop.permute.xlu0 %10352
        %10354 = vrot.lane.b32.xlu0 %v4690, 26
        %v10355 = vpop.permute.xlu0 %10354
        %10356 = vrot.lane.b32.xlu0 %v4788, 26
        %v10357 = vpop.permute.xlu0 %10356
        %10358 = vrot.lane.b32.xlu0 %v4886, 26
        %v10359 = vpop.permute.xlu0 %10358
        %10360 = vrot.lane.b32.xlu0 %v4984, 26
        %v10361 = vpop.permute.xlu0 %10360
        %10362 = vrot.lane.b32.xlu0 %v5082, 26
        %v10363 = vpop.permute.xlu0 %10362
        %10364 = vrot.lane.b32.xlu0 %v5180, 26
        %v10365 = vpop.permute.xlu0 %10364
        %10366 = vrot.lane.b32.xlu0 %v5278, 26
        %v10367 = vpop.permute.xlu0 %10366
        %10368 = vrot.lane.b32.xlu0 %v5376, 26
        %v10369 = vpop.permute.xlu0 %10368
        %10370 = vrot.lane.b32.xlu0 %v5474, 26
        %v10371 = vpop.permute.xlu0 %10370
        %10372 = vrot.lane.b32.xlu0 %v5572, 26
        %v10373 = vpop.permute.xlu0 %10372
        %10374 = vrot.lane.b32.xlu0 %v5670, 26
        %v10375 = vpop.permute.xlu0 %10374
        %10376 = vrot.lane.b32.xlu0 %v5768, 26
        %v10377 = vpop.permute.xlu0 %10376
        %10378 = vrot.lane.b32.xlu0 %v5866, 26
        %v10379 = vpop.permute.xlu0 %10378
        %10380 = vrot.lane.b32.xlu0 %v5964, 26
        %v10381 = vpop.permute.xlu0 %10380
        %10382 = vrot.lane.b32.xlu0 %v6062, 26
        %v10383 = vpop.permute.xlu0 %10382
        %10384 = vrot.lane.b32.xlu0 %v6160, 26
        %v10385 = vpop.permute.xlu0 %10384
        %10386 = vrot.lane.b32.xlu0 %v6258, 26
        %v10387 = vpop.permute.xlu0 %10386
        %10388 = vrot.lane.b32.xlu0 %v6356, 26
        %v10389 = vpop.permute.xlu0 %10388
        %10390 = vrot.lane.b32.xlu0 %v6454, 26
        %v10391 = vpop.permute.xlu0 %10390
        %10392 = vrot.lane.b32.xlu0 %v6552, 26
        %v10393 = vpop.permute.xlu0 %10392
        %10394 = vrot.lane.b32.xlu0 %v6650, 26
        %v10395 = vpop.permute.xlu0 %10394
        %10396 = vrot.lane.b32.xlu0 %v6748, 26
        %v10397 = vpop.permute.xlu0 %10396
        %10398 = vrot.lane.b32.xlu0 %v6846, 26
        %v10399 = vpop.permute.xlu0 %10398
        %10400 = vrot.lane.b32.xlu0 %v6944, 26
        %v10401 = vpop.permute.xlu0 %10400
        %10402 = vrot.lane.b32.xlu0 %v7042, 26
        %v10403 = vpop.permute.xlu0 %10402
        %10404 = vrot.lane.b32.xlu0 %v7140, 26
        %v10405 = vpop.permute.xlu0 %10404
        %10534 = vrot.lane.b32.xlu0 %v963, 28
        %v10535 = vpop.permute.xlu0 %10534
        %10536 = vrot.lane.b32.xlu0 %v1061, 28
        %v10537 = vpop.permute.xlu0 %10536
        %10538 = vrot.lane.b32.xlu0 %v1159, 28
        %v10539 = vpop.permute.xlu0 %10538
        %10540 = vrot.lane.b32.xlu0 %v1257, 28
        %v10541 = vpop.permute.xlu0 %10540
        %10542 = vrot.lane.b32.xlu0 %v1355, 28
        %v10543 = vpop.permute.xlu0 %10542
        %10544 = vrot.lane.b32.xlu0 %v1453, 28
        %v10545 = vpop.permute.xlu0 %10544
        %10546 = vrot.lane.b32.xlu0 %v1551, 28
        %v10547 = vpop.permute.xlu0 %10546
        %10548 = vrot.lane.b32.xlu0 %v1649, 28
        %v10549 = vpop.permute.xlu0 %10548
        %10550 = vrot.lane.b32.xlu0 %v1747, 28
        %v10551 = vpop.permute.xlu0 %10550
        %10552 = vrot.lane.b32.xlu0 %v1845, 28
        %v10553 = vpop.permute.xlu0 %10552
        %10554 = vrot.lane.b32.xlu0 %v1943, 28
        %v10555 = vpop.permute.xlu0 %10554
        %10556 = vrot.lane.b32.xlu0 %v2041, 28
        %v10557 = vpop.permute.xlu0 %10556
        %10558 = vrot.lane.b32.xlu0 %v2139, 28
        %v10559 = vpop.permute.xlu0 %10558
        %10560 = vrot.lane.b32.xlu0 %v2237, 28
        %v10561 = vpop.permute.xlu0 %10560
        %10562 = vrot.lane.b32.xlu0 %v2335, 28
        %v10563 = vpop.permute.xlu0 %10562
        %10564 = vrot.lane.b32.xlu0 %v2433, 28
        %v10565 = vpop.permute.xlu0 %10564
        %10566 = vrot.lane.b32.xlu0 %v2531, 28
        %v10567 = vpop.permute.xlu0 %10566
        %10568 = vrot.lane.b32.xlu0 %v2629, 28
        %v10569 = vpop.permute.xlu0 %10568
        %10570 = vrot.lane.b32.xlu0 %v2727, 28
        %v10571 = vpop.permute.xlu0 %10570
        %10572 = vrot.lane.b32.xlu0 %v2825, 28
        %v10573 = vpop.permute.xlu0 %10572
        %10574 = vrot.lane.b32.xlu0 %v2923, 28
        %v10575 = vpop.permute.xlu0 %10574
        %10576 = vrot.lane.b32.xlu0 %v3021, 28
        %v10577 = vpop.permute.xlu0 %10576
        %10578 = vrot.lane.b32.xlu0 %v3119, 28
        %v10579 = vpop.permute.xlu0 %10578
        %10580 = vrot.lane.b32.xlu0 %v3217, 28
        %v10581 = vpop.permute.xlu0 %10580
        %10582 = vrot.lane.b32.xlu0 %v3315, 28
        %v10583 = vpop.permute.xlu0 %10582
        %10584 = vrot.lane.b32.xlu0 %v3413, 28
        %v10585 = vpop.permute.xlu0 %10584
        %10586 = vrot.lane.b32.xlu0 %v3511, 28
        %v10587 = vpop.permute.xlu0 %10586
        %10588 = vrot.lane.b32.xlu0 %v3609, 28
        %v10589 = vpop.permute.xlu0 %10588
        %10590 = vrot.lane.b32.xlu0 %v3707, 28
        %v10591 = vpop.permute.xlu0 %10590
        %10592 = vrot.lane.b32.xlu0 %v3805, 28
        %v10593 = vpop.permute.xlu0 %10592
        %10594 = vrot.lane.b32.xlu0 %v3903, 28
        %v10595 = vpop.permute.xlu0 %10594
        %10596 = vrot.lane.b32.xlu0 %v4001, 28
        %v10597 = vpop.permute.xlu0 %10596
        %10598 = vrot.lane.b32.xlu0 %v4099, 28
        %v10599 = vpop.permute.xlu0 %10598
        %10600 = vrot.lane.b32.xlu0 %v4197, 28
        %v10601 = vpop.permute.xlu0 %10600
        %10602 = vrot.lane.b32.xlu0 %v4295, 28
        %v10603 = vpop.permute.xlu0 %10602
        %10604 = vrot.lane.b32.xlu0 %v4393, 28
        %v10605 = vpop.permute.xlu0 %10604
        %10606 = vrot.lane.b32.xlu0 %v4491, 28
        %v10607 = vpop.permute.xlu0 %10606
        %10608 = vrot.lane.b32.xlu0 %v4589, 28
        %v10609 = vpop.permute.xlu0 %10608
        %10610 = vrot.lane.b32.xlu0 %v4687, 28
        %v10611 = vpop.permute.xlu0 %10610
        %10612 = vrot.lane.b32.xlu0 %v4785, 28
        %v10613 = vpop.permute.xlu0 %10612
        %10614 = vrot.lane.b32.xlu0 %v4883, 28
        %v10615 = vpop.permute.xlu0 %10614
        %10616 = vrot.lane.b32.xlu0 %v4981, 28
        %v10617 = vpop.permute.xlu0 %10616
        %10618 = vrot.lane.b32.xlu0 %v5079, 28
        %v10619 = vpop.permute.xlu0 %10618
        %10620 = vrot.lane.b32.xlu0 %v5177, 28
        %v10621 = vpop.permute.xlu0 %10620
        %10622 = vrot.lane.b32.xlu0 %v5275, 28
        %v10623 = vpop.permute.xlu0 %10622
        %10624 = vrot.lane.b32.xlu0 %v5373, 28
        %v10625 = vpop.permute.xlu0 %10624
        %10626 = vrot.lane.b32.xlu0 %v5471, 28
        %v10627 = vpop.permute.xlu0 %10626
        %10628 = vrot.lane.b32.xlu0 %v5569, 28
        %v10629 = vpop.permute.xlu0 %10628
        %10630 = vrot.lane.b32.xlu0 %v5667, 28
        %v10631 = vpop.permute.xlu0 %10630
        %10632 = vrot.lane.b32.xlu0 %v5765, 28
        %v10633 = vpop.permute.xlu0 %10632
        %10634 = vrot.lane.b32.xlu0 %v5863, 28
        %v10635 = vpop.permute.xlu0 %10634
        %10636 = vrot.lane.b32.xlu0 %v5961, 28
        %v10637 = vpop.permute.xlu0 %10636
        %10638 = vrot.lane.b32.xlu0 %v6059, 28
        %v10639 = vpop.permute.xlu0 %10638
        %10640 = vrot.lane.b32.xlu0 %v6157, 28
        %v10641 = vpop.permute.xlu0 %10640
        %10642 = vrot.lane.b32.xlu0 %v6255, 28
        %v10643 = vpop.permute.xlu0 %10642
        %10644 = vrot.lane.b32.xlu0 %v6353, 28
        %v10645 = vpop.permute.xlu0 %10644
        %10646 = vrot.lane.b32.xlu0 %v6451, 28
        %v10647 = vpop.permute.xlu0 %10646
        %10648 = vrot.lane.b32.xlu0 %v6549, 28
        %v10649 = vpop.permute.xlu0 %10648
        %10650 = vrot.lane.b32.xlu0 %v6647, 28
        %v10651 = vpop.permute.xlu0 %10650
        %10652 = vrot.lane.b32.xlu0 %v6745, 28
        %v10653 = vpop.permute.xlu0 %10652
        %10654 = vrot.lane.b32.xlu0 %v6843, 28
        %v10655 = vpop.permute.xlu0 %10654
        %10656 = vrot.lane.b32.xlu0 %v6941, 28
        %v10657 = vpop.permute.xlu0 %10656
        %10658 = vrot.lane.b32.xlu0 %v7039, 28
        %v10659 = vpop.permute.xlu0 %10658
        %10660 = vrot.lane.b32.xlu0 %v7137, 28
        %v10661 = vpop.permute.xlu0 %10660
        %10790 = vrot.lane.b32.xlu0 %v967, 30
        %v10791 = vpop.permute.xlu0 %10790
        %10792 = vrot.lane.b32.xlu0 %v1065, 30
        %v10793 = vpop.permute.xlu0 %10792
        %10794 = vrot.lane.b32.xlu0 %v1163, 30
        %v10795 = vpop.permute.xlu0 %10794
        %10796 = vrot.lane.b32.xlu0 %v1261, 30
        %v10797 = vpop.permute.xlu0 %10796
        %10798 = vrot.lane.b32.xlu0 %v1359, 30
        %v10799 = vpop.permute.xlu0 %10798
        %10800 = vrot.lane.b32.xlu0 %v1457, 30
        %v10801 = vpop.permute.xlu0 %10800
        %10802 = vrot.lane.b32.xlu0 %v1555, 30
        %v10803 = vpop.permute.xlu0 %10802
        %10804 = vrot.lane.b32.xlu0 %v1653, 30
        %v10805 = vpop.permute.xlu0 %10804
        %10806 = vrot.lane.b32.xlu0 %v1751, 30
        %v10807 = vpop.permute.xlu0 %10806
        %10808 = vrot.lane.b32.xlu0 %v1849, 30
        %v10809 = vpop.permute.xlu0 %10808
        %10810 = vrot.lane.b32.xlu0 %v1947, 30
        %v10811 = vpop.permute.xlu0 %10810
        %10812 = vrot.lane.b32.xlu0 %v2045, 30
        %v10813 = vpop.permute.xlu0 %10812
        %10814 = vrot.lane.b32.xlu0 %v2143, 30
        %v10815 = vpop.permute.xlu0 %10814
        %10816 = vrot.lane.b32.xlu0 %v2241, 30
        %v10817 = vpop.permute.xlu0 %10816
        %10818 = vrot.lane.b32.xlu0 %v2339, 30
        %v10819 = vpop.permute.xlu0 %10818
        %10820 = vrot.lane.b32.xlu0 %v2437, 30
        %v10821 = vpop.permute.xlu0 %10820
        %10822 = vrot.lane.b32.xlu0 %v2535, 30
        %v10823 = vpop.permute.xlu0 %10822
        %10824 = vrot.lane.b32.xlu0 %v2633, 30
        %v10825 = vpop.permute.xlu0 %10824
        %10826 = vrot.lane.b32.xlu0 %v2731, 30
        %v10827 = vpop.permute.xlu0 %10826
        %10828 = vrot.lane.b32.xlu0 %v2829, 30
        %v10829 = vpop.permute.xlu0 %10828
        %10830 = vrot.lane.b32.xlu0 %v2927, 30
        %v10831 = vpop.permute.xlu0 %10830
        %10832 = vrot.lane.b32.xlu0 %v3025, 30
        %v10833 = vpop.permute.xlu0 %10832
        %10834 = vrot.lane.b32.xlu0 %v3123, 30
        %v10835 = vpop.permute.xlu0 %10834
        %10836 = vrot.lane.b32.xlu0 %v3221, 30
        %v10837 = vpop.permute.xlu0 %10836
        %10838 = vrot.lane.b32.xlu0 %v3319, 30
        %v10839 = vpop.permute.xlu0 %10838
        %10840 = vrot.lane.b32.xlu0 %v3417, 30
        %v10841 = vpop.permute.xlu0 %10840
        %10842 = vrot.lane.b32.xlu0 %v3515, 30
        %v10843 = vpop.permute.xlu0 %10842
        %10844 = vrot.lane.b32.xlu0 %v3613, 30
        %v10845 = vpop.permute.xlu0 %10844
        %10846 = vrot.lane.b32.xlu0 %v3711, 30
        %v10847 = vpop.permute.xlu0 %10846
        %10848 = vrot.lane.b32.xlu0 %v3809, 30
        %v10849 = vpop.permute.xlu0 %10848
        %10850 = vrot.lane.b32.xlu0 %v3907, 30
        %v10851 = vpop.permute.xlu0 %10850
        %10852 = vrot.lane.b32.xlu0 %v4005, 30
        %v10853 = vpop.permute.xlu0 %10852
        %10854 = vrot.lane.b32.xlu0 %v4103, 30
        %v10855 = vpop.permute.xlu0 %10854
        %10856 = vrot.lane.b32.xlu0 %v4201, 30
        %v10857 = vpop.permute.xlu0 %10856
        %10858 = vrot.lane.b32.xlu0 %v4299, 30
        %v10859 = vpop.permute.xlu0 %10858
        %10860 = vrot.lane.b32.xlu0 %v4397, 30
        %v10861 = vpop.permute.xlu0 %10860
        %10862 = vrot.lane.b32.xlu0 %v4495, 30
        %v10863 = vpop.permute.xlu0 %10862
        %10864 = vrot.lane.b32.xlu0 %v4593, 30
        %v10865 = vpop.permute.xlu0 %10864
        %10866 = vrot.lane.b32.xlu0 %v4691, 30
        %v10867 = vpop.permute.xlu0 %10866
        %10868 = vrot.lane.b32.xlu0 %v4789, 30
        %v10869 = vpop.permute.xlu0 %10868
        %10870 = vrot.lane.b32.xlu0 %v4887, 30
        %v10871 = vpop.permute.xlu0 %10870
        %10872 = vrot.lane.b32.xlu0 %v4985, 30
        %v10873 = vpop.permute.xlu0 %10872
        %10874 = vrot.lane.b32.xlu0 %v5083, 30
        %v10875 = vpop.permute.xlu0 %10874
        %10876 = vrot.lane.b32.xlu0 %v5181, 30
        %v10877 = vpop.permute.xlu0 %10876
        %10878 = vrot.lane.b32.xlu0 %v5279, 30
        %v10879 = vpop.permute.xlu0 %10878
        %10880 = vrot.lane.b32.xlu0 %v5377, 30
        %v10881 = vpop.permute.xlu0 %10880
        %10882 = vrot.lane.b32.xlu0 %v5475, 30
        %v10883 = vpop.permute.xlu0 %10882
        %10884 = vrot.lane.b32.xlu0 %v5573, 30
        %v10885 = vpop.permute.xlu0 %10884
        %10886 = vrot.lane.b32.xlu0 %v5671, 30
        %v10887 = vpop.permute.xlu0 %10886
        %10888 = vrot.lane.b32.xlu0 %v5769, 30
        %v10889 = vpop.permute.xlu0 %10888
        %10890 = vrot.lane.b32.xlu0 %v5867, 30
        %v10891 = vpop.permute.xlu0 %10890
        %10892 = vrot.lane.b32.xlu0 %v5965, 30
        %v10893 = vpop.permute.xlu0 %10892
        %10894 = vrot.lane.b32.xlu0 %v6063, 30
        %v10895 = vpop.permute.xlu0 %10894
        %10896 = vrot.lane.b32.xlu0 %v6161, 30
        %v10897 = vpop.permute.xlu0 %10896
        %10898 = vrot.lane.b32.xlu0 %v6259, 30
        %v10899 = vpop.permute.xlu0 %10898
        %10900 = vrot.lane.b32.xlu0 %v6357, 30
        %v10901 = vpop.permute.xlu0 %10900
        %10902 = vrot.lane.b32.xlu0 %v6455, 30
        %v10903 = vpop.permute.xlu0 %10902
        %10904 = vrot.lane.b32.xlu0 %v6553, 30
        %v10905 = vpop.permute.xlu0 %10904
        %10906 = vrot.lane.b32.xlu0 %v6651, 30
        %v10907 = vpop.permute.xlu0 %10906
        %10908 = vrot.lane.b32.xlu0 %v6749, 30
        %v10909 = vpop.permute.xlu0 %10908
        %10910 = vrot.lane.b32.xlu0 %v6847, 30
        %v10911 = vpop.permute.xlu0 %10910
        %10912 = vrot.lane.b32.xlu0 %v6945, 30
        %v10913 = vpop.permute.xlu0 %10912
        %10914 = vrot.lane.b32.xlu0 %v7043, 30
        %v10915 = vpop.permute.xlu0 %10914
        %10916 = vrot.lane.b32.xlu0 %v7141, 30
        %v10917 = vpop.permute.xlu0 %10916
        %vm10982 = vcmask 15360
        %v10983 = vsel %vm10982, %v892, %v7207
        %v10984 = vsel %vm10982, %v990, %v7209
        %v10985 = vsel %vm10982, %v1088, %v7211
        %v10986 = vsel %vm10982, %v1186, %v7213
        %v10987 = vsel %vm10982, %v1284, %v7215
        %v10988 = vsel %vm10982, %v1382, %v7217
        %v10989 = vsel %vm10982, %v1480, %v7219
        %v10990 = vsel %vm10982, %v1578, %v7221
        %v10991 = vsel %vm10982, %v1676, %v7223
        %v10992 = vsel %vm10982, %v1774, %v7225
        %v10993 = vsel %vm10982, %v1872, %v7227
        %v10994 = vsel %vm10982, %v1970, %v7229
        %v10995 = vsel %vm10982, %v2068, %v7231
        %v10996 = vsel %vm10982, %v2166, %v7233
        %v10997 = vsel %vm10982, %v2264, %v7235
        %v10998 = vsel %vm10982, %v2362, %v7237
        %v10999 = vsel %vm10982, %v2460, %v7239
        %v11000 = vsel %vm10982, %v2558, %v7241
        %v11001 = vsel %vm10982, %v2656, %v7243
        %v11002 = vsel %vm10982, %v2754, %v7245
        %v11003 = vsel %vm10982, %v2852, %v7247
        %v11004 = vsel %vm10982, %v2950, %v7249
        %v11005 = vsel %vm10982, %v3048, %v7251
        %v11006 = vsel %vm10982, %v3146, %v7253
        %v11007 = vsel %vm10982, %v3244, %v7255
        %v11008 = vsel %vm10982, %v3342, %v7257
        %v11009 = vsel %vm10982, %v3440, %v7259
        %v11010 = vsel %vm10982, %v3538, %v7261
        %v11011 = vsel %vm10982, %v3636, %v7263
        %v11012 = vsel %vm10982, %v3734, %v7265
        %v11013 = vsel %vm10982, %v3832, %v7267
        %v11014 = vsel %vm10982, %v3930, %v7269
        %v11015 = vsel %vm10982, %v4028, %v7271
        %v11016 = vsel %vm10982, %v4126, %v7273
        %v11017 = vsel %vm10982, %v4224, %v7275
        %v11018 = vsel %vm10982, %v4322, %v7277
        %v11019 = vsel %vm10982, %v4420, %v7279
        %v11020 = vsel %vm10982, %v4518, %v7281
        %v11021 = vsel %vm10982, %v4616, %v7283
        %v11022 = vsel %vm10982, %v4714, %v7285
        %v11023 = vsel %vm10982, %v4812, %v7287
        %v11024 = vsel %vm10982, %v4910, %v7289
        %v11025 = vsel %vm10982, %v5008, %v7291
        %v11026 = vsel %vm10982, %v5106, %v7293
        %v11027 = vsel %vm10982, %v5204, %v7295
        %v11028 = vsel %vm10982, %v5302, %v7297
        %v11029 = vsel %vm10982, %v5400, %v7299
        %v11030 = vsel %vm10982, %v5498, %v7301
        %v11031 = vsel %vm10982, %v5596, %v7303
        %v11032 = vsel %vm10982, %v5694, %v7305
        %v11033 = vsel %vm10982, %v5792, %v7307
        %v11034 = vsel %vm10982, %v5890, %v7309
        %v11035 = vsel %vm10982, %v5988, %v7311
        %v11036 = vsel %vm10982, %v6086, %v7313
        %v11037 = vsel %vm10982, %v6184, %v7315
        %v11038 = vsel %vm10982, %v6282, %v7317
        %v11039 = vsel %vm10982, %v6380, %v7319
        %v11040 = vsel %vm10982, %v6478, %v7321
        %v11041 = vsel %vm10982, %v6576, %v7323
        %v11042 = vsel %vm10982, %v6674, %v7325
        %v11043 = vsel %vm10982, %v6772, %v7327
        %v11044 = vsel %vm10982, %v6870, %v7329
        %v11045 = vsel %vm10982, %v6968, %v7331
        %v11046 = vsel %vm10982, %v7066, %v7333
        %vm11047 = vcmask 31744
        %v11048 = vsel %vm11047, %v10983, %v7463
        %v11049 = vsel %vm11047, %v10984, %v7465
        %v11050 = vsel %vm11047, %v10985, %v7467
        %v11051 = vsel %vm11047, %v10986, %v7469
        %v11052 = vsel %vm11047, %v10987, %v7471
        %v11053 = vsel %vm11047, %v10988, %v7473
        %v11054 = vsel %vm11047, %v10989, %v7475
        %v11055 = vsel %vm11047, %v10990, %v7477
        %v11056 = vsel %vm11047, %v10991, %v7479
        %v11057 = vsel %vm11047, %v10992, %v7481
        %v11058 = vsel %vm11047, %v10993, %v7483
        %v11059 = vsel %vm11047, %v10994, %v7485
        %v11060 = vsel %vm11047, %v10995, %v7487
        %v11061 = vsel %vm11047, %v10996, %v7489
        %v11062 = vsel %vm11047, %v10997, %v7491
        %v11063 = vsel %vm11047, %v10998, %v7493
        %v11064 = vsel %vm11047, %v10999, %v7495
        %v11065 = vsel %vm11047, %v11000, %v7497
        %v11066 = vsel %vm11047, %v11001, %v7499
        %v11067 = vsel %vm11047, %v11002, %v7501
        %v11068 = vsel %vm11047, %v11003, %v7503
        %v11069 = vsel %vm11047, %v11004, %v7505
        %v11070 = vsel %vm11047, %v11005, %v7507
        %v11071 = vsel %vm11047, %v11006, %v7509
        %v11072 = vsel %vm11047, %v11007, %v7511
        %v11073 = vsel %vm11047, %v11008, %v7513
        %v11074 = vsel %vm11047, %v11009, %v7515
        %v11075 = vsel %vm11047, %v11010, %v7517
        %v11076 = vsel %vm11047, %v11011, %v7519
        %v11077 = vsel %vm11047, %v11012, %v7521
        %v11078 = vsel %vm11047, %v11013, %v7523
        %v11079 = vsel %vm11047, %v11014, %v7525
        %v11080 = vsel %vm11047, %v11015, %v7527
        %v11081 = vsel %vm11047, %v11016, %v7529
        %v11082 = vsel %vm11047, %v11017, %v7531
        %v11083 = vsel %vm11047, %v11018, %v7533
        %v11084 = vsel %vm11047, %v11019, %v7535
        %v11085 = vsel %vm11047, %v11020, %v7537
        %v11086 = vsel %vm11047, %v11021, %v7539
        %v11087 = vsel %vm11047, %v11022, %v7541
        %v11088 = vsel %vm11047, %v11023, %v7543
        %v11089 = vsel %vm11047, %v11024, %v7545
        %v11090 = vsel %vm11047, %v11025, %v7547
        %v11091 = vsel %vm11047, %v11026, %v7549
        %v11092 = vsel %vm11047, %v11027, %v7551
        %v11093 = vsel %vm11047, %v11028, %v7553
        %v11094 = vsel %vm11047, %v11029, %v7555
        %v11095 = vsel %vm11047, %v11030, %v7557
        %v11096 = vsel %vm11047, %v11031, %v7559
        %v11097 = vsel %vm11047, %v11032, %v7561
        %v11098 = vsel %vm11047, %v11033, %v7563
        %v11099 = vsel %vm11047, %v11034, %v7565
        %v11100 = vsel %vm11047, %v11035, %v7567
        %v11101 = vsel %vm11047, %v11036, %v7569
        %v11102 = vsel %vm11047, %v11037, %v7571
        %v11103 = vsel %vm11047, %v11038, %v7573
        %v11104 = vsel %vm11047, %v11039, %v7575
        %v11105 = vsel %vm11047, %v11040, %v7577
        %v11106 = vsel %vm11047, %v11041, %v7579
        %v11107 = vsel %vm11047, %v11042, %v7581
        %v11108 = vsel %vm11047, %v11043, %v7583
        %v11109 = vsel %vm11047, %v11044, %v7585
        %v11110 = vsel %vm11047, %v11045, %v7587
        %v11111 = vsel %vm11047, %v11046, %v7589
        %vm11112 = vcmask 48128
        %v11113 = vsel %vm11112, %v11048, %v7719
        %v11114 = vsel %vm11112, %v11049, %v7721
        %v11115 = vsel %vm11112, %v11050, %v7723
        %v11116 = vsel %vm11112, %v11051, %v7725
        %v11117 = vsel %vm11112, %v11052, %v7727
        %v11118 = vsel %vm11112, %v11053, %v7729
        %v11119 = vsel %vm11112, %v11054, %v7731
        %v11120 = vsel %vm11112, %v11055, %v7733
        %v11121 = vsel %vm11112, %v11056, %v7735
        %v11122 = vsel %vm11112, %v11057, %v7737
        %v11123 = vsel %vm11112, %v11058, %v7739
        %v11124 = vsel %vm11112, %v11059, %v7741
        %v11125 = vsel %vm11112, %v11060, %v7743
        %v11126 = vsel %vm11112, %v11061, %v7745
        %v11127 = vsel %vm11112, %v11062, %v7747
        %v11128 = vsel %vm11112, %v11063, %v7749
        %v11129 = vsel %vm11112, %v11064, %v7751
        %v11130 = vsel %vm11112, %v11065, %v7753
        %v11131 = vsel %vm11112, %v11066, %v7755
        %v11132 = vsel %vm11112, %v11067, %v7757
        %v11133 = vsel %vm11112, %v11068, %v7759
        %v11134 = vsel %vm11112, %v11069, %v7761
        %v11135 = vsel %vm11112, %v11070, %v7763
        %v11136 = vsel %vm11112, %v11071, %v7765
        %v11137 = vsel %vm11112, %v11072, %v7767
        %v11138 = vsel %vm11112, %v11073, %v7769
        %v11139 = vsel %vm11112, %v11074, %v7771
        %v11140 = vsel %vm11112, %v11075, %v7773
        %v11141 = vsel %vm11112, %v11076, %v7775
        %v11142 = vsel %vm11112, %v11077, %v7777
        %v11143 = vsel %vm11112, %v11078, %v7779
        %v11144 = vsel %vm11112, %v11079, %v7781
        %v11145 = vsel %vm11112, %v11080, %v7783
        %v11146 = vsel %vm11112, %v11081, %v7785
        %v11147 = vsel %vm11112, %v11082, %v7787
        %v11148 = vsel %vm11112, %v11083, %v7789
        %v11149 = vsel %vm11112, %v11084, %v7791
        %v11150 = vsel %vm11112, %v11085, %v7793
        %v11151 = vsel %vm11112, %v11086, %v7795
        %v11152 = vsel %vm11112, %v11087, %v7797
        %v11153 = vsel %vm11112, %v11088, %v7799
        %v11154 = vsel %vm11112, %v11089, %v7801
        %v11155 = vsel %vm11112, %v11090, %v7803
        %v11156 = vsel %vm11112, %v11091, %v7805
        %v11157 = vsel %vm11112, %v11092, %v7807
        %v11158 = vsel %vm11112, %v11093, %v7809
        %v11159 = vsel %vm11112, %v11094, %v7811
        %v11160 = vsel %vm11112, %v11095, %v7813
        %v11161 = vsel %vm11112, %v11096, %v7815
        %v11162 = vsel %vm11112, %v11097, %v7817
        %v11163 = vsel %vm11112, %v11098, %v7819
        %v11164 = vsel %vm11112, %v11099, %v7821
        %v11165 = vsel %vm11112, %v11100, %v7823
        %v11166 = vsel %vm11112, %v11101, %v7825
        %v11167 = vsel %vm11112, %v11102, %v7827
        %v11168 = vsel %vm11112, %v11103, %v7829
        %v11169 = vsel %vm11112, %v11104, %v7831
        %v11170 = vsel %vm11112, %v11105, %v7833
        %v11171 = vsel %vm11112, %v11106, %v7835
        %v11172 = vsel %vm11112, %v11107, %v7837
        %v11173 = vsel %vm11112, %v11108, %v7839
        %v11174 = vsel %vm11112, %v11109, %v7841
        %v11175 = vsel %vm11112, %v11110, %v7843
        %v11176 = vsel %vm11112, %v11111, %v7845
        %vm11177 = vcmask 64512
        %v11178 = vsel %vm11177, %v11113, %v7975
        %v11179 = vsel %vm11177, %v11114, %v7977
        %v11180 = vsel %vm11177, %v11115, %v7979
        %v11181 = vsel %vm11177, %v11116, %v7981
        %v11182 = vsel %vm11177, %v11117, %v7983
        %v11183 = vsel %vm11177, %v11118, %v7985
        %v11184 = vsel %vm11177, %v11119, %v7987
        %v11185 = vsel %vm11177, %v11120, %v7989
        %v11186 = vsel %vm11177, %v11121, %v7991
        %v11187 = vsel %vm11177, %v11122, %v7993
        %v11188 = vsel %vm11177, %v11123, %v7995
        %v11189 = vsel %vm11177, %v11124, %v7997
        %v11190 = vsel %vm11177, %v11125, %v7999
        %v11191 = vsel %vm11177, %v11126, %v8001
        %v11192 = vsel %vm11177, %v11127, %v8003
        %v11193 = vsel %vm11177, %v11128, %v8005
        %v11194 = vsel %vm11177, %v11129, %v8007
        %v11195 = vsel %vm11177, %v11130, %v8009
        %v11196 = vsel %vm11177, %v11131, %v8011
        %v11197 = vsel %vm11177, %v11132, %v8013
        %v11198 = vsel %vm11177, %v11133, %v8015
        %v11199 = vsel %vm11177, %v11134, %v8017
        %v11200 = vsel %vm11177, %v11135, %v8019
        %v11201 = vsel %vm11177, %v11136, %v8021
        %v11202 = vsel %vm11177, %v11137, %v8023
        %v11203 = vsel %vm11177, %v11138, %v8025
        %v11204 = vsel %vm11177, %v11139, %v8027
        %v11205 = vsel %vm11177, %v11140, %v8029
        %v11206 = vsel %vm11177, %v11141, %v8031
        %v11207 = vsel %vm11177, %v11142, %v8033
        %v11208 = vsel %vm11177, %v11143, %v8035
        %v11209 = vsel %vm11177, %v11144, %v8037
        %v11210 = vsel %vm11177, %v11145, %v8039
        %v11211 = vsel %vm11177, %v11146, %v8041
        %v11212 = vsel %vm11177, %v11147, %v8043
        %v11213 = vsel %vm11177, %v11148, %v8045
        %v11214 = vsel %vm11177, %v11149, %v8047
        %v11215 = vsel %vm11177, %v11150, %v8049
        %v11216 = vsel %vm11177, %v11151, %v8051
        %v11217 = vsel %vm11177, %v11152, %v8053
        %v11218 = vsel %vm11177, %v11153, %v8055
        %v11219 = vsel %vm11177, %v11154, %v8057
        %v11220 = vsel %vm11177, %v11155, %v8059
        %v11221 = vsel %vm11177, %v11156, %v8061
        %v11222 = vsel %vm11177, %v11157, %v8063
        %v11223 = vsel %vm11177, %v11158, %v8065
        %v11224 = vsel %vm11177, %v11159, %v8067
        %v11225 = vsel %vm11177, %v11160, %v8069
        %v11226 = vsel %vm11177, %v11161, %v8071
        %v11227 = vsel %vm11177, %v11162, %v8073
        %v11228 = vsel %vm11177, %v11163, %v8075
        %v11229 = vsel %vm11177, %v11164, %v8077
        %v11230 = vsel %vm11177, %v11165, %v8079
        %v11231 = vsel %vm11177, %v11166, %v8081
        %v11232 = vsel %vm11177, %v11167, %v8083
        %v11233 = vsel %vm11177, %v11168, %v8085
        %v11234 = vsel %vm11177, %v11169, %v8087
        %v11235 = vsel %vm11177, %v11170, %v8089
        %v11236 = vsel %vm11177, %v11171, %v8091
        %v11237 = vsel %vm11177, %v11172, %v8093
        %v11238 = vsel %vm11177, %v11173, %v8095
        %v11239 = vsel %vm11177, %v11174, %v8097
        %v11240 = vsel %vm11177, %v11175, %v8099
        %v11241 = vsel %vm11177, %v11176, %v8101
        %vm11242 = vcmask 80896
        %v11243 = vsel %vm11242, %v11178, %v8231
        %v11244 = vsel %vm11242, %v11179, %v8233
        %v11245 = vsel %vm11242, %v11180, %v8235
        %v11246 = vsel %vm11242, %v11181, %v8237
        %v11247 = vsel %vm11242, %v11182, %v8239
        %v11248 = vsel %vm11242, %v11183, %v8241
        %v11249 = vsel %vm11242, %v11184, %v8243
        %v11250 = vsel %vm11242, %v11185, %v8245
        %v11251 = vsel %vm11242, %v11186, %v8247
        %v11252 = vsel %vm11242, %v11187, %v8249
        %v11253 = vsel %vm11242, %v11188, %v8251
        %v11254 = vsel %vm11242, %v11189, %v8253
        %v11255 = vsel %vm11242, %v11190, %v8255
        %v11256 = vsel %vm11242, %v11191, %v8257
        %v11257 = vsel %vm11242, %v11192, %v8259
        %v11258 = vsel %vm11242, %v11193, %v8261
        %v11259 = vsel %vm11242, %v11194, %v8263
        %v11260 = vsel %vm11242, %v11195, %v8265
        %v11261 = vsel %vm11242, %v11196, %v8267
        %v11262 = vsel %vm11242, %v11197, %v8269
        %v11263 = vsel %vm11242, %v11198, %v8271
        %v11264 = vsel %vm11242, %v11199, %v8273
        %v11265 = vsel %vm11242, %v11200, %v8275
        %v11266 = vsel %vm11242, %v11201, %v8277
        %v11267 = vsel %vm11242, %v11202, %v8279
        %v11268 = vsel %vm11242, %v11203, %v8281
        %v11269 = vsel %vm11242, %v11204, %v8283
        %v11270 = vsel %vm11242, %v11205, %v8285
        %v11271 = vsel %vm11242, %v11206, %v8287
        %v11272 = vsel %vm11242, %v11207, %v8289
        %v11273 = vsel %vm11242, %v11208, %v8291
        %v11274 = vsel %vm11242, %v11209, %v8293
        %v11275 = vsel %vm11242, %v11210, %v8295
        %v11276 = vsel %vm11242, %v11211, %v8297
        %v11277 = vsel %vm11242, %v11212, %v8299
        %v11278 = vsel %vm11242, %v11213, %v8301
        %v11279 = vsel %vm11242, %v11214, %v8303
        %v11280 = vsel %vm11242, %v11215, %v8305
        %v11281 = vsel %vm11242, %v11216, %v8307
        %v11282 = vsel %vm11242, %v11217, %v8309
        %v11283 = vsel %vm11242, %v11218, %v8311
        %v11284 = vsel %vm11242, %v11219, %v8313
        %v11285 = vsel %vm11242, %v11220, %v8315
        %v11286 = vsel %vm11242, %v11221, %v8317
        %v11287 = vsel %vm11242, %v11222, %v8319
        %v11288 = vsel %vm11242, %v11223, %v8321
        %v11289 = vsel %vm11242, %v11224, %v8323
        %v11290 = vsel %vm11242, %v11225, %v8325
        %v11291 = vsel %vm11242, %v11226, %v8327
        %v11292 = vsel %vm11242, %v11227, %v8329
        %v11293 = vsel %vm11242, %v11228, %v8331
        %v11294 = vsel %vm11242, %v11229, %v8333
        %v11295 = vsel %vm11242, %v11230, %v8335
        %v11296 = vsel %vm11242, %v11231, %v8337
        %v11297 = vsel %vm11242, %v11232, %v8339
        %v11298 = vsel %vm11242, %v11233, %v8341
        %v11299 = vsel %vm11242, %v11234, %v8343
        %v11300 = vsel %vm11242, %v11235, %v8345
        %v11301 = vsel %vm11242, %v11236, %v8347
        %v11302 = vsel %vm11242, %v11237, %v8349
        %v11303 = vsel %vm11242, %v11238, %v8351
        %v11304 = vsel %vm11242, %v11239, %v8353
        %v11305 = vsel %vm11242, %v11240, %v8355
        %v11306 = vsel %vm11242, %v11241, %v8357
        %vm11307 = vcmask 97280
        %v11308 = vsel %vm11307, %v11243, %v8487
        %v11309 = vsel %vm11307, %v11244, %v8489
        %v11310 = vsel %vm11307, %v11245, %v8491
        %v11311 = vsel %vm11307, %v11246, %v8493
        %v11312 = vsel %vm11307, %v11247, %v8495
        %v11313 = vsel %vm11307, %v11248, %v8497
        %v11314 = vsel %vm11307, %v11249, %v8499
        %v11315 = vsel %vm11307, %v11250, %v8501
        %v11316 = vsel %vm11307, %v11251, %v8503
        %v11317 = vsel %vm11307, %v11252, %v8505
        %v11318 = vsel %vm11307, %v11253, %v8507
        %v11319 = vsel %vm11307, %v11254, %v8509
        %v11320 = vsel %vm11307, %v11255, %v8511
        %v11321 = vsel %vm11307, %v11256, %v8513
        %v11322 = vsel %vm11307, %v11257, %v8515
        %v11323 = vsel %vm11307, %v11258, %v8517
        %v11324 = vsel %vm11307, %v11259, %v8519
        %v11325 = vsel %vm11307, %v11260, %v8521
        %v11326 = vsel %vm11307, %v11261, %v8523
        %v11327 = vsel %vm11307, %v11262, %v8525
        %v11328 = vsel %vm11307, %v11263, %v8527
        %v11329 = vsel %vm11307, %v11264, %v8529
        %v11330 = vsel %vm11307, %v11265, %v8531
        %v11331 = vsel %vm11307, %v11266, %v8533
        %v11332 = vsel %vm11307, %v11267, %v8535
        %v11333 = vsel %vm11307, %v11268, %v8537
        %v11334 = vsel %vm11307, %v11269, %v8539
        %v11335 = vsel %vm11307, %v11270, %v8541
        %v11336 = vsel %vm11307, %v11271, %v8543
        %v11337 = vsel %vm11307, %v11272, %v8545
        %v11338 = vsel %vm11307, %v11273, %v8547
        %v11339 = vsel %vm11307, %v11274, %v8549
        %v11340 = vsel %vm11307, %v11275, %v8551
        %v11341 = vsel %vm11307, %v11276, %v8553
        %v11342 = vsel %vm11307, %v11277, %v8555
        %v11343 = vsel %vm11307, %v11278, %v8557
        %v11344 = vsel %vm11307, %v11279, %v8559
        %v11345 = vsel %vm11307, %v11280, %v8561
        %v11346 = vsel %vm11307, %v11281, %v8563
        %v11347 = vsel %vm11307, %v11282, %v8565
        %v11348 = vsel %vm11307, %v11283, %v8567
        %v11349 = vsel %vm11307, %v11284, %v8569
        %v11350 = vsel %vm11307, %v11285, %v8571
        %v11351 = vsel %vm11307, %v11286, %v8573
        %v11352 = vsel %vm11307, %v11287, %v8575
        %v11353 = vsel %vm11307, %v11288, %v8577
        %v11354 = vsel %vm11307, %v11289, %v8579
        %v11355 = vsel %vm11307, %v11290, %v8581
        %v11356 = vsel %vm11307, %v11291, %v8583
        %v11357 = vsel %vm11307, %v11292, %v8585
        %v11358 = vsel %vm11307, %v11293, %v8587
        %v11359 = vsel %vm11307, %v11294, %v8589
        %v11360 = vsel %vm11307, %v11295, %v8591
        %v11361 = vsel %vm11307, %v11296, %v8593
        %v11362 = vsel %vm11307, %v11297, %v8595
        %v11363 = vsel %vm11307, %v11298, %v8597
        %v11364 = vsel %vm11307, %v11299, %v8599
        %v11365 = vsel %vm11307, %v11300, %v8601
        %v11366 = vsel %vm11307, %v11301, %v8603
        %v11367 = vsel %vm11307, %v11302, %v8605
        %v11368 = vsel %vm11307, %v11303, %v8607
        %v11369 = vsel %vm11307, %v11304, %v8609
        %v11370 = vsel %vm11307, %v11305, %v8611
        %v11371 = vsel %vm11307, %v11306, %v8613
        %vm11372 = vcmask 113664
        %v11373 = vsel %vm11372, %v11308, %v8743
        %v11374 = vsel %vm11372, %v11309, %v8745
        %v11375 = vsel %vm11372, %v11310, %v8747
        %v11376 = vsel %vm11372, %v11311, %v8749
        %v11377 = vsel %vm11372, %v11312, %v8751
        %v11378 = vsel %vm11372, %v11313, %v8753
        %v11379 = vsel %vm11372, %v11314, %v8755
        %v11380 = vsel %vm11372, %v11315, %v8757
        %v11381 = vsel %vm11372, %v11316, %v8759
        %v11382 = vsel %vm11372, %v11317, %v8761
        %v11383 = vsel %vm11372, %v11318, %v8763
        %v11384 = vsel %vm11372, %v11319, %v8765
        %v11385 = vsel %vm11372, %v11320, %v8767
        %v11386 = vsel %vm11372, %v11321, %v8769
        %v11387 = vsel %vm11372, %v11322, %v8771
        %v11388 = vsel %vm11372, %v11323, %v8773
        %v11389 = vsel %vm11372, %v11324, %v8775
        %v11390 = vsel %vm11372, %v11325, %v8777
        %v11391 = vsel %vm11372, %v11326, %v8779
        %v11392 = vsel %vm11372, %v11327, %v8781
        %v11393 = vsel %vm11372, %v11328, %v8783
        %v11394 = vsel %vm11372, %v11329, %v8785
        %v11395 = vsel %vm11372, %v11330, %v8787
        %v11396 = vsel %vm11372, %v11331, %v8789
        %v11397 = vsel %vm11372, %v11332, %v8791
        %v11398 = vsel %vm11372, %v11333, %v8793
        %v11399 = vsel %vm11372, %v11334, %v8795
        %v11400 = vsel %vm11372, %v11335, %v8797
        %v11401 = vsel %vm11372, %v11336, %v8799
        %v11402 = vsel %vm11372, %v11337, %v8801
        %v11403 = vsel %vm11372, %v11338, %v8803
        %v11404 = vsel %vm11372, %v11339, %v8805
        %v11405 = vsel %vm11372, %v11340, %v8807
        %v11406 = vsel %vm11372, %v11341, %v8809
        %v11407 = vsel %vm11372, %v11342, %v8811
        %v11408 = vsel %vm11372, %v11343, %v8813
        %v11409 = vsel %vm11372, %v11344, %v8815
        %v11410 = vsel %vm11372, %v11345, %v8817
        %v11411 = vsel %vm11372, %v11346, %v8819
        %v11412 = vsel %vm11372, %v11347, %v8821
        %v11413 = vsel %vm11372, %v11348, %v8823
        %v11414 = vsel %vm11372, %v11349, %v8825
        %v11415 = vsel %vm11372, %v11350, %v8827
        %v11416 = vsel %vm11372, %v11351, %v8829
        %v11417 = vsel %vm11372, %v11352, %v8831
        %v11418 = vsel %vm11372, %v11353, %v8833
        %v11419 = vsel %vm11372, %v11354, %v8835
        %v11420 = vsel %vm11372, %v11355, %v8837
        %v11421 = vsel %vm11372, %v11356, %v8839
        %v11422 = vsel %vm11372, %v11357, %v8841
        %v11423 = vsel %vm11372, %v11358, %v8843
        %v11424 = vsel %vm11372, %v11359, %v8845
        %v11425 = vsel %vm11372, %v11360, %v8847
        %v11426 = vsel %vm11372, %v11361, %v8849
        %v11427 = vsel %vm11372, %v11362, %v8851
        %v11428 = vsel %vm11372, %v11363, %v8853
        %v11429 = vsel %vm11372, %v11364, %v8855
        %v11430 = vsel %vm11372, %v11365, %v8857
        %v11431 = vsel %vm11372, %v11366, %v8859
        %v11432 = vsel %vm11372, %v11367, %v8861
        %v11433 = vsel %vm11372, %v11368, %v8863
        %v11434 = vsel %vm11372, %v11369, %v8865
        %v11435 = vsel %vm11372, %v11370, %v8867
        %v11436 = vsel %vm11372, %v11371, %v8869
        %vm11437 = vcmask 130048
        %v11438 = vsel %vm11437, %v11373, %v8999
        %v11439 = vsel %vm11437, %v11374, %v9001
        %v11440 = vsel %vm11437, %v11375, %v9003
        %v11441 = vsel %vm11437, %v11376, %v9005
        %v11442 = vsel %vm11437, %v11377, %v9007
        %v11443 = vsel %vm11437, %v11378, %v9009
        %v11444 = vsel %vm11437, %v11379, %v9011
        %v11445 = vsel %vm11437, %v11380, %v9013
        %v11446 = vsel %vm11437, %v11381, %v9015
        %v11447 = vsel %vm11437, %v11382, %v9017
        %v11448 = vsel %vm11437, %v11383, %v9019
        %v11449 = vsel %vm11437, %v11384, %v9021
        %v11450 = vsel %vm11437, %v11385, %v9023
        %v11451 = vsel %vm11437, %v11386, %v9025
        %v11452 = vsel %vm11437, %v11387, %v9027
        %v11453 = vsel %vm11437, %v11388, %v9029
        %v11454 = vsel %vm11437, %v11389, %v9031
        %v11455 = vsel %vm11437, %v11390, %v9033
        %v11456 = vsel %vm11437, %v11391, %v9035
        %v11457 = vsel %vm11437, %v11392, %v9037
        %v11458 = vsel %vm11437, %v11393, %v9039
        %v11459 = vsel %vm11437, %v11394, %v9041
        %v11460 = vsel %vm11437, %v11395, %v9043
        %v11461 = vsel %vm11437, %v11396, %v9045
        %v11462 = vsel %vm11437, %v11397, %v9047
        %v11463 = vsel %vm11437, %v11398, %v9049
        %v11464 = vsel %vm11437, %v11399, %v9051
        %v11465 = vsel %vm11437, %v11400, %v9053
        %v11466 = vsel %vm11437, %v11401, %v9055
        %v11467 = vsel %vm11437, %v11402, %v9057
        %v11468 = vsel %vm11437, %v11403, %v9059
        %v11469 = vsel %vm11437, %v11404, %v9061
        %v11470 = vsel %vm11437, %v11405, %v9063
        %v11471 = vsel %vm11437, %v11406, %v9065
        %v11472 = vsel %vm11437, %v11407, %v9067
        %v11473 = vsel %vm11437, %v11408, %v9069
        %v11474 = vsel %vm11437, %v11409, %v9071
        %v11475 = vsel %vm11437, %v11410, %v9073
        %v11476 = vsel %vm11437, %v11411, %v9075
        %v11477 = vsel %vm11437, %v11412, %v9077
        %v11478 = vsel %vm11437, %v11413, %v9079
        %v11479 = vsel %vm11437, %v11414, %v9081
        %v11480 = vsel %vm11437, %v11415, %v9083
        %v11481 = vsel %vm11437, %v11416, %v9085
        %v11482 = vsel %vm11437, %v11417, %v9087
        %v11483 = vsel %vm11437, %v11418, %v9089
        %v11484 = vsel %vm11437, %v11419, %v9091
        %v11485 = vsel %vm11437, %v11420, %v9093
        %v11486 = vsel %vm11437, %v11421, %v9095
        %v11487 = vsel %vm11437, %v11422, %v9097
        %v11488 = vsel %vm11437, %v11423, %v9099
        %v11489 = vsel %vm11437, %v11424, %v9101
        %v11490 = vsel %vm11437, %v11425, %v9103
        %v11491 = vsel %vm11437, %v11426, %v9105
        %v11492 = vsel %vm11437, %v11427, %v9107
        %v11493 = vsel %vm11437, %v11428, %v9109
        %v11494 = vsel %vm11437, %v11429, %v9111
        %v11495 = vsel %vm11437, %v11430, %v9113
        %v11496 = vsel %vm11437, %v11431, %v9115
        %v11497 = vsel %vm11437, %v11432, %v9117
        %v11498 = vsel %vm11437, %v11433, %v9119
        %v11499 = vsel %vm11437, %v11434, %v9121
        %v11500 = vsel %vm11437, %v11435, %v9123
        %v11501 = vsel %vm11437, %v11436, %v9125
        %vm11502 = vcmask 146432
        %v11503 = vsel %vm11502, %v11438, %v9255
        %v11504 = vsel %vm11502, %v11439, %v9257
        %v11505 = vsel %vm11502, %v11440, %v9259
        %v11506 = vsel %vm11502, %v11441, %v9261
        %v11507 = vsel %vm11502, %v11442, %v9263
        %v11508 = vsel %vm11502, %v11443, %v9265
        %v11509 = vsel %vm11502, %v11444, %v9267
        %v11510 = vsel %vm11502, %v11445, %v9269
        %v11511 = vsel %vm11502, %v11446, %v9271
        %v11512 = vsel %vm11502, %v11447, %v9273
        %v11513 = vsel %vm11502, %v11448, %v9275
        %v11514 = vsel %vm11502, %v11449, %v9277
        %v11515 = vsel %vm11502, %v11450, %v9279
        %v11516 = vsel %vm11502, %v11451, %v9281
        %v11517 = vsel %vm11502, %v11452, %v9283
        %v11518 = vsel %vm11502, %v11453, %v9285
        %v11519 = vsel %vm11502, %v11454, %v9287
        %v11520 = vsel %vm11502, %v11455, %v9289
        %v11521 = vsel %vm11502, %v11456, %v9291
        %v11522 = vsel %vm11502, %v11457, %v9293
        %v11523 = vsel %vm11502, %v11458, %v9295
        %v11524 = vsel %vm11502, %v11459, %v9297
        %v11525 = vsel %vm11502, %v11460, %v9299
        %v11526 = vsel %vm11502, %v11461, %v9301
        %v11527 = vsel %vm11502, %v11462, %v9303
        %v11528 = vsel %vm11502, %v11463, %v9305
        %v11529 = vsel %vm11502, %v11464, %v9307
        %v11530 = vsel %vm11502, %v11465, %v9309
        %v11531 = vsel %vm11502, %v11466, %v9311
        %v11532 = vsel %vm11502, %v11467, %v9313
        %v11533 = vsel %vm11502, %v11468, %v9315
        %v11534 = vsel %vm11502, %v11469, %v9317
        %v11535 = vsel %vm11502, %v11470, %v9319
        %v11536 = vsel %vm11502, %v11471, %v9321
        %v11537 = vsel %vm11502, %v11472, %v9323
        %v11538 = vsel %vm11502, %v11473, %v9325
        %v11539 = vsel %vm11502, %v11474, %v9327
        %v11540 = vsel %vm11502, %v11475, %v9329
        %v11541 = vsel %vm11502, %v11476, %v9331
        %v11542 = vsel %vm11502, %v11477, %v9333
        %v11543 = vsel %vm11502, %v11478, %v9335
        %v11544 = vsel %vm11502, %v11479, %v9337
        %v11545 = vsel %vm11502, %v11480, %v9339
        %v11546 = vsel %vm11502, %v11481, %v9341
        %v11547 = vsel %vm11502, %v11482, %v9343
        %v11548 = vsel %vm11502, %v11483, %v9345
        %v11549 = vsel %vm11502, %v11484, %v9347
        %v11550 = vsel %vm11502, %v11485, %v9349
        %v11551 = vsel %vm11502, %v11486, %v9351
        %v11552 = vsel %vm11502, %v11487, %v9353
        %v11553 = vsel %vm11502, %v11488, %v9355
        %v11554 = vsel %vm11502, %v11489, %v9357
        %v11555 = vsel %vm11502, %v11490, %v9359
        %v11556 = vsel %vm11502, %v11491, %v9361
        %v11557 = vsel %vm11502, %v11492, %v9363
        %v11558 = vsel %vm11502, %v11493, %v9365
        %v11559 = vsel %vm11502, %v11494, %v9367
        %v11560 = vsel %vm11502, %v11495, %v9369
        %v11561 = vsel %vm11502, %v11496, %v9371
        %v11562 = vsel %vm11502, %v11497, %v9373
        %v11563 = vsel %vm11502, %v11498, %v9375
        %v11564 = vsel %vm11502, %v11499, %v9377
        %v11565 = vsel %vm11502, %v11500, %v9379
        %v11566 = vsel %vm11502, %v11501, %v9381
        %vm11567 = vcmask 162816
        %v11568 = vsel %vm11567, %v11503, %v9511
        %v11569 = vsel %vm11567, %v11504, %v9513
        %v11570 = vsel %vm11567, %v11505, %v9515
        %v11571 = vsel %vm11567, %v11506, %v9517
        %v11572 = vsel %vm11567, %v11507, %v9519
        %v11573 = vsel %vm11567, %v11508, %v9521
        %v11574 = vsel %vm11567, %v11509, %v9523
        %v11575 = vsel %vm11567, %v11510, %v9525
        %v11576 = vsel %vm11567, %v11511, %v9527
        %v11577 = vsel %vm11567, %v11512, %v9529
        %v11578 = vsel %vm11567, %v11513, %v9531
        %v11579 = vsel %vm11567, %v11514, %v9533
        %v11580 = vsel %vm11567, %v11515, %v9535
        %v11581 = vsel %vm11567, %v11516, %v9537
        %v11582 = vsel %vm11567, %v11517, %v9539
        %v11583 = vsel %vm11567, %v11518, %v9541
        %v11584 = vsel %vm11567, %v11519, %v9543
        %v11585 = vsel %vm11567, %v11520, %v9545
        %v11586 = vsel %vm11567, %v11521, %v9547
        %v11587 = vsel %vm11567, %v11522, %v9549
        %v11588 = vsel %vm11567, %v11523, %v9551
        %v11589 = vsel %vm11567, %v11524, %v9553
        %v11590 = vsel %vm11567, %v11525, %v9555
        %v11591 = vsel %vm11567, %v11526, %v9557
        %v11592 = vsel %vm11567, %v11527, %v9559
        %v11593 = vsel %vm11567, %v11528, %v9561
        %v11594 = vsel %vm11567, %v11529, %v9563
        %v11595 = vsel %vm11567, %v11530, %v9565
        %v11596 = vsel %vm11567, %v11531, %v9567
        %v11597 = vsel %vm11567, %v11532, %v9569
        %v11598 = vsel %vm11567, %v11533, %v9571
        %v11599 = vsel %vm11567, %v11534, %v9573
        %v11600 = vsel %vm11567, %v11535, %v9575
        %v11601 = vsel %vm11567, %v11536, %v9577
        %v11602 = vsel %vm11567, %v11537, %v9579
        %v11603 = vsel %vm11567, %v11538, %v9581
        %v11604 = vsel %vm11567, %v11539, %v9583
        %v11605 = vsel %vm11567, %v11540, %v9585
        %v11606 = vsel %vm11567, %v11541, %v9587
        %v11607 = vsel %vm11567, %v11542, %v9589
        %v11608 = vsel %vm11567, %v11543, %v9591
        %v11609 = vsel %vm11567, %v11544, %v9593
        %v11610 = vsel %vm11567, %v11545, %v9595
        %v11611 = vsel %vm11567, %v11546, %v9597
        %v11612 = vsel %vm11567, %v11547, %v9599
        %v11613 = vsel %vm11567, %v11548, %v9601
        %v11614 = vsel %vm11567, %v11549, %v9603
        %v11615 = vsel %vm11567, %v11550, %v9605
        %v11616 = vsel %vm11567, %v11551, %v9607
        %v11617 = vsel %vm11567, %v11552, %v9609
        %v11618 = vsel %vm11567, %v11553, %v9611
        %v11619 = vsel %vm11567, %v11554, %v9613
        %v11620 = vsel %vm11567, %v11555, %v9615
        %v11621 = vsel %vm11567, %v11556, %v9617
        %v11622 = vsel %vm11567, %v11557, %v9619
        %v11623 = vsel %vm11567, %v11558, %v9621
        %v11624 = vsel %vm11567, %v11559, %v9623
        %v11625 = vsel %vm11567, %v11560, %v9625
        %v11626 = vsel %vm11567, %v11561, %v9627
        %v11627 = vsel %vm11567, %v11562, %v9629
        %v11628 = vsel %vm11567, %v11563, %v9631
        %v11629 = vsel %vm11567, %v11564, %v9633
        %v11630 = vsel %vm11567, %v11565, %v9635
        %v11631 = vsel %vm11567, %v11566, %v9637
        %vm11632 = vcmask 179200
        %v11633 = vsel %vm11632, %v11568, %v9767
        %v11634 = vsel %vm11632, %v11569, %v9769
        %v11635 = vsel %vm11632, %v11570, %v9771
        %v11636 = vsel %vm11632, %v11571, %v9773
        %v11637 = vsel %vm11632, %v11572, %v9775
        %v11638 = vsel %vm11632, %v11573, %v9777
        %v11639 = vsel %vm11632, %v11574, %v9779
        %v11640 = vsel %vm11632, %v11575, %v9781
        %v11641 = vsel %vm11632, %v11576, %v9783
        %v11642 = vsel %vm11632, %v11577, %v9785
        %v11643 = vsel %vm11632, %v11578, %v9787
        %v11644 = vsel %vm11632, %v11579, %v9789
        %v11645 = vsel %vm11632, %v11580, %v9791
        %v11646 = vsel %vm11632, %v11581, %v9793
        %v11647 = vsel %vm11632, %v11582, %v9795
        %v11648 = vsel %vm11632, %v11583, %v9797
        %v11649 = vsel %vm11632, %v11584, %v9799
        %v11650 = vsel %vm11632, %v11585, %v9801
        %v11651 = vsel %vm11632, %v11586, %v9803
        %v11652 = vsel %vm11632, %v11587, %v9805
        %v11653 = vsel %vm11632, %v11588, %v9807
        %v11654 = vsel %vm11632, %v11589, %v9809
        %v11655 = vsel %vm11632, %v11590, %v9811
        %v11656 = vsel %vm11632, %v11591, %v9813
        %v11657 = vsel %vm11632, %v11592, %v9815
        %v11658 = vsel %vm11632, %v11593, %v9817
        %v11659 = vsel %vm11632, %v11594, %v9819
        %v11660 = vsel %vm11632, %v11595, %v9821
        %v11661 = vsel %vm11632, %v11596, %v9823
        %v11662 = vsel %vm11632, %v11597, %v9825
        %v11663 = vsel %vm11632, %v11598, %v9827
        %v11664 = vsel %vm11632, %v11599, %v9829
        %v11665 = vsel %vm11632, %v11600, %v9831
        %v11666 = vsel %vm11632, %v11601, %v9833
        %v11667 = vsel %vm11632, %v11602, %v9835
        %v11668 = vsel %vm11632, %v11603, %v9837
        %v11669 = vsel %vm11632, %v11604, %v9839
        %v11670 = vsel %vm11632, %v11605, %v9841
        %v11671 = vsel %vm11632, %v11606, %v9843
        %v11672 = vsel %vm11632, %v11607, %v9845
        %v11673 = vsel %vm11632, %v11608, %v9847
        %v11674 = vsel %vm11632, %v11609, %v9849
        %v11675 = vsel %vm11632, %v11610, %v9851
        %v11676 = vsel %vm11632, %v11611, %v9853
        %v11677 = vsel %vm11632, %v11612, %v9855
        %v11678 = vsel %vm11632, %v11613, %v9857
        %v11679 = vsel %vm11632, %v11614, %v9859
        %v11680 = vsel %vm11632, %v11615, %v9861
        %v11681 = vsel %vm11632, %v11616, %v9863
        %v11682 = vsel %vm11632, %v11617, %v9865
        %v11683 = vsel %vm11632, %v11618, %v9867
        %v11684 = vsel %vm11632, %v11619, %v9869
        %v11685 = vsel %vm11632, %v11620, %v9871
        %v11686 = vsel %vm11632, %v11621, %v9873
        %v11687 = vsel %vm11632, %v11622, %v9875
        %v11688 = vsel %vm11632, %v11623, %v9877
        %v11689 = vsel %vm11632, %v11624, %v9879
        %v11690 = vsel %vm11632, %v11625, %v9881
        %v11691 = vsel %vm11632, %v11626, %v9883
        %v11692 = vsel %vm11632, %v11627, %v9885
        %v11693 = vsel %vm11632, %v11628, %v9887
        %v11694 = vsel %vm11632, %v11629, %v9889
        %v11695 = vsel %vm11632, %v11630, %v9891
        %v11696 = vsel %vm11632, %v11631, %v9893
        %vm11697 = vcmask 195584
        %v11698 = vsel %vm11697, %v11633, %v10023
        %v11699 = vsel %vm11697, %v11634, %v10025
        %v11700 = vsel %vm11697, %v11635, %v10027
        %v11701 = vsel %vm11697, %v11636, %v10029
        %v11702 = vsel %vm11697, %v11637, %v10031
        %v11703 = vsel %vm11697, %v11638, %v10033
        %v11704 = vsel %vm11697, %v11639, %v10035
        %v11705 = vsel %vm11697, %v11640, %v10037
        %v11706 = vsel %vm11697, %v11641, %v10039
        %v11707 = vsel %vm11697, %v11642, %v10041
        %v11708 = vsel %vm11697, %v11643, %v10043
        %v11709 = vsel %vm11697, %v11644, %v10045
        %v11710 = vsel %vm11697, %v11645, %v10047
        %v11711 = vsel %vm11697, %v11646, %v10049
        %v11712 = vsel %vm11697, %v11647, %v10051
        %v11713 = vsel %vm11697, %v11648, %v10053
        %v11714 = vsel %vm11697, %v11649, %v10055
        %v11715 = vsel %vm11697, %v11650, %v10057
        %v11716 = vsel %vm11697, %v11651, %v10059
        %v11717 = vsel %vm11697, %v11652, %v10061
        %v11718 = vsel %vm11697, %v11653, %v10063
        %v11719 = vsel %vm11697, %v11654, %v10065
        %v11720 = vsel %vm11697, %v11655, %v10067
        %v11721 = vsel %vm11697, %v11656, %v10069
        %v11722 = vsel %vm11697, %v11657, %v10071
        %v11723 = vsel %vm11697, %v11658, %v10073
        %v11724 = vsel %vm11697, %v11659, %v10075
        %v11725 = vsel %vm11697, %v11660, %v10077
        %v11726 = vsel %vm11697, %v11661, %v10079
        %v11727 = vsel %vm11697, %v11662, %v10081
        %v11728 = vsel %vm11697, %v11663, %v10083
        %v11729 = vsel %vm11697, %v11664, %v10085
        %v11730 = vsel %vm11697, %v11665, %v10087
        %v11731 = vsel %vm11697, %v11666, %v10089
        %v11732 = vsel %vm11697, %v11667, %v10091
        %v11733 = vsel %vm11697, %v11668, %v10093
        %v11734 = vsel %vm11697, %v11669, %v10095
        %v11735 = vsel %vm11697, %v11670, %v10097
        %v11736 = vsel %vm11697, %v11671, %v10099
        %v11737 = vsel %vm11697, %v11672, %v10101
        %v11738 = vsel %vm11697, %v11673, %v10103
        %v11739 = vsel %vm11697, %v11674, %v10105
        %v11740 = vsel %vm11697, %v11675, %v10107
        %v11741 = vsel %vm11697, %v11676, %v10109
        %v11742 = vsel %vm11697, %v11677, %v10111
        %v11743 = vsel %vm11697, %v11678, %v10113
        %v11744 = vsel %vm11697, %v11679, %v10115
        %v11745 = vsel %vm11697, %v11680, %v10117
        %v11746 = vsel %vm11697, %v11681, %v10119
        %v11747 = vsel %vm11697, %v11682, %v10121
        %v11748 = vsel %vm11697, %v11683, %v10123
        %v11749 = vsel %vm11697, %v11684, %v10125
        %v11750 = vsel %vm11697, %v11685, %v10127
        %v11751 = vsel %vm11697, %v11686, %v10129
        %v11752 = vsel %vm11697, %v11687, %v10131
        %v11753 = vsel %vm11697, %v11688, %v10133
        %v11754 = vsel %vm11697, %v11689, %v10135
        %v11755 = vsel %vm11697, %v11690, %v10137
        %v11756 = vsel %vm11697, %v11691, %v10139
        %v11757 = vsel %vm11697, %v11692, %v10141
        %v11758 = vsel %vm11697, %v11693, %v10143
        %v11759 = vsel %vm11697, %v11694, %v10145
        %v11760 = vsel %vm11697, %v11695, %v10147
        %v11761 = vsel %vm11697, %v11696, %v10149
        %vm11762 = vcmask 211968
        %v11763 = vsel %vm11762, %v11698, %v10279
        %v11764 = vsel %vm11762, %v11699, %v10281
        %v11765 = vsel %vm11762, %v11700, %v10283
        %v11766 = vsel %vm11762, %v11701, %v10285
        %v11767 = vsel %vm11762, %v11702, %v10287
        %v11768 = vsel %vm11762, %v11703, %v10289
        %v11769 = vsel %vm11762, %v11704, %v10291
        %v11770 = vsel %vm11762, %v11705, %v10293
        %v11771 = vsel %vm11762, %v11706, %v10295
        %v11772 = vsel %vm11762, %v11707, %v10297
        %v11773 = vsel %vm11762, %v11708, %v10299
        %v11774 = vsel %vm11762, %v11709, %v10301
        %v11775 = vsel %vm11762, %v11710, %v10303
        %v11776 = vsel %vm11762, %v11711, %v10305
        %v11777 = vsel %vm11762, %v11712, %v10307
        %v11778 = vsel %vm11762, %v11713, %v10309
        %v11779 = vsel %vm11762, %v11714, %v10311
        %v11780 = vsel %vm11762, %v11715, %v10313
        %v11781 = vsel %vm11762, %v11716, %v10315
        %v11782 = vsel %vm11762, %v11717, %v10317
        %v11783 = vsel %vm11762, %v11718, %v10319
        %v11784 = vsel %vm11762, %v11719, %v10321
        %v11785 = vsel %vm11762, %v11720, %v10323
        %v11786 = vsel %vm11762, %v11721, %v10325
        %v11787 = vsel %vm11762, %v11722, %v10327
        %v11788 = vsel %vm11762, %v11723, %v10329
        %v11789 = vsel %vm11762, %v11724, %v10331
        %v11790 = vsel %vm11762, %v11725, %v10333
        %v11791 = vsel %vm11762, %v11726, %v10335
        %v11792 = vsel %vm11762, %v11727, %v10337
        %v11793 = vsel %vm11762, %v11728, %v10339
        %v11794 = vsel %vm11762, %v11729, %v10341
        %v11795 = vsel %vm11762, %v11730, %v10343
        %v11796 = vsel %vm11762, %v11731, %v10345
        %v11797 = vsel %vm11762, %v11732, %v10347
        %v11798 = vsel %vm11762, %v11733, %v10349
        %v11799 = vsel %vm11762, %v11734, %v10351
        %v11800 = vsel %vm11762, %v11735, %v10353
        %v11801 = vsel %vm11762, %v11736, %v10355
        %v11802 = vsel %vm11762, %v11737, %v10357
        %v11803 = vsel %vm11762, %v11738, %v10359
        %v11804 = vsel %vm11762, %v11739, %v10361
        %v11805 = vsel %vm11762, %v11740, %v10363
        %v11806 = vsel %vm11762, %v11741, %v10365
        %v11807 = vsel %vm11762, %v11742, %v10367
        %v11808 = vsel %vm11762, %v11743, %v10369
        %v11809 = vsel %vm11762, %v11744, %v10371
        %v11810 = vsel %vm11762, %v11745, %v10373
        %v11811 = vsel %vm11762, %v11746, %v10375
        %v11812 = vsel %vm11762, %v11747, %v10377
        %v11813 = vsel %vm11762, %v11748, %v10379
        %v11814 = vsel %vm11762, %v11749, %v10381
        %v11815 = vsel %vm11762, %v11750, %v10383
        %v11816 = vsel %vm11762, %v11751, %v10385
        %v11817 = vsel %vm11762, %v11752, %v10387
        %v11818 = vsel %vm11762, %v11753, %v10389
        %v11819 = vsel %vm11762, %v11754, %v10391
        %v11820 = vsel %vm11762, %v11755, %v10393
        %v11821 = vsel %vm11762, %v11756, %v10395
        %v11822 = vsel %vm11762, %v11757, %v10397
        %v11823 = vsel %vm11762, %v11758, %v10399
        %v11824 = vsel %vm11762, %v11759, %v10401
        %v11825 = vsel %vm11762, %v11760, %v10403
        %v11826 = vsel %vm11762, %v11761, %v10405
        %vm11827 = vcmask 228352
        %v11828 = vsel %vm11827, %v11763, %v10535
        %v11829 = vsel %vm11827, %v11764, %v10537
        %v11830 = vsel %vm11827, %v11765, %v10539
        %v11831 = vsel %vm11827, %v11766, %v10541
        %v11832 = vsel %vm11827, %v11767, %v10543
        %v11833 = vsel %vm11827, %v11768, %v10545
        %v11834 = vsel %vm11827, %v11769, %v10547
        %v11835 = vsel %vm11827, %v11770, %v10549
        %v11836 = vsel %vm11827, %v11771, %v10551
        %v11837 = vsel %vm11827, %v11772, %v10553
        %v11838 = vsel %vm11827, %v11773, %v10555
        %v11839 = vsel %vm11827, %v11774, %v10557
        %v11840 = vsel %vm11827, %v11775, %v10559
        %v11841 = vsel %vm11827, %v11776, %v10561
        %v11842 = vsel %vm11827, %v11777, %v10563
        %v11843 = vsel %vm11827, %v11778, %v10565
        %v11844 = vsel %vm11827, %v11779, %v10567
        %v11845 = vsel %vm11827, %v11780, %v10569
        %v11846 = vsel %vm11827, %v11781, %v10571
        %v11847 = vsel %vm11827, %v11782, %v10573
        %v11848 = vsel %vm11827, %v11783, %v10575
        %v11849 = vsel %vm11827, %v11784, %v10577
        %v11850 = vsel %vm11827, %v11785, %v10579
        %v11851 = vsel %vm11827, %v11786, %v10581
        %v11852 = vsel %vm11827, %v11787, %v10583
        %v11853 = vsel %vm11827, %v11788, %v10585
        %v11854 = vsel %vm11827, %v11789, %v10587
        %v11855 = vsel %vm11827, %v11790, %v10589
        %v11856 = vsel %vm11827, %v11791, %v10591
        %v11857 = vsel %vm11827, %v11792, %v10593
        %v11858 = vsel %vm11827, %v11793, %v10595
        %v11859 = vsel %vm11827, %v11794, %v10597
        %v11860 = vsel %vm11827, %v11795, %v10599
        %v11861 = vsel %vm11827, %v11796, %v10601
        %v11862 = vsel %vm11827, %v11797, %v10603
        %v11863 = vsel %vm11827, %v11798, %v10605
        %v11864 = vsel %vm11827, %v11799, %v10607
        %v11865 = vsel %vm11827, %v11800, %v10609
        %v11866 = vsel %vm11827, %v11801, %v10611
        %v11867 = vsel %vm11827, %v11802, %v10613
        %v11868 = vsel %vm11827, %v11803, %v10615
        %v11869 = vsel %vm11827, %v11804, %v10617
        %v11870 = vsel %vm11827, %v11805, %v10619
        %v11871 = vsel %vm11827, %v11806, %v10621
        %v11872 = vsel %vm11827, %v11807, %v10623
        %v11873 = vsel %vm11827, %v11808, %v10625
        %v11874 = vsel %vm11827, %v11809, %v10627
        %v11875 = vsel %vm11827, %v11810, %v10629
        %v11876 = vsel %vm11827, %v11811, %v10631
        %v11877 = vsel %vm11827, %v11812, %v10633
        %v11878 = vsel %vm11827, %v11813, %v10635
        %v11879 = vsel %vm11827, %v11814, %v10637
        %v11880 = vsel %vm11827, %v11815, %v10639
        %v11881 = vsel %vm11827, %v11816, %v10641
        %v11882 = vsel %vm11827, %v11817, %v10643
        %v11883 = vsel %vm11827, %v11818, %v10645
        %v11884 = vsel %vm11827, %v11819, %v10647
        %v11885 = vsel %vm11827, %v11820, %v10649
        %v11886 = vsel %vm11827, %v11821, %v10651
        %v11887 = vsel %vm11827, %v11822, %v10653
        %v11888 = vsel %vm11827, %v11823, %v10655
        %v11889 = vsel %vm11827, %v11824, %v10657
        %v11890 = vsel %vm11827, %v11825, %v10659
        %v11891 = vsel %vm11827, %v11826, %v10661
        %vm11892 = vcmask 244736
        %v11893 = vsel %vm11892, %v11828, %v10791
        %v11894 = vsel %vm11892, %v11829, %v10793
        %v11895 = vsel %vm11892, %v11830, %v10795
        %v11896 = vsel %vm11892, %v11831, %v10797
        %v11897 = vsel %vm11892, %v11832, %v10799
        %v11898 = vsel %vm11892, %v11833, %v10801
        %v11899 = vsel %vm11892, %v11834, %v10803
        %v11900 = vsel %vm11892, %v11835, %v10805
        %v11901 = vsel %vm11892, %v11836, %v10807
        %v11902 = vsel %vm11892, %v11837, %v10809
        %v11903 = vsel %vm11892, %v11838, %v10811
        %v11904 = vsel %vm11892, %v11839, %v10813
        %v11905 = vsel %vm11892, %v11840, %v10815
        %v11906 = vsel %vm11892, %v11841, %v10817
        %v11907 = vsel %vm11892, %v11842, %v10819
        %v11908 = vsel %vm11892, %v11843, %v10821
        %v11909 = vsel %vm11892, %v11844, %v10823
        %v11910 = vsel %vm11892, %v11845, %v10825
        %v11911 = vsel %vm11892, %v11846, %v10827
        %v11912 = vsel %vm11892, %v11847, %v10829
        %v11913 = vsel %vm11892, %v11848, %v10831
        %v11914 = vsel %vm11892, %v11849, %v10833
        %v11915 = vsel %vm11892, %v11850, %v10835
        %v11916 = vsel %vm11892, %v11851, %v10837
        %v11917 = vsel %vm11892, %v11852, %v10839
        %v11918 = vsel %vm11892, %v11853, %v10841
        %v11919 = vsel %vm11892, %v11854, %v10843
        %v11920 = vsel %vm11892, %v11855, %v10845
        %v11921 = vsel %vm11892, %v11856, %v10847
        %v11922 = vsel %vm11892, %v11857, %v10849
        %v11923 = vsel %vm11892, %v11858, %v10851
        %v11924 = vsel %vm11892, %v11859, %v10853
        %v11925 = vsel %vm11892, %v11860, %v10855
        %v11926 = vsel %vm11892, %v11861, %v10857
        %v11927 = vsel %vm11892, %v11862, %v10859
        %v11928 = vsel %vm11892, %v11863, %v10861
        %v11929 = vsel %vm11892, %v11864, %v10863
        %v11930 = vsel %vm11892, %v11865, %v10865
        %v11931 = vsel %vm11892, %v11866, %v10867
        %v11932 = vsel %vm11892, %v11867, %v10869
        %v11933 = vsel %vm11892, %v11868, %v10871
        %v11934 = vsel %vm11892, %v11869, %v10873
        %v11935 = vsel %vm11892, %v11870, %v10875
        %v11936 = vsel %vm11892, %v11871, %v10877
        %v11937 = vsel %vm11892, %v11872, %v10879
        %v11938 = vsel %vm11892, %v11873, %v10881
        %v11939 = vsel %vm11892, %v11874, %v10883
        %v11940 = vsel %vm11892, %v11875, %v10885
        %v11941 = vsel %vm11892, %v11876, %v10887
        %v11942 = vsel %vm11892, %v11877, %v10889
        %v11943 = vsel %vm11892, %v11878, %v10891
        %v11944 = vsel %vm11892, %v11879, %v10893
        %v11945 = vsel %vm11892, %v11880, %v10895
        %v11946 = vsel %vm11892, %v11881, %v10897
        %v11947 = vsel %vm11892, %v11882, %v10899
        %v11948 = vsel %vm11892, %v11883, %v10901
        %v11949 = vsel %vm11892, %v11884, %v10903
        %v11950 = vsel %vm11892, %v11885, %v10905
        %v11951 = vsel %vm11892, %v11886, %v10907
        %v11952 = vsel %vm11892, %v11887, %v10909
        %v11953 = vsel %vm11892, %v11888, %v10911
        %v11954 = vsel %vm11892, %v11889, %v10913
        %v11955 = vsel %vm11892, %v11890, %v10915
        %v11956 = vsel %vm11892, %v11891, %v10917
        %v11957 = vlaneseq
        %v11958 = vshrl.u32 %v11957, 7
        %v11959 = vsub.s32 0, %v11958
        %v11960 = vrot.slane %v11893, %v11959
        %v11961 = vlaneseq
        %v11962 = vshrl.u32 %v11961, 7
        %v11963 = vsub.s32 0, %v11962
        %v11964 = vrot.slane %v11894, %v11963
        %v11965 = vlaneseq
        %v11966 = vshrl.u32 %v11965, 7
        %v11967 = vsub.s32 0, %v11966
        %v11968 = vrot.slane %v11895, %v11967
        %v11969 = vlaneseq
        %v11970 = vshrl.u32 %v11969, 7
        %v11971 = vsub.s32 0, %v11970
        %v11972 = vrot.slane %v11896, %v11971
        %v11973 = vlaneseq
        %v11974 = vshrl.u32 %v11973, 7
        %v11975 = vsub.s32 0, %v11974
        %v11976 = vrot.slane %v11897, %v11975
        %v11977 = vlaneseq
        %v11978 = vshrl.u32 %v11977, 7
        %v11979 = vsub.s32 0, %v11978
        %v11980 = vrot.slane %v11898, %v11979
        %v11981 = vlaneseq
        %v11982 = vshrl.u32 %v11981, 7
        %v11983 = vsub.s32 0, %v11982
        %v11984 = vrot.slane %v11899, %v11983
        %v11985 = vlaneseq
        %v11986 = vshrl.u32 %v11985, 7
        %v11987 = vsub.s32 0, %v11986
        %v11988 = vrot.slane %v11900, %v11987
        %v11989 = vlaneseq
        %v11990 = vshrl.u32 %v11989, 7
        %v11991 = vsub.s32 0, %v11990
        %v11992 = vrot.slane %v11901, %v11991
        %v11993 = vlaneseq
        %v11994 = vshrl.u32 %v11993, 7
        %v11995 = vsub.s32 0, %v11994
        %v11996 = vrot.slane %v11902, %v11995
        %v11997 = vlaneseq
        %v11998 = vshrl.u32 %v11997, 7
        %v11999 = vsub.s32 0, %v11998
        %v12000 = vrot.slane %v11903, %v11999
        %v12001 = vlaneseq
        %v12002 = vshrl.u32 %v12001, 7
        %v12003 = vsub.s32 0, %v12002
        %v12004 = vrot.slane %v11904, %v12003
        %v12005 = vlaneseq
        %v12006 = vshrl.u32 %v12005, 7
        %v12007 = vsub.s32 0, %v12006
        %v12008 = vrot.slane %v11905, %v12007
        %v12009 = vlaneseq
        %v12010 = vshrl.u32 %v12009, 7
        %v12011 = vsub.s32 0, %v12010
        %v12012 = vrot.slane %v11906, %v12011
        %v12013 = vlaneseq
        %v12014 = vshrl.u32 %v12013, 7
        %v12015 = vsub.s32 0, %v12014
        %v12016 = vrot.slane %v11907, %v12015
        %v12017 = vlaneseq
        %v12018 = vshrl.u32 %v12017, 7
        %v12019 = vsub.s32 0, %v12018
        %v12020 = vrot.slane %v11908, %v12019
        %v12021 = vlaneseq
        %v12022 = vshrl.u32 %v12021, 7
        %v12023 = vsub.s32 0, %v12022
        %v12024 = vrot.slane %v11909, %v12023
        %v12025 = vlaneseq
        %v12026 = vshrl.u32 %v12025, 7
        %v12027 = vsub.s32 0, %v12026
        %v12028 = vrot.slane %v11910, %v12027
        %v12029 = vlaneseq
        %v12030 = vshrl.u32 %v12029, 7
        %v12031 = vsub.s32 0, %v12030
        %v12032 = vrot.slane %v11911, %v12031
        %v12033 = vlaneseq
        %v12034 = vshrl.u32 %v12033, 7
        %v12035 = vsub.s32 0, %v12034
        %v12036 = vrot.slane %v11912, %v12035
        %v12037 = vlaneseq
        %v12038 = vshrl.u32 %v12037, 7
        %v12039 = vsub.s32 0, %v12038
        %v12040 = vrot.slane %v11913, %v12039
        %v12041 = vlaneseq
        %v12042 = vshrl.u32 %v12041, 7
        %v12043 = vsub.s32 0, %v12042
        %v12044 = vrot.slane %v11914, %v12043
        %v12045 = vlaneseq
        %v12046 = vshrl.u32 %v12045, 7
        %v12047 = vsub.s32 0, %v12046
        %v12048 = vrot.slane %v11915, %v12047
        %v12049 = vlaneseq
        %v12050 = vshrl.u32 %v12049, 7
        %v12051 = vsub.s32 0, %v12050
        %v12052 = vrot.slane %v11916, %v12051
        %v12053 = vlaneseq
        %v12054 = vshrl.u32 %v12053, 7
        %v12055 = vsub.s32 0, %v12054
        %v12056 = vrot.slane %v11917, %v12055
        %v12057 = vlaneseq
        %v12058 = vshrl.u32 %v12057, 7
        %v12059 = vsub.s32 0, %v12058
        %v12060 = vrot.slane %v11918, %v12059
        %v12061 = vlaneseq
        %v12062 = vshrl.u32 %v12061, 7
        %v12063 = vsub.s32 0, %v12062
        %v12064 = vrot.slane %v11919, %v12063
        %v12065 = vlaneseq
        %v12066 = vshrl.u32 %v12065, 7
        %v12067 = vsub.s32 0, %v12066
        %v12068 = vrot.slane %v11920, %v12067
        %v12069 = vlaneseq
        %v12070 = vshrl.u32 %v12069, 7
        %v12071 = vsub.s32 0, %v12070
        %v12072 = vrot.slane %v11921, %v12071
        %v12073 = vlaneseq
        %v12074 = vshrl.u32 %v12073, 7
        %v12075 = vsub.s32 0, %v12074
        %v12076 = vrot.slane %v11922, %v12075
        %v12077 = vlaneseq
        %v12078 = vshrl.u32 %v12077, 7
        %v12079 = vsub.s32 0, %v12078
        %v12080 = vrot.slane %v11923, %v12079
        %v12081 = vlaneseq
        %v12082 = vshrl.u32 %v12081, 7
        %v12083 = vsub.s32 0, %v12082
        %v12084 = vrot.slane %v11924, %v12083
        %v12085 = vlaneseq
        %v12086 = vshrl.u32 %v12085, 7
        %v12087 = vsub.s32 0, %v12086
        %v12088 = vrot.slane %v11925, %v12087
        %v12089 = vlaneseq
        %v12090 = vshrl.u32 %v12089, 7
        %v12091 = vsub.s32 0, %v12090
        %v12092 = vrot.slane %v11926, %v12091
        %v12093 = vlaneseq
        %v12094 = vshrl.u32 %v12093, 7
        %v12095 = vsub.s32 0, %v12094
        %v12096 = vrot.slane %v11927, %v12095
        %v12097 = vlaneseq
        %v12098 = vshrl.u32 %v12097, 7
        %v12099 = vsub.s32 0, %v12098
        %v12100 = vrot.slane %v11928, %v12099
        %v12101 = vlaneseq
        %v12102 = vshrl.u32 %v12101, 7
        %v12103 = vsub.s32 0, %v12102
        %v12104 = vrot.slane %v11929, %v12103
        %v12105 = vlaneseq
        %v12106 = vshrl.u32 %v12105, 7
        %v12107 = vsub.s32 0, %v12106
        %v12108 = vrot.slane %v11930, %v12107
        %v12109 = vlaneseq
        %v12110 = vshrl.u32 %v12109, 7
        %v12111 = vsub.s32 0, %v12110
        %v12112 = vrot.slane %v11931, %v12111
        %v12113 = vlaneseq
        %v12114 = vshrl.u32 %v12113, 7
        %v12115 = vsub.s32 0, %v12114
        %v12116 = vrot.slane %v11932, %v12115
        %v12117 = vlaneseq
        %v12118 = vshrl.u32 %v12117, 7
        %v12119 = vsub.s32 0, %v12118
        %v12120 = vrot.slane %v11933, %v12119
        %v12121 = vlaneseq
        %v12122 = vshrl.u32 %v12121, 7
        %v12123 = vsub.s32 0, %v12122
        %v12124 = vrot.slane %v11934, %v12123
        %v12125 = vlaneseq
        %v12126 = vshrl.u32 %v12125, 7
        %v12127 = vsub.s32 0, %v12126
        %v12128 = vrot.slane %v11935, %v12127
        %v12129 = vlaneseq
        %v12130 = vshrl.u32 %v12129, 7
        %v12131 = vsub.s32 0, %v12130
        %v12132 = vrot.slane %v11936, %v12131
        %v12133 = vlaneseq
        %v12134 = vshrl.u32 %v12133, 7
        %v12135 = vsub.s32 0, %v12134
        %v12136 = vrot.slane %v11937, %v12135
        %v12137 = vlaneseq
        %v12138 = vshrl.u32 %v12137, 7
        %v12139 = vsub.s32 0, %v12138
        %v12140 = vrot.slane %v11938, %v12139
        %v12141 = vlaneseq
        %v12142 = vshrl.u32 %v12141, 7
        %v12143 = vsub.s32 0, %v12142
        %v12144 = vrot.slane %v11939, %v12143
        %v12145 = vlaneseq
        %v12146 = vshrl.u32 %v12145, 7
        %v12147 = vsub.s32 0, %v12146
        %v12148 = vrot.slane %v11940, %v12147
        %v12149 = vlaneseq
        %v12150 = vshrl.u32 %v12149, 7
        %v12151 = vsub.s32 0, %v12150
        %v12152 = vrot.slane %v11941, %v12151
        %v12153 = vlaneseq
        %v12154 = vshrl.u32 %v12153, 7
        %v12155 = vsub.s32 0, %v12154
        %v12156 = vrot.slane %v11942, %v12155
        %v12157 = vlaneseq
        %v12158 = vshrl.u32 %v12157, 7
        %v12159 = vsub.s32 0, %v12158
        %v12160 = vrot.slane %v11943, %v12159
        %v12161 = vlaneseq
        %v12162 = vshrl.u32 %v12161, 7
        %v12163 = vsub.s32 0, %v12162
        %v12164 = vrot.slane %v11944, %v12163
        %v12165 = vlaneseq
        %v12166 = vshrl.u32 %v12165, 7
        %v12167 = vsub.s32 0, %v12166
        %v12168 = vrot.slane %v11945, %v12167
        %v12169 = vlaneseq
        %v12170 = vshrl.u32 %v12169, 7
        %v12171 = vsub.s32 0, %v12170
        %v12172 = vrot.slane %v11946, %v12171
        %v12173 = vlaneseq
        %v12174 = vshrl.u32 %v12173, 7
        %v12175 = vsub.s32 0, %v12174
        %v12176 = vrot.slane %v11947, %v12175
        %v12177 = vlaneseq
        %v12178 = vshrl.u32 %v12177, 7
        %v12179 = vsub.s32 0, %v12178
        %v12180 = vrot.slane %v11948, %v12179
        %v12181 = vlaneseq
        %v12182 = vshrl.u32 %v12181, 7
        %v12183 = vsub.s32 0, %v12182
        %v12184 = vrot.slane %v11949, %v12183
        %v12185 = vlaneseq
        %v12186 = vshrl.u32 %v12185, 7
        %v12187 = vsub.s32 0, %v12186
        %v12188 = vrot.slane %v11950, %v12187
        %v12189 = vlaneseq
        %v12190 = vshrl.u32 %v12189, 7
        %v12191 = vsub.s32 0, %v12190
        %v12192 = vrot.slane %v11951, %v12191
        %v12193 = vlaneseq
        %v12194 = vshrl.u32 %v12193, 7
        %v12195 = vsub.s32 0, %v12194
        %v12196 = vrot.slane %v11952, %v12195
        %v12197 = vlaneseq
        %v12198 = vshrl.u32 %v12197, 7
        %v12199 = vsub.s32 0, %v12198
        %v12200 = vrot.slane %v11953, %v12199
        %v12201 = vlaneseq
        %v12202 = vshrl.u32 %v12201, 7
        %v12203 = vsub.s32 0, %v12202
        %v12204 = vrot.slane %v11954, %v12203
        %v12205 = vlaneseq
        %v12206 = vshrl.u32 %v12205, 7
        %v12207 = vsub.s32 0, %v12206
        %v12208 = vrot.slane %v11955, %v12207
        %v12209 = vlaneseq
        %v12210 = vshrl.u32 %v12209, 7
        %v12211 = vsub.s32 0, %v12210
        %v12212 = vrot.slane %v11956, %v12211
        %v12277 = vcombine.low %v11960, %v11964
        %v12278 = vcombine.low %v11968, %v11972
        %v12280 = vunpack.c.l.s4 1983009808
        %v12281 = vunpack.c.0.s8 %v12280
        %v12282 = vlaneseq
        %v12283 = vshrl.u32 %v12282, 7
        %v12284 = vsub.s32 %v12281, %v12283
        %v12285 = vrot.slane %v12277, %v12284
        %v12287 = vunpack.c.l.s4 1983009808
        %v12288 = vunpack.c.0.s8 %v12287
        %v12289 = vlaneseq
        %v12290 = vshrl.u32 %v12289, 7
        %v12291 = vsub.s32 %v12288, %v12290
        %v12292 = vrot.slane %v12278, %v12291
        %v12293 = vcombine.low %v12285, %v12292
        %v12294 = vcombine.low %v11976, %v11980
        %v12295 = vcombine.low %v11984, %v11988
        %v12297 = vunpack.c.l.s4 1983009808
        %v12298 = vunpack.c.0.s8 %v12297
        %v12299 = vlaneseq
        %v12300 = vshrl.u32 %v12299, 7
        %v12301 = vsub.s32 %v12298, %v12300
        %v12302 = vrot.slane %v12294, %v12301
        %v12304 = vunpack.c.l.s4 1983009808
        %v12305 = vunpack.c.0.s8 %v12304
        %v12306 = vlaneseq
        %v12307 = vshrl.u32 %v12306, 7
        %v12308 = vsub.s32 %v12305, %v12307
        %v12309 = vrot.slane %v12295, %v12308
        %v12310 = vcombine.low %v12302, %v12309
        %v12311 = vcombine.low %v11992, %v11996
        %v12312 = vcombine.low %v12000, %v12004
        %v12314 = vunpack.c.l.s4 1983009808
        %v12315 = vunpack.c.0.s8 %v12314
        %v12316 = vlaneseq
        %v12317 = vshrl.u32 %v12316, 7
        %v12318 = vsub.s32 %v12315, %v12317
        %v12319 = vrot.slane %v12311, %v12318
        %v12321 = vunpack.c.l.s4 1983009808
        %v12322 = vunpack.c.0.s8 %v12321
        %v12323 = vlaneseq
        %v12324 = vshrl.u32 %v12323, 7
        %v12325 = vsub.s32 %v12322, %v12324
        %v12326 = vrot.slane %v12312, %v12325
        %v12327 = vcombine.low %v12319, %v12326
        %v12328 = vcombine.low %v12008, %v12012
        %v12329 = vcombine.low %v12016, %v12020
        %v12331 = vunpack.c.l.s4 1983009808
        %v12332 = vunpack.c.0.s8 %v12331
        %v12333 = vlaneseq
        %v12334 = vshrl.u32 %v12333, 7
        %v12335 = vsub.s32 %v12332, %v12334
        %v12336 = vrot.slane %v12328, %v12335
        %v12338 = vunpack.c.l.s4 1983009808
        %v12339 = vunpack.c.0.s8 %v12338
        %v12340 = vlaneseq
        %v12341 = vshrl.u32 %v12340, 7
        %v12342 = vsub.s32 %v12339, %v12341
        %v12343 = vrot.slane %v12329, %v12342
        %v12344 = vcombine.low %v12336, %v12343
        %v12345 = vcombine.low %v12024, %v12028
        %v12346 = vcombine.low %v12032, %v12036
        %v12348 = vunpack.c.l.s4 1983009808
        %v12349 = vunpack.c.0.s8 %v12348
        %v12350 = vlaneseq
        %v12351 = vshrl.u32 %v12350, 7
        %v12352 = vsub.s32 %v12349, %v12351
        %v12353 = vrot.slane %v12345, %v12352
        %v12355 = vunpack.c.l.s4 1983009808
        %v12356 = vunpack.c.0.s8 %v12355
        %v12357 = vlaneseq
        %v12358 = vshrl.u32 %v12357, 7
        %v12359 = vsub.s32 %v12356, %v12358
        %v12360 = vrot.slane %v12346, %v12359
        %v12361 = vcombine.low %v12353, %v12360
        %v12362 = vcombine.low %v12040, %v12044
        %v12363 = vcombine.low %v12048, %v12052
        %v12365 = vunpack.c.l.s4 1983009808
        %v12366 = vunpack.c.0.s8 %v12365
        %v12367 = vlaneseq
        %v12368 = vshrl.u32 %v12367, 7
        %v12369 = vsub.s32 %v12366, %v12368
        %v12370 = vrot.slane %v12362, %v12369
        %v12372 = vunpack.c.l.s4 1983009808
        %v12373 = vunpack.c.0.s8 %v12372
        %v12374 = vlaneseq
        %v12375 = vshrl.u32 %v12374, 7
        %v12376 = vsub.s32 %v12373, %v12375
        %v12377 = vrot.slane %v12363, %v12376
        %v12378 = vcombine.low %v12370, %v12377
        %v12379 = vcombine.low %v12056, %v12060
        %v12380 = vcombine.low %v12064, %v12068
        %v12382 = vunpack.c.l.s4 1983009808
        %v12383 = vunpack.c.0.s8 %v12382
        %v12384 = vlaneseq
        %v12385 = vshrl.u32 %v12384, 7
        %v12386 = vsub.s32 %v12383, %v12385
        %v12387 = vrot.slane %v12379, %v12386
        %v12389 = vunpack.c.l.s4 1983009808
        %v12390 = vunpack.c.0.s8 %v12389
        %v12391 = vlaneseq
        %v12392 = vshrl.u32 %v12391, 7
        %v12393 = vsub.s32 %v12390, %v12392
        %v12394 = vrot.slane %v12380, %v12393
        %v12395 = vcombine.low %v12387, %v12394
        %v12396 = vcombine.low %v12072, %v12076
        %v12397 = vcombine.low %v12080, %v12084
        %v12399 = vunpack.c.l.s4 1983009808
        %v12400 = vunpack.c.0.s8 %v12399
        %v12401 = vlaneseq
        %v12402 = vshrl.u32 %v12401, 7
        %v12403 = vsub.s32 %v12400, %v12402
        %v12404 = vrot.slane %v12396, %v12403
        %v12406 = vunpack.c.l.s4 1983009808
        %v12407 = vunpack.c.0.s8 %v12406
        %v12408 = vlaneseq
        %v12409 = vshrl.u32 %v12408, 7
        %v12410 = vsub.s32 %v12407, %v12409
        %v12411 = vrot.slane %v12397, %v12410
        %v12412 = vcombine.low %v12404, %v12411
        %v12413 = vcombine.low %v12088, %v12092
        %v12414 = vcombine.low %v12096, %v12100
        %v12416 = vunpack.c.l.s4 1983009808
        %v12417 = vunpack.c.0.s8 %v12416
        %v12418 = vlaneseq
        %v12419 = vshrl.u32 %v12418, 7
        %v12420 = vsub.s32 %v12417, %v12419
        %v12421 = vrot.slane %v12413, %v12420
        %v12423 = vunpack.c.l.s4 1983009808
        %v12424 = vunpack.c.0.s8 %v12423
        %v12425 = vlaneseq
        %v12426 = vshrl.u32 %v12425, 7
        %v12427 = vsub.s32 %v12424, %v12426
        %v12428 = vrot.slane %v12414, %v12427
        %v12429 = vcombine.low %v12421, %v12428
        %v12430 = vcombine.low %v12104, %v12108
        %v12431 = vcombine.low %v12112, %v12116
        %v12433 = vunpack.c.l.s4 1983009808
        %v12434 = vunpack.c.0.s8 %v12433
        %v12435 = vlaneseq
        %v12436 = vshrl.u32 %v12435, 7
        %v12437 = vsub.s32 %v12434, %v12436
        %v12438 = vrot.slane %v12430, %v12437
        %v12440 = vunpack.c.l.s4 1983009808
        %v12441 = vunpack.c.0.s8 %v12440
        %v12442 = vlaneseq
        %v12443 = vshrl.u32 %v12442, 7
        %v12444 = vsub.s32 %v12441, %v12443
        %v12445 = vrot.slane %v12431, %v12444
        %v12446 = vcombine.low %v12438, %v12445
        %v12447 = vcombine.low %v12120, %v12124
        %v12448 = vcombine.low %v12128, %v12132
        %v12450 = vunpack.c.l.s4 1983009808
        %v12451 = vunpack.c.0.s8 %v12450
        %v12452 = vlaneseq
        %v12453 = vshrl.u32 %v12452, 7
        %v12454 = vsub.s32 %v12451, %v12453
        %v12455 = vrot.slane %v12447, %v12454
        %v12457 = vunpack.c.l.s4 1983009808
        %v12458 = vunpack.c.0.s8 %v12457
        %v12459 = vlaneseq
        %v12460 = vshrl.u32 %v12459, 7
        %v12461 = vsub.s32 %v12458, %v12460
        %v12462 = vrot.slane %v12448, %v12461
        %v12463 = vcombine.low %v12455, %v12462
        %v12464 = vcombine.low %v12136, %v12140
        %v12465 = vcombine.low %v12144, %v12148
        %v12467 = vunpack.c.l.s4 1983009808
        %v12468 = vunpack.c.0.s8 %v12467
        %v12469 = vlaneseq
        %v12470 = vshrl.u32 %v12469, 7
        %v12471 = vsub.s32 %v12468, %v12470
        %v12472 = vrot.slane %v12464, %v12471
        %v12474 = vunpack.c.l.s4 1983009808
        %v12475 = vunpack.c.0.s8 %v12474
        %v12476 = vlaneseq
        %v12477 = vshrl.u32 %v12476, 7
        %v12478 = vsub.s32 %v12475, %v12477
        %v12479 = vrot.slane %v12465, %v12478
        %v12480 = vcombine.low %v12472, %v12479
        %v12481 = vcombine.low %v12152, %v12156
        %v12482 = vcombine.low %v12160, %v12164
        %v12484 = vunpack.c.l.s4 1983009808
        %v12485 = vunpack.c.0.s8 %v12484
        %v12486 = vlaneseq
        %v12487 = vshrl.u32 %v12486, 7
        %v12488 = vsub.s32 %v12485, %v12487
        %v12489 = vrot.slane %v12481, %v12488
        %v12491 = vunpack.c.l.s4 1983009808
        %v12492 = vunpack.c.0.s8 %v12491
        %v12493 = vlaneseq
        %v12494 = vshrl.u32 %v12493, 7
        %v12495 = vsub.s32 %v12492, %v12494
        %v12496 = vrot.slane %v12482, %v12495
        %v12497 = vcombine.low %v12489, %v12496
        %v12498 = vcombine.low %v12168, %v12172
        %v12499 = vcombine.low %v12176, %v12180
        %v12501 = vunpack.c.l.s4 1983009808
        %v12502 = vunpack.c.0.s8 %v12501
        %v12503 = vlaneseq
        %v12504 = vshrl.u32 %v12503, 7
        %v12505 = vsub.s32 %v12502, %v12504
        %v12506 = vrot.slane %v12498, %v12505
        %v12508 = vunpack.c.l.s4 1983009808
        %v12509 = vunpack.c.0.s8 %v12508
        %v12510 = vlaneseq
        %v12511 = vshrl.u32 %v12510, 7
        %v12512 = vsub.s32 %v12509, %v12511
        %v12513 = vrot.slane %v12499, %v12512
        %v12514 = vcombine.low %v12506, %v12513
        %v12515 = vcombine.low %v12184, %v12188
        %v12516 = vcombine.low %v12192, %v12196
        %v12518 = vunpack.c.l.s4 1983009808
        %v12519 = vunpack.c.0.s8 %v12518
        %v12520 = vlaneseq
        %v12521 = vshrl.u32 %v12520, 7
        %v12522 = vsub.s32 %v12519, %v12521
        %v12523 = vrot.slane %v12515, %v12522
        %v12525 = vunpack.c.l.s4 1983009808
        %v12526 = vunpack.c.0.s8 %v12525
        %v12527 = vlaneseq
        %v12528 = vshrl.u32 %v12527, 7
        %v12529 = vsub.s32 %v12526, %v12528
        %v12530 = vrot.slane %v12516, %v12529
        %v12531 = vcombine.low %v12523, %v12530
        %v12532 = vcombine.low %v12200, %v12204
        %v12533 = vcombine.low %v12208, %v12212
        %v12535 = vunpack.c.l.s4 1983009808
        %v12536 = vunpack.c.0.s8 %v12535
        %v12537 = vlaneseq
        %v12538 = vshrl.u32 %v12537, 7
        %v12539 = vsub.s32 %v12536, %v12538
        %v12540 = vrot.slane %v12532, %v12539
        %v12542 = vunpack.c.l.s4 1983009808
        %v12543 = vunpack.c.0.s8 %v12542
        %v12544 = vlaneseq
        %v12545 = vshrl.u32 %v12544, 7
        %v12546 = vsub.s32 %v12543, %v12545
        %v12547 = vrot.slane %v12533, %v12546
        %v12548 = vcombine.low %v12540, %v12547
        %vm12565 = vcmask 261120
        %12566 = vst.msk [vmem:[%s153] sm:$0xff] %vm12565, %v12293
        %12567 = vst.msk [vmem:[%s153 + $0x8] sm:$0xff] %vm12565, %v12310
        %12568 = vst.msk [vmem:[%s153 + $0x10] sm:$0xff] %vm12565, %v12327
        %12569 = vst.msk [vmem:[%s153 + $0x18] sm:$0xff] %vm12565, %v12344
        %12570 = vst.msk [vmem:[%s153 + $0x20] sm:$0xff] %vm12565, %v12361
        %12571 = vst.msk [vmem:[%s153 + $0x28] sm:$0xff] %vm12565, %v12378
        %12572 = vst.msk [vmem:[%s153 + $0x30] sm:$0xff] %vm12565, %v12395
        %12573 = vst.msk [vmem:[%s153 + $0x38] sm:$0xff] %vm12565, %v12412
        %12574 = vst.msk [vmem:[%s153 + $0x40] sm:$0xff] %vm12565, %v12429
        %12575 = vst.msk [vmem:[%s153 + $0x48] sm:$0xff] %vm12565, %v12446
        %12576 = vst.msk [vmem:[%s153 + $0x50] sm:$0xff] %vm12565, %v12463
        %12577 = vst.msk [vmem:[%s153 + $0x58] sm:$0xff] %vm12565, %v12480
        %12578 = vst.msk [vmem:[%s153 + $0x60] sm:$0xff] %vm12565, %v12497
        %12579 = vst.msk [vmem:[%s153 + $0x68] sm:$0xff] %vm12565, %v12514
        %12580 = vst.msk [vmem:[%s153 + $0x70] sm:$0xff] %vm12565, %v12531
        %12581 = vst.msk [vmem:[%s153 + $0x78] sm:$0xff] %vm12565, %v12548
        %s12582 = sand.u32 %s68, 1
        %s12583 = scalar_lea.sflag [#allocation4], %s12582
        %s12584 = sand.u32 %s68, 1
        %s12585 = smul.addr %s12584, 128
        %s12586 = scalar_lea.vmem [#allocation5], %s12585
        // Predicated region
        $region29: #{tpu_custom_call.1} parent=23 // pred_check
          %p12587 = pneg %p78
        $region30: #{tpu_custom_call.1} parent=23 // pred_check_branch
          %12589 = sbr.rel (%p12587) target = $region32
        $region31: #{tpu_custom_call.1} parent=23 // pred_region
          %s12590 = smul.u32 4, %s22
          %s12591 = smul.u32 4, %s23
          %s12593 = ssub.s32 2048, 2048
          %12594 = vsyncadd %s12583, %s12593
          %s12595 = smul.addr %s12590, 4
          %s12596 = sadd.s32 %s12591, %s12595
          %s12597 = smul.addr %s12596, 128
          %s12598 = scalar_lea.hbm %s1, %s12597
          %s12599 = sshll.u32 %s12586, 4
          %s12600 = int_to_ptr.vmem [resolvable:$true] %s12599
          %12605 = dma.vmem_to_hbm [thread:$0]  %s12600, 2048, %s12598, %s12583, 128, 128, 8
        $region32: #{tpu_custom_call.1} parent=23 // pred_fallthru
          _
      $region24: #{tpu_custom_call.1} parent=5 // pred_fallthru
        _
      %p12606 = scmp.le.s32.totalorder 2, %s13
      // Predicated region
      $region33: #{tpu_custom_call.1} parent=5 // pred_check
        %p12607 = pneg %p12606
      $region34: #{tpu_custom_call.1} parent=5 // pred_check_branch
        %12609 = sbr.rel (%p12607) target = $region36
      $region35: #{tpu_custom_call.1} parent=5 // pred_region
        %s12610 = ssub.s32 %s13, 2
        // Predicated region
        $region37: #{tpu_custom_call.1} parent=35 // pred_check
          %p12611 = pneg %p84
        $region38: #{tpu_custom_call.1} parent=35 // pred_check_branch
          %12613 = sbr.rel (%p12611) target = $region40
        $region39: #{tpu_custom_call.1} parent=35 // pred_region
          %s12614 = sand.u32 %s69, 1
          %s12615 = scalar_lea.sflag [#allocation4], %s12614
          %s12616 = sand.u32 %s69, 1
          %s12617 = smul.addr %s12616, 128
          %s12618 = scalar_lea.vmem [#allocation5], %s12617
          %12619 = dma.done %s12615, 2048
        $region40: #{tpu_custom_call.1} parent=35 // pred_fallthru
          _
      $region36: #{tpu_custom_call.1} parent=5 // pred_fallthru
        _
    $region6: #{tpu_custom_call.1} parent=1 // loop_footer
      %s17 = sadd.s32 1, %s13
    $region7: #{tpu_custom_call.1} parent=1 // loop_footer_branch
      %12 = sbr.rel target = $region3
    $region8: #{tpu_custom_call.1} parent=1 // loop_exit
      _
    %12620 = vsyncpa [#allocation3], 1
    %s12621 = scalar_lea.sflag [#allocation3], 1
    %12622 = vsyncpa %s12621, 1
    %12623 = vsyncpa [#allocation4], 1
    %s12624 = scalar_lea.sflag [#allocation4], 1
    %12625 = vsyncpa %s12624, 1

</llo_original>
